<compile_context>
chip_gen: v7x
topology: tpu7x:2x2x1
jax: 0.10.0
libtpu: 0.0.40
codegen_flags: <defaults>
</compile_context>

<pallas_src>
import functools
import math

import jax
import jax.numpy as jnp
from jax.experimental import pallas as pl
from jax.experimental.pallas import tpu as pltpu


# -----------------------------------------------------------------------------
# In-kernel helpers.
# PyTorch GRU gate order is (r, z, n):
#   r = sigmoid(Wir x + bir + Whr h + bhr)
#   z = sigmoid(Wiz x + biz + Whz h + bhz)
#   n = tanh  (Win x + bin + r * (Whn h + bhn))
#   h = (1 - z) * n + z * h
# gx already contains  Wi? x + bi?  (+ bh? folded in for r and z); bhh_n is separate.
# -----------------------------------------------------------------------------
def _gru_recurrence(gx_ref, whh_ref, bhhn_ref, seq_ref, *, T, BP):
    """One GRU layer's recurrence over T (static, small) timesteps.

    gx_ref  : (T*BP, 3*HP) precomputed input-gate activations [r|z|n], f32
    whh_ref : (HP, 3*HP)   fused per-gate hidden weights, pre-transposed, bf16
    bhhn_ref: (1, HP)      hidden bias of the n gate (the only one not foldable), f32
    seq_ref : (T*BP, HP)   hidden state for every timestep (written here), f32
    """
    HP = whh_ref.shape[0]
    whh = whh_ref[...]                         # load fused weight slab once
    bhh_n = bhhn_ref[...]
    h = jnp.zeros((BP, HP), jnp.float32)       # PyTorch default h0 = 0
    for t in range(T):                         # T == 2, static unroll, static slices
        r0 = t * BP
        gx = gx_ref[r0:r0 + BP, :]             # (BP, 3HP)
        gh = jnp.dot(h.astype(jnp.bfloat16), whh,
                     preferred_element_type=jnp.float32)          # ONE matmul / step
        r = jax.nn.sigmoid(gx[:, 0:HP] + gh[:, 0:HP])
        z = jax.nn.sigmoid(gx[:, HP:2 * HP] + gh[:, HP:2 * HP])
        n = jnp.tanh(gx[:, 2 * HP:3 * HP] + r * (gh[:, 2 * HP:3 * HP] + bhh_n))
        h = (1.0 - z) * n + z * h
        seq_ref[r0:r0 + BP, :] = h


def _input_projection(prev_ref, wih_ref, bih_ref, gx_ref):
    """gx = prev @ wih_all + bih_fold for all timesteps at once (one fused matmul)."""
    prev = prev_ref[...].astype(jnp.bfloat16)                      # (T*BP, Hprev)
    gx_ref[...] = (jnp.dot(prev, wih_ref[...], preferred_element_type=jnp.float32)
                   + bih_ref[...])


# -----------------------------------------------------------------------------
# Fused kernel: gru1 -> gru2 -> gru3 -> gru4 -> fc(cat(h_t0, h_t1))
# -----------------------------------------------------------------------------
def _dqn_fused_kernel(gx1_ref, whh1_ref, bhhn1_ref,
                      wih2_ref, bih2_ref, whh2_ref, bhhn2_ref,
                      wih3_ref, bih3_ref, whh3_ref, bhhn3_ref,
                      wih4_ref, bih4_ref, whh4_ref, bhhn4_ref,
                      fcw_ref, fcb_ref,
                      out_ref,
                      seq1_ref, seq2_ref, seq3_ref, seq4_ref,
                      gx2_ref, gx3_ref, gx4_ref,
                      *, T, BP):
    # gru1 (input projection precomputed in XLA, passed in as gx1)
    _gru_recurrence(gx1_ref, whh1_ref, bhhn1_ref, seq1_ref, T=T, BP=BP)
    # dropout20: identity in eval mode

    # gru2
    _input_projection(seq1_ref, wih2_ref, bih2_ref, gx2_ref)
    _gru_recurrence(gx2_ref, whh2_ref, bhhn2_ref, seq2_ref, T=T, BP=BP)
    # dropout20: identity in eval mode

    # gru3
    _input_projection(seq2_ref, wih3_ref, bih3_ref, gx3_ref)
    _gru_recurrence(gx3_ref, whh3_ref, bhhn3_ref, seq3_ref, T=T, BP=BP)
    # dropout20: identity in eval mode

    # gru4 (hidden padded 64 -> 128; padded lanes stay exactly zero)
    _input_projection(seq3_ref, wih4_ref, bih4_ref, gx4_ref)
    _gru_recurrence(gx4_ref, whh4_ref, bhhn4_ref, seq4_ref, T=T, BP=BP)
    # dropout50: identity in eval mode

    # fc head on cat(h_t0, h_t1); split-weight form avoids a lane concatenation.
    h_t0 = seq4_ref[0:BP, :].astype(jnp.bfloat16)
    h_t1 = seq4_ref[BP:2 * BP, :].astype(jnp.bfloat16)
    out = (jnp.dot(h_t0, fcw_ref[0], preferred_element_type=jnp.float32)
           + jnp.dot(h_t1, fcw_ref[1], preferred_element_type=jnp.float32)
           + fcb_ref[...])
    out_ref[...] = out.astype(out_ref.dtype)


# -----------------------------------------------------------------------------
# One-time parameter layout preparation (transpose + gate fusion + bias folding +
# layer-4 padding + bf16 cast). Do NOT call this per forward pass.
# -----------------------------------------------------------------------------
def _prep_gru(p, HP):
    """Returns (wih_cat, whh_cat, bih_fold, bhh_n) with gates fused on the lane axis."""
    wih, whh, bih, bhh = p["wih"], p["whh"], p["bih"], p["bhh"]
    H = whh.shape[1]
    pad = HP - H

    def gate_w(w):   # (3H, K) -> three (K, HP) transposed, lane-padded gate blocks
        blocks = []
        for g in range(3):
            wg = jnp.transpose(w[g * H:(g + 1) * H, :])
            if pad:
                wg = jnp.pad(wg, ((0, 0), (0, pad)))
            blocks.append(wg)
        return blocks

    def gate_b(b):   # (3H,) -> three (HP,) padded gate blocks
        blocks = []
        for g in range(3):
            bg = b[g * H:(g + 1) * H]
            if pad:
                bg = jnp.pad(bg, ((0, pad),))
            blocks.append(bg)
        return blocks

    wih_cat = jnp.concatenate(gate_w(wih), axis=1)                 # (I, 3HP)
    whh_cat = jnp.concatenate(gate_w(whh), axis=1)                 # (H, 3HP)
    if pad:
        # pad the h-input rows too (padded h lanes are always zero, so zero rows are exact)
        whh_cat = jnp.pad(whh_cat, ((0, pad), (0, 0)))             # (HP, 3HP)
    bih_g = gate_b(bih)
    bhh_g = gate_b(bhh)
    # fold bhh_r / bhh_z into the precomputed input-gate bias; bhh_n must stay separate
    bih_fold = jnp.concatenate(
        [bih_g[0] + bhh_g[0], bih_g[1] + bhh_g[1], bih_g[2]]).reshape(1, 3 * HP)
    bhh_n = bhh_g[2].reshape(1, HP)
    return wih_cat, whh_cat, bih_fold, bhh_n


def prepare_params(params):
    hs = [params[f"gru{i}"]["whh"].shape[1] for i in (1, 2, 3, 4)]     # (512, 256, 128, 64)
    HP4 = 128                                                          # pad layer 4 to 128 lanes
    prepped = {}

    # Layer 1: wih / bih stay f32 (used by the XLA-side projection); whh used in-kernel -> bf16.
    wih1, whh1, bih1, bhhn1 = _prep_gru(params["gru1"], hs[0])
    prepped["gru1"] = {"wih": wih1, "bih": bih1,
                       "whh": whh1.astype(jnp.bfloat16), "bhhn": bhhn1}

    for idx, HP in zip((2, 3, 4), (hs[1], hs[2], HP4)):
        wih, whh, bih, bhhn = _prep_gru(params[f"gru{idx}"], HP)
        prepped[f"gru{idx}"] = {"wih": wih.astype(jnp.bfloat16), "bih": bih,
                                "whh": whh.astype(jnp.bfloat16), "bhhn": bhhn}

    # FC: cat(h_t0, h_t1) @ w.T + b  ->  h_t0 @ w0 + h_t1 @ w1 + b, rows padded 64 -> 128
    w, b = params["fc"]["w"], params["fc"]["b"]
    H4 = hs[3]
    pad4 = HP4 - H4
    w0 = jnp.pad(jnp.transpose(w[:, :H4]), ((0, pad4), (0, 0)))       # (HP4, A)
    w1 = jnp.pad(jnp.transpose(w[:, H4:]), ((0, pad4), (0, 0)))       # (HP4, A)
    prepped["fc"] = {"w": jnp.stack([w0, w1]).astype(jnp.bfloat16),    # (2, HP4, A)
                     "b": b.reshape(1, -1)}
    return prepped


# -----------------------------------------------------------------------------
# Forward pass (matches DQN.forward in eval mode).
# -----------------------------------------------------------------------------
@jax.jit
def dqn_forward(prepped, x):
    """x: (B, T, n_observations), batch_first, float32 — same as the PyTorch module."""
    B, T, I = x.shape
    assert T >= 2, "forward uses timesteps 0 and 1 of the last GRU output"
    # The head reads gru4's output only at t=0 and t=1; GRUs are causal with h0=0,
    # so only the first two timesteps need to be computed anywhere.
    T_EFF = 2
    BP = ((B + 7) // 8) * 8          # pad batch to whole sublane tiles -> aligned row blocks
    TB = T_EFF * BP

    p1, p2, p3, p4 = (prepped[f"gru{i}"] for i in (1, 2, 3, 4))
    H1 = p1["whh"].shape[0]
    H2 = p2["whh"].shape[0]
    H3 = p3["whh"].shape[0]
    H4P = p4["whh"].shape[0]
    A = prepped["fc"]["w"].shape[-1]

    xt = x[:, :T_EFF, :]
    if BP != B:
        xt = jnp.pad(xt, ((0, BP - B), (0, 0), (0, 0)))
    x2d = jnp.swapaxes(xt, 0, 1).reshape(TB, I)      # time-major rows: row = t*BP + b

    # Hoisted layer-1 input projection: one XLA matmul so W_ih1 (largest weight, ~24.6 MiB at
    # the real n_observations=4000) never has to be resident in kernel VMEM.
    gx1 = jnp.dot(x2d, p1["wih"], preferred_element_type=jnp.float32) + p1["bih"]

    inputs = (gx1,
              p1["whh"], p1["bhhn"],
              p2["wih"], p2["bih"], p2["whh"], p2["bhhn"],
              p3["wih"], p3["bih"], p3["whh"], p3["bhhn"],
              p4["wih"], p4["bih"], p4["whh"], p4["bhhn"],
              prepped["fc"]["w"], prepped["fc"]["b"])

    def full_spec(a):
        nd = a.ndim
        return pl.BlockSpec(a.shape, lambda i, nd=nd: (0,) * nd)

    out = pl.pallas_call(
        functools.partial(_dqn_fused_kernel, T=T_EFF, BP=BP),
        out_shape=jax.ShapeDtypeStruct((BP, A), jnp.float32),
        grid_spec=pltpu.PrefetchScalarGridSpec(
            num_scalar_prefetch=0,
            grid=(1,),                                   # single fused kernel invocation
            in_specs=[full_spec(a) for a in inputs],
            out_specs=pl.BlockSpec((BP, A), lambda i: (0, 0)),
            scratch_shapes=[
                pltpu.VMEM((TB, H1), jnp.float32),        # seq1
                pltpu.VMEM((TB, H2), jnp.float32),        # seq2
                pltpu.VMEM((TB, H3), jnp.float32),        # seq3
                pltpu.VMEM((TB, H4P), jnp.float32),       # seq4 (lane-padded to 128)
                pltpu.VMEM((TB, 3 * H2), jnp.float32),    # gx2
                pltpu.VMEM((TB, 3 * H3), jnp.float32),    # gx3
                pltpu.VMEM((TB, 3 * H4P), jnp.float32),   # gx4
            ],
        ),
        compiler_params=pltpu.CompilerParams(
            dimension_semantics=("arbitrary",),
            vmem_limit_bytes=16 * 1024 * 1024,            # tight, honest budget (<64 MiB v7x)
        ),
    )(*inputs)
    return out[:B]


# -----------------------------------------------------------------------------
# Pure-JAX reference (full-sequence lax.scan GRU, f32) for a sanity check.
# -----------------------------------------------------------------------------
def gru_layer_ref(x, wih, whh, bih, bhh):
    B, T, I = x.shape
    H = whh.shape[1]

    def step(h, x_t):
        gx = x_t @ wih.T + bih
        gh = h @ whh.T + bhh
        r = jax.nn.sigmoid(gx[:, :H] + gh[:, :H])
        z = jax.nn.sigmoid(gx[:, H:2 * H] + gh[:, H:2 * H])
        n = jnp.tanh(gx[:, 2 * H:] + r * gh[:, 2 * H:])
        h_new = (1.0 - z) * n + z * h
        return h_new, h_new

    h0 = jnp.zeros((B, H), jnp.float32)
    _, ys = jax.lax.scan(step, h0, jnp.swapaxes(x, 0, 1))
    return jnp.swapaxes(ys, 0, 1)


def dqn_forward_ref(params, x):
    h = x
    for name in ("gru1", "gru2", "gru3", "gru4"):
        p = params[name]
        h = gru_layer_ref(h, p["wih"], p["whh"], p["bih"], p["bhh"])
    cat = jnp.concatenate([h[:, 0, :], h[:, 1, :]], axis=1)
    return cat @ params["fc"]["w"].T + params["fc"]["b"]


# -----------------------------------------------------------------------------
# Deterministic parameter init (PyTorch-style uniform(-1/sqrt(H), 1/sqrt(H))).
# -----------------------------------------------------------------------------
def init_params(key, n_observations, n_angles, hidden_sizes=(512, 256, 128, 64)):
    params = {}
    in_dim = n_observations
    for idx, H in enumerate(hidden_sizes, start=1):
        k = 1.0 / math.sqrt(H)
        key, k1, k2, k3, k4 = jax.random.split(key, 5)
        params[f"gru{idx}"] = {
            "wih": jax.random.uniform(k1, (3 * H, in_dim), jnp.float32, -k, k),
            "whh": jax.random.uniform(k2, (3 * H, H), jnp.float32, -k, k),
            "bih": jax.random.uniform(k3, (3 * H,), jnp.float32, -k, k),
            "bhh": jax.random.uniform(k4, (3 * H,), jnp.float32, -k, k),
        }
        in_dim = H
    fc_in = hidden_sizes[-1] * 2
    kf = 1.0 / math.sqrt(fc_in)
    key, k1, k2 = jax.random.split(key, 3)
    params["fc"] = {
        "w": jax.random.uniform(k1, (n_angles, fc_in), jnp.float32, -kf, kf),
        "b": jax.random.uniform(k2, (n_angles,), jnp.float32, -kf, kf),
    }
    return params


if __name__ == "__main__":
    # Small shapes consistent with the module: (B, T, n_observations) batch_first input.
    B, T = 2, 8
    n_observations = 256   # scaled down from 4000 for the synthetic run
    n_angles = 8

    key = jax.random.PRNGKey(0)
    key, pkey, xkey = jax.random.split(key, 3)
    params = init_params(pkey, n_observations, n_angles)
    prepped = prepare_params(params)       # one-time layout prep (fusion, padding, bf16)
    x = jax.random.normal(xkey, (B, T, n_observations), jnp.float32)

    out = dqn_forward(prepped, x)
    out = jax.block_until_ready(out)
    assert out.shape == (B, n_angles), out.shape

    ref = dqn_forward_ref(params, x)
    diff = float(jnp.max(jnp.abs(out - ref)))
    assert diff < 5e-2, f"max abs diff vs reference: {diff}"

    print("KERNEL_OK")
</pallas_src>

<mosaic_0001>
module attributes {stable_mosaic.version = 11 : i64} {
  func.func @_dqn_fused_kernel(%arg0: i32, %arg1: memref<16x1536xf32, #tpu.memory_space<vmem>>, %arg2: memref<512x1536xbf16, #tpu.memory_space<vmem>>, %arg3: memref<1x512xf32, #tpu.memory_space<vmem>>, %arg4: memref<512x768xbf16, #tpu.memory_space<vmem>>, %arg5: memref<1x768xf32, #tpu.memory_space<vmem>>, %arg6: memref<256x768xbf16, #tpu.memory_space<vmem>>, %arg7: memref<1x256xf32, #tpu.memory_space<vmem>>, %arg8: memref<256x384xbf16, #tpu.memory_space<vmem>>, %arg9: memref<1x384xf32, #tpu.memory_space<vmem>>, %arg10: memref<128x384xbf16, #tpu.memory_space<vmem>>, %arg11: memref<1x128xf32, #tpu.memory_space<vmem>>, %arg12: memref<128x384xbf16, #tpu.memory_space<vmem>>, %arg13: memref<1x384xf32, #tpu.memory_space<vmem>>, %arg14: memref<128x384xbf16, #tpu.memory_space<vmem>>, %arg15: memref<1x128xf32, #tpu.memory_space<vmem>>, %arg16: memref<2x128x8xbf16, #tpu.memory_space<vmem>>, %arg17: memref<1x8xf32, #tpu.memory_space<vmem>>, %arg18: memref<8x8xf32, #tpu.memory_space<vmem>>, %arg19: memref<16x512xf32, #tpu.memory_space<vmem>>, %arg20: memref<16x256xf32, #tpu.memory_space<vmem>>, %arg21: memref<16x128xf32, #tpu.memory_space<vmem>>, %arg22: memref<16x128xf32, #tpu.memory_space<vmem>>, %arg23: memref<16x768xf32, #tpu.memory_space<vmem>>, %arg24: memref<16x384xf32, #tpu.memory_space<vmem>>, %arg25: memref<16x384xf32, #tpu.memory_space<vmem>>) attributes {dimension_semantics = [#tpu.dimension_semantics<arbitrary>], iteration_bounds = array<i64: 1>, scalar_prefetch = 0 : i64, scratch_operands = 7 : i64, tpu.core_type = #tpu.core_type<tc>, window_params = [{pipeline_mode = #tpu.pipeline_mode<synchronous>, transform_indices = @transform_0, window_bounds = array<i64: 16, 1536>}, {pipeline_mode = #tpu.pipeline_mode<synchronous>, transform_indices = @transform_1, window_bounds = array<i64: 512, 1536>}, {pipeline_mode = #tpu.pipeline_mode<synchronous>, transform_indices = @transform_2, window_bounds = array<i64: 1, 512>}, {pipeline_mode = #tpu.pipeline_mode<synchronous>, transform_indices = @transform_3, window_bounds = array<i64: 512, 768>}, {pipeline_mode = #tpu.pipeline_mode<synchronous>, transform_indices = @transform_4, window_bounds = array<i64: 1, 768>}, {pipeline_mode = #tpu.pipeline_mode<synchronous>, transform_indices = @transform_5, window_bounds = array<i64: 256, 768>}, {pipeline_mode = #tpu.pipeline_mode<synchronous>, transform_indices = @transform_6, window_bounds = array<i64: 1, 256>}, {pipeline_mode = #tpu.pipeline_mode<synchronous>, transform_indices = @transform_7, window_bounds = array<i64: 256, 384>}, {pipeline_mode = #tpu.pipeline_mode<synchronous>, transform_indices = @transform_8, window_bounds = array<i64: 1, 384>}, {pipeline_mode = #tpu.pipeline_mode<synchronous>, transform_indices = @transform_9, window_bounds = array<i64: 128, 384>}, {pipeline_mode = #tpu.pipeline_mode<synchronous>, transform_indices = @transform_10, window_bounds = array<i64: 1, 128>}, {pipeline_mode = #tpu.pipeline_mode<synchronous>, transform_indices = @transform_11, window_bounds = array<i64: 128, 384>}, {pipeline_mode = #tpu.pipeline_mode<synchronous>, transform_indices = @transform_12, window_bounds = array<i64: 1, 384>}, {pipeline_mode = #tpu.pipeline_mode<synchronous>, transform_indices = @transform_13, window_bounds = array<i64: 128, 384>}, {pipeline_mode = #tpu.pipeline_mode<synchronous>, transform_indices = @transform_14, window_bounds = array<i64: 1, 128>}, {pipeline_mode = #tpu.pipeline_mode<synchronous>, transform_indices = @transform_15, window_bounds = array<i64: 2, 128, 8>}, {pipeline_mode = #tpu.pipeline_mode<synchronous>, transform_indices = @transform_16, window_bounds = array<i64: 1, 8>}, {pipeline_mode = #tpu.pipeline_mode<synchronous>, transform_indices = @transform_17, window_bounds = array<i64: 8, 8>}]} {
    %c0 = arith.constant 0 : index
    %c0_0 = arith.constant 0 : index
    %0 = vector.load %arg2[%c0, %c0_0] : memref<512x1536xbf16, #tpu.memory_space<vmem>>, vector<512x1536xbf16>
    %c0_1 = arith.constant 0 : index
    %c0_2 = arith.constant 0 : index
    %1 = vector.load %arg3[%c0_1, %c0_2] : memref<1x512xf32, #tpu.memory_space<vmem>>, vector<1x512xf32>
    %cst = arith.constant 0.000000e+00 : f32
    %2 = vector.broadcast %cst : f32 to vector<8x512xf32>
    %c0_3 = arith.constant 0 : index
    %c0_4 = arith.constant 0 : index
    %3 = vector.load %arg1[%c0_3, %c0_4] : memref<16x1536xf32, #tpu.memory_space<vmem>>, vector<8x1536xf32>
    %4 = arith.truncf %2 : vector<8x512xf32> to vector<8x512xbf16>
    %cst_5 = arith.constant dense<0.000000e+00> : vector<8x1536xf32>
    %5 = tpu.matmul %4, %0, %cst_5 {dimension_numbers = #tpu.dot_dimension_numbers<[1], [0], [0], [1], [0, 0, 1, 1], [], []>} : vector<8x512xbf16>, vector<512x1536xbf16>, vector<8x1536xf32> -> vector<8x1536xf32>
    %6 = vector.extract_strided_slice %3 {offsets = [0, 0], sizes = [8, 512], strides = [1, 1]} : vector<8x1536xf32> to vector<8x512xf32>
    %7 = vector.extract_strided_slice %5 {offsets = [0, 0], sizes = [8, 512], strides = [1, 1]} : vector<8x1536xf32> to vector<8x512xf32>
    %8 = arith.addf %6, %7 : vector<8x512xf32>
    %9 = arith.negf %8 : vector<8x512xf32>
    %10 = math.exp %9 : vector<8x512xf32>
    %cst_6 = arith.constant 1.000000e+00 : f32
    %11 = vector.broadcast %cst_6 : f32 to vector<8x512xf32>
    %12 = arith.addf %11, %10 : vector<8x512xf32>
    %13 = arith.divf %11, %12 : vector<8x512xf32>
    %14 = vector.extract_strided_slice %3 {offsets = [0, 512], sizes = [8, 512], strides = [1, 1]} : vector<8x1536xf32> to vector<8x512xf32>
    %15 = vector.extract_strided_slice %5 {offsets = [0, 512], sizes = [8, 512], strides = [1, 1]} : vector<8x1536xf32> to vector<8x512xf32>
    %16 = arith.addf %14, %15 : vector<8x512xf32>
    %17 = arith.negf %16 : vector<8x512xf32>
    %18 = math.exp %17 : vector<8x512xf32>
    %cst_7 = arith.constant 1.000000e+00 : f32
    %19 = vector.broadcast %cst_7 : f32 to vector<8x512xf32>
    %20 = arith.addf %19, %18 : vector<8x512xf32>
    %21 = arith.divf %19, %20 : vector<8x512xf32>
    %22 = vector.extract_strided_slice %3 {offsets = [0, 1024], sizes = [8, 512], strides = [1, 1]} : vector<8x1536xf32> to vector<8x512xf32>
    %23 = vector.extract_strided_slice %5 {offsets = [0, 1024], sizes = [8, 512], strides = [1, 1]} : vector<8x1536xf32> to vector<8x512xf32>
    %24 = vector.broadcast %1 : vector<1x512xf32> to vector<8x512xf32>
    %25 = arith.addf %23, %24 : vector<8x512xf32>
    %26 = arith.mulf %13, %25 : vector<8x512xf32>
    %27 = arith.addf %22, %26 : vector<8x512xf32>
    %28 = math.tanh %27 : vector<8x512xf32>
    %cst_8 = arith.constant 1.000000e+00 : f32
    %29 = vector.broadcast %cst_8 : f32 to vector<8x512xf32>
    %30 = arith.subf %29, %21 : vector<8x512xf32>
    %31 = arith.mulf %30, %28 : vector<8x512xf32>
    %32 = arith.mulf %21, %2 : vector<8x512xf32>
    %33 = arith.addf %31, %32 : vector<8x512xf32>
    %c0_9 = arith.constant 0 : index
    %c0_10 = arith.constant 0 : index
    %34 = vector.load %arg19[%c0_9, %c0_10] : memref<16x512xf32, #tpu.memory_space<vmem>>, vector<8x512xf32>
    tpu.vector_store %arg19[%c0_9, %c0_10], %33 {strides = array<i32>} : memref<16x512xf32, #tpu.memory_space<vmem>>, vector<8x512xf32>,
    %c8 = arith.constant 8 : index
    %c0_11 = arith.constant 0 : index
    %35 = vector.load %arg1[%c8, %c0_11] : memref<16x1536xf32, #tpu.memory_space<vmem>>, vector<8x1536xf32>
    %36 = arith.truncf %33 : vector<8x512xf32> to vector<8x512xbf16>
    %cst_12 = arith.constant dense<0.000000e+00> : vector<8x1536xf32>
    %37 = tpu.matmul %36, %0, %cst_12 {dimension_numbers = #tpu.dot_dimension_numbers<[1], [0], [0], [1], [0, 0, 1, 1], [], []>} : vector<8x512xbf16>, vector<512x1536xbf16>, vector<8x1536xf32> -> vector<8x1536xf32>
    %38 = vector.extract_strided_slice %35 {offsets = [0, 0], sizes = [8, 512], strides = [1, 1]} : vector<8x1536xf32> to vector<8x512xf32>
    %39 = vector.extract_strided_slice %37 {offsets = [0, 0], sizes = [8, 512], strides = [1, 1]} : vector<8x1536xf32> to vector<8x512xf32>
    %40 = arith.addf %38, %39 : vector<8x512xf32>
    %41 = arith.negf %40 : vector<8x512xf32>
    %42 = math.exp %41 : vector<8x512xf32>
    %cst_13 = arith.constant 1.000000e+00 : f32
    %43 = vector.broadcast %cst_13 : f32 to vector<8x512xf32>
    %44 = arith.addf %43, %42 : vector<8x512xf32>
    %45 = arith.divf %43, %44 : vector<8x512xf32>
    %46 = vector.extract_strided_slice %35 {offsets = [0, 512], sizes = [8, 512], strides = [1, 1]} : vector<8x1536xf32> to vector<8x512xf32>
    %47 = vector.extract_strided_slice %37 {offsets = [0, 512], sizes = [8, 512], strides = [1, 1]} : vector<8x1536xf32> to vector<8x512xf32>
    %48 = arith.addf %46, %47 : vector<8x512xf32>
    %49 = arith.negf %48 : vector<8x512xf32>
    %50 = math.exp %49 : vector<8x512xf32>
    %cst_14 = arith.constant 1.000000e+00 : f32
    %51 = vector.broadcast %cst_14 : f32 to vector<8x512xf32>
    %52 = arith.addf %51, %50 : vector<8x512xf32>
    %53 = arith.divf %51, %52 : vector<8x512xf32>
    %54 = vector.extract_strided_slice %35 {offsets = [0, 1024], sizes = [8, 512], strides = [1, 1]} : vector<8x1536xf32> to vector<8x512xf32>
    %55 = vector.extract_strided_slice %37 {offsets = [0, 1024], sizes = [8, 512], strides = [1, 1]} : vector<8x1536xf32> to vector<8x512xf32>
    %56 = vector.broadcast %1 : vector<1x512xf32> to vector<8x512xf32>
    %57 = arith.addf %55, %56 : vector<8x512xf32>
    %58 = arith.mulf %45, %57 : vector<8x512xf32>
    %59 = arith.addf %54, %58 : vector<8x512xf32>
    %60 = math.tanh %59 : vector<8x512xf32>
    %cst_15 = arith.constant 1.000000e+00 : f32
    %61 = vector.broadcast %cst_15 : f32 to vector<8x512xf32>
    %62 = arith.subf %61, %53 : vector<8x512xf32>
    %63 = arith.mulf %62, %60 : vector<8x512xf32>
    %64 = arith.mulf %53, %33 : vector<8x512xf32>
    %65 = arith.addf %63, %64 : vector<8x512xf32>
    %c8_16 = arith.constant 8 : index
    %c0_17 = arith.constant 0 : index
    %66 = vector.load %arg19[%c8_16, %c0_17] : memref<16x512xf32, #tpu.memory_space<vmem>>, vector<8x512xf32>
    tpu.vector_store %arg19[%c8_16, %c0_17], %65 {strides = array<i32>} : memref<16x512xf32, #tpu.memory_space<vmem>>, vector<8x512xf32>,
    %c0_18 = arith.constant 0 : index
    %c0_19 = arith.constant 0 : index
    %67 = vector.load %arg19[%c0_18, %c0_19] : memref<16x512xf32, #tpu.memory_space<vmem>>, vector<16x512xf32>
    %68 = arith.truncf %67 : vector<16x512xf32> to vector<16x512xbf16>
    %c0_20 = arith.constant 0 : index
    %c0_21 = arith.constant 0 : index
    %69 = vector.load %arg4[%c0_20, %c0_21] : memref<512x768xbf16, #tpu.memory_space<vmem>>, vector<512x768xbf16>
    %cst_22 = arith.constant dense<0.000000e+00> : vector<16x768xf32>
    %70 = tpu.matmul %68, %69, %cst_22 {dimension_numbers = #tpu.dot_dimension_numbers<[1], [0], [0], [1], [0, 0, 1, 1], [], []>} : vector<16x512xbf16>, vector<512x768xbf16>, vector<16x768xf32> -> vector<16x768xf32>
    %c0_23 = arith.constant 0 : index
    %c0_24 = arith.constant 0 : index
    %71 = vector.load %arg5[%c0_23, %c0_24] : memref<1x768xf32, #tpu.memory_space<vmem>>, vector<1x768xf32>
    %72 = vector.broadcast %71 : vector<1x768xf32> to vector<16x768xf32>
    %73 = arith.addf %70, %72 : vector<16x768xf32>
    %c0_25 = arith.constant 0 : index
    %c0_26 = arith.constant 0 : index
    %74 = vector.load %arg23[%c0_25, %c0_26] : memref<16x768xf32, #tpu.memory_space<vmem>>, vector<16x768xf32>
    tpu.vector_store %arg23[%c0_25, %c0_26], %73 {strides = array<i32>} : memref<16x768xf32, #tpu.memory_space<vmem>>, vector<16x768xf32>,
    %c0_27 = arith.constant 0 : index
    %c0_28 = arith.constant 0 : index
    %75 = vector.load %arg6[%c0_27, %c0_28] : memref<256x768xbf16, #tpu.memory_space<vmem>>, vector<256x768xbf16>
    %c0_29 = arith.constant 0 : index
    %c0_30 = arith.constant 0 : index
    %76 = vector.load %arg7[%c0_29, %c0_30] : memref<1x256xf32, #tpu.memory_space<vmem>>, vector<1x256xf32>
    %cst_31 = arith.constant 0.000000e+00 : f32
    %77 = vector.broadcast %cst_31 : f32 to vector<8x256xf32>
    %c0_32 = arith.constant 0 : index
    %c0_33 = arith.constant 0 : index
    %78 = vector.load %arg23[%c0_32, %c0_33] : memref<16x768xf32, #tpu.memory_space<vmem>>, vector<8x768xf32>
    %79 = arith.truncf %77 : vector<8x256xf32> to vector<8x256xbf16>
    %cst_34 = arith.constant dense<0.000000e+00> : vector<8x768xf32>
    %80 = tpu.matmul %79, %75, %cst_34 {dimension_numbers = #tpu.dot_dimension_numbers<[1], [0], [0], [1], [0, 0, 1, 1], [], []>} : vector<8x256xbf16>, vector<256x768xbf16>, vector<8x768xf32> -> vector<8x768xf32>
    %81 = vector.extract_strided_slice %78 {offsets = [0, 0], sizes = [8, 256], strides = [1, 1]} : vector<8x768xf32> to vector<8x256xf32>
    %82 = vector.extract_strided_slice %80 {offsets = [0, 0], sizes = [8, 256], strides = [1, 1]} : vector<8x768xf32> to vector<8x256xf32>
    %83 = arith.addf %81, %82 : vector<8x256xf32>
    %84 = arith.negf %83 : vector<8x256xf32>
    %85 = math.exp %84 : vector<8x256xf32>
    %cst_35 = arith.constant 1.000000e+00 : f32
    %86 = vector.broadcast %cst_35 : f32 to vector<8x256xf32>
    %87 = arith.addf %86, %85 : vector<8x256xf32>
    %88 = arith.divf %86, %87 : vector<8x256xf32>
    %89 = vector.extract_strided_slice %78 {offsets = [0, 256], sizes = [8, 256], strides = [1, 1]} : vector<8x768xf32> to vector<8x256xf32>
    %90 = vector.extract_strided_slice %80 {offsets = [0, 256], sizes = [8, 256], strides = [1, 1]} : vector<8x768xf32> to vector<8x256xf32>
    %91 = arith.addf %89, %90 : vector<8x256xf32>
    %92 = arith.negf %91 : vector<8x256xf32>
    %93 = math.exp %92 : vector<8x256xf32>
    %cst_36 = arith.constant 1.000000e+00 : f32
    %94 = vector.broadcast %cst_36 : f32 to vector<8x256xf32>
    %95 = arith.addf %94, %93 : vector<8x256xf32>
    %96 = arith.divf %94, %95 : vector<8x256xf32>
    %97 = vector.extract_strided_slice %78 {offsets = [0, 512], sizes = [8, 256], strides = [1, 1]} : vector<8x768xf32> to vector<8x256xf32>
    %98 = vector.extract_strided_slice %80 {offsets = [0, 512], sizes = [8, 256], strides = [1, 1]} : vector<8x768xf32> to vector<8x256xf32>
    %99 = vector.broadcast %76 : vector<1x256xf32> to vector<8x256xf32>
    %100 = arith.addf %98, %99 : vector<8x256xf32>
    %101 = arith.mulf %88, %100 : vector<8x256xf32>
    %102 = arith.addf %97, %101 : vector<8x256xf32>
    %103 = math.tanh %102 : vector<8x256xf32>
    %cst_37 = arith.constant 1.000000e+00 : f32
    %104 = vector.broadcast %cst_37 : f32 to vector<8x256xf32>
    %105 = arith.subf %104, %96 : vector<8x256xf32>
    %106 = arith.mulf %105, %103 : vector<8x256xf32>
    %107 = arith.mulf %96, %77 : vector<8x256xf32>
    %108 = arith.addf %106, %107 : vector<8x256xf32>
    %c0_38 = arith.constant 0 : index
    %c0_39 = arith.constant 0 : index
    %109 = vector.load %arg20[%c0_38, %c0_39] : memref<16x256xf32, #tpu.memory_space<vmem>>, vector<8x256xf32>
    tpu.vector_store %arg20[%c0_38, %c0_39], %108 {strides = array<i32>} : memref<16x256xf32, #tpu.memory_space<vmem>>, vector<8x256xf32>,
    %c8_40 = arith.constant 8 : index
    %c0_41 = arith.constant 0 : index
    %110 = vector.load %arg23[%c8_40, %c0_41] : memref<16x768xf32, #tpu.memory_space<vmem>>, vector<8x768xf32>
    %111 = arith.truncf %108 : vector<8x256xf32> to vector<8x256xbf16>
    %cst_42 = arith.constant dense<0.000000e+00> : vector<8x768xf32>
    %112 = tpu.matmul %111, %75, %cst_42 {dimension_numbers = #tpu.dot_dimension_numbers<[1], [0], [0], [1], [0, 0, 1, 1], [], []>} : vector<8x256xbf16>, vector<256x768xbf16>, vector<8x768xf32> -> vector<8x768xf32>
    %113 = vector.extract_strided_slice %110 {offsets = [0, 0], sizes = [8, 256], strides = [1, 1]} : vector<8x768xf32> to vector<8x256xf32>
    %114 = vector.extract_strided_slice %112 {offsets = [0, 0], sizes = [8, 256], strides = [1, 1]} : vector<8x768xf32> to vector<8x256xf32>
    %115 = arith.addf %113, %114 : vector<8x256xf32>
    %116 = arith.negf %115 : vector<8x256xf32>
    %117 = math.exp %116 : vector<8x256xf32>
    %cst_43 = arith.constant 1.000000e+00 : f32
    %118 = vector.broadcast %cst_43 : f32 to vector<8x256xf32>
    %119 = arith.addf %118, %117 : vector<8x256xf32>
    %120 = arith.divf %118, %119 : vector<8x256xf32>
    %121 = vector.extract_strided_slice %110 {offsets = [0, 256], sizes = [8, 256], strides = [1, 1]} : vector<8x768xf32> to vector<8x256xf32>
    %122 = vector.extract_strided_slice %112 {offsets = [0, 256], sizes = [8, 256], strides = [1, 1]} : vector<8x768xf32> to vector<8x256xf32>
    %123 = arith.addf %121, %122 : vector<8x256xf32>
    %124 = arith.negf %123 : vector<8x256xf32>
    %125 = math.exp %124 : vector<8x256xf32>
    %cst_44 = arith.constant 1.000000e+00 : f32
    %126 = vector.broadcast %cst_44 : f32 to vector<8x256xf32>
    %127 = arith.addf %126, %125 : vector<8x256xf32>
    %128 = arith.divf %126, %127 : vector<8x256xf32>
    %129 = vector.extract_strided_slice %110 {offsets = [0, 512], sizes = [8, 256], strides = [1, 1]} : vector<8x768xf32> to vector<8x256xf32>
    %130 = vector.extract_strided_slice %112 {offsets = [0, 512], sizes = [8, 256], strides = [1, 1]} : vector<8x768xf32> to vector<8x256xf32>
    %131 = vector.broadcast %76 : vector<1x256xf32> to vector<8x256xf32>
    %132 = arith.addf %130, %131 : vector<8x256xf32>
    %133 = arith.mulf %120, %132 : vector<8x256xf32>
    %134 = arith.addf %129, %133 : vector<8x256xf32>
    %135 = math.tanh %134 : vector<8x256xf32>
    %cst_45 = arith.constant 1.000000e+00 : f32
    %136 = vector.broadcast %cst_45 : f32 to vector<8x256xf32>
    %137 = arith.subf %136, %128 : vector<8x256xf32>
    %138 = arith.mulf %137, %135 : vector<8x256xf32>
    %139 = arith.mulf %128, %108 : vector<8x256xf32>
    %140 = arith.addf %138, %139 : vector<8x256xf32>
    %c8_46 = arith.constant 8 : index
    %c0_47 = arith.constant 0 : index
    %141 = vector.load %arg20[%c8_46, %c0_47] : memref<16x256xf32, #tpu.memory_space<vmem>>, vector<8x256xf32>
    tpu.vector_store %arg20[%c8_46, %c0_47], %140 {strides = array<i32>} : memref<16x256xf32, #tpu.memory_space<vmem>>, vector<8x256xf32>,
    %c0_48 = arith.constant 0 : index
    %c0_49 = arith.constant 0 : index
    %142 = vector.load %arg20[%c0_48, %c0_49] : memref<16x256xf32, #tpu.memory_space<vmem>>, vector<16x256xf32>
    %143 = arith.truncf %142 : vector<16x256xf32> to vector<16x256xbf16>
    %c0_50 = arith.constant 0 : index
    %c0_51 = arith.constant 0 : index
    %144 = vector.load %arg8[%c0_50, %c0_51] : memref<256x384xbf16, #tpu.memory_space<vmem>>, vector<256x384xbf16>
    %cst_52 = arith.constant dense<0.000000e+00> : vector<16x384xf32>
    %145 = tpu.matmul %143, %144, %cst_52 {dimension_numbers = #tpu.dot_dimension_numbers<[1], [0], [0], [1], [0, 0, 1, 1], [], []>} : vector<16x256xbf16>, vector<256x384xbf16>, vector<16x384xf32> -> vector<16x384xf32>
    %c0_53 = arith.constant 0 : index
    %c0_54 = arith.constant 0 : index
    %146 = vector.load %arg9[%c0_53, %c0_54] : memref<1x384xf32, #tpu.memory_space<vmem>>, vector<1x384xf32>
    %147 = vector.broadcast %146 : vector<1x384xf32> to vector<16x384xf32>
    %148 = arith.addf %145, %147 : vector<16x384xf32>
    %c0_55 = arith.constant 0 : index
    %c0_56 = arith.constant 0 : index
    %149 = vector.load %arg24[%c0_55, %c0_56] : memref<16x384xf32, #tpu.memory_space<vmem>>, vector<16x384xf32>
    tpu.vector_store %arg24[%c0_55, %c0_56], %148 {strides = array<i32>} : memref<16x384xf32, #tpu.memory_space<vmem>>, vector<16x384xf32>,
    %c0_57 = arith.constant 0 : index
    %c0_58 = arith.constant 0 : index
    %150 = vector.load %arg10[%c0_57, %c0_58] : memref<128x384xbf16, #tpu.memory_space<vmem>>, vector<128x384xbf16>
    %c0_59 = arith.constant 0 : index
    %c0_60 = arith.constant 0 : index
    %151 = vector.load %arg11[%c0_59, %c0_60] : memref<1x128xf32, #tpu.memory_space<vmem>>, vector<1x128xf32>
    %cst_61 = arith.constant 0.000000e+00 : f32
    %152 = vector.broadcast %cst_61 : f32 to vector<8x128xf32>
    %c0_62 = arith.constant 0 : index
    %c0_63 = arith.constant 0 : index
    %153 = vector.load %arg24[%c0_62, %c0_63] : memref<16x384xf32, #tpu.memory_space<vmem>>, vector<8x384xf32>
    %154 = arith.truncf %152 : vector<8x128xf32> to vector<8x128xbf16>
    %cst_64 = arith.constant dense<0.000000e+00> : vector<8x384xf32>
    %155 = tpu.matmul %154, %150, %cst_64 {dimension_numbers = #tpu.dot_dimension_numbers<[1], [0], [0], [1], [0, 0, 1, 1], [], []>} : vector<8x128xbf16>, vector<128x384xbf16>, vector<8x384xf32> -> vector<8x384xf32>
    %156 = vector.extract_strided_slice %153 {offsets = [0, 0], sizes = [8, 128], strides = [1, 1]} : vector<8x384xf32> to vector<8x128xf32>
    %157 = vector.extract_strided_slice %155 {offsets = [0, 0], sizes = [8, 128], strides = [1, 1]} : vector<8x384xf32> to vector<8x128xf32>
    %158 = arith.addf %156, %157 : vector<8x128xf32>
    %159 = arith.negf %158 : vector<8x128xf32>
    %160 = math.exp %159 : vector<8x128xf32>
    %cst_65 = arith.constant 1.000000e+00 : f32
    %161 = vector.broadcast %cst_65 : f32 to vector<8x128xf32>
    %162 = arith.addf %161, %160 : vector<8x128xf32>
    %163 = arith.divf %161, %162 : vector<8x128xf32>
    %164 = vector.extract_strided_slice %153 {offsets = [0, 128], sizes = [8, 128], strides = [1, 1]} : vector<8x384xf32> to vector<8x128xf32>
    %165 = vector.extract_strided_slice %155 {offsets = [0, 128], sizes = [8, 128], strides = [1, 1]} : vector<8x384xf32> to vector<8x128xf32>
    %166 = arith.addf %164, %165 : vector<8x128xf32>
    %167 = arith.negf %166 : vector<8x128xf32>
    %168 = math.exp %167 : vector<8x128xf32>
    %cst_66 = arith.constant 1.000000e+00 : f32
    %169 = vector.broadcast %cst_66 : f32 to vector<8x128xf32>
    %170 = arith.addf %169, %168 : vector<8x128xf32>
    %171 = arith.divf %169, %170 : vector<8x128xf32>
    %172 = vector.extract_strided_slice %153 {offsets = [0, 256], sizes = [8, 128], strides = [1, 1]} : vector<8x384xf32> to vector<8x128xf32>
    %173 = vector.extract_strided_slice %155 {offsets = [0, 256], sizes = [8, 128], strides = [1, 1]} : vector<8x384xf32> to vector<8x128xf32>
    %174 = vector.broadcast %151 : vector<1x128xf32> to vector<8x128xf32>
    %175 = arith.addf %173, %174 : vector<8x128xf32>
    %176 = arith.mulf %163, %175 : vector<8x128xf32>
    %177 = arith.addf %172, %176 : vector<8x128xf32>
    %178 = math.tanh %177 : vector<8x128xf32>
    %cst_67 = arith.constant 1.000000e+00 : f32
    %179 = vector.broadcast %cst_67 : f32 to vector<8x128xf32>
    %180 = arith.subf %179, %171 : vector<8x128xf32>
    %181 = arith.mulf %180, %178 : vector<8x128xf32>
    %182 = arith.mulf %171, %152 : vector<8x128xf32>
    %183 = arith.addf %181, %182 : vector<8x128xf32>
    %c0_68 = arith.constant 0 : index
    %c0_69 = arith.constant 0 : index
    %184 = vector.load %arg21[%c0_68, %c0_69] : memref<16x128xf32, #tpu.memory_space<vmem>>, vector<8x128xf32>
    tpu.vector_store %arg21[%c0_68, %c0_69], %183 {strides = array<i32>} : memref<16x128xf32, #tpu.memory_space<vmem>>, vector<8x128xf32>,
    %c8_70 = arith.constant 8 : index
    %c0_71 = arith.constant 0 : index
    %185 = vector.load %arg24[%c8_70, %c0_71] : memref<16x384xf32, #tpu.memory_space<vmem>>, vector<8x384xf32>
    %186 = arith.truncf %183 : vector<8x128xf32> to vector<8x128xbf16>
    %cst_72 = arith.constant dense<0.000000e+00> : vector<8x384xf32>
    %187 = tpu.matmul %186, %150, %cst_72 {dimension_numbers = #tpu.dot_dimension_numbers<[1], [0], [0], [1], [0, 0, 1, 1], [], []>} : vector<8x128xbf16>, vector<128x384xbf16>, vector<8x384xf32> -> vector<8x384xf32>
    %188 = vector.extract_strided_slice %185 {offsets = [0, 0], sizes = [8, 128], strides = [1, 1]} : vector<8x384xf32> to vector<8x128xf32>
    %189 = vector.extract_strided_slice %187 {offsets = [0, 0], sizes = [8, 128], strides = [1, 1]} : vector<8x384xf32> to vector<8x128xf32>
    %190 = arith.addf %188, %189 : vector<8x128xf32>
    %191 = arith.negf %190 : vector<8x128xf32>
    %192 = math.exp %191 : vector<8x128xf32>
    %cst_73 = arith.constant 1.000000e+00 : f32
    %193 = vector.broadcast %cst_73 : f32 to vector<8x128xf32>
    %194 = arith.addf %193, %192 : vector<8x128xf32>
    %195 = arith.divf %193, %194 : vector<8x128xf32>
    %196 = vector.extract_strided_slice %185 {offsets = [0, 128], sizes = [8, 128], strides = [1, 1]} : vector<8x384xf32> to vector<8x128xf32>
    %197 = vector.extract_strided_slice %187 {offsets = [0, 128], sizes = [8, 128], strides = [1, 1]} : vector<8x384xf32> to vector<8x128xf32>
    %198 = arith.addf %196, %197 : vector<8x128xf32>
    %199 = arith.negf %198 : vector<8x128xf32>
    %200 = math.exp %199 : vector<8x128xf32>
    %cst_74 = arith.constant 1.000000e+00 : f32
    %201 = vector.broadcast %cst_74 : f32 to vector<8x128xf32>
    %202 = arith.addf %201, %200 : vector<8x128xf32>
    %203 = arith.divf %201, %202 : vector<8x128xf32>
    %204 = vector.extract_strided_slice %185 {offsets = [0, 256], sizes = [8, 128], strides = [1, 1]} : vector<8x384xf32> to vector<8x128xf32>
    %205 = vector.extract_strided_slice %187 {offsets = [0, 256], sizes = [8, 128], strides = [1, 1]} : vector<8x384xf32> to vector<8x128xf32>
    %206 = vector.broadcast %151 : vector<1x128xf32> to vector<8x128xf32>
    %207 = arith.addf %205, %206 : vector<8x128xf32>
    %208 = arith.mulf %195, %207 : vector<8x128xf32>
    %209 = arith.addf %204, %208 : vector<8x128xf32>
    %210 = math.tanh %209 : vector<8x128xf32>
    %cst_75 = arith.constant 1.000000e+00 : f32
    %211 = vector.broadcast %cst_75 : f32 to vector<8x128xf32>
    %212 = arith.subf %211, %203 : vector<8x128xf32>
    %213 = arith.mulf %212, %210 : vector<8x128xf32>
    %214 = arith.mulf %203, %183 : vector<8x128xf32>
    %215 = arith.addf %213, %214 : vector<8x128xf32>
    %c8_76 = arith.constant 8 : index
    %c0_77 = arith.constant 0 : index
    %216 = vector.load %arg21[%c8_76, %c0_77] : memref<16x128xf32, #tpu.memory_space<vmem>>, vector<8x128xf32>
    tpu.vector_store %arg21[%c8_76, %c0_77], %215 {strides = array<i32>} : memref<16x128xf32, #tpu.memory_space<vmem>>, vector<8x128xf32>,
    %c0_78 = arith.constant 0 : index
    %c0_79 = arith.constant 0 : index
    %217 = vector.load %arg21[%c0_78, %c0_79] : memref<16x128xf32, #tpu.memory_space<vmem>>, vector<16x128xf32>
    %218 = arith.truncf %217 : vector<16x128xf32> to vector<16x128xbf16>
    %c0_80 = arith.constant 0 : index
    %c0_81 = arith.constant 0 : index
    %219 = vector.load %arg12[%c0_80, %c0_81] : memref<128x384xbf16, #tpu.memory_space<vmem>>, vector<128x384xbf16>
    %cst_82 = arith.constant dense<0.000000e+00> : vector<16x384xf32>
    %220 = tpu.matmul %218, %219, %cst_82 {dimension_numbers = #tpu.dot_dimension_numbers<[1], [0], [0], [1], [0, 0, 1, 1], [], []>} : vector<16x128xbf16>, vector<128x384xbf16>, vector<16x384xf32> -> vector<16x384xf32>
    %c0_83 = arith.constant 0 : index
    %c0_84 = arith.constant 0 : index
    %221 = vector.load %arg13[%c0_83, %c0_84] : memref<1x384xf32, #tpu.memory_space<vmem>>, vector<1x384xf32>
    %222 = vector.broadcast %221 : vector<1x384xf32> to vector<16x384xf32>
    %223 = arith.addf %220, %222 : vector<16x384xf32>
    %c0_85 = arith.constant 0 : index
    %c0_86 = arith.constant 0 : index
    %224 = vector.load %arg25[%c0_85, %c0_86] : memref<16x384xf32, #tpu.memory_space<vmem>>, vector<16x384xf32>
    tpu.vector_store %arg25[%c0_85, %c0_86], %223 {strides = array<i32>} : memref<16x384xf32, #tpu.memory_space<vmem>>, vector<16x384xf32>,
    %c0_87 = arith.constant 0 : index
    %c0_88 = arith.constant 0 : index
    %225 = vector.load %arg14[%c0_87, %c0_88] : memref<128x384xbf16, #tpu.memory_space<vmem>>, vector<128x384xbf16>
    %c0_89 = arith.constant 0 : index
    %c0_90 = arith.constant 0 : index
    %226 = vector.load %arg15[%c0_89, %c0_90] : memref<1x128xf32, #tpu.memory_space<vmem>>, vector<1x128xf32>
    %cst_91 = arith.constant 0.000000e+00 : f32
    %227 = vector.broadcast %cst_91 : f32 to vector<8x128xf32>
    %c0_92 = arith.constant 0 : index
    %c0_93 = arith.constant 0 : index
    %228 = vector.load %arg25[%c0_92, %c0_93] : memref<16x384xf32, #tpu.memory_space<vmem>>, vector<8x384xf32>
    %229 = arith.truncf %227 : vector<8x128xf32> to vector<8x128xbf16>
    %cst_94 = arith.constant dense<0.000000e+00> : vector<8x384xf32>
    %230 = tpu.matmul %229, %225, %cst_94 {dimension_numbers = #tpu.dot_dimension_numbers<[1], [0], [0], [1], [0, 0, 1, 1], [], []>} : vector<8x128xbf16>, vector<128x384xbf16>, vector<8x384xf32> -> vector<8x384xf32>
    %231 = vector.extract_strided_slice %228 {offsets = [0, 0], sizes = [8, 128], strides = [1, 1]} : vector<8x384xf32> to vector<8x128xf32>
    %232 = vector.extract_strided_slice %230 {offsets = [0, 0], sizes = [8, 128], strides = [1, 1]} : vector<8x384xf32> to vector<8x128xf32>
    %233 = arith.addf %231, %232 : vector<8x128xf32>
    %234 = arith.negf %233 : vector<8x128xf32>
    %235 = math.exp %234 : vector<8x128xf32>
    %cst_95 = arith.constant 1.000000e+00 : f32
    %236 = vector.broadcast %cst_95 : f32 to vector<8x128xf32>
    %237 = arith.addf %236, %235 : vector<8x128xf32>
    %238 = arith.divf %236, %237 : vector<8x128xf32>
    %239 = vector.extract_strided_slice %228 {offsets = [0, 128], sizes = [8, 128], strides = [1, 1]} : vector<8x384xf32> to vector<8x128xf32>
    %240 = vector.extract_strided_slice %230 {offsets = [0, 128], sizes = [8, 128], strides = [1, 1]} : vector<8x384xf32> to vector<8x128xf32>
    %241 = arith.addf %239, %240 : vector<8x128xf32>
    %242 = arith.negf %241 : vector<8x128xf32>
    %243 = math.exp %242 : vector<8x128xf32>
    %cst_96 = arith.constant 1.000000e+00 : f32
    %244 = vector.broadcast %cst_96 : f32 to vector<8x128xf32>
    %245 = arith.addf %244, %243 : vector<8x128xf32>
    %246 = arith.divf %244, %245 : vector<8x128xf32>
    %247 = vector.extract_strided_slice %228 {offsets = [0, 256], sizes = [8, 128], strides = [1, 1]} : vector<8x384xf32> to vector<8x128xf32>
    %248 = vector.extract_strided_slice %230 {offsets = [0, 256], sizes = [8, 128], strides = [1, 1]} : vector<8x384xf32> to vector<8x128xf32>
    %249 = vector.broadcast %226 : vector<1x128xf32> to vector<8x128xf32>
    %250 = arith.addf %248, %249 : vector<8x128xf32>
    %251 = arith.mulf %238, %250 : vector<8x128xf32>
    %252 = arith.addf %247, %251 : vector<8x128xf32>
    %253 = math.tanh %252 : vector<8x128xf32>
    %cst_97 = arith.constant 1.000000e+00 : f32
    %254 = vector.broadcast %cst_97 : f32 to vector<8x128xf32>
    %255 = arith.subf %254, %246 : vector<8x128xf32>
    %256 = arith.mulf %255, %253 : vector<8x128xf32>
    %257 = arith.mulf %246, %227 : vector<8x128xf32>
    %258 = arith.addf %256, %257 : vector<8x128xf32>
    %c0_98 = arith.constant 0 : index
    %c0_99 = arith.constant 0 : index
    %259 = vector.load %arg22[%c0_98, %c0_99] : memref<16x128xf32, #tpu.memory_space<vmem>>, vector<8x128xf32>
    tpu.vector_store %arg22[%c0_98, %c0_99], %258 {strides = array<i32>} : memref<16x128xf32, #tpu.memory_space<vmem>>, vector<8x128xf32>,
    %c8_100 = arith.constant 8 : index
    %c0_101 = arith.constant 0 : index
    %260 = vector.load %arg25[%c8_100, %c0_101] : memref<16x384xf32, #tpu.memory_space<vmem>>, vector<8x384xf32>
    %261 = arith.truncf %258 : vector<8x128xf32> to vector<8x128xbf16>
    %cst_102 = arith.constant dense<0.000000e+00> : vector<8x384xf32>
    %262 = tpu.matmul %261, %225, %cst_102 {dimension_numbers = #tpu.dot_dimension_numbers<[1], [0], [0], [1], [0, 0, 1, 1], [], []>} : vector<8x128xbf16>, vector<128x384xbf16>, vector<8x384xf32> -> vector<8x384xf32>
    %263 = vector.extract_strided_slice %260 {offsets = [0, 0], sizes = [8, 128], strides = [1, 1]} : vector<8x384xf32> to vector<8x128xf32>
    %264 = vector.extract_strided_slice %262 {offsets = [0, 0], sizes = [8, 128], strides = [1, 1]} : vector<8x384xf32> to vector<8x128xf32>
    %265 = arith.addf %263, %264 : vector<8x128xf32>
    %266 = arith.negf %265 : vector<8x128xf32>
    %267 = math.exp %266 : vector<8x128xf32>
    %cst_103 = arith.constant 1.000000e+00 : f32
    %268 = vector.broadcast %cst_103 : f32 to vector<8x128xf32>
    %269 = arith.addf %268, %267 : vector<8x128xf32>
    %270 = arith.divf %268, %269 : vector<8x128xf32>
    %271 = vector.extract_strided_slice %260 {offsets = [0, 128], sizes = [8, 128], strides = [1, 1]} : vector<8x384xf32> to vector<8x128xf32>
    %272 = vector.extract_strided_slice %262 {offsets = [0, 128], sizes = [8, 128], strides = [1, 1]} : vector<8x384xf32> to vector<8x128xf32>
    %273 = arith.addf %271, %272 : vector<8x128xf32>
    %274 = arith.negf %273 : vector<8x128xf32>
    %275 = math.exp %274 : vector<8x128xf32>
    %cst_104 = arith.constant 1.000000e+00 : f32
    %276 = vector.broadcast %cst_104 : f32 to vector<8x128xf32>
    %277 = arith.addf %276, %275 : vector<8x128xf32>
    %278 = arith.divf %276, %277 : vector<8x128xf32>
    %279 = vector.extract_strided_slice %260 {offsets = [0, 256], sizes = [8, 128], strides = [1, 1]} : vector<8x384xf32> to vector<8x128xf32>
    %280 = vector.extract_strided_slice %262 {offsets = [0, 256], sizes = [8, 128], strides = [1, 1]} : vector<8x384xf32> to vector<8x128xf32>
    %281 = vector.broadcast %226 : vector<1x128xf32> to vector<8x128xf32>
    %282 = arith.addf %280, %281 : vector<8x128xf32>
    %283 = arith.mulf %270, %282 : vector<8x128xf32>
    %284 = arith.addf %279, %283 : vector<8x128xf32>
    %285 = math.tanh %284 : vector<8x128xf32>
    %cst_105 = arith.constant 1.000000e+00 : f32
    %286 = vector.broadcast %cst_105 : f32 to vector<8x128xf32>
    %287 = arith.subf %286, %278 : vector<8x128xf32>
    %288 = arith.mulf %287, %285 : vector<8x128xf32>
    %289 = arith.mulf %278, %258 : vector<8x128xf32>
    %290 = arith.addf %288, %289 : vector<8x128xf32>
    %c8_106 = arith.constant 8 : index
    %c0_107 = arith.constant 0 : index
    %291 = vector.load %arg22[%c8_106, %c0_107] : memref<16x128xf32, #tpu.memory_space<vmem>>, vector<8x128xf32>
    tpu.vector_store %arg22[%c8_106, %c0_107], %290 {strides = array<i32>} : memref<16x128xf32, #tpu.memory_space<vmem>>, vector<8x128xf32>,
    %c0_108 = arith.constant 0 : index
    %c0_109 = arith.constant 0 : index
    %292 = vector.load %arg22[%c0_108, %c0_109] : memref<16x128xf32, #tpu.memory_space<vmem>>, vector<8x128xf32>
    %293 = arith.truncf %292 : vector<8x128xf32> to vector<8x128xbf16>
    %c8_110 = arith.constant 8 : index
    %c0_111 = arith.constant 0 : index
    %294 = vector.load %arg22[%c8_110, %c0_111] : memref<16x128xf32, #tpu.memory_space<vmem>>, vector<8x128xf32>
    %295 = arith.truncf %294 : vector<8x128xf32> to vector<8x128xbf16>
    %c0_112 = arith.constant 0 : index
    %c0_113 = arith.constant 0 : index
    %c0_114 = arith.constant 0 : index
    %296 = vector.load %arg16[%c0_112, %c0_113, %c0_114] : memref<2x128x8xbf16, #tpu.memory_space<vmem>>, vector<1x128x8xbf16>
    %297 = vector.shape_cast %296 : vector<1x128x8xbf16> to vector<128x8xbf16>
    %cst_115 = arith.constant dense<0.000000e+00> : vector<8x8xf32>
    %298 = tpu.matmul %293, %297, %cst_115 {dimension_numbers = #tpu.dot_dimension_numbers<[1], [0], [0], [1], [0, 0, 1, 1], [], []>} : vector<8x128xbf16>, vector<128x8xbf16>, vector<8x8xf32> -> vector<8x8xf32>
    %c1 = arith.constant 1 : index
    %c0_116 = arith.constant 0 : index
    %c0_117 = arith.constant 0 : index
    %299 = vector.load %arg16[%c1, %c0_116, %c0_117] : memref<2x128x8xbf16, #tpu.memory_space<vmem>>, vector<1x128x8xbf16>
    %300 = vector.shape_cast %299 : vector<1x128x8xbf16> to vector<128x8xbf16>
    %cst_118 = arith.constant dense<0.000000e+00> : vector<8x8xf32>
    %301 = tpu.matmul %295, %300, %cst_118 {dimension_numbers = #tpu.dot_dimension_numbers<[1], [0], [0], [1], [0, 0, 1, 1], [], []>} : vector<8x128xbf16>, vector<128x8xbf16>, vector<8x8xf32> -> vector<8x8xf32>
    %302 = arith.addf %298, %301 : vector<8x8xf32>
    %c0_119 = arith.constant 0 : index
    %c0_120 = arith.constant 0 : index
    %303 = vector.load %arg17[%c0_119, %c0_120] : memref<1x8xf32, #tpu.memory_space<vmem>>, vector<1x8xf32>
    %304 = vector.broadcast %303 : vector<1x8xf32> to vector<8x8xf32>
    %305 = arith.addf %302, %304 : vector<8x8xf32>
    %c0_121 = arith.constant 0 : index
    %c0_122 = arith.constant 0 : index
    %306 = vector.load %arg18[%c0_121, %c0_122] : memref<8x8xf32, #tpu.memory_space<vmem>>, vector<8x8xf32>
    tpu.vector_store %arg18[%c0_121, %c0_122], %305 {strides = array<i32>} : memref<8x8xf32, #tpu.memory_space<vmem>>, vector<8x8xf32>,
    return
  }
  func.func @transform_0(%arg0: i32) -> (i32, i32) {
    %c0_i32 = arith.constant 0 : i32
    %c0_i32_0 = arith.constant 0 : i32
    %c0_i32_1 = arith.constant 0 : i32
    return %c0_i32, %c0_i32_0 : i32, i32
  }
  func.func @transform_1(%arg0: i32) -> (i32, i32) {
    %c0_i32 = arith.constant 0 : i32
    %c0_i32_0 = arith.constant 0 : i32
    %c0_i32_1 = arith.constant 0 : i32
    return %c0_i32, %c0_i32_0 : i32, i32
  }
  func.func @transform_2(%arg0: i32) -> (i32, i32) {
    %c0_i32 = arith.constant 0 : i32
    %c0_i32_0 = arith.constant 0 : i32
    %c0_i32_1 = arith.constant 0 : i32
    return %c0_i32, %c0_i32_0 : i32, i32
  }
  func.func @transform_3(%arg0: i32) -> (i32, i32) {
    %c0_i32 = arith.constant 0 : i32
    %c0_i32_0 = arith.constant 0 : i32
    %c0_i32_1 = arith.constant 0 : i32
    return %c0_i32, %c0_i32_0 : i32, i32
  }
  func.func @transform_4(%arg0: i32) -> (i32, i32) {
    %c0_i32 = arith.constant 0 : i32
    %c0_i32_0 = arith.constant 0 : i32
    %c0_i32_1 = arith.constant 0 : i32
    return %c0_i32, %c0_i32_0 : i32, i32
  }
  func.func @transform_5(%arg0: i32) -> (i32, i32) {
    %c0_i32 = arith.constant 0 : i32
    %c0_i32_0 = arith.constant 0 : i32
    %c0_i32_1 = arith.constant 0 : i32
    return %c0_i32, %c0_i32_0 : i32, i32
  }
  func.func @transform_6(%arg0: i32) -> (i32, i32) {
    %c0_i32 = arith.constant 0 : i32
    %c0_i32_0 = arith.constant 0 : i32
    %c0_i32_1 = arith.constant 0 : i32
    return %c0_i32, %c0_i32_0 : i32, i32
  }
  func.func @transform_7(%arg0: i32) -> (i32, i32) {
    %c0_i32 = arith.constant 0 : i32
    %c0_i32_0 = arith.constant 0 : i32
    %c0_i32_1 = arith.constant 0 : i32
    return %c0_i32, %c0_i32_0 : i32, i32
  }
  func.func @transform_8(%arg0: i32) -> (i32, i32) {
    %c0_i32 = arith.constant 0 : i32
    %c0_i32_0 = arith.constant 0 : i32
    %c0_i32_1 = arith.constant 0 : i32
    return %c0_i32, %c0_i32_0 : i32, i32
  }
  func.func @transform_9(%arg0: i32) -> (i32, i32) {
    %c0_i32 = arith.constant 0 : i32
    %c0_i32_0 = arith.constant 0 : i32
    %c0_i32_1 = arith.constant 0 : i32
    return %c0_i32, %c0_i32_0 : i32, i32
  }
  func.func @transform_10(%arg0: i32) -> (i32, i32) {
    %c0_i32 = arith.constant 0 : i32
    %c0_i32_0 = arith.constant 0 : i32
    %c0_i32_1 = arith.constant 0 : i32
    return %c0_i32, %c0_i32_0 : i32, i32
  }
  func.func @transform_11(%arg0: i32) -> (i32, i32) {
    %c0_i32 = arith.constant 0 : i32
    %c0_i32_0 = arith.constant 0 : i32
    %c0_i32_1 = arith.constant 0 : i32
    return %c0_i32, %c0_i32_0 : i32, i32
  }
  func.func @transform_12(%arg0: i32) -> (i32, i32) {
    %c0_i32 = arith.constant 0 : i32
    %c0_i32_0 = arith.constant 0 : i32
    %c0_i32_1 = arith.constant 0 : i32
    return %c0_i32, %c0_i32_0 : i32, i32
  }
  func.func @transform_13(%arg0: i32) -> (i32, i32) {
    %c0_i32 = arith.constant 0 : i32
    %c0_i32_0 = arith.constant 0 : i32
    %c0_i32_1 = arith.constant 0 : i32
    return %c0_i32, %c0_i32_0 : i32, i32
  }
  func.func @transform_14(%arg0: i32) -> (i32, i32) {
    %c0_i32 = arith.constant 0 : i32
    %c0_i32_0 = arith.constant 0 : i32
    %c0_i32_1 = arith.constant 0 : i32
    return %c0_i32, %c0_i32_0 : i32, i32
  }
  func.func @transform_15(%arg0: i32) -> (i32, i32, i32) {
    %c0_i32 = arith.constant 0 : i32
    %c0_i32_0 = arith.constant 0 : i32
    %c0_i32_1 = arith.constant 0 : i32
    %c0_i32_2 = arith.constant 0 : i32
    return %c0_i32, %c0_i32_0, %c0_i32_1 : i32, i32, i32
  }
  func.func @transform_16(%arg0: i32) -> (i32, i32) {
    %c0_i32 = arith.constant 0 : i32
    %c0_i32_0 = arith.constant 0 : i32
    %c0_i32_1 = arith.constant 0 : i32
    return %c0_i32, %c0_i32_0 : i32, i32
  }
  func.func @transform_17(%arg0: i32) -> (i32, i32) {
    %c0_i32 = arith.constant 0 : i32
    %c0_i32_0 = arith.constant 0 : i32
    %c0_i32_1 = arith.constant 0 : i32
    return %c0_i32, %c0_i32_0 : i32, i32
  }
}

</mosaic_0001>

<llo_original>
// kernel: dqn_forward.1
$region0: #{dqn_forward.1}
  #allocation0 [shape = 'u32[]', space=smem, size = 0x4, offset = 0x4, fixed_abs, tag = 'smem constant byte address 0x4 - core index']
  #allocation1 [shape = 'u32[144,128]{1,0:T(1,128)}', space=vmem, size = 0x12000, scoped, tag = 'internal scratch']
  #allocation2 [shape = 'f32[16,512]{1,0:T(8,128)}', space=vmem, size = 0x8000, scoped, tag = 'scratch operand']
  #allocation3 [shape = 'f32[16,256]{1,0:T(8,128)}', space=vmem, size = 0x4000, scoped, tag = 'scratch operand']
  #allocation4 [shape = 'f32[16,128]{1,0:T(8,128)}', space=vmem, size = 0x2000, scoped, tag = 'scratch operand']
  #allocation5 [shape = 'f32[16,128]{1,0:T(8,128)}', space=vmem, size = 0x2000, scoped, tag = 'scratch operand']
  #allocation6 [shape = 'f32[16,768]{1,0:T(8,128)}', space=vmem, size = 0xc000, scoped, tag = 'scratch operand']
  #allocation7 [shape = 'f32[16,384]{1,0:T(8,128)}', space=vmem, size = 0x6000, scoped, tag = 'scratch operand']
  #allocation8 [shape = 'f32[16,384]{1,0:T(8,128)}', space=vmem, size = 0x6000, scoped, tag = 'scratch operand']
  %s0 = inlined_call_operand.vmem [shape: f32[16,1536], index: 0, kind: input, shape index: {}]
  %s1 = inlined_call_operand.vmem [shape: bf16[512,1536], index: 1, kind: input, shape index: {}]
  %s2 = inlined_call_operand.vmem [shape: f32[1,512], index: 2, kind: input, shape index: {}]
  %s3 = inlined_call_operand.hbm [shape: bf16[512,768], index: 3, kind: input, shape index: {}]
  %s4 = inlined_call_operand.vmem [shape: f32[1,768], index: 4, kind: input, shape index: {}]
  %s5 = inlined_call_operand.hbm [shape: bf16[256,768], index: 5, kind: input, shape index: {}]
  %s6 = inlined_call_operand.vmem [shape: f32[1,256], index: 6, kind: input, shape index: {}]
  %s7 = inlined_call_operand.vmem [shape: bf16[256,384], index: 7, kind: input, shape index: {}]
  %s8 = inlined_call_operand.vmem [shape: f32[1,384], index: 8, kind: input, shape index: {}]
  %s9 = inlined_call_operand.hbm [shape: bf16[128,384], index: 9, kind: input, shape index: {}]
  %s10 = inlined_call_operand.vmem [shape: f32[1,128], index: 10, kind: input, shape index: {}]
  %s11 = inlined_call_operand.hbm [shape: bf16[128,384], index: 11, kind: input, shape index: {}]
  %s12 = inlined_call_operand.vmem [shape: f32[1,384], index: 12, kind: input, shape index: {}]
  %s13 = inlined_call_operand.hbm [shape: bf16[128,384], index: 13, kind: input, shape index: {}]
  %s14 = inlined_call_operand.vmem [shape: f32[1,128], index: 14, kind: input, shape index: {}]
  %s15 = inlined_call_operand.vmem [shape: bf16[2,128,8], index: 15, kind: input, shape index: {}]
  %s16 = inlined_call_operand.vmem [shape: f32[1,8], index: 16, kind: input, shape index: {}]
  %s17 = inlined_call_operand.vmem [shape: f32[8,8], index: 17, kind: output, shape index: {}]
  %s18 = sld [smem:[#allocation0]]
  $region98: #{dqn_forward.1} parent=0
    _
  %s20 = ssub.s32 1, %s18
  %s21 = scalar_select 0, %s20, %s18
  $region1: #{dqn_forward.1} parent=0
    #allocation9 [shape = 'u8[786432]{0}', space=vmem, size = 0xc0000, scoped, tag = 'input window, operand 3, single buffered']
    #allocation10 [shape = 's32[1]{0}', space=sflag, size = 0x4, scoped, tag = 'scoped memory for dqn_forward.1']
    #allocation11 [shape = 'u8[393216]{0}', space=vmem, size = 0x60000, scoped, tag = 'input window, operand 5, single buffered']
    #allocation12 [shape = 's32[1]{0}', space=sflag, size = 0x4, scoped, tag = 'scoped memory for dqn_forward.1']
    #allocation13 [shape = 'u8[98304]{0}', space=vmem, size = 0x18000, scoped, tag = 'input window, operand 9, single buffered']
    #allocation14 [shape = 'u8[98304]{0}', space=vmem, size = 0x18000, scoped, tag = 'input window, operand 11, single buffered']
    #allocation15 [shape = 's32[1]{0}', space=sflag, size = 0x4, scoped, tag = 'scoped memory for dqn_forward.1']
    #allocation16 [shape = 'u8[98304]{0}', space=vmem, size = 0x18000, scoped, tag = 'input window, operand 13, single buffered']
    %22 = vsyncpa [#allocation10], 0
    %23 = vsyncpa [#allocation12], 0
    %24 = vsyncpa [#allocation15], 0
    // Predicated region
    $region2: #{dqn_forward.1} parent=1 // pred_check
      _
    $region3: #{dqn_forward.1} parent=1 // pred_check_branch
      %26 = sbr.rel (0) target = $region5
    $region4: #{dqn_forward.1} parent=1 // pred_region
      _
    $region5: #{dqn_forward.1} parent=1 // pred_fallthru
      _
    // Predicated region
    $region6: #{dqn_forward.1} parent=1 // pred_check
      _
    $region7: #{dqn_forward.1} parent=1 // pred_check_branch
      %28 = sbr.rel (0) target = $region9
    $region8: #{dqn_forward.1} parent=1 // pred_region
      _
    $region9: #{dqn_forward.1} parent=1 // pred_fallthru
      _
    // Predicated region
    $region10: #{dqn_forward.1} parent=1 // pred_check
      _
    $region11: #{dqn_forward.1} parent=1 // pred_check_branch
      %30 = sbr.rel (0) target = $region13
    $region12: #{dqn_forward.1} parent=1 // pred_region
      _
    $region13: #{dqn_forward.1} parent=1 // pred_fallthru
      _
    // Predicated region
    $region14: #{dqn_forward.1} parent=1 // pred_check
      _
    $region15: #{dqn_forward.1} parent=1 // pred_check_branch
      %32 = sbr.rel (0) target = $region17
    $region16: #{dqn_forward.1} parent=1 // pred_region
      %s34 = ssub.s32 24576, 24576
      %35 = vsyncadd [#allocation10], %s34
      %s36 = sshll.u32 [#allocation9], 4
      %s37 = int_to_ptr.vmem [resolvable:$true] %s36
      %42 = dma.hbm_to_vmem [thread:$0]  %s3, 24576, %s37, [#allocation10], 384, 384, 24
    $region17: #{dqn_forward.1} parent=1 // pred_fallthru
      _
    // Predicated region
    $region18: #{dqn_forward.1} parent=1 // pred_check
      _
    $region19: #{dqn_forward.1} parent=1 // pred_check_branch
      %44 = sbr.rel (0) target = $region21
    $region20: #{dqn_forward.1} parent=1 // pred_region
      _
    $region21: #{dqn_forward.1} parent=1 // pred_fallthru
      _
    // Predicated region
    $region22: #{dqn_forward.1} parent=1 // pred_check
      _
    $region23: #{dqn_forward.1} parent=1 // pred_check_branch
      %46 = sbr.rel (0) target = $region25
    $region24: #{dqn_forward.1} parent=1 // pred_region
      %s48 = ssub.s32 12288, 12288
      %49 = vsyncadd [#allocation12], %s48
      %s50 = sshll.u32 [#allocation11], 4
      %s51 = int_to_ptr.vmem [resolvable:$true] %s50
      %56 = dma.hbm_to_vmem [thread:$0]  %s5, 12288, %s51, [#allocation12], 384, 384, 24
    $region25: #{dqn_forward.1} parent=1 // pred_fallthru
      _
    // Predicated region
    $region26: #{dqn_forward.1} parent=1 // pred_check
      _
    $region27: #{dqn_forward.1} parent=1 // pred_check_branch
      %58 = sbr.rel (0) target = $region29
    $region28: #{dqn_forward.1} parent=1 // pred_region
      _
    $region29: #{dqn_forward.1} parent=1 // pred_fallthru
      _
    // Predicated region
    $region30: #{dqn_forward.1} parent=1 // pred_check
      _
    $region31: #{dqn_forward.1} parent=1 // pred_check_branch
      %60 = sbr.rel (0) target = $region33
    $region32: #{dqn_forward.1} parent=1 // pred_region
      _
    $region33: #{dqn_forward.1} parent=1 // pred_fallthru
      _
    // Predicated region
    $region34: #{dqn_forward.1} parent=1 // pred_check
      _
    $region35: #{dqn_forward.1} parent=1 // pred_check_branch
      %62 = sbr.rel (0) target = $region37
    $region36: #{dqn_forward.1} parent=1 // pred_region
      _
    $region37: #{dqn_forward.1} parent=1 // pred_fallthru
      _
    // Predicated region
    $region38: #{dqn_forward.1} parent=1 // pred_check
      _
    $region39: #{dqn_forward.1} parent=1 // pred_check_branch
      %64 = sbr.rel (0) target = $region41
    $region40: #{dqn_forward.1} parent=1 // pred_region
      %s66 = ssub.s32 3072, 3072
      %67 = vsyncadd [#allocation12], %s66
      %s68 = sshll.u32 [#allocation13], 4
      %s69 = int_to_ptr.vmem [resolvable:$true] %s68
      %74 = dma.hbm_to_vmem [thread:$0]  %s9, 3072, %s69, [#allocation12], 192, 192, 12
    $region41: #{dqn_forward.1} parent=1 // pred_fallthru
      _
    // Predicated region
    $region42: #{dqn_forward.1} parent=1 // pred_check
      _
    $region43: #{dqn_forward.1} parent=1 // pred_check_branch
      %76 = sbr.rel (0) target = $region45
    $region44: #{dqn_forward.1} parent=1 // pred_region
      _
    $region45: #{dqn_forward.1} parent=1 // pred_fallthru
      _
    // Predicated region
    $region46: #{dqn_forward.1} parent=1 // pred_check
      _
    $region47: #{dqn_forward.1} parent=1 // pred_check_branch
      %78 = sbr.rel (0) target = $region49
    $region48: #{dqn_forward.1} parent=1 // pred_region
      %s80 = ssub.s32 3072, 3072
      %81 = vsyncadd [#allocation15], %s80
      %s82 = sshll.u32 [#allocation14], 4
      %s83 = int_to_ptr.vmem [resolvable:$true] %s82
      %88 = dma.hbm_to_vmem [thread:$0]  %s11, 3072, %s83, [#allocation15], 192, 192, 12
    $region49: #{dqn_forward.1} parent=1 // pred_fallthru
      _
    // Predicated region
    $region50: #{dqn_forward.1} parent=1 // pred_check
      _
    $region51: #{dqn_forward.1} parent=1 // pred_check_branch
      %90 = sbr.rel (0) target = $region53
    $region52: #{dqn_forward.1} parent=1 // pred_region
      _
    $region53: #{dqn_forward.1} parent=1 // pred_fallthru
      _
    // Predicated region
    $region54: #{dqn_forward.1} parent=1 // pred_check
      _
    $region55: #{dqn_forward.1} parent=1 // pred_check_branch
      %92 = sbr.rel (0) target = $region57
    $region56: #{dqn_forward.1} parent=1 // pred_region
      %s94 = ssub.s32 3072, 3072
      %95 = vsyncadd [#allocation15], %s94
      %s96 = sshll.u32 [#allocation16], 4
      %s97 = int_to_ptr.vmem [resolvable:$true] %s96
      %102 = dma.hbm_to_vmem [thread:$0]  %s13, 3072, %s97, [#allocation15], 192, 192, 12
    $region57: #{dqn_forward.1} parent=1 // pred_fallthru
      _
    // Predicated region
    $region58: #{dqn_forward.1} parent=1 // pred_check
      _
    $region59: #{dqn_forward.1} parent=1 // pred_check_branch
      %104 = sbr.rel (0) target = $region61
    $region60: #{dqn_forward.1} parent=1 // pred_region
      _
    $region61: #{dqn_forward.1} parent=1 // pred_fallthru
      _
    // Predicated region
    $region62: #{dqn_forward.1} parent=1 // pred_check
      _
    $region63: #{dqn_forward.1} parent=1 // pred_check_branch
      %106 = sbr.rel (0) target = $region65
    $region64: #{dqn_forward.1} parent=1 // pred_region
      _
    $region65: #{dqn_forward.1} parent=1 // pred_fallthru
      _
    // Predicated region
    $region66: #{dqn_forward.1} parent=1 // pred_check
      _
    $region67: #{dqn_forward.1} parent=1 // pred_check_branch
      %108 = sbr.rel (0) target = $region69
    $region68: #{dqn_forward.1} parent=1 // pred_region
      _
    $region69: #{dqn_forward.1} parent=1 // pred_fallthru
      _
    // Predicated region
    $region70: #{dqn_forward.1} parent=1 // pred_check
      _
    $region71: #{dqn_forward.1} parent=1 // pred_check_branch
      %110 = sbr.rel (0) target = $region73
    $region72: #{dqn_forward.1} parent=1 // pred_region
      %111 = dma.done [#allocation10], 24576
    $region73: #{dqn_forward.1} parent=1 // pred_fallthru
      _
    // Predicated region
    $region74: #{dqn_forward.1} parent=1 // pred_check
      _
    $region75: #{dqn_forward.1} parent=1 // pred_check_branch
      %113 = sbr.rel (0) target = $region77
    $region76: #{dqn_forward.1} parent=1 // pred_region
      %114 = dma.done [#allocation12], 12288
    $region77: #{dqn_forward.1} parent=1 // pred_fallthru
      _
    // Predicated region
    $region78: #{dqn_forward.1} parent=1 // pred_check
      _
    $region79: #{dqn_forward.1} parent=1 // pred_check_branch
      %116 = sbr.rel (0) target = $region81
    $region80: #{dqn_forward.1} parent=1 // pred_region
      %117 = dma.done [#allocation12], 3072
    $region81: #{dqn_forward.1} parent=1 // pred_fallthru
      _
    // Predicated region
    $region82: #{dqn_forward.1} parent=1 // pred_check
      _
    $region83: #{dqn_forward.1} parent=1 // pred_check_branch
      %119 = sbr.rel (0) target = $region85
    $region84: #{dqn_forward.1} parent=1 // pred_region
      %120 = dma.done [#allocation15], 3072
    $region85: #{dqn_forward.1} parent=1 // pred_fallthru
      _
    // Predicated region
    $region86: #{dqn_forward.1} parent=1 // pred_check
      _
    $region87: #{dqn_forward.1} parent=1 // pred_check_branch
      %122 = sbr.rel (0) target = $region89
    $region88: #{dqn_forward.1} parent=1 // pred_region
      %123 = dma.done [#allocation15], 3072
    $region89: #{dqn_forward.1} parent=1 // pred_fallthru
      _
    %v125 = vld [vmem:[%s1] sm:$0xff]
    %v126 = vld [vmem:[%s1 + $0x8] sm:$0xff]
    %v127 = vld [vmem:[%s1 + $0x10] sm:$0xff]
    %v128 = vld [vmem:[%s1 + $0x18] sm:$0xff]
    %v129 = vld [vmem:[%s1 + $0x20] sm:$0xff]
    %v130 = vld [vmem:[%s1 + $0x28] sm:$0xff]
    %v131 = vld [vmem:[%s1 + $0x30] sm:$0xff]
    %v132 = vld [vmem:[%s1 + $0x38] sm:$0xff]
    %v133 = vld [vmem:[%s1 + $0x40] sm:$0xff]
    %v134 = vld [vmem:[%s1 + $0x48] sm:$0xff]
    %v135 = vld [vmem:[%s1 + $0x50] sm:$0xff]
    %v136 = vld [vmem:[%s1 + $0x58] sm:$0xff]
    %v137 = vld [vmem:[%s1 + $0x60] sm:$0xff]
    %v138 = vld [vmem:[%s1 + $0x68] sm:$0xff]
    %v139 = vld [vmem:[%s1 + $0x70] sm:$0xff]
    %v140 = vld [vmem:[%s1 + $0x78] sm:$0xff]
    %v141 = vld [vmem:[%s1 + $0x80] sm:$0xff]
    %v142 = vld [vmem:[%s1 + $0x88] sm:$0xff]
    %v143 = vld [vmem:[%s1 + $0x90] sm:$0xff]
    %v144 = vld [vmem:[%s1 + $0x98] sm:$0xff]
    %v145 = vld [vmem:[%s1 + $0xa0] sm:$0xff]
    %v146 = vld [vmem:[%s1 + $0xa8] sm:$0xff]
    %v147 = vld [vmem:[%s1 + $0xb0] sm:$0xff]
    %v148 = vld [vmem:[%s1 + $0xb8] sm:$0xff]
    %v149 = vld [vmem:[%s1 + $0xc0] sm:$0xff]
    %v150 = vld [vmem:[%s1 + $0xc8] sm:$0xff]
    %v151 = vld [vmem:[%s1 + $0xd0] sm:$0xff]
    %v152 = vld [vmem:[%s1 + $0xd8] sm:$0xff]
    %v153 = vld [vmem:[%s1 + $0xe0] sm:$0xff]
    %v154 = vld [vmem:[%s1 + $0xe8] sm:$0xff]
    %v155 = vld [vmem:[%s1 + $0xf0] sm:$0xff]
    %v156 = vld [vmem:[%s1 + $0xf8] sm:$0xff]
    %v157 = vld [vmem:[%s1 + $0x100] sm:$0xff]
    %v158 = vld [vmem:[%s1 + $0x108] sm:$0xff]
    %v159 = vld [vmem:[%s1 + $0x110] sm:$0xff]
    %v160 = vld [vmem:[%s1 + $0x118] sm:$0xff]
    %v161 = vld [vmem:[%s1 + $0x120] sm:$0xff]
    %v162 = vld [vmem:[%s1 + $0x128] sm:$0xff]
    %v163 = vld [vmem:[%s1 + $0x130] sm:$0xff]
    %v164 = vld [vmem:[%s1 + $0x138] sm:$0xff]
    %v165 = vld [vmem:[%s1 + $0x140] sm:$0xff]
    %v166 = vld [vmem:[%s1 + $0x148] sm:$0xff]
    %v167 = vld [vmem:[%s1 + $0x150] sm:$0xff]
    %v168 = vld [vmem:[%s1 + $0x158] sm:$0xff]
    %v169 = vld [vmem:[%s1 + $0x160] sm:$0xff]
    %v170 = vld [vmem:[%s1 + $0x168] sm:$0xff]
    %v171 = vld [vmem:[%s1 + $0x170] sm:$0xff]
    %v172 = vld [vmem:[%s1 + $0x178] sm:$0xff]
    %v173 = vld [vmem:[%s1 + $0x180] sm:$0xff]
    %v174 = vld [vmem:[%s1 + $0x188] sm:$0xff]
    %v175 = vld [vmem:[%s1 + $0x190] sm:$0xff]
    %v176 = vld [vmem:[%s1 + $0x198] sm:$0xff]
    %v177 = vld [vmem:[%s1 + $0x1a0] sm:$0xff]
    %v178 = vld [vmem:[%s1 + $0x1a8] sm:$0xff]
    %v179 = vld [vmem:[%s1 + $0x1b0] sm:$0xff]
    %v180 = vld [vmem:[%s1 + $0x1b8] sm:$0xff]
    %v181 = vld [vmem:[%s1 + $0x1c0] sm:$0xff]
    %v182 = vld [vmem:[%s1 + $0x1c8] sm:$0xff]
    %v183 = vld [vmem:[%s1 + $0x1d0] sm:$0xff]
    %v184 = vld [vmem:[%s1 + $0x1d8] sm:$0xff]
    %v185 = vld [vmem:[%s1 + $0x1e0] sm:$0xff]
    %v186 = vld [vmem:[%s1 + $0x1e8] sm:$0xff]
    %v187 = vld [vmem:[%s1 + $0x1f0] sm:$0xff]
    %v188 = vld [vmem:[%s1 + $0x1f8] sm:$0xff]
    %v189 = vld [vmem:[%s1 + $0x200] sm:$0xff]
    %v190 = vld [vmem:[%s1 + $0x208] sm:$0xff]
    %v191 = vld [vmem:[%s1 + $0x210] sm:$0xff]
    %v192 = vld [vmem:[%s1 + $0x218] sm:$0xff]
    %v193 = vld [vmem:[%s1 + $0x220] sm:$0xff]
    %v194 = vld [vmem:[%s1 + $0x228] sm:$0xff]
    %v195 = vld [vmem:[%s1 + $0x230] sm:$0xff]
    %v196 = vld [vmem:[%s1 + $0x238] sm:$0xff]
    %v197 = vld [vmem:[%s1 + $0x240] sm:$0xff]
    %v198 = vld [vmem:[%s1 + $0x248] sm:$0xff]
    %v199 = vld [vmem:[%s1 + $0x250] sm:$0xff]
    %v200 = vld [vmem:[%s1 + $0x258] sm:$0xff]
    %v201 = vld [vmem:[%s1 + $0x260] sm:$0xff]
    %v202 = vld [vmem:[%s1 + $0x268] sm:$0xff]
    %v203 = vld [vmem:[%s1 + $0x270] sm:$0xff]
    %v204 = vld [vmem:[%s1 + $0x278] sm:$0xff]
    %v205 = vld [vmem:[%s1 + $0x280] sm:$0xff]
    %v206 = vld [vmem:[%s1 + $0x288] sm:$0xff]
    %v207 = vld [vmem:[%s1 + $0x290] sm:$0xff]
    %v208 = vld [vmem:[%s1 + $0x298] sm:$0xff]
    %v209 = vld [vmem:[%s1 + $0x2a0] sm:$0xff]
    %v210 = vld [vmem:[%s1 + $0x2a8] sm:$0xff]
    %v211 = vld [vmem:[%s1 + $0x2b0] sm:$0xff]
    %v212 = vld [vmem:[%s1 + $0x2b8] sm:$0xff]
    %v213 = vld [vmem:[%s1 + $0x2c0] sm:$0xff]
    %v214 = vld [vmem:[%s1 + $0x2c8] sm:$0xff]
    %v215 = vld [vmem:[%s1 + $0x2d0] sm:$0xff]
    %v216 = vld [vmem:[%s1 + $0x2d8] sm:$0xff]
    %v217 = vld [vmem:[%s1 + $0x2e0] sm:$0xff]
    %v218 = vld [vmem:[%s1 + $0x2e8] sm:$0xff]
    %v219 = vld [vmem:[%s1 + $0x2f0] sm:$0xff]
    %v220 = vld [vmem:[%s1 + $0x2f8] sm:$0xff]
    %v221 = vld [vmem:[%s1 + $0x300] sm:$0xff]
    %v222 = vld [vmem:[%s1 + $0x308] sm:$0xff]
    %v223 = vld [vmem:[%s1 + $0x310] sm:$0xff]
    %v224 = vld [vmem:[%s1 + $0x318] sm:$0xff]
    %v225 = vld [vmem:[%s1 + $0x320] sm:$0xff]
    %v226 = vld [vmem:[%s1 + $0x328] sm:$0xff]
    %v227 = vld [vmem:[%s1 + $0x330] sm:$0xff]
    %v228 = vld [vmem:[%s1 + $0x338] sm:$0xff]
    %v229 = vld [vmem:[%s1 + $0x340] sm:$0xff]
    %v230 = vld [vmem:[%s1 + $0x348] sm:$0xff]
    %v231 = vld [vmem:[%s1 + $0x350] sm:$0xff]
    %v232 = vld [vmem:[%s1 + $0x358] sm:$0xff]
    %v233 = vld [vmem:[%s1 + $0x360] sm:$0xff]
    %v234 = vld [vmem:[%s1 + $0x368] sm:$0xff]
    %v235 = vld [vmem:[%s1 + $0x370] sm:$0xff]
    %v236 = vld [vmem:[%s1 + $0x378] sm:$0xff]
    %v237 = vld [vmem:[%s1 + $0x380] sm:$0xff]
    %v238 = vld [vmem:[%s1 + $0x388] sm:$0xff]
    %v239 = vld [vmem:[%s1 + $0x390] sm:$0xff]
    %v240 = vld [vmem:[%s1 + $0x398] sm:$0xff]
    %v241 = vld [vmem:[%s1 + $0x3a0] sm:$0xff]
    %v242 = vld [vmem:[%s1 + $0x3a8] sm:$0xff]
    %v243 = vld [vmem:[%s1 + $0x3b0] sm:$0xff]
    %v244 = vld [vmem:[%s1 + $0x3b8] sm:$0xff]
    %v245 = vld [vmem:[%s1 + $0x3c0] sm:$0xff]
    %v246 = vld [vmem:[%s1 + $0x3c8] sm:$0xff]
    %v247 = vld [vmem:[%s1 + $0x3d0] sm:$0xff]
    %v248 = vld [vmem:[%s1 + $0x3d8] sm:$0xff]
    %v249 = vld [vmem:[%s1 + $0x3e0] sm:$0xff]
    %v250 = vld [vmem:[%s1 + $0x3e8] sm:$0xff]
    %v251 = vld [vmem:[%s1 + $0x3f0] sm:$0xff]
    %v252 = vld [vmem:[%s1 + $0x3f8] sm:$0xff]
    %v253 = vld [vmem:[%s1 + $0x400] sm:$0xff]
    %v254 = vld [vmem:[%s1 + $0x408] sm:$0xff]
    %v255 = vld [vmem:[%s1 + $0x410] sm:$0xff]
    %v256 = vld [vmem:[%s1 + $0x418] sm:$0xff]
    %v257 = vld [vmem:[%s1 + $0x420] sm:$0xff]
    %v258 = vld [vmem:[%s1 + $0x428] sm:$0xff]
    %v259 = vld [vmem:[%s1 + $0x430] sm:$0xff]
    %v260 = vld [vmem:[%s1 + $0x438] sm:$0xff]
    %v261 = vld [vmem:[%s1 + $0x440] sm:$0xff]
    %v262 = vld [vmem:[%s1 + $0x448] sm:$0xff]
    %v263 = vld [vmem:[%s1 + $0x450] sm:$0xff]
    %v264 = vld [vmem:[%s1 + $0x458] sm:$0xff]
    %v265 = vld [vmem:[%s1 + $0x460] sm:$0xff]
    %v266 = vld [vmem:[%s1 + $0x468] sm:$0xff]
    %v267 = vld [vmem:[%s1 + $0x470] sm:$0xff]
    %v268 = vld [vmem:[%s1 + $0x478] sm:$0xff]
    %v269 = vld [vmem:[%s1 + $0x480] sm:$0xff]
    %v270 = vld [vmem:[%s1 + $0x488] sm:$0xff]
    %v271 = vld [vmem:[%s1 + $0x490] sm:$0xff]
    %v272 = vld [vmem:[%s1 + $0x498] sm:$0xff]
    %v273 = vld [vmem:[%s1 + $0x4a0] sm:$0xff]
    %v274 = vld [vmem:[%s1 + $0x4a8] sm:$0xff]
    %v275 = vld [vmem:[%s1 + $0x4b0] sm:$0xff]
    %v276 = vld [vmem:[%s1 + $0x4b8] sm:$0xff]
    %v277 = vld [vmem:[%s1 + $0x4c0] sm:$0xff]
    %v278 = vld [vmem:[%s1 + $0x4c8] sm:$0xff]
    %v279 = vld [vmem:[%s1 + $0x4d0] sm:$0xff]
    %v280 = vld [vmem:[%s1 + $0x4d8] sm:$0xff]
    %v281 = vld [vmem:[%s1 + $0x4e0] sm:$0xff]
    %v282 = vld [vmem:[%s1 + $0x4e8] sm:$0xff]
    %v283 = vld [vmem:[%s1 + $0x4f0] sm:$0xff]
    %v284 = vld [vmem:[%s1 + $0x4f8] sm:$0xff]
    %v285 = vld [vmem:[%s1 + $0x500] sm:$0xff]
    %v286 = vld [vmem:[%s1 + $0x508] sm:$0xff]
    %v287 = vld [vmem:[%s1 + $0x510] sm:$0xff]
    %v288 = vld [vmem:[%s1 + $0x518] sm:$0xff]
    %v289 = vld [vmem:[%s1 + $0x520] sm:$0xff]
    %v290 = vld [vmem:[%s1 + $0x528] sm:$0xff]
    %v291 = vld [vmem:[%s1 + $0x530] sm:$0xff]
    %v292 = vld [vmem:[%s1 + $0x538] sm:$0xff]
    %v293 = vld [vmem:[%s1 + $0x540] sm:$0xff]
    %v294 = vld [vmem:[%s1 + $0x548] sm:$0xff]
    %v295 = vld [vmem:[%s1 + $0x550] sm:$0xff]
    %v296 = vld [vmem:[%s1 + $0x558] sm:$0xff]
    %v297 = vld [vmem:[%s1 + $0x560] sm:$0xff]
    %v298 = vld [vmem:[%s1 + $0x568] sm:$0xff]
    %v299 = vld [vmem:[%s1 + $0x570] sm:$0xff]
    %v300 = vld [vmem:[%s1 + $0x578] sm:$0xff]
    %v301 = vld [vmem:[%s1 + $0x580] sm:$0xff]
    %v302 = vld [vmem:[%s1 + $0x588] sm:$0xff]
    %v303 = vld [vmem:[%s1 + $0x590] sm:$0xff]
    %v304 = vld [vmem:[%s1 + $0x598] sm:$0xff]
    %v305 = vld [vmem:[%s1 + $0x5a0] sm:$0xff]
    %v306 = vld [vmem:[%s1 + $0x5a8] sm:$0xff]
    %v307 = vld [vmem:[%s1 + $0x5b0] sm:$0xff]
    %v308 = vld [vmem:[%s1 + $0x5b8] sm:$0xff]
    %v309 = vld [vmem:[%s1 + $0x5c0] sm:$0xff]
    %v310 = vld [vmem:[%s1 + $0x5c8] sm:$0xff]
    %v311 = vld [vmem:[%s1 + $0x5d0] sm:$0xff]
    %v312 = vld [vmem:[%s1 + $0x5d8] sm:$0xff]
    %v313 = vld [vmem:[%s1 + $0x5e0] sm:$0xff]
    %v314 = vld [vmem:[%s1 + $0x5e8] sm:$0xff]
    %v315 = vld [vmem:[%s1 + $0x5f0] sm:$0xff]
    %v316 = vld [vmem:[%s1 + $0x5f8] sm:$0xff]
    %v317 = vld [vmem:[%s1 + $0x600] sm:$0xff]
    %v318 = vld [vmem:[%s1 + $0x608] sm:$0xff]
    %v319 = vld [vmem:[%s1 + $0x610] sm:$0xff]
    %v320 = vld [vmem:[%s1 + $0x618] sm:$0xff]
    %v321 = vld [vmem:[%s1 + $0x620] sm:$0xff]
    %v322 = vld [vmem:[%s1 + $0x628] sm:$0xff]
    %v323 = vld [vmem:[%s1 + $0x630] sm:$0xff]
    %v324 = vld [vmem:[%s1 + $0x638] sm:$0xff]
    %v325 = vld [vmem:[%s1 + $0x640] sm:$0xff]
    %v326 = vld [vmem:[%s1 + $0x648] sm:$0xff]
    %v327 = vld [vmem:[%s1 + $0x650] sm:$0xff]
    %v328 = vld [vmem:[%s1 + $0x658] sm:$0xff]
    %v329 = vld [vmem:[%s1 + $0x660] sm:$0xff]
    %v330 = vld [vmem:[%s1 + $0x668] sm:$0xff]
    %v331 = vld [vmem:[%s1 + $0x670] sm:$0xff]
    %v332 = vld [vmem:[%s1 + $0x678] sm:$0xff]
    %v333 = vld [vmem:[%s1 + $0x680] sm:$0xff]
    %v334 = vld [vmem:[%s1 + $0x688] sm:$0xff]
    %v335 = vld [vmem:[%s1 + $0x690] sm:$0xff]
    %v336 = vld [vmem:[%s1 + $0x698] sm:$0xff]
    %v337 = vld [vmem:[%s1 + $0x6a0] sm:$0xff]
    %v338 = vld [vmem:[%s1 + $0x6a8] sm:$0xff]
    %v339 = vld [vmem:[%s1 + $0x6b0] sm:$0xff]
    %v340 = vld [vmem:[%s1 + $0x6b8] sm:$0xff]
    %v341 = vld [vmem:[%s1 + $0x6c0] sm:$0xff]
    %v342 = vld [vmem:[%s1 + $0x6c8] sm:$0xff]
    %v343 = vld [vmem:[%s1 + $0x6d0] sm:$0xff]
    %v344 = vld [vmem:[%s1 + $0x6d8] sm:$0xff]
    %v345 = vld [vmem:[%s1 + $0x6e0] sm:$0xff]
    %v346 = vld [vmem:[%s1 + $0x6e8] sm:$0xff]
    %v347 = vld [vmem:[%s1 + $0x6f0] sm:$0xff]
    %v348 = vld [vmem:[%s1 + $0x6f8] sm:$0xff]
    %v349 = vld [vmem:[%s1 + $0x700] sm:$0xff]
    %v350 = vld [vmem:[%s1 + $0x708] sm:$0xff]
    %v351 = vld [vmem:[%s1 + $0x710] sm:$0xff]
    %v352 = vld [vmem:[%s1 + $0x718] sm:$0xff]
    %v353 = vld [vmem:[%s1 + $0x720] sm:$0xff]
    %v354 = vld [vmem:[%s1 + $0x728] sm:$0xff]
    %v355 = vld [vmem:[%s1 + $0x730] sm:$0xff]
    %v356 = vld [vmem:[%s1 + $0x738] sm:$0xff]
    %v357 = vld [vmem:[%s1 + $0x740] sm:$0xff]
    %v358 = vld [vmem:[%s1 + $0x748] sm:$0xff]
    %v359 = vld [vmem:[%s1 + $0x750] sm:$0xff]
    %v360 = vld [vmem:[%s1 + $0x758] sm:$0xff]
    %v361 = vld [vmem:[%s1 + $0x760] sm:$0xff]
    %v362 = vld [vmem:[%s1 + $0x768] sm:$0xff]
    %v363 = vld [vmem:[%s1 + $0x770] sm:$0xff]
    %v364 = vld [vmem:[%s1 + $0x778] sm:$0xff]
    %v365 = vld [vmem:[%s1 + $0x780] sm:$0xff]
    %v366 = vld [vmem:[%s1 + $0x788] sm:$0xff]
    %v367 = vld [vmem:[%s1 + $0x790] sm:$0xff]
    %v368 = vld [vmem:[%s1 + $0x798] sm:$0xff]
    %v369 = vld [vmem:[%s1 + $0x7a0] sm:$0xff]
    %v370 = vld [vmem:[%s1 + $0x7a8] sm:$0xff]
    %v371 = vld [vmem:[%s1 + $0x7b0] sm:$0xff]
    %v372 = vld [vmem:[%s1 + $0x7b8] sm:$0xff]
    %v373 = vld [vmem:[%s1 + $0x7c0] sm:$0xff]
    %v374 = vld [vmem:[%s1 + $0x7c8] sm:$0xff]
    %v375 = vld [vmem:[%s1 + $0x7d0] sm:$0xff]
    %v376 = vld [vmem:[%s1 + $0x7d8] sm:$0xff]
    %v377 = vld [vmem:[%s1 + $0x7e0] sm:$0xff]
    %v378 = vld [vmem:[%s1 + $0x7e8] sm:$0xff]
    %v379 = vld [vmem:[%s1 + $0x7f0] sm:$0xff]
    %v380 = vld [vmem:[%s1 + $0x7f8] sm:$0xff]
    %v381 = vld [vmem:[%s1 + $0x800] sm:$0xff]
    %v382 = vld [vmem:[%s1 + $0x808] sm:$0xff]
    %v383 = vld [vmem:[%s1 + $0x810] sm:$0xff]
    %v384 = vld [vmem:[%s1 + $0x818] sm:$0xff]
    %v385 = vld [vmem:[%s1 + $0x820] sm:$0xff]
    %v386 = vld [vmem:[%s1 + $0x828] sm:$0xff]
    %v387 = vld [vmem:[%s1 + $0x830] sm:$0xff]
    %v388 = vld [vmem:[%s1 + $0x838] sm:$0xff]
    %v389 = vld [vmem:[%s1 + $0x840] sm:$0xff]
    %v390 = vld [vmem:[%s1 + $0x848] sm:$0xff]
    %v391 = vld [vmem:[%s1 + $0x850] sm:$0xff]
    %v392 = vld [vmem:[%s1 + $0x858] sm:$0xff]
    %v393 = vld [vmem:[%s1 + $0x860] sm:$0xff]
    %v394 = vld [vmem:[%s1 + $0x868] sm:$0xff]
    %v395 = vld [vmem:[%s1 + $0x870] sm:$0xff]
    %v396 = vld [vmem:[%s1 + $0x878] sm:$0xff]
    %v397 = vld [vmem:[%s1 + $0x880] sm:$0xff]
    %v398 = vld [vmem:[%s1 + $0x888] sm:$0xff]
    %v399 = vld [vmem:[%s1 + $0x890] sm:$0xff]
    %v400 = vld [vmem:[%s1 + $0x898] sm:$0xff]
    %v401 = vld [vmem:[%s1 + $0x8a0] sm:$0xff]
    %v402 = vld [vmem:[%s1 + $0x8a8] sm:$0xff]
    %v403 = vld [vmem:[%s1 + $0x8b0] sm:$0xff]
    %v404 = vld [vmem:[%s1 + $0x8b8] sm:$0xff]
    %v405 = vld [vmem:[%s1 + $0x8c0] sm:$0xff]
    %v406 = vld [vmem:[%s1 + $0x8c8] sm:$0xff]
    %v407 = vld [vmem:[%s1 + $0x8d0] sm:$0xff]
    %v408 = vld [vmem:[%s1 + $0x8d8] sm:$0xff]
    %v409 = vld [vmem:[%s1 + $0x8e0] sm:$0xff]
    %v410 = vld [vmem:[%s1 + $0x8e8] sm:$0xff]
    %v411 = vld [vmem:[%s1 + $0x8f0] sm:$0xff]
    %v412 = vld [vmem:[%s1 + $0x8f8] sm:$0xff]
    %v413 = vld [vmem:[%s1 + $0x900] sm:$0xff]
    %v414 = vld [vmem:[%s1 + $0x908] sm:$0xff]
    %v415 = vld [vmem:[%s1 + $0x910] sm:$0xff]
    %v416 = vld [vmem:[%s1 + $0x918] sm:$0xff]
    %v417 = vld [vmem:[%s1 + $0x920] sm:$0xff]
    %v418 = vld [vmem:[%s1 + $0x928] sm:$0xff]
    %v419 = vld [vmem:[%s1 + $0x930] sm:$0xff]
    %v420 = vld [vmem:[%s1 + $0x938] sm:$0xff]
    %v421 = vld [vmem:[%s1 + $0x940] sm:$0xff]
    %v422 = vld [vmem:[%s1 + $0x948] sm:$0xff]
    %v423 = vld [vmem:[%s1 + $0x950] sm:$0xff]
    %v424 = vld [vmem:[%s1 + $0x958] sm:$0xff]
    %v425 = vld [vmem:[%s1 + $0x960] sm:$0xff]
    %v426 = vld [vmem:[%s1 + $0x968] sm:$0xff]
    %v427 = vld [vmem:[%s1 + $0x970] sm:$0xff]
    %v428 = vld [vmem:[%s1 + $0x978] sm:$0xff]
    %v429 = vld [vmem:[%s1 + $0x980] sm:$0xff]
    %v430 = vld [vmem:[%s1 + $0x988] sm:$0xff]
    %v431 = vld [vmem:[%s1 + $0x990] sm:$0xff]
    %v432 = vld [vmem:[%s1 + $0x998] sm:$0xff]
    %v433 = vld [vmem:[%s1 + $0x9a0] sm:$0xff]
    %v434 = vld [vmem:[%s1 + $0x9a8] sm:$0xff]
    %v435 = vld [vmem:[%s1 + $0x9b0] sm:$0xff]
    %v436 = vld [vmem:[%s1 + $0x9b8] sm:$0xff]
    %v437 = vld [vmem:[%s1 + $0x9c0] sm:$0xff]
    %v438 = vld [vmem:[%s1 + $0x9c8] sm:$0xff]
    %v439 = vld [vmem:[%s1 + $0x9d0] sm:$0xff]
    %v440 = vld [vmem:[%s1 + $0x9d8] sm:$0xff]
    %v441 = vld [vmem:[%s1 + $0x9e0] sm:$0xff]
    %v442 = vld [vmem:[%s1 + $0x9e8] sm:$0xff]
    %v443 = vld [vmem:[%s1 + $0x9f0] sm:$0xff]
    %v444 = vld [vmem:[%s1 + $0x9f8] sm:$0xff]
    %v445 = vld [vmem:[%s1 + $0xa00] sm:$0xff]
    %v446 = vld [vmem:[%s1 + $0xa08] sm:$0xff]
    %v447 = vld [vmem:[%s1 + $0xa10] sm:$0xff]
    %v448 = vld [vmem:[%s1 + $0xa18] sm:$0xff]
    %v449 = vld [vmem:[%s1 + $0xa20] sm:$0xff]
    %v450 = vld [vmem:[%s1 + $0xa28] sm:$0xff]
    %v451 = vld [vmem:[%s1 + $0xa30] sm:$0xff]
    %v452 = vld [vmem:[%s1 + $0xa38] sm:$0xff]
    %v453 = vld [vmem:[%s1 + $0xa40] sm:$0xff]
    %v454 = vld [vmem:[%s1 + $0xa48] sm:$0xff]
    %v455 = vld [vmem:[%s1 + $0xa50] sm:$0xff]
    %v456 = vld [vmem:[%s1 + $0xa58] sm:$0xff]
    %v457 = vld [vmem:[%s1 + $0xa60] sm:$0xff]
    %v458 = vld [vmem:[%s1 + $0xa68] sm:$0xff]
    %v459 = vld [vmem:[%s1 + $0xa70] sm:$0xff]
    %v460 = vld [vmem:[%s1 + $0xa78] sm:$0xff]
    %v461 = vld [vmem:[%s1 + $0xa80] sm:$0xff]
    %v462 = vld [vmem:[%s1 + $0xa88] sm:$0xff]
    %v463 = vld [vmem:[%s1 + $0xa90] sm:$0xff]
    %v464 = vld [vmem:[%s1 + $0xa98] sm:$0xff]
    %v465 = vld [vmem:[%s1 + $0xaa0] sm:$0xff]
    %v466 = vld [vmem:[%s1 + $0xaa8] sm:$0xff]
    %v467 = vld [vmem:[%s1 + $0xab0] sm:$0xff]
    %v468 = vld [vmem:[%s1 + $0xab8] sm:$0xff]
    %v469 = vld [vmem:[%s1 + $0xac0] sm:$0xff]
    %v470 = vld [vmem:[%s1 + $0xac8] sm:$0xff]
    %v471 = vld [vmem:[%s1 + $0xad0] sm:$0xff]
    %v472 = vld [vmem:[%s1 + $0xad8] sm:$0xff]
    %v473 = vld [vmem:[%s1 + $0xae0] sm:$0xff]
    %v474 = vld [vmem:[%s1 + $0xae8] sm:$0xff]
    %v475 = vld [vmem:[%s1 + $0xaf0] sm:$0xff]
    %v476 = vld [vmem:[%s1 + $0xaf8] sm:$0xff]
    %v477 = vld [vmem:[%s1 + $0xb00] sm:$0xff]
    %v478 = vld [vmem:[%s1 + $0xb08] sm:$0xff]
    %v479 = vld [vmem:[%s1 + $0xb10] sm:$0xff]
    %v480 = vld [vmem:[%s1 + $0xb18] sm:$0xff]
    %v481 = vld [vmem:[%s1 + $0xb20] sm:$0xff]
    %v482 = vld [vmem:[%s1 + $0xb28] sm:$0xff]
    %v483 = vld [vmem:[%s1 + $0xb30] sm:$0xff]
    %v484 = vld [vmem:[%s1 + $0xb38] sm:$0xff]
    %v485 = vld [vmem:[%s1 + $0xb40] sm:$0xff]
    %v486 = vld [vmem:[%s1 + $0xb48] sm:$0xff]
    %v487 = vld [vmem:[%s1 + $0xb50] sm:$0xff]
    %v488 = vld [vmem:[%s1 + $0xb58] sm:$0xff]
    %v489 = vld [vmem:[%s1 + $0xb60] sm:$0xff]
    %v490 = vld [vmem:[%s1 + $0xb68] sm:$0xff]
    %v491 = vld [vmem:[%s1 + $0xb70] sm:$0xff]
    %v492 = vld [vmem:[%s1 + $0xb78] sm:$0xff]
    %v493 = vld [vmem:[%s1 + $0xb80] sm:$0xff]
    %v494 = vld [vmem:[%s1 + $0xb88] sm:$0xff]
    %v495 = vld [vmem:[%s1 + $0xb90] sm:$0xff]
    %v496 = vld [vmem:[%s1 + $0xb98] sm:$0xff]
    %v497 = vld [vmem:[%s1 + $0xba0] sm:$0xff]
    %v498 = vld [vmem:[%s1 + $0xba8] sm:$0xff]
    %v499 = vld [vmem:[%s1 + $0xbb0] sm:$0xff]
    %v500 = vld [vmem:[%s1 + $0xbb8] sm:$0xff]
    %v501 = vld [vmem:[%s1 + $0xbc0] sm:$0xff]
    %v502 = vld [vmem:[%s1 + $0xbc8] sm:$0xff]
    %v503 = vld [vmem:[%s1 + $0xbd0] sm:$0xff]
    %v504 = vld [vmem:[%s1 + $0xbd8] sm:$0xff]
    %v505 = vld [vmem:[%s1 + $0xbe0] sm:$0xff]
    %v506 = vld [vmem:[%s1 + $0xbe8] sm:$0xff]
    %v507 = vld [vmem:[%s1 + $0xbf0] sm:$0xff]
    %v508 = vld [vmem:[%s1 + $0xbf8] sm:$0xff]
    %v509 = vld [vmem:[%s2] sm:$0xf]
    %v510 = vld [vmem:[%s0] sm:$0xff]
    %v511 = vld [vmem:[%s0 + $0x8] sm:$0xff]
    %v512 = vld [vmem:[%s0 + $0x10] sm:$0xff]
    %v513 = vld [vmem:[%s0 + $0x18] sm:$0xff]
    %v514 = vld [vmem:[%s0 + $0x20] sm:$0xff]
    %v515 = vld [vmem:[%s0 + $0x28] sm:$0xff]
    %v516 = vld [vmem:[%s0 + $0x30] sm:$0xff]
    %v517 = vld [vmem:[%s0 + $0x38] sm:$0xff]
    %v518 = vld [vmem:[%s0 + $0x40] sm:$0xff]
    %v519 = vld [vmem:[%s0 + $0x48] sm:$0xff]
    %v520 = vld [vmem:[%s0 + $0x50] sm:$0xff]
    %v521 = vld [vmem:[%s0 + $0x58] sm:$0xff]
    %v906 = vunpack.c.l.b16 %v125
    %v907 = vunpack.c.h.b16 %v125
    %v908 = vunpack.c.l.b16 %v126
    %v909 = vunpack.c.h.b16 %v126
    %v910 = vunpack.c.l.b16 %v127
    %v911 = vunpack.c.h.b16 %v127
    %v912 = vunpack.c.l.b16 %v128
    %v913 = vunpack.c.h.b16 %v128
    %v914 = vunpack.c.l.b16 %v129
    %v915 = vunpack.c.h.b16 %v129
    %v916 = vunpack.c.l.b16 %v130
    %v917 = vunpack.c.h.b16 %v130
    %v918 = vunpack.c.l.b16 %v131
    %v919 = vunpack.c.h.b16 %v131
    %v920 = vunpack.c.l.b16 %v132
    %v921 = vunpack.c.h.b16 %v132
    %v922 = vunpack.c.l.b16 %v133
    %v923 = vunpack.c.h.b16 %v133
    %v924 = vunpack.c.l.b16 %v134
    %v925 = vunpack.c.h.b16 %v134
    %v926 = vunpack.c.l.b16 %v135
    %v927 = vunpack.c.h.b16 %v135
    %v928 = vunpack.c.l.b16 %v136
    %v929 = vunpack.c.h.b16 %v136
    %v930 = vunpack.c.l.b16 %v137
    %v931 = vunpack.c.h.b16 %v137
    %v932 = vunpack.c.l.b16 %v138
    %v933 = vunpack.c.h.b16 %v138
    %v934 = vunpack.c.l.b16 %v139
    %v935 = vunpack.c.h.b16 %v139
    %v936 = vunpack.c.l.b16 %v140
    %v937 = vunpack.c.h.b16 %v140
    %v938 = vunpack.c.l.b16 %v141
    %v939 = vunpack.c.h.b16 %v141
    %v940 = vunpack.c.l.b16 %v142
    %v941 = vunpack.c.h.b16 %v142
    %v942 = vunpack.c.l.b16 %v143
    %v943 = vunpack.c.h.b16 %v143
    %v944 = vunpack.c.l.b16 %v144
    %v945 = vunpack.c.h.b16 %v144
    %v946 = vunpack.c.l.b16 %v145
    %v947 = vunpack.c.h.b16 %v145
    %v948 = vunpack.c.l.b16 %v146
    %v949 = vunpack.c.h.b16 %v146
    %v950 = vunpack.c.l.b16 %v147
    %v951 = vunpack.c.h.b16 %v147
    %v952 = vunpack.c.l.b16 %v148
    %v953 = vunpack.c.h.b16 %v148
    %v954 = vunpack.c.l.b16 %v149
    %v955 = vunpack.c.h.b16 %v149
    %v956 = vunpack.c.l.b16 %v150
    %v957 = vunpack.c.h.b16 %v150
    %v958 = vunpack.c.l.b16 %v151
    %v959 = vunpack.c.h.b16 %v151
    %v960 = vunpack.c.l.b16 %v152
    %v961 = vunpack.c.h.b16 %v152
    %v962 = vunpack.c.l.b16 %v153
    %v963 = vunpack.c.h.b16 %v153
    %v964 = vunpack.c.l.b16 %v154
    %v965 = vunpack.c.h.b16 %v154
    %v966 = vunpack.c.l.b16 %v155
    %v967 = vunpack.c.h.b16 %v155
    %v968 = vunpack.c.l.b16 %v156
    %v969 = vunpack.c.h.b16 %v156
    %v970 = vunpack.c.l.b16 %v157
    %v971 = vunpack.c.h.b16 %v157
    %v972 = vunpack.c.l.b16 %v158
    %v973 = vunpack.c.h.b16 %v158
    %v974 = vunpack.c.l.b16 %v159
    %v975 = vunpack.c.h.b16 %v159
    %v976 = vunpack.c.l.b16 %v160
    %v977 = vunpack.c.h.b16 %v160
    %v978 = vunpack.c.l.b16 %v161
    %v979 = vunpack.c.h.b16 %v161
    %v980 = vunpack.c.l.b16 %v162
    %v981 = vunpack.c.h.b16 %v162
    %v982 = vunpack.c.l.b16 %v163
    %v983 = vunpack.c.h.b16 %v163
    %v984 = vunpack.c.l.b16 %v164
    %v985 = vunpack.c.h.b16 %v164
    %v986 = vunpack.c.l.b16 %v165
    %v987 = vunpack.c.h.b16 %v165
    %v988 = vunpack.c.l.b16 %v166
    %v989 = vunpack.c.h.b16 %v166
    %v990 = vunpack.c.l.b16 %v167
    %v991 = vunpack.c.h.b16 %v167
    %v992 = vunpack.c.l.b16 %v168
    %v993 = vunpack.c.h.b16 %v168
    %v994 = vunpack.c.l.b16 %v169
    %v995 = vunpack.c.h.b16 %v169
    %v996 = vunpack.c.l.b16 %v170
    %v997 = vunpack.c.h.b16 %v170
    %v998 = vunpack.c.l.b16 %v171
    %v999 = vunpack.c.h.b16 %v171
    %v1000 = vunpack.c.l.b16 %v172
    %v1001 = vunpack.c.h.b16 %v172
    %v1002 = vunpack.c.l.b16 %v173
    %v1003 = vunpack.c.h.b16 %v173
    %v1004 = vunpack.c.l.b16 %v174
    %v1005 = vunpack.c.h.b16 %v174
    %v1006 = vunpack.c.l.b16 %v175
    %v1007 = vunpack.c.h.b16 %v175
    %v1008 = vunpack.c.l.b16 %v176
    %v1009 = vunpack.c.h.b16 %v176
    %v1010 = vunpack.c.l.b16 %v177
    %v1011 = vunpack.c.h.b16 %v177
    %v1012 = vunpack.c.l.b16 %v178
    %v1013 = vunpack.c.h.b16 %v178
    %v1014 = vunpack.c.l.b16 %v179
    %v1015 = vunpack.c.h.b16 %v179
    %v1016 = vunpack.c.l.b16 %v180
    %v1017 = vunpack.c.h.b16 %v180
    %v1018 = vunpack.c.l.b16 %v181
    %v1019 = vunpack.c.h.b16 %v181
    %v1020 = vunpack.c.l.b16 %v182
    %v1021 = vunpack.c.h.b16 %v182
    %v1022 = vunpack.c.l.b16 %v183
    %v1023 = vunpack.c.h.b16 %v183
    %v1024 = vunpack.c.l.b16 %v184
    %v1025 = vunpack.c.h.b16 %v184
    %v1026 = vunpack.c.l.b16 %v185
    %v1027 = vunpack.c.h.b16 %v185
    %v1028 = vunpack.c.l.b16 %v186
    %v1029 = vunpack.c.h.b16 %v186
    %v1030 = vunpack.c.l.b16 %v187
    %v1031 = vunpack.c.h.b16 %v187
    %v1032 = vunpack.c.l.b16 %v188
    %v1033 = vunpack.c.h.b16 %v188
    %v1034 = vunpack.c.l.b16 %v189
    %v1035 = vunpack.c.h.b16 %v189
    %v1036 = vunpack.c.l.b16 %v190
    %v1037 = vunpack.c.h.b16 %v190
    %v1038 = vunpack.c.l.b16 %v191
    %v1039 = vunpack.c.h.b16 %v191
    %v1040 = vunpack.c.l.b16 %v192
    %v1041 = vunpack.c.h.b16 %v192
    %v1042 = vunpack.c.l.b16 %v193
    %v1043 = vunpack.c.h.b16 %v193
    %v1044 = vunpack.c.l.b16 %v194
    %v1045 = vunpack.c.h.b16 %v194
    %v1046 = vunpack.c.l.b16 %v195
    %v1047 = vunpack.c.h.b16 %v195
    %v1048 = vunpack.c.l.b16 %v196
    %v1049 = vunpack.c.h.b16 %v196
    %v1050 = vunpack.c.l.b16 %v197
    %v1051 = vunpack.c.h.b16 %v197
    %v1052 = vunpack.c.l.b16 %v198
    %v1053 = vunpack.c.h.b16 %v198
    %v1054 = vunpack.c.l.b16 %v199
    %v1055 = vunpack.c.h.b16 %v199
    %v1056 = vunpack.c.l.b16 %v200
    %v1057 = vunpack.c.h.b16 %v200
    %v1058 = vunpack.c.l.b16 %v201
    %v1059 = vunpack.c.h.b16 %v201
    %v1060 = vunpack.c.l.b16 %v202
    %v1061 = vunpack.c.h.b16 %v202
    %v1062 = vunpack.c.l.b16 %v203
    %v1063 = vunpack.c.h.b16 %v203
    %v1064 = vunpack.c.l.b16 %v204
    %v1065 = vunpack.c.h.b16 %v204
    %v1066 = vunpack.c.l.b16 %v205
    %v1067 = vunpack.c.h.b16 %v205
    %v1068 = vunpack.c.l.b16 %v206
    %v1069 = vunpack.c.h.b16 %v206
    %v1070 = vunpack.c.l.b16 %v207
    %v1071 = vunpack.c.h.b16 %v207
    %v1072 = vunpack.c.l.b16 %v208
    %v1073 = vunpack.c.h.b16 %v208
    %v1074 = vunpack.c.l.b16 %v209
    %v1075 = vunpack.c.h.b16 %v209
    %v1076 = vunpack.c.l.b16 %v210
    %v1077 = vunpack.c.h.b16 %v210
    %v1078 = vunpack.c.l.b16 %v211
    %v1079 = vunpack.c.h.b16 %v211
    %v1080 = vunpack.c.l.b16 %v212
    %v1081 = vunpack.c.h.b16 %v212
    %v1082 = vunpack.c.l.b16 %v213
    %v1083 = vunpack.c.h.b16 %v213
    %v1084 = vunpack.c.l.b16 %v214
    %v1085 = vunpack.c.h.b16 %v214
    %v1086 = vunpack.c.l.b16 %v215
    %v1087 = vunpack.c.h.b16 %v215
    %v1088 = vunpack.c.l.b16 %v216
    %v1089 = vunpack.c.h.b16 %v216
    %v1090 = vunpack.c.l.b16 %v217
    %v1091 = vunpack.c.h.b16 %v217
    %v1092 = vunpack.c.l.b16 %v218
    %v1093 = vunpack.c.h.b16 %v218
    %v1094 = vunpack.c.l.b16 %v219
    %v1095 = vunpack.c.h.b16 %v219
    %v1096 = vunpack.c.l.b16 %v220
    %v1097 = vunpack.c.h.b16 %v220
    %v1098 = vunpack.c.l.b16 %v221
    %v1099 = vunpack.c.h.b16 %v221
    %v1100 = vunpack.c.l.b16 %v222
    %v1101 = vunpack.c.h.b16 %v222
    %v1102 = vunpack.c.l.b16 %v223
    %v1103 = vunpack.c.h.b16 %v223
    %v1104 = vunpack.c.l.b16 %v224
    %v1105 = vunpack.c.h.b16 %v224
    %v1106 = vunpack.c.l.b16 %v225
    %v1107 = vunpack.c.h.b16 %v225
    %v1108 = vunpack.c.l.b16 %v226
    %v1109 = vunpack.c.h.b16 %v226
    %v1110 = vunpack.c.l.b16 %v227
    %v1111 = vunpack.c.h.b16 %v227
    %v1112 = vunpack.c.l.b16 %v228
    %v1113 = vunpack.c.h.b16 %v228
    %v1114 = vunpack.c.l.b16 %v229
    %v1115 = vunpack.c.h.b16 %v229
    %v1116 = vunpack.c.l.b16 %v230
    %v1117 = vunpack.c.h.b16 %v230
    %v1118 = vunpack.c.l.b16 %v231
    %v1119 = vunpack.c.h.b16 %v231
    %v1120 = vunpack.c.l.b16 %v232
    %v1121 = vunpack.c.h.b16 %v232
    %v1122 = vunpack.c.l.b16 %v233
    %v1123 = vunpack.c.h.b16 %v233
    %v1124 = vunpack.c.l.b16 %v234
    %v1125 = vunpack.c.h.b16 %v234
    %v1126 = vunpack.c.l.b16 %v235
    %v1127 = vunpack.c.h.b16 %v235
    %v1128 = vunpack.c.l.b16 %v236
    %v1129 = vunpack.c.h.b16 %v236
    %v1130 = vunpack.c.l.b16 %v237
    %v1131 = vunpack.c.h.b16 %v237
    %v1132 = vunpack.c.l.b16 %v238
    %v1133 = vunpack.c.h.b16 %v238
    %v1134 = vunpack.c.l.b16 %v239
    %v1135 = vunpack.c.h.b16 %v239
    %v1136 = vunpack.c.l.b16 %v240
    %v1137 = vunpack.c.h.b16 %v240
    %v1138 = vunpack.c.l.b16 %v241
    %v1139 = vunpack.c.h.b16 %v241
    %v1140 = vunpack.c.l.b16 %v242
    %v1141 = vunpack.c.h.b16 %v242
    %v1142 = vunpack.c.l.b16 %v243
    %v1143 = vunpack.c.h.b16 %v243
    %v1144 = vunpack.c.l.b16 %v244
    %v1145 = vunpack.c.h.b16 %v244
    %v1146 = vunpack.c.l.b16 %v245
    %v1147 = vunpack.c.h.b16 %v245
    %v1148 = vunpack.c.l.b16 %v246
    %v1149 = vunpack.c.h.b16 %v246
    %v1150 = vunpack.c.l.b16 %v247
    %v1151 = vunpack.c.h.b16 %v247
    %v1152 = vunpack.c.l.b16 %v248
    %v1153 = vunpack.c.h.b16 %v248
    %v1154 = vunpack.c.l.b16 %v249
    %v1155 = vunpack.c.h.b16 %v249
    %v1156 = vunpack.c.l.b16 %v250
    %v1157 = vunpack.c.h.b16 %v250
    %v1158 = vunpack.c.l.b16 %v251
    %v1159 = vunpack.c.h.b16 %v251
    %v1160 = vunpack.c.l.b16 %v252
    %v1161 = vunpack.c.h.b16 %v252
    %v1162 = vunpack.c.l.b16 %v253
    %v1163 = vunpack.c.h.b16 %v253
    %v1164 = vunpack.c.l.b16 %v254
    %v1165 = vunpack.c.h.b16 %v254
    %v1166 = vunpack.c.l.b16 %v255
    %v1167 = vunpack.c.h.b16 %v255
    %v1168 = vunpack.c.l.b16 %v256
    %v1169 = vunpack.c.h.b16 %v256
    %v1170 = vunpack.c.l.b16 %v257
    %v1171 = vunpack.c.h.b16 %v257
    %v1172 = vunpack.c.l.b16 %v258
    %v1173 = vunpack.c.h.b16 %v258
    %v1174 = vunpack.c.l.b16 %v259
    %v1175 = vunpack.c.h.b16 %v259
    %v1176 = vunpack.c.l.b16 %v260
    %v1177 = vunpack.c.h.b16 %v260
    %v1178 = vunpack.c.l.b16 %v261
    %v1179 = vunpack.c.h.b16 %v261
    %v1180 = vunpack.c.l.b16 %v262
    %v1181 = vunpack.c.h.b16 %v262
    %v1182 = vunpack.c.l.b16 %v263
    %v1183 = vunpack.c.h.b16 %v263
    %v1184 = vunpack.c.l.b16 %v264
    %v1185 = vunpack.c.h.b16 %v264
    %v1186 = vunpack.c.l.b16 %v265
    %v1187 = vunpack.c.h.b16 %v265
    %v1188 = vunpack.c.l.b16 %v266
    %v1189 = vunpack.c.h.b16 %v266
    %v1190 = vunpack.c.l.b16 %v267
    %v1191 = vunpack.c.h.b16 %v267
    %v1192 = vunpack.c.l.b16 %v268
    %v1193 = vunpack.c.h.b16 %v268
    %v1194 = vunpack.c.l.b16 %v269
    %v1195 = vunpack.c.h.b16 %v269
    %v1196 = vunpack.c.l.b16 %v270
    %v1197 = vunpack.c.h.b16 %v270
    %v1198 = vunpack.c.l.b16 %v271
    %v1199 = vunpack.c.h.b16 %v271
    %v1200 = vunpack.c.l.b16 %v272
    %v1201 = vunpack.c.h.b16 %v272
    %v1202 = vunpack.c.l.b16 %v273
    %v1203 = vunpack.c.h.b16 %v273
    %v1204 = vunpack.c.l.b16 %v274
    %v1205 = vunpack.c.h.b16 %v274
    %v1206 = vunpack.c.l.b16 %v275
    %v1207 = vunpack.c.h.b16 %v275
    %v1208 = vunpack.c.l.b16 %v276
    %v1209 = vunpack.c.h.b16 %v276
    %v1210 = vunpack.c.l.b16 %v277
    %v1211 = vunpack.c.h.b16 %v277
    %v1212 = vunpack.c.l.b16 %v278
    %v1213 = vunpack.c.h.b16 %v278
    %v1214 = vunpack.c.l.b16 %v279
    %v1215 = vunpack.c.h.b16 %v279
    %v1216 = vunpack.c.l.b16 %v280
    %v1217 = vunpack.c.h.b16 %v280
    %v1218 = vunpack.c.l.b16 %v281
    %v1219 = vunpack.c.h.b16 %v281
    %v1220 = vunpack.c.l.b16 %v282
    %v1221 = vunpack.c.h.b16 %v282
    %v1222 = vunpack.c.l.b16 %v283
    %v1223 = vunpack.c.h.b16 %v283
    %v1224 = vunpack.c.l.b16 %v284
    %v1225 = vunpack.c.h.b16 %v284
    %v1226 = vunpack.c.l.b16 %v285
    %v1227 = vunpack.c.h.b16 %v285
    %v1228 = vunpack.c.l.b16 %v286
    %v1229 = vunpack.c.h.b16 %v286
    %v1230 = vunpack.c.l.b16 %v287
    %v1231 = vunpack.c.h.b16 %v287
    %v1232 = vunpack.c.l.b16 %v288
    %v1233 = vunpack.c.h.b16 %v288
    %v1234 = vunpack.c.l.b16 %v289
    %v1235 = vunpack.c.h.b16 %v289
    %v1236 = vunpack.c.l.b16 %v290
    %v1237 = vunpack.c.h.b16 %v290
    %v1238 = vunpack.c.l.b16 %v291
    %v1239 = vunpack.c.h.b16 %v291
    %v1240 = vunpack.c.l.b16 %v292
    %v1241 = vunpack.c.h.b16 %v292
    %v1242 = vunpack.c.l.b16 %v293
    %v1243 = vunpack.c.h.b16 %v293
    %v1244 = vunpack.c.l.b16 %v294
    %v1245 = vunpack.c.h.b16 %v294
    %v1246 = vunpack.c.l.b16 %v295
    %v1247 = vunpack.c.h.b16 %v295
    %v1248 = vunpack.c.l.b16 %v296
    %v1249 = vunpack.c.h.b16 %v296
    %v1250 = vunpack.c.l.b16 %v297
    %v1251 = vunpack.c.h.b16 %v297
    %v1252 = vunpack.c.l.b16 %v298
    %v1253 = vunpack.c.h.b16 %v298
    %v1254 = vunpack.c.l.b16 %v299
    %v1255 = vunpack.c.h.b16 %v299
    %v1256 = vunpack.c.l.b16 %v300
    %v1257 = vunpack.c.h.b16 %v300
    %v1258 = vunpack.c.l.b16 %v301
    %v1259 = vunpack.c.h.b16 %v301
    %v1260 = vunpack.c.l.b16 %v302
    %v1261 = vunpack.c.h.b16 %v302
    %v1262 = vunpack.c.l.b16 %v303
    %v1263 = vunpack.c.h.b16 %v303
    %v1264 = vunpack.c.l.b16 %v304
    %v1265 = vunpack.c.h.b16 %v304
    %v1266 = vunpack.c.l.b16 %v305
    %v1267 = vunpack.c.h.b16 %v305
    %v1268 = vunpack.c.l.b16 %v306
    %v1269 = vunpack.c.h.b16 %v306
    %v1270 = vunpack.c.l.b16 %v307
    %v1271 = vunpack.c.h.b16 %v307
    %v1272 = vunpack.c.l.b16 %v308
    %v1273 = vunpack.c.h.b16 %v308
    %v1274 = vunpack.c.l.b16 %v309
    %v1275 = vunpack.c.h.b16 %v309
    %v1276 = vunpack.c.l.b16 %v310
    %v1277 = vunpack.c.h.b16 %v310
    %v1278 = vunpack.c.l.b16 %v311
    %v1279 = vunpack.c.h.b16 %v311
    %v1280 = vunpack.c.l.b16 %v312
    %v1281 = vunpack.c.h.b16 %v312
    %v1282 = vunpack.c.l.b16 %v313
    %v1283 = vunpack.c.h.b16 %v313
    %v1284 = vunpack.c.l.b16 %v314
    %v1285 = vunpack.c.h.b16 %v314
    %v1286 = vunpack.c.l.b16 %v315
    %v1287 = vunpack.c.h.b16 %v315
    %v1288 = vunpack.c.l.b16 %v316
    %v1289 = vunpack.c.h.b16 %v316
    %v1290 = vunpack.c.l.b16 %v317
    %v1291 = vunpack.c.h.b16 %v317
    %v1292 = vunpack.c.l.b16 %v318
    %v1293 = vunpack.c.h.b16 %v318
    %v1294 = vunpack.c.l.b16 %v319
    %v1295 = vunpack.c.h.b16 %v319
    %v1296 = vunpack.c.l.b16 %v320
    %v1297 = vunpack.c.h.b16 %v320
    %v1298 = vunpack.c.l.b16 %v321
    %v1299 = vunpack.c.h.b16 %v321
    %v1300 = vunpack.c.l.b16 %v322
    %v1301 = vunpack.c.h.b16 %v322
    %v1302 = vunpack.c.l.b16 %v323
    %v1303 = vunpack.c.h.b16 %v323
    %v1304 = vunpack.c.l.b16 %v324
    %v1305 = vunpack.c.h.b16 %v324
    %v1306 = vunpack.c.l.b16 %v325
    %v1307 = vunpack.c.h.b16 %v325
    %v1308 = vunpack.c.l.b16 %v326
    %v1309 = vunpack.c.h.b16 %v326
    %v1310 = vunpack.c.l.b16 %v327
    %v1311 = vunpack.c.h.b16 %v327
    %v1312 = vunpack.c.l.b16 %v328
    %v1313 = vunpack.c.h.b16 %v328
    %v1314 = vunpack.c.l.b16 %v329
    %v1315 = vunpack.c.h.b16 %v329
    %v1316 = vunpack.c.l.b16 %v330
    %v1317 = vunpack.c.h.b16 %v330
    %v1318 = vunpack.c.l.b16 %v331
    %v1319 = vunpack.c.h.b16 %v331
    %v1320 = vunpack.c.l.b16 %v332
    %v1321 = vunpack.c.h.b16 %v332
    %v1322 = vunpack.c.l.b16 %v333
    %v1323 = vunpack.c.h.b16 %v333
    %v1324 = vunpack.c.l.b16 %v334
    %v1325 = vunpack.c.h.b16 %v334
    %v1326 = vunpack.c.l.b16 %v335
    %v1327 = vunpack.c.h.b16 %v335
    %v1328 = vunpack.c.l.b16 %v336
    %v1329 = vunpack.c.h.b16 %v336
    %v1330 = vunpack.c.l.b16 %v337
    %v1331 = vunpack.c.h.b16 %v337
    %v1332 = vunpack.c.l.b16 %v338
    %v1333 = vunpack.c.h.b16 %v338
    %v1334 = vunpack.c.l.b16 %v339
    %v1335 = vunpack.c.h.b16 %v339
    %v1336 = vunpack.c.l.b16 %v340
    %v1337 = vunpack.c.h.b16 %v340
    %v1338 = vunpack.c.l.b16 %v341
    %v1339 = vunpack.c.h.b16 %v341
    %v1340 = vunpack.c.l.b16 %v342
    %v1341 = vunpack.c.h.b16 %v342
    %v1342 = vunpack.c.l.b16 %v343
    %v1343 = vunpack.c.h.b16 %v343
    %v1344 = vunpack.c.l.b16 %v344
    %v1345 = vunpack.c.h.b16 %v344
    %v1346 = vunpack.c.l.b16 %v345
    %v1347 = vunpack.c.h.b16 %v345
    %v1348 = vunpack.c.l.b16 %v346
    %v1349 = vunpack.c.h.b16 %v346
    %v1350 = vunpack.c.l.b16 %v347
    %v1351 = vunpack.c.h.b16 %v347
    %v1352 = vunpack.c.l.b16 %v348
    %v1353 = vunpack.c.h.b16 %v348
    %v1354 = vunpack.c.l.b16 %v349
    %v1355 = vunpack.c.h.b16 %v349
    %v1356 = vunpack.c.l.b16 %v350
    %v1357 = vunpack.c.h.b16 %v350
    %v1358 = vunpack.c.l.b16 %v351
    %v1359 = vunpack.c.h.b16 %v351
    %v1360 = vunpack.c.l.b16 %v352
    %v1361 = vunpack.c.h.b16 %v352
    %v1362 = vunpack.c.l.b16 %v353
    %v1363 = vunpack.c.h.b16 %v353
    %v1364 = vunpack.c.l.b16 %v354
    %v1365 = vunpack.c.h.b16 %v354
    %v1366 = vunpack.c.l.b16 %v355
    %v1367 = vunpack.c.h.b16 %v355
    %v1368 = vunpack.c.l.b16 %v356
    %v1369 = vunpack.c.h.b16 %v356
    %v1370 = vunpack.c.l.b16 %v357
    %v1371 = vunpack.c.h.b16 %v357
    %v1372 = vunpack.c.l.b16 %v358
    %v1373 = vunpack.c.h.b16 %v358
    %v1374 = vunpack.c.l.b16 %v359
    %v1375 = vunpack.c.h.b16 %v359
    %v1376 = vunpack.c.l.b16 %v360
    %v1377 = vunpack.c.h.b16 %v360
    %v1378 = vunpack.c.l.b16 %v361
    %v1379 = vunpack.c.h.b16 %v361
    %v1380 = vunpack.c.l.b16 %v362
    %v1381 = vunpack.c.h.b16 %v362
    %v1382 = vunpack.c.l.b16 %v363
    %v1383 = vunpack.c.h.b16 %v363
    %v1384 = vunpack.c.l.b16 %v364
    %v1385 = vunpack.c.h.b16 %v364
    %v1386 = vunpack.c.l.b16 %v365
    %v1387 = vunpack.c.h.b16 %v365
    %v1388 = vunpack.c.l.b16 %v366
    %v1389 = vunpack.c.h.b16 %v366
    %v1390 = vunpack.c.l.b16 %v367
    %v1391 = vunpack.c.h.b16 %v367
    %v1392 = vunpack.c.l.b16 %v368
    %v1393 = vunpack.c.h.b16 %v368
    %v1394 = vunpack.c.l.b16 %v369
    %v1395 = vunpack.c.h.b16 %v369
    %v1396 = vunpack.c.l.b16 %v370
    %v1397 = vunpack.c.h.b16 %v370
    %v1398 = vunpack.c.l.b16 %v371
    %v1399 = vunpack.c.h.b16 %v371
    %v1400 = vunpack.c.l.b16 %v372
    %v1401 = vunpack.c.h.b16 %v372
    %v1402 = vunpack.c.l.b16 %v373
    %v1403 = vunpack.c.h.b16 %v373
    %v1404 = vunpack.c.l.b16 %v374
    %v1405 = vunpack.c.h.b16 %v374
    %v1406 = vunpack.c.l.b16 %v375
    %v1407 = vunpack.c.h.b16 %v375
    %v1408 = vunpack.c.l.b16 %v376
    %v1409 = vunpack.c.h.b16 %v376
    %v1410 = vunpack.c.l.b16 %v377
    %v1411 = vunpack.c.h.b16 %v377
    %v1412 = vunpack.c.l.b16 %v378
    %v1413 = vunpack.c.h.b16 %v378
    %v1414 = vunpack.c.l.b16 %v379
    %v1415 = vunpack.c.h.b16 %v379
    %v1416 = vunpack.c.l.b16 %v380
    %v1417 = vunpack.c.h.b16 %v380
    %v1418 = vunpack.c.l.b16 %v381
    %v1419 = vunpack.c.h.b16 %v381
    %v1420 = vunpack.c.l.b16 %v382
    %v1421 = vunpack.c.h.b16 %v382
    %v1422 = vunpack.c.l.b16 %v383
    %v1423 = vunpack.c.h.b16 %v383
    %v1424 = vunpack.c.l.b16 %v384
    %v1425 = vunpack.c.h.b16 %v384
    %v1426 = vunpack.c.l.b16 %v385
    %v1427 = vunpack.c.h.b16 %v385
    %v1428 = vunpack.c.l.b16 %v386
    %v1429 = vunpack.c.h.b16 %v386
    %v1430 = vunpack.c.l.b16 %v387
    %v1431 = vunpack.c.h.b16 %v387
    %v1432 = vunpack.c.l.b16 %v388
    %v1433 = vunpack.c.h.b16 %v388
    %v1434 = vunpack.c.l.b16 %v389
    %v1435 = vunpack.c.h.b16 %v389
    %v1436 = vunpack.c.l.b16 %v390
    %v1437 = vunpack.c.h.b16 %v390
    %v1438 = vunpack.c.l.b16 %v391
    %v1439 = vunpack.c.h.b16 %v391
    %v1440 = vunpack.c.l.b16 %v392
    %v1441 = vunpack.c.h.b16 %v392
    %v1442 = vunpack.c.l.b16 %v393
    %v1443 = vunpack.c.h.b16 %v393
    %v1444 = vunpack.c.l.b16 %v394
    %v1445 = vunpack.c.h.b16 %v394
    %v1446 = vunpack.c.l.b16 %v395
    %v1447 = vunpack.c.h.b16 %v395
    %v1448 = vunpack.c.l.b16 %v396
    %v1449 = vunpack.c.h.b16 %v396
    %v1450 = vunpack.c.l.b16 %v397
    %v1451 = vunpack.c.h.b16 %v397
    %v1452 = vunpack.c.l.b16 %v398
    %v1453 = vunpack.c.h.b16 %v398
    %v1454 = vunpack.c.l.b16 %v399
    %v1455 = vunpack.c.h.b16 %v399
    %v1456 = vunpack.c.l.b16 %v400
    %v1457 = vunpack.c.h.b16 %v400
    %v1458 = vunpack.c.l.b16 %v401
    %v1459 = vunpack.c.h.b16 %v401
    %v1460 = vunpack.c.l.b16 %v402
    %v1461 = vunpack.c.h.b16 %v402
    %v1462 = vunpack.c.l.b16 %v403
    %v1463 = vunpack.c.h.b16 %v403
    %v1464 = vunpack.c.l.b16 %v404
    %v1465 = vunpack.c.h.b16 %v404
    %v1466 = vunpack.c.l.b16 %v405
    %v1467 = vunpack.c.h.b16 %v405
    %v1468 = vunpack.c.l.b16 %v406
    %v1469 = vunpack.c.h.b16 %v406
    %v1470 = vunpack.c.l.b16 %v407
    %v1471 = vunpack.c.h.b16 %v407
    %v1472 = vunpack.c.l.b16 %v408
    %v1473 = vunpack.c.h.b16 %v408
    %v1474 = vunpack.c.l.b16 %v409
    %v1475 = vunpack.c.h.b16 %v409
    %v1476 = vunpack.c.l.b16 %v410
    %v1477 = vunpack.c.h.b16 %v410
    %v1478 = vunpack.c.l.b16 %v411
    %v1479 = vunpack.c.h.b16 %v411
    %v1480 = vunpack.c.l.b16 %v412
    %v1481 = vunpack.c.h.b16 %v412
    %v1482 = vunpack.c.l.b16 %v413
    %v1483 = vunpack.c.h.b16 %v413
    %v1484 = vunpack.c.l.b16 %v414
    %v1485 = vunpack.c.h.b16 %v414
    %v1486 = vunpack.c.l.b16 %v415
    %v1487 = vunpack.c.h.b16 %v415
    %v1488 = vunpack.c.l.b16 %v416
    %v1489 = vunpack.c.h.b16 %v416
    %v1490 = vunpack.c.l.b16 %v417
    %v1491 = vunpack.c.h.b16 %v417
    %v1492 = vunpack.c.l.b16 %v418
    %v1493 = vunpack.c.h.b16 %v418
    %v1494 = vunpack.c.l.b16 %v419
    %v1495 = vunpack.c.h.b16 %v419
    %v1496 = vunpack.c.l.b16 %v420
    %v1497 = vunpack.c.h.b16 %v420
    %v1498 = vunpack.c.l.b16 %v421
    %v1499 = vunpack.c.h.b16 %v421
    %v1500 = vunpack.c.l.b16 %v422
    %v1501 = vunpack.c.h.b16 %v422
    %v1502 = vunpack.c.l.b16 %v423
    %v1503 = vunpack.c.h.b16 %v423
    %v1504 = vunpack.c.l.b16 %v424
    %v1505 = vunpack.c.h.b16 %v424
    %v1506 = vunpack.c.l.b16 %v425
    %v1507 = vunpack.c.h.b16 %v425
    %v1508 = vunpack.c.l.b16 %v426
    %v1509 = vunpack.c.h.b16 %v426
    %v1510 = vunpack.c.l.b16 %v427
    %v1511 = vunpack.c.h.b16 %v427
    %v1512 = vunpack.c.l.b16 %v428
    %v1513 = vunpack.c.h.b16 %v428
    %v1514 = vunpack.c.l.b16 %v429
    %v1515 = vunpack.c.h.b16 %v429
    %v1516 = vunpack.c.l.b16 %v430
    %v1517 = vunpack.c.h.b16 %v430
    %v1518 = vunpack.c.l.b16 %v431
    %v1519 = vunpack.c.h.b16 %v431
    %v1520 = vunpack.c.l.b16 %v432
    %v1521 = vunpack.c.h.b16 %v432
    %v1522 = vunpack.c.l.b16 %v433
    %v1523 = vunpack.c.h.b16 %v433
    %v1524 = vunpack.c.l.b16 %v434
    %v1525 = vunpack.c.h.b16 %v434
    %v1526 = vunpack.c.l.b16 %v435
    %v1527 = vunpack.c.h.b16 %v435
    %v1528 = vunpack.c.l.b16 %v436
    %v1529 = vunpack.c.h.b16 %v436
    %v1530 = vunpack.c.l.b16 %v437
    %v1531 = vunpack.c.h.b16 %v437
    %v1532 = vunpack.c.l.b16 %v438
    %v1533 = vunpack.c.h.b16 %v438
    %v1534 = vunpack.c.l.b16 %v439
    %v1535 = vunpack.c.h.b16 %v439
    %v1536 = vunpack.c.l.b16 %v440
    %v1537 = vunpack.c.h.b16 %v440
    %v1538 = vunpack.c.l.b16 %v441
    %v1539 = vunpack.c.h.b16 %v441
    %v1540 = vunpack.c.l.b16 %v442
    %v1541 = vunpack.c.h.b16 %v442
    %v1542 = vunpack.c.l.b16 %v443
    %v1543 = vunpack.c.h.b16 %v443
    %v1544 = vunpack.c.l.b16 %v444
    %v1545 = vunpack.c.h.b16 %v444
    %v1546 = vunpack.c.l.b16 %v445
    %v1547 = vunpack.c.h.b16 %v445
    %v1548 = vunpack.c.l.b16 %v446
    %v1549 = vunpack.c.h.b16 %v446
    %v1550 = vunpack.c.l.b16 %v447
    %v1551 = vunpack.c.h.b16 %v447
    %v1552 = vunpack.c.l.b16 %v448
    %v1553 = vunpack.c.h.b16 %v448
    %v1554 = vunpack.c.l.b16 %v449
    %v1555 = vunpack.c.h.b16 %v449
    %v1556 = vunpack.c.l.b16 %v450
    %v1557 = vunpack.c.h.b16 %v450
    %v1558 = vunpack.c.l.b16 %v451
    %v1559 = vunpack.c.h.b16 %v451
    %v1560 = vunpack.c.l.b16 %v452
    %v1561 = vunpack.c.h.b16 %v452
    %v1562 = vunpack.c.l.b16 %v453
    %v1563 = vunpack.c.h.b16 %v453
    %v1564 = vunpack.c.l.b16 %v454
    %v1565 = vunpack.c.h.b16 %v454
    %v1566 = vunpack.c.l.b16 %v455
    %v1567 = vunpack.c.h.b16 %v455
    %v1568 = vunpack.c.l.b16 %v456
    %v1569 = vunpack.c.h.b16 %v456
    %v1570 = vunpack.c.l.b16 %v457
    %v1571 = vunpack.c.h.b16 %v457
    %v1572 = vunpack.c.l.b16 %v458
    %v1573 = vunpack.c.h.b16 %v458
    %v1574 = vunpack.c.l.b16 %v459
    %v1575 = vunpack.c.h.b16 %v459
    %v1576 = vunpack.c.l.b16 %v460
    %v1577 = vunpack.c.h.b16 %v460
    %v1578 = vunpack.c.l.b16 %v461
    %v1579 = vunpack.c.h.b16 %v461
    %v1580 = vunpack.c.l.b16 %v462
    %v1581 = vunpack.c.h.b16 %v462
    %v1582 = vunpack.c.l.b16 %v463
    %v1583 = vunpack.c.h.b16 %v463
    %v1584 = vunpack.c.l.b16 %v464
    %v1585 = vunpack.c.h.b16 %v464
    %v1586 = vunpack.c.l.b16 %v465
    %v1587 = vunpack.c.h.b16 %v465
    %v1588 = vunpack.c.l.b16 %v466
    %v1589 = vunpack.c.h.b16 %v466
    %v1590 = vunpack.c.l.b16 %v467
    %v1591 = vunpack.c.h.b16 %v467
    %v1592 = vunpack.c.l.b16 %v468
    %v1593 = vunpack.c.h.b16 %v468
    %v1594 = vunpack.c.l.b16 %v469
    %v1595 = vunpack.c.h.b16 %v469
    %v1596 = vunpack.c.l.b16 %v470
    %v1597 = vunpack.c.h.b16 %v470
    %v1598 = vunpack.c.l.b16 %v471
    %v1599 = vunpack.c.h.b16 %v471
    %v1600 = vunpack.c.l.b16 %v472
    %v1601 = vunpack.c.h.b16 %v472
    %v1602 = vunpack.c.l.b16 %v473
    %v1603 = vunpack.c.h.b16 %v473
    %v1604 = vunpack.c.l.b16 %v474
    %v1605 = vunpack.c.h.b16 %v474
    %v1606 = vunpack.c.l.b16 %v475
    %v1607 = vunpack.c.h.b16 %v475
    %v1608 = vunpack.c.l.b16 %v476
    %v1609 = vunpack.c.h.b16 %v476
    %v1610 = vunpack.c.l.b16 %v477
    %v1611 = vunpack.c.h.b16 %v477
    %v1612 = vunpack.c.l.b16 %v478
    %v1613 = vunpack.c.h.b16 %v478
    %v1614 = vunpack.c.l.b16 %v479
    %v1615 = vunpack.c.h.b16 %v479
    %v1616 = vunpack.c.l.b16 %v480
    %v1617 = vunpack.c.h.b16 %v480
    %v1618 = vunpack.c.l.b16 %v481
    %v1619 = vunpack.c.h.b16 %v481
    %v1620 = vunpack.c.l.b16 %v482
    %v1621 = vunpack.c.h.b16 %v482
    %v1622 = vunpack.c.l.b16 %v483
    %v1623 = vunpack.c.h.b16 %v483
    %v1624 = vunpack.c.l.b16 %v484
    %v1625 = vunpack.c.h.b16 %v484
    %v1626 = vunpack.c.l.b16 %v485
    %v1627 = vunpack.c.h.b16 %v485
    %v1628 = vunpack.c.l.b16 %v486
    %v1629 = vunpack.c.h.b16 %v486
    %v1630 = vunpack.c.l.b16 %v487
    %v1631 = vunpack.c.h.b16 %v487
    %v1632 = vunpack.c.l.b16 %v488
    %v1633 = vunpack.c.h.b16 %v488
    %v1634 = vunpack.c.l.b16 %v489
    %v1635 = vunpack.c.h.b16 %v489
    %v1636 = vunpack.c.l.b16 %v490
    %v1637 = vunpack.c.h.b16 %v490
    %v1638 = vunpack.c.l.b16 %v491
    %v1639 = vunpack.c.h.b16 %v491
    %v1640 = vunpack.c.l.b16 %v492
    %v1641 = vunpack.c.h.b16 %v492
    %v1642 = vunpack.c.l.b16 %v493
    %v1643 = vunpack.c.h.b16 %v493
    %v1644 = vunpack.c.l.b16 %v494
    %v1645 = vunpack.c.h.b16 %v494
    %v1646 = vunpack.c.l.b16 %v495
    %v1647 = vunpack.c.h.b16 %v495
    %v1648 = vunpack.c.l.b16 %v496
    %v1649 = vunpack.c.h.b16 %v496
    %v1650 = vunpack.c.l.b16 %v497
    %v1651 = vunpack.c.h.b16 %v497
    %v1652 = vunpack.c.l.b16 %v498
    %v1653 = vunpack.c.h.b16 %v498
    %v1654 = vunpack.c.l.b16 %v499
    %v1655 = vunpack.c.h.b16 %v499
    %v1656 = vunpack.c.l.b16 %v500
    %v1657 = vunpack.c.h.b16 %v500
    %v1658 = vunpack.c.l.b16 %v501
    %v1659 = vunpack.c.h.b16 %v501
    %v1660 = vunpack.c.l.b16 %v502
    %v1661 = vunpack.c.h.b16 %v502
    %v1662 = vunpack.c.l.b16 %v503
    %v1663 = vunpack.c.h.b16 %v503
    %v1664 = vunpack.c.l.b16 %v504
    %v1665 = vunpack.c.h.b16 %v504
    %v1666 = vunpack.c.l.b16 %v505
    %v1667 = vunpack.c.h.b16 %v505
    %v1668 = vunpack.c.l.b16 %v506
    %v1669 = vunpack.c.h.b16 %v506
    %v1670 = vunpack.c.l.b16 %v507
    %v1671 = vunpack.c.h.b16 %v507
    %v1672 = vunpack.c.l.b16 %v508
    %v1673 = vunpack.c.h.b16 %v508
    %v1674 = vpack.c.b16 %v918, %v906
    %v1675 = vpack.c.b16 %v919, %v907
    %v1676 = vpack.c.b16 %v920, %v908
    %v1677 = vpack.c.b16 %v921, %v909
    %v1678 = vpack.c.b16 %v922, %v910
    %v1679 = vpack.c.b16 %v923, %v911
    %v1680 = vpack.c.b16 %v924, %v912
    %v1681 = vpack.c.b16 %v925, %v913
    %v1682 = vpack.c.b16 %v926, %v914
    %v1683 = vpack.c.b16 %v927, %v915
    %v1684 = vpack.c.b16 %v928, %v916
    %v1685 = vpack.c.b16 %v929, %v917
    %v1686 = vpack.c.b16 %v942, %v930
    %v1687 = vpack.c.b16 %v943, %v931
    %v1688 = vpack.c.b16 %v944, %v932
    %v1689 = vpack.c.b16 %v945, %v933
    %v1690 = vpack.c.b16 %v946, %v934
    %v1691 = vpack.c.b16 %v947, %v935
    %v1692 = vpack.c.b16 %v948, %v936
    %v1693 = vpack.c.b16 %v949, %v937
    %v1694 = vpack.c.b16 %v950, %v938
    %v1695 = vpack.c.b16 %v951, %v939
    %v1696 = vpack.c.b16 %v952, %v940
    %v1697 = vpack.c.b16 %v953, %v941
    %v1698 = vpack.c.b16 %v966, %v954
    %v1699 = vpack.c.b16 %v967, %v955
    %v1700 = vpack.c.b16 %v968, %v956
    %v1701 = vpack.c.b16 %v969, %v957
    %v1702 = vpack.c.b16 %v970, %v958
    %v1703 = vpack.c.b16 %v971, %v959
    %v1704 = vpack.c.b16 %v972, %v960
    %v1705 = vpack.c.b16 %v973, %v961
    %v1706 = vpack.c.b16 %v974, %v962
    %v1707 = vpack.c.b16 %v975, %v963
    %v1708 = vpack.c.b16 %v976, %v964
    %v1709 = vpack.c.b16 %v977, %v965
    %v1710 = vpack.c.b16 %v990, %v978
    %v1711 = vpack.c.b16 %v991, %v979
    %v1712 = vpack.c.b16 %v992, %v980
    %v1713 = vpack.c.b16 %v993, %v981
    %v1714 = vpack.c.b16 %v994, %v982
    %v1715 = vpack.c.b16 %v995, %v983
    %v1716 = vpack.c.b16 %v996, %v984
    %v1717 = vpack.c.b16 %v997, %v985
    %v1718 = vpack.c.b16 %v998, %v986
    %v1719 = vpack.c.b16 %v999, %v987
    %v1720 = vpack.c.b16 %v1000, %v988
    %v1721 = vpack.c.b16 %v1001, %v989
    %v1722 = vpack.c.b16 %v1014, %v1002
    %v1723 = vpack.c.b16 %v1015, %v1003
    %v1724 = vpack.c.b16 %v1016, %v1004
    %v1725 = vpack.c.b16 %v1017, %v1005
    %v1726 = vpack.c.b16 %v1018, %v1006
    %v1727 = vpack.c.b16 %v1019, %v1007
    %v1728 = vpack.c.b16 %v1020, %v1008
    %v1729 = vpack.c.b16 %v1021, %v1009
    %v1730 = vpack.c.b16 %v1022, %v1010
    %v1731 = vpack.c.b16 %v1023, %v1011
    %v1732 = vpack.c.b16 %v1024, %v1012
    %v1733 = vpack.c.b16 %v1025, %v1013
    %v1734 = vpack.c.b16 %v1038, %v1026
    %v1735 = vpack.c.b16 %v1039, %v1027
    %v1736 = vpack.c.b16 %v1040, %v1028
    %v1737 = vpack.c.b16 %v1041, %v1029
    %v1738 = vpack.c.b16 %v1042, %v1030
    %v1739 = vpack.c.b16 %v1043, %v1031
    %v1740 = vpack.c.b16 %v1044, %v1032
    %v1741 = vpack.c.b16 %v1045, %v1033
    %v1742 = vpack.c.b16 %v1046, %v1034
    %v1743 = vpack.c.b16 %v1047, %v1035
    %v1744 = vpack.c.b16 %v1048, %v1036
    %v1745 = vpack.c.b16 %v1049, %v1037
    %v1746 = vpack.c.b16 %v1062, %v1050
    %v1747 = vpack.c.b16 %v1063, %v1051
    %v1748 = vpack.c.b16 %v1064, %v1052
    %v1749 = vpack.c.b16 %v1065, %v1053
    %v1750 = vpack.c.b16 %v1066, %v1054
    %v1751 = vpack.c.b16 %v1067, %v1055
    %v1752 = vpack.c.b16 %v1068, %v1056
    %v1753 = vpack.c.b16 %v1069, %v1057
    %v1754 = vpack.c.b16 %v1070, %v1058
    %v1755 = vpack.c.b16 %v1071, %v1059
    %v1756 = vpack.c.b16 %v1072, %v1060
    %v1757 = vpack.c.b16 %v1073, %v1061
    %v1758 = vpack.c.b16 %v1086, %v1074
    %v1759 = vpack.c.b16 %v1087, %v1075
    %v1760 = vpack.c.b16 %v1088, %v1076
    %v1761 = vpack.c.b16 %v1089, %v1077
    %v1762 = vpack.c.b16 %v1090, %v1078
    %v1763 = vpack.c.b16 %v1091, %v1079
    %v1764 = vpack.c.b16 %v1092, %v1080
    %v1765 = vpack.c.b16 %v1093, %v1081
    %v1766 = vpack.c.b16 %v1094, %v1082
    %v1767 = vpack.c.b16 %v1095, %v1083
    %v1768 = vpack.c.b16 %v1096, %v1084
    %v1769 = vpack.c.b16 %v1097, %v1085
    %v1770 = vpack.c.b16 %v1110, %v1098
    %v1771 = vpack.c.b16 %v1111, %v1099
    %v1772 = vpack.c.b16 %v1112, %v1100
    %v1773 = vpack.c.b16 %v1113, %v1101
    %v1774 = vpack.c.b16 %v1114, %v1102
    %v1775 = vpack.c.b16 %v1115, %v1103
    %v1776 = vpack.c.b16 %v1116, %v1104
    %v1777 = vpack.c.b16 %v1117, %v1105
    %v1778 = vpack.c.b16 %v1118, %v1106
    %v1779 = vpack.c.b16 %v1119, %v1107
    %v1780 = vpack.c.b16 %v1120, %v1108
    %v1781 = vpack.c.b16 %v1121, %v1109
    %v1782 = vpack.c.b16 %v1134, %v1122
    %v1783 = vpack.c.b16 %v1135, %v1123
    %v1784 = vpack.c.b16 %v1136, %v1124
    %v1785 = vpack.c.b16 %v1137, %v1125
    %v1786 = vpack.c.b16 %v1138, %v1126
    %v1787 = vpack.c.b16 %v1139, %v1127
    %v1788 = vpack.c.b16 %v1140, %v1128
    %v1789 = vpack.c.b16 %v1141, %v1129
    %v1790 = vpack.c.b16 %v1142, %v1130
    %v1791 = vpack.c.b16 %v1143, %v1131
    %v1792 = vpack.c.b16 %v1144, %v1132
    %v1793 = vpack.c.b16 %v1145, %v1133
    %v1794 = vpack.c.b16 %v1158, %v1146
    %v1795 = vpack.c.b16 %v1159, %v1147
    %v1796 = vpack.c.b16 %v1160, %v1148
    %v1797 = vpack.c.b16 %v1161, %v1149
    %v1798 = vpack.c.b16 %v1162, %v1150
    %v1799 = vpack.c.b16 %v1163, %v1151
    %v1800 = vpack.c.b16 %v1164, %v1152
    %v1801 = vpack.c.b16 %v1165, %v1153
    %v1802 = vpack.c.b16 %v1166, %v1154
    %v1803 = vpack.c.b16 %v1167, %v1155
    %v1804 = vpack.c.b16 %v1168, %v1156
    %v1805 = vpack.c.b16 %v1169, %v1157
    %v1806 = vpack.c.b16 %v1182, %v1170
    %v1807 = vpack.c.b16 %v1183, %v1171
    %v1808 = vpack.c.b16 %v1184, %v1172
    %v1809 = vpack.c.b16 %v1185, %v1173
    %v1810 = vpack.c.b16 %v1186, %v1174
    %v1811 = vpack.c.b16 %v1187, %v1175
    %v1812 = vpack.c.b16 %v1188, %v1176
    %v1813 = vpack.c.b16 %v1189, %v1177
    %v1814 = vpack.c.b16 %v1190, %v1178
    %v1815 = vpack.c.b16 %v1191, %v1179
    %v1816 = vpack.c.b16 %v1192, %v1180
    %v1817 = vpack.c.b16 %v1193, %v1181
    %v1818 = vpack.c.b16 %v1206, %v1194
    %v1819 = vpack.c.b16 %v1207, %v1195
    %v1820 = vpack.c.b16 %v1208, %v1196
    %v1821 = vpack.c.b16 %v1209, %v1197
    %v1822 = vpack.c.b16 %v1210, %v1198
    %v1823 = vpack.c.b16 %v1211, %v1199
    %v1824 = vpack.c.b16 %v1212, %v1200
    %v1825 = vpack.c.b16 %v1213, %v1201
    %v1826 = vpack.c.b16 %v1214, %v1202
    %v1827 = vpack.c.b16 %v1215, %v1203
    %v1828 = vpack.c.b16 %v1216, %v1204
    %v1829 = vpack.c.b16 %v1217, %v1205
    %v1830 = vpack.c.b16 %v1230, %v1218
    %v1831 = vpack.c.b16 %v1231, %v1219
    %v1832 = vpack.c.b16 %v1232, %v1220
    %v1833 = vpack.c.b16 %v1233, %v1221
    %v1834 = vpack.c.b16 %v1234, %v1222
    %v1835 = vpack.c.b16 %v1235, %v1223
    %v1836 = vpack.c.b16 %v1236, %v1224
    %v1837 = vpack.c.b16 %v1237, %v1225
    %v1838 = vpack.c.b16 %v1238, %v1226
    %v1839 = vpack.c.b16 %v1239, %v1227
    %v1840 = vpack.c.b16 %v1240, %v1228
    %v1841 = vpack.c.b16 %v1241, %v1229
    %v1842 = vpack.c.b16 %v1254, %v1242
    %v1843 = vpack.c.b16 %v1255, %v1243
    %v1844 = vpack.c.b16 %v1256, %v1244
    %v1845 = vpack.c.b16 %v1257, %v1245
    %v1846 = vpack.c.b16 %v1258, %v1246
    %v1847 = vpack.c.b16 %v1259, %v1247
    %v1848 = vpack.c.b16 %v1260, %v1248
    %v1849 = vpack.c.b16 %v1261, %v1249
    %v1850 = vpack.c.b16 %v1262, %v1250
    %v1851 = vpack.c.b16 %v1263, %v1251
    %v1852 = vpack.c.b16 %v1264, %v1252
    %v1853 = vpack.c.b16 %v1265, %v1253
    %v1854 = vpack.c.b16 %v1278, %v1266
    %v1855 = vpack.c.b16 %v1279, %v1267
    %v1856 = vpack.c.b16 %v1280, %v1268
    %v1857 = vpack.c.b16 %v1281, %v1269
    %v1858 = vpack.c.b16 %v1282, %v1270
    %v1859 = vpack.c.b16 %v1283, %v1271
    %v1860 = vpack.c.b16 %v1284, %v1272
    %v1861 = vpack.c.b16 %v1285, %v1273
    %v1862 = vpack.c.b16 %v1286, %v1274
    %v1863 = vpack.c.b16 %v1287, %v1275
    %v1864 = vpack.c.b16 %v1288, %v1276
    %v1865 = vpack.c.b16 %v1289, %v1277
    %v1866 = vpack.c.b16 %v1302, %v1290
    %v1867 = vpack.c.b16 %v1303, %v1291
    %v1868 = vpack.c.b16 %v1304, %v1292
    %v1869 = vpack.c.b16 %v1305, %v1293
    %v1870 = vpack.c.b16 %v1306, %v1294
    %v1871 = vpack.c.b16 %v1307, %v1295
    %v1872 = vpack.c.b16 %v1308, %v1296
    %v1873 = vpack.c.b16 %v1309, %v1297
    %v1874 = vpack.c.b16 %v1310, %v1298
    %v1875 = vpack.c.b16 %v1311, %v1299
    %v1876 = vpack.c.b16 %v1312, %v1300
    %v1877 = vpack.c.b16 %v1313, %v1301
    %v1878 = vpack.c.b16 %v1326, %v1314
    %v1879 = vpack.c.b16 %v1327, %v1315
    %v1880 = vpack.c.b16 %v1328, %v1316
    %v1881 = vpack.c.b16 %v1329, %v1317
    %v1882 = vpack.c.b16 %v1330, %v1318
    %v1883 = vpack.c.b16 %v1331, %v1319
    %v1884 = vpack.c.b16 %v1332, %v1320
    %v1885 = vpack.c.b16 %v1333, %v1321
    %v1886 = vpack.c.b16 %v1334, %v1322
    %v1887 = vpack.c.b16 %v1335, %v1323
    %v1888 = vpack.c.b16 %v1336, %v1324
    %v1889 = vpack.c.b16 %v1337, %v1325
    %v1890 = vpack.c.b16 %v1350, %v1338
    %v1891 = vpack.c.b16 %v1351, %v1339
    %v1892 = vpack.c.b16 %v1352, %v1340
    %v1893 = vpack.c.b16 %v1353, %v1341
    %v1894 = vpack.c.b16 %v1354, %v1342
    %v1895 = vpack.c.b16 %v1355, %v1343
    %v1896 = vpack.c.b16 %v1356, %v1344
    %v1897 = vpack.c.b16 %v1357, %v1345
    %v1898 = vpack.c.b16 %v1358, %v1346
    %v1899 = vpack.c.b16 %v1359, %v1347
    %v1900 = vpack.c.b16 %v1360, %v1348
    %v1901 = vpack.c.b16 %v1361, %v1349
    %v1902 = vpack.c.b16 %v1374, %v1362
    %v1903 = vpack.c.b16 %v1375, %v1363
    %v1904 = vpack.c.b16 %v1376, %v1364
    %v1905 = vpack.c.b16 %v1377, %v1365
    %v1906 = vpack.c.b16 %v1378, %v1366
    %v1907 = vpack.c.b16 %v1379, %v1367
    %v1908 = vpack.c.b16 %v1380, %v1368
    %v1909 = vpack.c.b16 %v1381, %v1369
    %v1910 = vpack.c.b16 %v1382, %v1370
    %v1911 = vpack.c.b16 %v1383, %v1371
    %v1912 = vpack.c.b16 %v1384, %v1372
    %v1913 = vpack.c.b16 %v1385, %v1373
    %v1914 = vpack.c.b16 %v1398, %v1386
    %v1915 = vpack.c.b16 %v1399, %v1387
    %v1916 = vpack.c.b16 %v1400, %v1388
    %v1917 = vpack.c.b16 %v1401, %v1389
    %v1918 = vpack.c.b16 %v1402, %v1390
    %v1919 = vpack.c.b16 %v1403, %v1391
    %v1920 = vpack.c.b16 %v1404, %v1392
    %v1921 = vpack.c.b16 %v1405, %v1393
    %v1922 = vpack.c.b16 %v1406, %v1394
    %v1923 = vpack.c.b16 %v1407, %v1395
    %v1924 = vpack.c.b16 %v1408, %v1396
    %v1925 = vpack.c.b16 %v1409, %v1397
    %v1926 = vpack.c.b16 %v1422, %v1410
    %v1927 = vpack.c.b16 %v1423, %v1411
    %v1928 = vpack.c.b16 %v1424, %v1412
    %v1929 = vpack.c.b16 %v1425, %v1413
    %v1930 = vpack.c.b16 %v1426, %v1414
    %v1931 = vpack.c.b16 %v1427, %v1415
    %v1932 = vpack.c.b16 %v1428, %v1416
    %v1933 = vpack.c.b16 %v1429, %v1417
    %v1934 = vpack.c.b16 %v1430, %v1418
    %v1935 = vpack.c.b16 %v1431, %v1419
    %v1936 = vpack.c.b16 %v1432, %v1420
    %v1937 = vpack.c.b16 %v1433, %v1421
    %v1938 = vpack.c.b16 %v1446, %v1434
    %v1939 = vpack.c.b16 %v1447, %v1435
    %v1940 = vpack.c.b16 %v1448, %v1436
    %v1941 = vpack.c.b16 %v1449, %v1437
    %v1942 = vpack.c.b16 %v1450, %v1438
    %v1943 = vpack.c.b16 %v1451, %v1439
    %v1944 = vpack.c.b16 %v1452, %v1440
    %v1945 = vpack.c.b16 %v1453, %v1441
    %v1946 = vpack.c.b16 %v1454, %v1442
    %v1947 = vpack.c.b16 %v1455, %v1443
    %v1948 = vpack.c.b16 %v1456, %v1444
    %v1949 = vpack.c.b16 %v1457, %v1445
    %v1950 = vpack.c.b16 %v1470, %v1458
    %v1951 = vpack.c.b16 %v1471, %v1459
    %v1952 = vpack.c.b16 %v1472, %v1460
    %v1953 = vpack.c.b16 %v1473, %v1461
    %v1954 = vpack.c.b16 %v1474, %v1462
    %v1955 = vpack.c.b16 %v1475, %v1463
    %v1956 = vpack.c.b16 %v1476, %v1464
    %v1957 = vpack.c.b16 %v1477, %v1465
    %v1958 = vpack.c.b16 %v1478, %v1466
    %v1959 = vpack.c.b16 %v1479, %v1467
    %v1960 = vpack.c.b16 %v1480, %v1468
    %v1961 = vpack.c.b16 %v1481, %v1469
    %v1962 = vpack.c.b16 %v1494, %v1482
    %v1963 = vpack.c.b16 %v1495, %v1483
    %v1964 = vpack.c.b16 %v1496, %v1484
    %v1965 = vpack.c.b16 %v1497, %v1485
    %v1966 = vpack.c.b16 %v1498, %v1486
    %v1967 = vpack.c.b16 %v1499, %v1487
    %v1968 = vpack.c.b16 %v1500, %v1488
    %v1969 = vpack.c.b16 %v1501, %v1489
    %v1970 = vpack.c.b16 %v1502, %v1490
    %v1971 = vpack.c.b16 %v1503, %v1491
    %v1972 = vpack.c.b16 %v1504, %v1492
    %v1973 = vpack.c.b16 %v1505, %v1493
    %v1974 = vpack.c.b16 %v1518, %v1506
    %v1975 = vpack.c.b16 %v1519, %v1507
    %v1976 = vpack.c.b16 %v1520, %v1508
    %v1977 = vpack.c.b16 %v1521, %v1509
    %v1978 = vpack.c.b16 %v1522, %v1510
    %v1979 = vpack.c.b16 %v1523, %v1511
    %v1980 = vpack.c.b16 %v1524, %v1512
    %v1981 = vpack.c.b16 %v1525, %v1513
    %v1982 = vpack.c.b16 %v1526, %v1514
    %v1983 = vpack.c.b16 %v1527, %v1515
    %v1984 = vpack.c.b16 %v1528, %v1516
    %v1985 = vpack.c.b16 %v1529, %v1517
    %v1986 = vpack.c.b16 %v1542, %v1530
    %v1987 = vpack.c.b16 %v1543, %v1531
    %v1988 = vpack.c.b16 %v1544, %v1532
    %v1989 = vpack.c.b16 %v1545, %v1533
    %v1990 = vpack.c.b16 %v1546, %v1534
    %v1991 = vpack.c.b16 %v1547, %v1535
    %v1992 = vpack.c.b16 %v1548, %v1536
    %v1993 = vpack.c.b16 %v1549, %v1537
    %v1994 = vpack.c.b16 %v1550, %v1538
    %v1995 = vpack.c.b16 %v1551, %v1539
    %v1996 = vpack.c.b16 %v1552, %v1540
    %v1997 = vpack.c.b16 %v1553, %v1541
    %v1998 = vpack.c.b16 %v1566, %v1554
    %v1999 = vpack.c.b16 %v1567, %v1555
    %v2000 = vpack.c.b16 %v1568, %v1556
    %v2001 = vpack.c.b16 %v1569, %v1557
    %v2002 = vpack.c.b16 %v1570, %v1558
    %v2003 = vpack.c.b16 %v1571, %v1559
    %v2004 = vpack.c.b16 %v1572, %v1560
    %v2005 = vpack.c.b16 %v1573, %v1561
    %v2006 = vpack.c.b16 %v1574, %v1562
    %v2007 = vpack.c.b16 %v1575, %v1563
    %v2008 = vpack.c.b16 %v1576, %v1564
    %v2009 = vpack.c.b16 %v1577, %v1565
    %v2010 = vpack.c.b16 %v1590, %v1578
    %v2011 = vpack.c.b16 %v1591, %v1579
    %v2012 = vpack.c.b16 %v1592, %v1580
    %v2013 = vpack.c.b16 %v1593, %v1581
    %v2014 = vpack.c.b16 %v1594, %v1582
    %v2015 = vpack.c.b16 %v1595, %v1583
    %v2016 = vpack.c.b16 %v1596, %v1584
    %v2017 = vpack.c.b16 %v1597, %v1585
    %v2018 = vpack.c.b16 %v1598, %v1586
    %v2019 = vpack.c.b16 %v1599, %v1587
    %v2020 = vpack.c.b16 %v1600, %v1588
    %v2021 = vpack.c.b16 %v1601, %v1589
    %v2022 = vpack.c.b16 %v1614, %v1602
    %v2023 = vpack.c.b16 %v1615, %v1603
    %v2024 = vpack.c.b16 %v1616, %v1604
    %v2025 = vpack.c.b16 %v1617, %v1605
    %v2026 = vpack.c.b16 %v1618, %v1606
    %v2027 = vpack.c.b16 %v1619, %v1607
    %v2028 = vpack.c.b16 %v1620, %v1608
    %v2029 = vpack.c.b16 %v1621, %v1609
    %v2030 = vpack.c.b16 %v1622, %v1610
    %v2031 = vpack.c.b16 %v1623, %v1611
    %v2032 = vpack.c.b16 %v1624, %v1612
    %v2033 = vpack.c.b16 %v1625, %v1613
    %v2034 = vpack.c.b16 %v1638, %v1626
    %v2035 = vpack.c.b16 %v1639, %v1627
    %v2036 = vpack.c.b16 %v1640, %v1628
    %v2037 = vpack.c.b16 %v1641, %v1629
    %v2038 = vpack.c.b16 %v1642, %v1630
    %v2039 = vpack.c.b16 %v1643, %v1631
    %v2040 = vpack.c.b16 %v1644, %v1632
    %v2041 = vpack.c.b16 %v1645, %v1633
    %v2042 = vpack.c.b16 %v1646, %v1634
    %v2043 = vpack.c.b16 %v1647, %v1635
    %v2044 = vpack.c.b16 %v1648, %v1636
    %v2045 = vpack.c.b16 %v1649, %v1637
    %v2046 = vpack.c.b16 %v1662, %v1650
    %v2047 = vpack.c.b16 %v1663, %v1651
    %v2048 = vpack.c.b16 %v1664, %v1652
    %v2049 = vpack.c.b16 %v1665, %v1653
    %v2050 = vpack.c.b16 %v1666, %v1654
    %v2051 = vpack.c.b16 %v1667, %v1655
    %v2052 = vpack.c.b16 %v1668, %v1656
    %v2053 = vpack.c.b16 %v1669, %v1657
    %v2054 = vpack.c.b16 %v1670, %v1658
    %v2055 = vpack.c.b16 %v1671, %v1659
    %v2056 = vpack.c.b16 %v1672, %v1660
    %v2057 = vpack.c.b16 %v1673, %v1661
    %2442 = vmatprep.subr.bf16.mxu0 %v1675
    %2443 = vmatpush1.bf16.msra.mxu0 %v1674
    %2444 = vmatprep.subr.bf16.mxu0 %v1687
    %2445 = vmatpush1.bf16.msra.mxu0 %v1686
    %2446 = vmatprep.subr.bf16.mxu0 %v1699
    %2447 = vmatpush1.bf16.msra.mxu0 %v1698
    %2448 = vmatprep.subr.bf16.mxu0 %v1711
    %2449 = vmatpush1.bf16.msra.mxu0 %v1710
    %2450 = vmatprep.subr.bf16.mxu0 %v1723
    %2451 = vmatpush1.bf16.msra.mxu0 %v1722
    %2452 = vmatprep.subr.bf16.mxu0 %v1735
    %2453 = vmatpush1.bf16.msra.mxu0 %v1734
    %2454 = vmatprep.subr.bf16.mxu0 %v1747
    %2455 = vmatpush1.bf16.msra.mxu0 %v1746
    %2456 = vmatprep.subr.bf16.mxu0 %v1759
    %2457 = vmatpush1.bf16.msra.mxu0 %v1758
    %2458 = vmatprep.subr.bf16.mxu0 %v1771
    %2459 = vmatpush1.bf16.msra.mxu0 %v1770
    %2460 = vmatprep.subr.bf16.mxu0 %v1783
    %2461 = vmatpush1.bf16.msra.mxu0 %v1782
    %2462 = vmatprep.subr.bf16.mxu0 %v1795
    %2463 = vmatpush1.bf16.msra.mxu0 %v1794
    %2464 = vmatprep.subr.bf16.mxu0 %v1807
    %2465 = vmatpush1.bf16.msra.mxu0 %v1806
    %2466 = vmatprep.subr.bf16.mxu0 %v1819
    %2467 = vmatpush1.bf16.msra.mxu0 %v1818
    %2468 = vmatprep.subr.bf16.mxu0 %v1831
    %2469 = vmatpush1.bf16.msra.mxu0 %v1830
    %2470 = vmatprep.subr.bf16.mxu0 %v1843
    %2471 = vmatpush1.bf16.msra.mxu0 %v1842
    %2472 = vmatprep.subr.bf16.mxu0 %v1855
    %2473 = vmatpush1.bf16.msra.mxu0 %v1854
    %2474 = vmatprep.mubr.bf16.mxu0 0
    %2475 = vmatmul.mubr.bf16.gmra.mrb[0].mxu0 0
    %v2476 = vpop.f32.mrb[0].mxu0
    %v2477 = vadd.f32 0.0, %v2476
    %v2478 = vpop.f32.mrb[0].mxu0
    %v2479 = vadd.f32 0.0, %v2478
    %v2480 = vpop.f32.mrb[0].mxu0
    %v2481 = vpop.f32.mrb[0].mxu0
    %2482 = vdwg.mxu0
    %2483 = vmatprep.subr.bf16.mxu0 %v1867
    %2484 = vmatpush1.bf16.msra.mxu0 %v1866
    %2485 = vmatprep.subr.bf16.mxu0 %v1879
    %2486 = vmatpush1.bf16.msra.mxu0 %v1878
    %2487 = vmatprep.subr.bf16.mxu0 %v1891
    %2488 = vmatpush1.bf16.msra.mxu0 %v1890
    %2489 = vmatprep.subr.bf16.mxu0 %v1903
    %2490 = vmatpush1.bf16.msra.mxu0 %v1902
    %2491 = vmatprep.subr.bf16.mxu0 %v1915
    %2492 = vmatpush1.bf16.msra.mxu0 %v1914
    %2493 = vmatprep.subr.bf16.mxu0 %v1927
    %2494 = vmatpush1.bf16.msra.mxu0 %v1926
    %2495 = vmatprep.subr.bf16.mxu0 %v1939
    %2496 = vmatpush1.bf16.msra.mxu0 %v1938
    %2497 = vmatprep.subr.bf16.mxu0 %v1951
    %2498 = vmatpush1.bf16.msra.mxu0 %v1950
    %2499 = vmatprep.subr.bf16.mxu0 %v1963
    %2500 = vmatpush1.bf16.msra.mxu0 %v1962
    %2501 = vmatprep.subr.bf16.mxu0 %v1975
    %2502 = vmatpush1.bf16.msra.mxu0 %v1974
    %2503 = vmatprep.subr.bf16.mxu0 %v1987
    %2504 = vmatpush1.bf16.msra.mxu0 %v1986
    %2505 = vmatprep.subr.bf16.mxu0 %v1999
    %2506 = vmatpush1.bf16.msra.mxu0 %v1998
    %2507 = vmatprep.subr.bf16.mxu0 %v2011
    %2508 = vmatpush1.bf16.msra.mxu0 %v2010
    %2509 = vmatprep.subr.bf16.mxu0 %v2023
    %2510 = vmatpush1.bf16.msra.mxu0 %v2022
    %2511 = vmatprep.subr.bf16.mxu0 %v2035
    %2512 = vmatpush1.bf16.msra.mxu0 %v2034
    %2513 = vmatprep.subr.bf16.mxu0 %v2047
    %2514 = vmatpush1.bf16.msra.mxu0 %v2046
    %2515 = vmatprep.mubr.bf16.mxu0 0
    %2516 = vmatmul.mubr.bf16.gmra.mrb[0].mxu0 0
    %v2517 = vpop.f32.mrb[0].mxu0
    %v2518 = vadd.f32 %v2477, %v2517
    %v2519 = vpop.f32.mrb[0].mxu0
    %v2520 = vadd.f32 %v2479, %v2519
    %v2521 = vpop.f32.mrb[0].mxu0
    %v2522 = vpop.f32.mrb[0].mxu0
    %2523 = vdwg.mxu0
    %2524 = vmatprep.subr.bf16.mxu0 %v1677
    %2525 = vmatpush1.bf16.msra.mxu0 %v1676
    %2526 = vmatprep.subr.bf16.mxu0 %v1689
    %2527 = vmatpush1.bf16.msra.mxu0 %v1688
    %2528 = vmatprep.subr.bf16.mxu0 %v1701
    %2529 = vmatpush1.bf16.msra.mxu0 %v1700
    %2530 = vmatprep.subr.bf16.mxu0 %v1713
    %2531 = vmatpush1.bf16.msra.mxu0 %v1712
    %2532 = vmatprep.subr.bf16.mxu0 %v1725
    %2533 = vmatpush1.bf16.msra.mxu0 %v1724
    %2534 = vmatprep.subr.bf16.mxu0 %v1737
    %2535 = vmatpush1.bf16.msra.mxu0 %v1736
    %2536 = vmatprep.subr.bf16.mxu0 %v1749
    %2537 = vmatpush1.bf16.msra.mxu0 %v1748
    %2538 = vmatprep.subr.bf16.mxu0 %v1761
    %2539 = vmatpush1.bf16.msra.mxu0 %v1760
    %2540 = vmatprep.subr.bf16.mxu0 %v1773
    %2541 = vmatpush1.bf16.msra.mxu0 %v1772
    %2542 = vmatprep.subr.bf16.mxu0 %v1785
    %2543 = vmatpush1.bf16.msra.mxu0 %v1784
    %2544 = vmatprep.subr.bf16.mxu0 %v1797
    %2545 = vmatpush1.bf16.msra.mxu0 %v1796
    %2546 = vmatprep.subr.bf16.mxu0 %v1809
    %2547 = vmatpush1.bf16.msra.mxu0 %v1808
    %2548 = vmatprep.subr.bf16.mxu0 %v1821
    %2549 = vmatpush1.bf16.msra.mxu0 %v1820
    %2550 = vmatprep.subr.bf16.mxu0 %v1833
    %2551 = vmatpush1.bf16.msra.mxu0 %v1832
    %2552 = vmatprep.subr.bf16.mxu0 %v1845
    %2553 = vmatpush1.bf16.msra.mxu0 %v1844
    %2554 = vmatprep.subr.bf16.mxu0 %v1857
    %2555 = vmatpush1.bf16.msra.mxu0 %v1856
    %2556 = vmatprep.mubr.bf16.mxu0 0
    %2557 = vmatmul.mubr.bf16.gmra.mrb[0].mxu0 0
    %v2558 = vpop.f32.mrb[0].mxu0
    %v2559 = vadd.f32 0.0, %v2558
    %v2560 = vpop.f32.mrb[0].mxu0
    %v2561 = vadd.f32 0.0, %v2560
    %v2562 = vpop.f32.mrb[0].mxu0
    %v2563 = vpop.f32.mrb[0].mxu0
    %2564 = vdwg.mxu0
    %2565 = vmatprep.subr.bf16.mxu0 %v1869
    %2566 = vmatpush1.bf16.msra.mxu0 %v1868
    %2567 = vmatprep.subr.bf16.mxu0 %v1881
    %2568 = vmatpush1.bf16.msra.mxu0 %v1880
    %2569 = vmatprep.subr.bf16.mxu0 %v1893
    %2570 = vmatpush1.bf16.msra.mxu0 %v1892
    %2571 = vmatprep.subr.bf16.mxu0 %v1905
    %2572 = vmatpush1.bf16.msra.mxu0 %v1904
    %2573 = vmatprep.subr.bf16.mxu0 %v1917
    %2574 = vmatpush1.bf16.msra.mxu0 %v1916
    %2575 = vmatprep.subr.bf16.mxu0 %v1929
    %2576 = vmatpush1.bf16.msra.mxu0 %v1928
    %2577 = vmatprep.subr.bf16.mxu0 %v1941
    %2578 = vmatpush1.bf16.msra.mxu0 %v1940
    %2579 = vmatprep.subr.bf16.mxu0 %v1953
    %2580 = vmatpush1.bf16.msra.mxu0 %v1952
    %2581 = vmatprep.subr.bf16.mxu0 %v1965
    %2582 = vmatpush1.bf16.msra.mxu0 %v1964
    %2583 = vmatprep.subr.bf16.mxu0 %v1977
    %2584 = vmatpush1.bf16.msra.mxu0 %v1976
    %2585 = vmatprep.subr.bf16.mxu0 %v1989
    %2586 = vmatpush1.bf16.msra.mxu0 %v1988
    %2587 = vmatprep.subr.bf16.mxu0 %v2001
    %2588 = vmatpush1.bf16.msra.mxu0 %v2000
    %2589 = vmatprep.subr.bf16.mxu0 %v2013
    %2590 = vmatpush1.bf16.msra.mxu0 %v2012
    %2591 = vmatprep.subr.bf16.mxu0 %v2025
    %2592 = vmatpush1.bf16.msra.mxu0 %v2024
    %2593 = vmatprep.subr.bf16.mxu0 %v2037
    %2594 = vmatpush1.bf16.msra.mxu0 %v2036
    %2595 = vmatprep.subr.bf16.mxu0 %v2049
    %2596 = vmatpush1.bf16.msra.mxu0 %v2048
    %2597 = vmatprep.mubr.bf16.mxu0 0
    %2598 = vmatmul.mubr.bf16.gmra.mrb[0].mxu0 0
    %v2599 = vpop.f32.mrb[0].mxu0
    %v2600 = vadd.f32 %v2559, %v2599
    %v2601 = vpop.f32.mrb[0].mxu0
    %v2602 = vadd.f32 %v2561, %v2601
    %v2603 = vpop.f32.mrb[0].mxu0
    %v2604 = vpop.f32.mrb[0].mxu0
    %2605 = vdwg.mxu0
    %2606 = vmatprep.subr.bf16.mxu0 %v1679
    %2607 = vmatpush1.bf16.msra.mxu0 %v1678
    %2608 = vmatprep.subr.bf16.mxu0 %v1691
    %2609 = vmatpush1.bf16.msra.mxu0 %v1690
    %2610 = vmatprep.subr.bf16.mxu0 %v1703
    %2611 = vmatpush1.bf16.msra.mxu0 %v1702
    %2612 = vmatprep.subr.bf16.mxu0 %v1715
    %2613 = vmatpush1.bf16.msra.mxu0 %v1714
    %2614 = vmatprep.subr.bf16.mxu0 %v1727
    %2615 = vmatpush1.bf16.msra.mxu0 %v1726
    %2616 = vmatprep.subr.bf16.mxu0 %v1739
    %2617 = vmatpush1.bf16.msra.mxu0 %v1738
    %2618 = vmatprep.subr.bf16.mxu0 %v1751
    %2619 = vmatpush1.bf16.msra.mxu0 %v1750
    %2620 = vmatprep.subr.bf16.mxu0 %v1763
    %2621 = vmatpush1.bf16.msra.mxu0 %v1762
    %2622 = vmatprep.subr.bf16.mxu0 %v1775
    %2623 = vmatpush1.bf16.msra.mxu0 %v1774
    %2624 = vmatprep.subr.bf16.mxu0 %v1787
    %2625 = vmatpush1.bf16.msra.mxu0 %v1786
    %2626 = vmatprep.subr.bf16.mxu0 %v1799
    %2627 = vmatpush1.bf16.msra.mxu0 %v1798
    %2628 = vmatprep.subr.bf16.mxu0 %v1811
    %2629 = vmatpush1.bf16.msra.mxu0 %v1810
    %2630 = vmatprep.subr.bf16.mxu0 %v1823
    %2631 = vmatpush1.bf16.msra.mxu0 %v1822
    %2632 = vmatprep.subr.bf16.mxu0 %v1835
    %2633 = vmatpush1.bf16.msra.mxu0 %v1834
    %2634 = vmatprep.subr.bf16.mxu0 %v1847
    %2635 = vmatpush1.bf16.msra.mxu0 %v1846
    %2636 = vmatprep.subr.bf16.mxu0 %v1859
    %2637 = vmatpush1.bf16.msra.mxu0 %v1858
    %2638 = vmatprep.mubr.bf16.mxu0 0
    %2639 = vmatmul.mubr.bf16.gmra.mrb[0].mxu0 0
    %v2640 = vpop.f32.mrb[0].mxu0
    %v2641 = vadd.f32 0.0, %v2640
    %v2642 = vpop.f32.mrb[0].mxu0
    %v2643 = vadd.f32 0.0, %v2642
    %v2644 = vpop.f32.mrb[0].mxu0
    %v2645 = vpop.f32.mrb[0].mxu0
    %2646 = vdwg.mxu0
    %2647 = vmatprep.subr.bf16.mxu0 %v1871
    %2648 = vmatpush1.bf16.msra.mxu0 %v1870
    %2649 = vmatprep.subr.bf16.mxu0 %v1883
    %2650 = vmatpush1.bf16.msra.mxu0 %v1882
    %2651 = vmatprep.subr.bf16.mxu0 %v1895
    %2652 = vmatpush1.bf16.msra.mxu0 %v1894
    %2653 = vmatprep.subr.bf16.mxu0 %v1907
    %2654 = vmatpush1.bf16.msra.mxu0 %v1906
    %2655 = vmatprep.subr.bf16.mxu0 %v1919
    %2656 = vmatpush1.bf16.msra.mxu0 %v1918
    %2657 = vmatprep.subr.bf16.mxu0 %v1931
    %2658 = vmatpush1.bf16.msra.mxu0 %v1930
    %2659 = vmatprep.subr.bf16.mxu0 %v1943
    %2660 = vmatpush1.bf16.msra.mxu0 %v1942
    %2661 = vmatprep.subr.bf16.mxu0 %v1955
    %2662 = vmatpush1.bf16.msra.mxu0 %v1954
    %2663 = vmatprep.subr.bf16.mxu0 %v1967
    %2664 = vmatpush1.bf16.msra.mxu0 %v1966
    %2665 = vmatprep.subr.bf16.mxu0 %v1979
    %2666 = vmatpush1.bf16.msra.mxu0 %v1978
    %2667 = vmatprep.subr.bf16.mxu0 %v1991
    %2668 = vmatpush1.bf16.msra.mxu0 %v1990
    %2669 = vmatprep.subr.bf16.mxu0 %v2003
    %2670 = vmatpush1.bf16.msra.mxu0 %v2002
    %2671 = vmatprep.subr.bf16.mxu0 %v2015
    %2672 = vmatpush1.bf16.msra.mxu0 %v2014
    %2673 = vmatprep.subr.bf16.mxu0 %v2027
    %2674 = vmatpush1.bf16.msra.mxu0 %v2026
    %2675 = vmatprep.subr.bf16.mxu0 %v2039
    %2676 = vmatpush1.bf16.msra.mxu0 %v2038
    %2677 = vmatprep.subr.bf16.mxu0 %v2051
    %2678 = vmatpush1.bf16.msra.mxu0 %v2050
    %2679 = vmatprep.mubr.bf16.mxu0 0
    %2680 = vmatmul.mubr.bf16.gmra.mrb[0].mxu0 0
    %v2681 = vpop.f32.mrb[0].mxu0
    %v2682 = vadd.f32 %v2641, %v2681
    %v2683 = vpop.f32.mrb[0].mxu0
    %v2684 = vadd.f32 %v2643, %v2683
    %v2685 = vpop.f32.mrb[0].mxu0
    %v2686 = vpop.f32.mrb[0].mxu0
    %2687 = vdwg.mxu0
    %2688 = vmatprep.subr.bf16.mxu0 %v1681
    %2689 = vmatpush1.bf16.msra.mxu0 %v1680
    %2690 = vmatprep.subr.bf16.mxu0 %v1693
    %2691 = vmatpush1.bf16.msra.mxu0 %v1692
    %2692 = vmatprep.subr.bf16.mxu0 %v1705
    %2693 = vmatpush1.bf16.msra.mxu0 %v1704
    %2694 = vmatprep.subr.bf16.mxu0 %v1717
    %2695 = vmatpush1.bf16.msra.mxu0 %v1716
    %2696 = vmatprep.subr.bf16.mxu0 %v1729
    %2697 = vmatpush1.bf16.msra.mxu0 %v1728
    %2698 = vmatprep.subr.bf16.mxu0 %v1741
    %2699 = vmatpush1.bf16.msra.mxu0 %v1740
    %2700 = vmatprep.subr.bf16.mxu0 %v1753
    %2701 = vmatpush1.bf16.msra.mxu0 %v1752
    %2702 = vmatprep.subr.bf16.mxu0 %v1765
    %2703 = vmatpush1.bf16.msra.mxu0 %v1764
    %2704 = vmatprep.subr.bf16.mxu0 %v1777
    %2705 = vmatpush1.bf16.msra.mxu0 %v1776
    %2706 = vmatprep.subr.bf16.mxu0 %v1789
    %2707 = vmatpush1.bf16.msra.mxu0 %v1788
    %2708 = vmatprep.subr.bf16.mxu0 %v1801
    %2709 = vmatpush1.bf16.msra.mxu0 %v1800
    %2710 = vmatprep.subr.bf16.mxu0 %v1813
    %2711 = vmatpush1.bf16.msra.mxu0 %v1812
    %2712 = vmatprep.subr.bf16.mxu0 %v1825
    %2713 = vmatpush1.bf16.msra.mxu0 %v1824
    %2714 = vmatprep.subr.bf16.mxu0 %v1837
    %2715 = vmatpush1.bf16.msra.mxu0 %v1836
    %2716 = vmatprep.subr.bf16.mxu0 %v1849
    %2717 = vmatpush1.bf16.msra.mxu0 %v1848
    %2718 = vmatprep.subr.bf16.mxu0 %v1861
    %2719 = vmatpush1.bf16.msra.mxu0 %v1860
    %2720 = vmatprep.mubr.bf16.mxu0 0
    %2721 = vmatmul.mubr.bf16.gmra.mrb[0].mxu0 0
    %v2722 = vpop.f32.mrb[0].mxu0
    %v2723 = vadd.f32 0.0, %v2722
    %v2724 = vpop.f32.mrb[0].mxu0
    %v2725 = vadd.f32 0.0, %v2724
    %v2726 = vpop.f32.mrb[0].mxu0
    %v2727 = vpop.f32.mrb[0].mxu0
    %2728 = vdwg.mxu0
    %2729 = vmatprep.subr.bf16.mxu0 %v1873
    %2730 = vmatpush1.bf16.msra.mxu0 %v1872
    %2731 = vmatprep.subr.bf16.mxu0 %v1885
    %2732 = vmatpush1.bf16.msra.mxu0 %v1884
    %2733 = vmatprep.subr.bf16.mxu0 %v1897
    %2734 = vmatpush1.bf16.msra.mxu0 %v1896
    %2735 = vmatprep.subr.bf16.mxu0 %v1909
    %2736 = vmatpush1.bf16.msra.mxu0 %v1908
    %2737 = vmatprep.subr.bf16.mxu0 %v1921
    %2738 = vmatpush1.bf16.msra.mxu0 %v1920
    %2739 = vmatprep.subr.bf16.mxu0 %v1933
    %2740 = vmatpush1.bf16.msra.mxu0 %v1932
    %2741 = vmatprep.subr.bf16.mxu0 %v1945
    %2742 = vmatpush1.bf16.msra.mxu0 %v1944
    %2743 = vmatprep.subr.bf16.mxu0 %v1957
    %2744 = vmatpush1.bf16.msra.mxu0 %v1956
    %2745 = vmatprep.subr.bf16.mxu0 %v1969
    %2746 = vmatpush1.bf16.msra.mxu0 %v1968
    %2747 = vmatprep.subr.bf16.mxu0 %v1981
    %2748 = vmatpush1.bf16.msra.mxu0 %v1980
    %2749 = vmatprep.subr.bf16.mxu0 %v1993
    %2750 = vmatpush1.bf16.msra.mxu0 %v1992
    %2751 = vmatprep.subr.bf16.mxu0 %v2005
    %2752 = vmatpush1.bf16.msra.mxu0 %v2004
    %2753 = vmatprep.subr.bf16.mxu0 %v2017
    %2754 = vmatpush1.bf16.msra.mxu0 %v2016
    %2755 = vmatprep.subr.bf16.mxu0 %v2029
    %2756 = vmatpush1.bf16.msra.mxu0 %v2028
    %2757 = vmatprep.subr.bf16.mxu0 %v2041
    %2758 = vmatpush1.bf16.msra.mxu0 %v2040
    %2759 = vmatprep.subr.bf16.mxu0 %v2053
    %2760 = vmatpush1.bf16.msra.mxu0 %v2052
    %2761 = vmatprep.mubr.bf16.mxu0 0
    %2762 = vmatmul.mubr.bf16.gmra.mrb[0].mxu0 0
    %v2763 = vpop.f32.mrb[0].mxu0
    %v2764 = vadd.f32 %v2723, %v2763
    %v2765 = vpop.f32.mrb[0].mxu0
    %v2766 = vadd.f32 %v2725, %v2765
    %v2767 = vpop.f32.mrb[0].mxu0
    %v2768 = vpop.f32.mrb[0].mxu0
    %2769 = vdwg.mxu0
    %2770 = vmatprep.subr.bf16.mxu0 %v1683
    %2771 = vmatpush1.bf16.msra.mxu0 %v1682
    %2772 = vmatprep.subr.bf16.mxu0 %v1695
    %2773 = vmatpush1.bf16.msra.mxu0 %v1694
    %2774 = vmatprep.subr.bf16.mxu0 %v1707
    %2775 = vmatpush1.bf16.msra.mxu0 %v1706
    %2776 = vmatprep.subr.bf16.mxu0 %v1719
    %2777 = vmatpush1.bf16.msra.mxu0 %v1718
    %2778 = vmatprep.subr.bf16.mxu0 %v1731
    %2779 = vmatpush1.bf16.msra.mxu0 %v1730
    %2780 = vmatprep.subr.bf16.mxu0 %v1743
    %2781 = vmatpush1.bf16.msra.mxu0 %v1742
    %2782 = vmatprep.subr.bf16.mxu0 %v1755
    %2783 = vmatpush1.bf16.msra.mxu0 %v1754
    %2784 = vmatprep.subr.bf16.mxu0 %v1767
    %2785 = vmatpush1.bf16.msra.mxu0 %v1766
    %2786 = vmatprep.subr.bf16.mxu0 %v1779
    %2787 = vmatpush1.bf16.msra.mxu0 %v1778
    %2788 = vmatprep.subr.bf16.mxu0 %v1791
    %2789 = vmatpush1.bf16.msra.mxu0 %v1790
    %2790 = vmatprep.subr.bf16.mxu0 %v1803
    %2791 = vmatpush1.bf16.msra.mxu0 %v1802
    %2792 = vmatprep.subr.bf16.mxu0 %v1815
    %2793 = vmatpush1.bf16.msra.mxu0 %v1814
    %2794 = vmatprep.subr.bf16.mxu0 %v1827
    %2795 = vmatpush1.bf16.msra.mxu0 %v1826
    %2796 = vmatprep.subr.bf16.mxu0 %v1839
    %2797 = vmatpush1.bf16.msra.mxu0 %v1838
    %2798 = vmatprep.subr.bf16.mxu0 %v1851
    %2799 = vmatpush1.bf16.msra.mxu0 %v1850
    %2800 = vmatprep.subr.bf16.mxu0 %v1863
    %2801 = vmatpush1.bf16.msra.mxu0 %v1862
    %2802 = vmatprep.mubr.bf16.mxu0 0
    %2803 = vmatmul.mubr.bf16.gmra.mrb[0].mxu0 0
    %v2804 = vpop.f32.mrb[0].mxu0
    %v2805 = vadd.f32 0.0, %v2804
    %v2806 = vpop.f32.mrb[0].mxu0
    %v2807 = vadd.f32 0.0, %v2806
    %v2808 = vpop.f32.mrb[0].mxu0
    %v2809 = vpop.f32.mrb[0].mxu0
    %2810 = vdwg.mxu0
    %2811 = vmatprep.subr.bf16.mxu0 %v1875
    %2812 = vmatpush1.bf16.msra.mxu0 %v1874
    %2813 = vmatprep.subr.bf16.mxu0 %v1887
    %2814 = vmatpush1.bf16.msra.mxu0 %v1886
    %2815 = vmatprep.subr.bf16.mxu0 %v1899
    %2816 = vmatpush1.bf16.msra.mxu0 %v1898
    %2817 = vmatprep.subr.bf16.mxu0 %v1911
    %2818 = vmatpush1.bf16.msra.mxu0 %v1910
    %2819 = vmatprep.subr.bf16.mxu0 %v1923
    %2820 = vmatpush1.bf16.msra.mxu0 %v1922
    %2821 = vmatprep.subr.bf16.mxu0 %v1935
    %2822 = vmatpush1.bf16.msra.mxu0 %v1934
    %2823 = vmatprep.subr.bf16.mxu0 %v1947
    %2824 = vmatpush1.bf16.msra.mxu0 %v1946
    %2825 = vmatprep.subr.bf16.mxu0 %v1959
    %2826 = vmatpush1.bf16.msra.mxu0 %v1958
    %2827 = vmatprep.subr.bf16.mxu0 %v1971
    %2828 = vmatpush1.bf16.msra.mxu0 %v1970
    %2829 = vmatprep.subr.bf16.mxu0 %v1983
    %2830 = vmatpush1.bf16.msra.mxu0 %v1982
    %2831 = vmatprep.subr.bf16.mxu0 %v1995
    %2832 = vmatpush1.bf16.msra.mxu0 %v1994
    %2833 = vmatprep.subr.bf16.mxu0 %v2007
    %2834 = vmatpush1.bf16.msra.mxu0 %v2006
    %2835 = vmatprep.subr.bf16.mxu0 %v2019
    %2836 = vmatpush1.bf16.msra.mxu0 %v2018
    %2837 = vmatprep.subr.bf16.mxu0 %v2031
    %2838 = vmatpush1.bf16.msra.mxu0 %v2030
    %2839 = vmatprep.subr.bf16.mxu0 %v2043
    %2840 = vmatpush1.bf16.msra.mxu0 %v2042
    %2841 = vmatprep.subr.bf16.mxu0 %v2055
    %2842 = vmatpush1.bf16.msra.mxu0 %v2054
    %2843 = vmatprep.mubr.bf16.mxu0 0
    %2844 = vmatmul.mubr.bf16.gmra.mrb[0].mxu0 0
    %v2845 = vpop.f32.mrb[0].mxu0
    %v2846 = vadd.f32 %v2805, %v2845
    %v2847 = vpop.f32.mrb[0].mxu0
    %v2848 = vadd.f32 %v2807, %v2847
    %v2849 = vpop.f32.mrb[0].mxu0
    %v2850 = vpop.f32.mrb[0].mxu0
    %2851 = vdwg.mxu0
    %2852 = vmatprep.subr.bf16.mxu0 %v1685
    %2853 = vmatpush1.bf16.msra.mxu0 %v1684
    %2854 = vmatprep.subr.bf16.mxu0 %v1697
    %2855 = vmatpush1.bf16.msra.mxu0 %v1696
    %2856 = vmatprep.subr.bf16.mxu0 %v1709
    %2857 = vmatpush1.bf16.msra.mxu0 %v1708
    %2858 = vmatprep.subr.bf16.mxu0 %v1721
    %2859 = vmatpush1.bf16.msra.mxu0 %v1720
    %2860 = vmatprep.subr.bf16.mxu0 %v1733
    %2861 = vmatpush1.bf16.msra.mxu0 %v1732
    %2862 = vmatprep.subr.bf16.mxu0 %v1745
    %2863 = vmatpush1.bf16.msra.mxu0 %v1744
    %2864 = vmatprep.subr.bf16.mxu0 %v1757
    %2865 = vmatpush1.bf16.msra.mxu0 %v1756
    %2866 = vmatprep.subr.bf16.mxu0 %v1769
    %2867 = vmatpush1.bf16.msra.mxu0 %v1768
    %2868 = vmatprep.subr.bf16.mxu0 %v1781
    %2869 = vmatpush1.bf16.msra.mxu0 %v1780
    %2870 = vmatprep.subr.bf16.mxu0 %v1793
    %2871 = vmatpush1.bf16.msra.mxu0 %v1792
    %2872 = vmatprep.subr.bf16.mxu0 %v1805
    %2873 = vmatpush1.bf16.msra.mxu0 %v1804
    %2874 = vmatprep.subr.bf16.mxu0 %v1817
    %2875 = vmatpush1.bf16.msra.mxu0 %v1816
    %2876 = vmatprep.subr.bf16.mxu0 %v1829
    %2877 = vmatpush1.bf16.msra.mxu0 %v1828
    %2878 = vmatprep.subr.bf16.mxu0 %v1841
    %2879 = vmatpush1.bf16.msra.mxu0 %v1840
    %2880 = vmatprep.subr.bf16.mxu0 %v1853
    %2881 = vmatpush1.bf16.msra.mxu0 %v1852
    %2882 = vmatprep.subr.bf16.mxu0 %v1865
    %2883 = vmatpush1.bf16.msra.mxu0 %v1864
    %2884 = vmatprep.mubr.bf16.mxu0 0
    %2885 = vmatmul.mubr.bf16.gmra.mrb[0].mxu0 0
    %v2886 = vpop.f32.mrb[0].mxu0
    %v2887 = vadd.f32 0.0, %v2886
    %v2888 = vpop.f32.mrb[0].mxu0
    %v2889 = vadd.f32 0.0, %v2888
    %v2890 = vpop.f32.mrb[0].mxu0
    %v2891 = vpop.f32.mrb[0].mxu0
    %2892 = vdwg.mxu0
    %2893 = vmatprep.subr.bf16.mxu0 %v1877
    %2894 = vmatpush1.bf16.msra.mxu0 %v1876
    %2895 = vmatprep.subr.bf16.mxu0 %v1889
    %2896 = vmatpush1.bf16.msra.mxu0 %v1888
    %2897 = vmatprep.subr.bf16.mxu0 %v1901
    %2898 = vmatpush1.bf16.msra.mxu0 %v1900
    %2899 = vmatprep.subr.bf16.mxu0 %v1913
    %2900 = vmatpush1.bf16.msra.mxu0 %v1912
    %2901 = vmatprep.subr.bf16.mxu0 %v1925
    %2902 = vmatpush1.bf16.msra.mxu0 %v1924
    %2903 = vmatprep.subr.bf16.mxu0 %v1937
    %2904 = vmatpush1.bf16.msra.mxu0 %v1936
    %2905 = vmatprep.subr.bf16.mxu0 %v1949
    %2906 = vmatpush1.bf16.msra.mxu0 %v1948
    %2907 = vmatprep.subr.bf16.mxu0 %v1961
    %2908 = vmatpush1.bf16.msra.mxu0 %v1960
    %2909 = vmatprep.subr.bf16.mxu0 %v1973
    %2910 = vmatpush1.bf16.msra.mxu0 %v1972
    %2911 = vmatprep.subr.bf16.mxu0 %v1985
    %2912 = vmatpush1.bf16.msra.mxu0 %v1984
    %2913 = vmatprep.subr.bf16.mxu0 %v1997
    %2914 = vmatpush1.bf16.msra.mxu0 %v1996
    %2915 = vmatprep.subr.bf16.mxu0 %v2009
    %2916 = vmatpush1.bf16.msra.mxu0 %v2008
    %2917 = vmatprep.subr.bf16.mxu0 %v2021
    %2918 = vmatpush1.bf16.msra.mxu0 %v2020
    %2919 = vmatprep.subr.bf16.mxu0 %v2033
    %2920 = vmatpush1.bf16.msra.mxu0 %v2032
    %2921 = vmatprep.subr.bf16.mxu0 %v2045
    %2922 = vmatpush1.bf16.msra.mxu0 %v2044
    %2923 = vmatprep.subr.bf16.mxu0 %v2057
    %2924 = vmatpush1.bf16.msra.mxu0 %v2056
    %2925 = vmatprep.mubr.bf16.mxu0 0
    %2926 = vmatmul.mubr.bf16.gmra.mrb[0].mxu0 0
    %v2927 = vpop.f32.mrb[0].mxu0
    %v2928 = vadd.f32 %v2887, %v2927
    %v2929 = vpop.f32.mrb[0].mxu0
    %v2930 = vadd.f32 %v2889, %v2929
    %v2931 = vpop.f32.mrb[0].mxu0
    %v2932 = vpop.f32.mrb[0].mxu0
    %2933 = vdwg.mxu0
    %v2934 = vadd.f32 %v510, %v2518
    %v2935 = vadd.f32 %v511, %v2520
    %v2936 = vadd.f32 %v512, %v2600
    %v2937 = vadd.f32 %v513, %v2602
    %v2938 = vxor.u32 %v2934, 2147483648
    %v2939 = vxor.u32 %v2935, 2147483648
    %v2940 = vxor.u32 %v2936, 2147483648
    %v2941 = vxor.u32 %v2937, 2147483648
    %v2942 = vmul.f32 %v2938, 1.442695
    %v2943 = vpow.pop %v2942
    %v2944 = vmul.f32 %v2939, 1.442695
    %v2945 = vpow.pop %v2944
    %v2946 = vmul.f32 %v2940, 1.442695
    %v2947 = vpow.pop %v2946
    %v2948 = vmul.f32 %v2941, 1.442695
    %v2949 = vpow.pop %v2948
    %v2950 = vadd.f32 %v2943, 1.0
    %v2951 = vadd.f32 %v2945, 1.0
    %v2952 = vadd.f32 %v2947, 1.0
    %v2953 = vadd.f32 %v2949, 1.0
    %v2954 = vrcp.pop %v2950
    %v2955 = vmul.f32 1.0, %v2954
    %v2956 = vrcp.pop %v2951
    %v2957 = vmul.f32 1.0, %v2956
    %v2958 = vrcp.pop %v2952
    %v2959 = vmul.f32 1.0, %v2958
    %v2960 = vrcp.pop %v2953
    %v2961 = vmul.f32 1.0, %v2960
    %v2962 = vadd.f32 %v514, %v2682
    %v2963 = vadd.f32 %v515, %v2684
    %v2964 = vadd.f32 %v516, %v2764
    %v2965 = vadd.f32 %v517, %v2766
    %v2966 = vxor.u32 %v2962, 2147483648
    %v2967 = vxor.u32 %v2963, 2147483648
    %v2968 = vxor.u32 %v2964, 2147483648
    %v2969 = vxor.u32 %v2965, 2147483648
    %v2970 = vmul.f32 %v2966, 1.442695
    %v2971 = vpow.pop %v2970
    %v2972 = vmul.f32 %v2967, 1.442695
    %v2973 = vpow.pop %v2972
    %v2974 = vmul.f32 %v2968, 1.442695
    %v2975 = vpow.pop %v2974
    %v2976 = vmul.f32 %v2969, 1.442695
    %v2977 = vpow.pop %v2976
    %v2978 = vadd.f32 %v2971, 1.0
    %v2979 = vadd.f32 %v2973, 1.0
    %v2980 = vadd.f32 %v2975, 1.0
    %v2981 = vadd.f32 %v2977, 1.0
    %v2982 = vrcp.pop %v2978
    %v2983 = vmul.f32 1.0, %v2982
    %v2984 = vrcp.pop %v2979
    %v2985 = vmul.f32 1.0, %v2984
    %v2986 = vrcp.pop %v2980
    %v2987 = vmul.f32 1.0, %v2986
    %v2988 = vrcp.pop %v2981
    %v2989 = vmul.f32 1.0, %v2988
    %v2991 = vlaneseq
    %v2992 = vshrl.u32 %v2991, 7
    %v2993 = vsub.s32 0, %v2992
    %v2994 = vrot.slane %v509, %v2993
    %v2995 = vlaneseq
    %v2996 = vshrl.u32 %v2995, 7
    %v2997 = vsub.s32 1, %v2996
    %v2998 = vrot.slane %v509, %v2997
    %v2999 = vlaneseq
    %v3000 = vshrl.u32 %v2999, 7
    %v3001 = vsub.s32 2, %v3000
    %v3002 = vrot.slane %v509, %v3001
    %v3003 = vlaneseq
    %v3004 = vshrl.u32 %v3003, 7
    %v3005 = vsub.s32 3, %v3004
    %v3006 = vrot.slane %v509, %v3005
    %v3011 = vadd.f32 %v2846, %v2994
    %v3012 = vadd.f32 %v2848, %v2998
    %v3013 = vadd.f32 %v2928, %v3002
    %v3014 = vadd.f32 %v2930, %v3006
    %v3015 = vmul.f32 %v2955, %v3011
    %v3016 = vmul.f32 %v2957, %v3012
    %v3017 = vmul.f32 %v2959, %v3013
    %v3018 = vmul.f32 %v2961, %v3014
    %v3019 = vadd.f32 %v518, %v3015
    %v3020 = vadd.f32 %v519, %v3016
    %v3021 = vadd.f32 %v520, %v3017
    %v3022 = vadd.f32 %v521, %v3018
    %v3023 = vtanh.pop %v3019
    %v3024 = vtanh.pop %v3020
    %v3025 = vtanh.pop %v3021
    %v3026 = vtanh.pop %v3022
    %v3027 = vsub.f32 1.0, %v2983
    %v3028 = vsub.f32 1.0, %v2985
    %v3029 = vsub.f32 1.0, %v2987
    %v3030 = vsub.f32 1.0, %v2989
    %v3031 = vmul.f32 %v3027, %v3023
    %v3032 = vmul.f32 %v3028, %v3024
    %v3033 = vmul.f32 %v3029, %v3025
    %v3034 = vmul.f32 %v3030, %v3026
    %v3035 = vmul.f32 %v2983, 0.0
    %v3036 = vmul.f32 %v2985, 0.0
    %v3037 = vmul.f32 %v2987, 0.0
    %v3038 = vmul.f32 %v2989, 0.0
    %v3039 = vadd.f32 %v3031, %v3035
    %v3040 = vadd.f32 %v3032, %v3036
    %v3041 = vadd.f32 %v3033, %v3037
    %v3042 = vadd.f32 %v3034, %v3038
    %3043 = vst [vmem:[#allocation2] sm:$0xff] %v3039
    %3044 = vst [vmem:[#allocation2 + $0x8] sm:$0xff] %v3040
    %3045 = vst [vmem:[#allocation2 + $0x10] sm:$0xff] %v3041
    %3046 = vst [vmem:[#allocation2 + $0x18] sm:$0xff] %v3042
    %v3047 = vld [vmem:[%s0 + $0x60] sm:$0xff]
    %v3048 = vld [vmem:[%s0 + $0x68] sm:$0xff]
    %v3049 = vld [vmem:[%s0 + $0x70] sm:$0xff]
    %v3050 = vld [vmem:[%s0 + $0x78] sm:$0xff]
    %v3051 = vld [vmem:[%s0 + $0x80] sm:$0xff]
    %v3052 = vld [vmem:[%s0 + $0x88] sm:$0xff]
    %v3053 = vld [vmem:[%s0 + $0x90] sm:$0xff]
    %v3054 = vld [vmem:[%s0 + $0x98] sm:$0xff]
    %v3055 = vld [vmem:[%s0 + $0xa0] sm:$0xff]
    %v3056 = vld [vmem:[%s0 + $0xa8] sm:$0xff]
    %v3057 = vld [vmem:[%s0 + $0xb0] sm:$0xff]
    %v3058 = vld [vmem:[%s0 + $0xb8] sm:$0xff]
    %v3059 = vpack.c.bf16 %v3039, %v3039
    %v3060 = vpack.c.bf16 %v3040, %v3040
    %v3061 = vpack.c.bf16 %v3041, %v3041
    %v3062 = vpack.c.bf16 %v3042, %v3042
    %3063 = vmatprep.subr.bf16.mxu0 %v1675
    %3064 = vmatpush1.bf16.msra.mxu0 %v1674
    %3065 = vmatprep.subr.bf16.mxu0 %v1687
    %3066 = vmatpush1.bf16.msra.mxu0 %v1686
    %3067 = vmatprep.subr.bf16.mxu0 %v1699
    %3068 = vmatpush1.bf16.msra.mxu0 %v1698
    %3069 = vmatprep.subr.bf16.mxu0 %v1711
    %3070 = vmatpush1.bf16.msra.mxu0 %v1710
    %3071 = vmatprep.subr.bf16.mxu0 %v1723
    %3072 = vmatpush1.bf16.msra.mxu0 %v1722
    %3073 = vmatprep.subr.bf16.mxu0 %v1735
    %3074 = vmatpush1.bf16.msra.mxu0 %v1734
    %3075 = vmatprep.subr.bf16.mxu0 %v1747
    %3076 = vmatpush1.bf16.msra.mxu0 %v1746
    %3077 = vmatprep.subr.bf16.mxu0 %v1759
    %3078 = vmatpush1.bf16.msra.mxu0 %v1758
    %3079 = vmatprep.subr.bf16.mxu0 %v1771
    %3080 = vmatpush1.bf16.msra.mxu0 %v1770
    %3081 = vmatprep.subr.bf16.mxu0 %v1783
    %3082 = vmatpush1.bf16.msra.mxu0 %v1782
    %3083 = vmatprep.subr.bf16.mxu0 %v1795
    %3084 = vmatpush1.bf16.msra.mxu0 %v1794
    %3085 = vmatprep.subr.bf16.mxu0 %v1807
    %3086 = vmatpush1.bf16.msra.mxu0 %v1806
    %3087 = vmatprep.subr.bf16.mxu0 %v1819
    %3088 = vmatpush1.bf16.msra.mxu0 %v1818
    %3089 = vmatprep.subr.bf16.mxu0 %v1831
    %3090 = vmatpush1.bf16.msra.mxu0 %v1830
    %3091 = vmatprep.subr.bf16.mxu0 %v1843
    %3092 = vmatpush1.bf16.msra.mxu0 %v1842
    %3093 = vmatprep.subr.bf16.mxu0 %v1855
    %3094 = vmatpush1.bf16.msra.mxu0 %v1854
    %3095 = vmatprep.mubr.bf16.mxu0 %v3060
    %3096 = vmatmul.mubr.bf16.gmra.mrb[0].mxu0 %v3059
    %v3097 = vpop.f32.mrb[0].mxu0
    %v3098 = vadd.f32 0.0, %v3097
    %v3099 = vpop.f32.mrb[0].mxu0
    %v3100 = vadd.f32 0.0, %v3099
    %v3101 = vpop.f32.mrb[0].mxu0
    %v3102 = vpop.f32.mrb[0].mxu0
    %3103 = vdwg.mxu0
    %3104 = vmatprep.subr.bf16.mxu0 %v1867
    %3105 = vmatpush1.bf16.msra.mxu0 %v1866
    %3106 = vmatprep.subr.bf16.mxu0 %v1879
    %3107 = vmatpush1.bf16.msra.mxu0 %v1878
    %3108 = vmatprep.subr.bf16.mxu0 %v1891
    %3109 = vmatpush1.bf16.msra.mxu0 %v1890
    %3110 = vmatprep.subr.bf16.mxu0 %v1903
    %3111 = vmatpush1.bf16.msra.mxu0 %v1902
    %3112 = vmatprep.subr.bf16.mxu0 %v1915
    %3113 = vmatpush1.bf16.msra.mxu0 %v1914
    %3114 = vmatprep.subr.bf16.mxu0 %v1927
    %3115 = vmatpush1.bf16.msra.mxu0 %v1926
    %3116 = vmatprep.subr.bf16.mxu0 %v1939
    %3117 = vmatpush1.bf16.msra.mxu0 %v1938
    %3118 = vmatprep.subr.bf16.mxu0 %v1951
    %3119 = vmatpush1.bf16.msra.mxu0 %v1950
    %3120 = vmatprep.subr.bf16.mxu0 %v1963
    %3121 = vmatpush1.bf16.msra.mxu0 %v1962
    %3122 = vmatprep.subr.bf16.mxu0 %v1975
    %3123 = vmatpush1.bf16.msra.mxu0 %v1974
    %3124 = vmatprep.subr.bf16.mxu0 %v1987
    %3125 = vmatpush1.bf16.msra.mxu0 %v1986
    %3126 = vmatprep.subr.bf16.mxu0 %v1999
    %3127 = vmatpush1.bf16.msra.mxu0 %v1998
    %3128 = vmatprep.subr.bf16.mxu0 %v2011
    %3129 = vmatpush1.bf16.msra.mxu0 %v2010
    %3130 = vmatprep.subr.bf16.mxu0 %v2023
    %3131 = vmatpush1.bf16.msra.mxu0 %v2022
    %3132 = vmatprep.subr.bf16.mxu0 %v2035
    %3133 = vmatpush1.bf16.msra.mxu0 %v2034
    %3134 = vmatprep.subr.bf16.mxu0 %v2047
    %3135 = vmatpush1.bf16.msra.mxu0 %v2046
    %3136 = vmatprep.mubr.bf16.mxu0 %v3062
    %3137 = vmatmul.mubr.bf16.gmra.mrb[0].mxu0 %v3061
    %v3138 = vpop.f32.mrb[0].mxu0
    %v3139 = vadd.f32 %v3098, %v3138
    %v3140 = vpop.f32.mrb[0].mxu0
    %v3141 = vadd.f32 %v3100, %v3140
    %v3142 = vpop.f32.mrb[0].mxu0
    %v3143 = vpop.f32.mrb[0].mxu0
    %3144 = vdwg.mxu0
    %3145 = vmatprep.subr.bf16.mxu0 %v1677
    %3146 = vmatpush1.bf16.msra.mxu0 %v1676
    %3147 = vmatprep.subr.bf16.mxu0 %v1689
    %3148 = vmatpush1.bf16.msra.mxu0 %v1688
    %3149 = vmatprep.subr.bf16.mxu0 %v1701
    %3150 = vmatpush1.bf16.msra.mxu0 %v1700
    %3151 = vmatprep.subr.bf16.mxu0 %v1713
    %3152 = vmatpush1.bf16.msra.mxu0 %v1712
    %3153 = vmatprep.subr.bf16.mxu0 %v1725
    %3154 = vmatpush1.bf16.msra.mxu0 %v1724
    %3155 = vmatprep.subr.bf16.mxu0 %v1737
    %3156 = vmatpush1.bf16.msra.mxu0 %v1736
    %3157 = vmatprep.subr.bf16.mxu0 %v1749
    %3158 = vmatpush1.bf16.msra.mxu0 %v1748
    %3159 = vmatprep.subr.bf16.mxu0 %v1761
    %3160 = vmatpush1.bf16.msra.mxu0 %v1760
    %3161 = vmatprep.subr.bf16.mxu0 %v1773
    %3162 = vmatpush1.bf16.msra.mxu0 %v1772
    %3163 = vmatprep.subr.bf16.mxu0 %v1785
    %3164 = vmatpush1.bf16.msra.mxu0 %v1784
    %3165 = vmatprep.subr.bf16.mxu0 %v1797
    %3166 = vmatpush1.bf16.msra.mxu0 %v1796
    %3167 = vmatprep.subr.bf16.mxu0 %v1809
    %3168 = vmatpush1.bf16.msra.mxu0 %v1808
    %3169 = vmatprep.subr.bf16.mxu0 %v1821
    %3170 = vmatpush1.bf16.msra.mxu0 %v1820
    %3171 = vmatprep.subr.bf16.mxu0 %v1833
    %3172 = vmatpush1.bf16.msra.mxu0 %v1832
    %3173 = vmatprep.subr.bf16.mxu0 %v1845
    %3174 = vmatpush1.bf16.msra.mxu0 %v1844
    %3175 = vmatprep.subr.bf16.mxu0 %v1857
    %3176 = vmatpush1.bf16.msra.mxu0 %v1856
    %3177 = vmatprep.mubr.bf16.mxu0 %v3060
    %3178 = vmatmul.mubr.bf16.gmra.mrb[0].mxu0 %v3059
    %v3179 = vpop.f32.mrb[0].mxu0
    %v3180 = vadd.f32 0.0, %v3179
    %v3181 = vpop.f32.mrb[0].mxu0
    %v3182 = vadd.f32 0.0, %v3181
    %v3183 = vpop.f32.mrb[0].mxu0
    %v3184 = vpop.f32.mrb[0].mxu0
    %3185 = vdwg.mxu0
    %3186 = vmatprep.subr.bf16.mxu0 %v1869
    %3187 = vmatpush1.bf16.msra.mxu0 %v1868
    %3188 = vmatprep.subr.bf16.mxu0 %v1881
    %3189 = vmatpush1.bf16.msra.mxu0 %v1880
    %3190 = vmatprep.subr.bf16.mxu0 %v1893
    %3191 = vmatpush1.bf16.msra.mxu0 %v1892
    %3192 = vmatprep.subr.bf16.mxu0 %v1905
    %3193 = vmatpush1.bf16.msra.mxu0 %v1904
    %3194 = vmatprep.subr.bf16.mxu0 %v1917
    %3195 = vmatpush1.bf16.msra.mxu0 %v1916
    %3196 = vmatprep.subr.bf16.mxu0 %v1929
    %3197 = vmatpush1.bf16.msra.mxu0 %v1928
    %3198 = vmatprep.subr.bf16.mxu0 %v1941
    %3199 = vmatpush1.bf16.msra.mxu0 %v1940
    %3200 = vmatprep.subr.bf16.mxu0 %v1953
    %3201 = vmatpush1.bf16.msra.mxu0 %v1952
    %3202 = vmatprep.subr.bf16.mxu0 %v1965
    %3203 = vmatpush1.bf16.msra.mxu0 %v1964
    %3204 = vmatprep.subr.bf16.mxu0 %v1977
    %3205 = vmatpush1.bf16.msra.mxu0 %v1976
    %3206 = vmatprep.subr.bf16.mxu0 %v1989
    %3207 = vmatpush1.bf16.msra.mxu0 %v1988
    %3208 = vmatprep.subr.bf16.mxu0 %v2001
    %3209 = vmatpush1.bf16.msra.mxu0 %v2000
    %3210 = vmatprep.subr.bf16.mxu0 %v2013
    %3211 = vmatpush1.bf16.msra.mxu0 %v2012
    %3212 = vmatprep.subr.bf16.mxu0 %v2025
    %3213 = vmatpush1.bf16.msra.mxu0 %v2024
    %3214 = vmatprep.subr.bf16.mxu0 %v2037
    %3215 = vmatpush1.bf16.msra.mxu0 %v2036
    %3216 = vmatprep.subr.bf16.mxu0 %v2049
    %3217 = vmatpush1.bf16.msra.mxu0 %v2048
    %3218 = vmatprep.mubr.bf16.mxu0 %v3062
    %3219 = vmatmul.mubr.bf16.gmra.mrb[0].mxu0 %v3061
    %v3220 = vpop.f32.mrb[0].mxu0
    %v3221 = vadd.f32 %v3180, %v3220
    %v3222 = vpop.f32.mrb[0].mxu0
    %v3223 = vadd.f32 %v3182, %v3222
    %v3224 = vpop.f32.mrb[0].mxu0
    %v3225 = vpop.f32.mrb[0].mxu0
    %3226 = vdwg.mxu0
    %3227 = vmatprep.subr.bf16.mxu0 %v1679
    %3228 = vmatpush1.bf16.msra.mxu0 %v1678
    %3229 = vmatprep.subr.bf16.mxu0 %v1691
    %3230 = vmatpush1.bf16.msra.mxu0 %v1690
    %3231 = vmatprep.subr.bf16.mxu0 %v1703
    %3232 = vmatpush1.bf16.msra.mxu0 %v1702
    %3233 = vmatprep.subr.bf16.mxu0 %v1715
    %3234 = vmatpush1.bf16.msra.mxu0 %v1714
    %3235 = vmatprep.subr.bf16.mxu0 %v1727
    %3236 = vmatpush1.bf16.msra.mxu0 %v1726
    %3237 = vmatprep.subr.bf16.mxu0 %v1739
    %3238 = vmatpush1.bf16.msra.mxu0 %v1738
    %3239 = vmatprep.subr.bf16.mxu0 %v1751
    %3240 = vmatpush1.bf16.msra.mxu0 %v1750
    %3241 = vmatprep.subr.bf16.mxu0 %v1763
    %3242 = vmatpush1.bf16.msra.mxu0 %v1762
    %3243 = vmatprep.subr.bf16.mxu0 %v1775
    %3244 = vmatpush1.bf16.msra.mxu0 %v1774
    %3245 = vmatprep.subr.bf16.mxu0 %v1787
    %3246 = vmatpush1.bf16.msra.mxu0 %v1786
    %3247 = vmatprep.subr.bf16.mxu0 %v1799
    %3248 = vmatpush1.bf16.msra.mxu0 %v1798
    %3249 = vmatprep.subr.bf16.mxu0 %v1811
    %3250 = vmatpush1.bf16.msra.mxu0 %v1810
    %3251 = vmatprep.subr.bf16.mxu0 %v1823
    %3252 = vmatpush1.bf16.msra.mxu0 %v1822
    %3253 = vmatprep.subr.bf16.mxu0 %v1835
    %3254 = vmatpush1.bf16.msra.mxu0 %v1834
    %3255 = vmatprep.subr.bf16.mxu0 %v1847
    %3256 = vmatpush1.bf16.msra.mxu0 %v1846
    %3257 = vmatprep.subr.bf16.mxu0 %v1859
    %3258 = vmatpush1.bf16.msra.mxu0 %v1858
    %3259 = vmatprep.mubr.bf16.mxu0 %v3060
    %3260 = vmatmul.mubr.bf16.gmra.mrb[0].mxu0 %v3059
    %v3261 = vpop.f32.mrb[0].mxu0
    %v3262 = vadd.f32 0.0, %v3261
    %v3263 = vpop.f32.mrb[0].mxu0
    %v3264 = vadd.f32 0.0, %v3263
    %v3265 = vpop.f32.mrb[0].mxu0
    %v3266 = vpop.f32.mrb[0].mxu0
    %3267 = vdwg.mxu0
    %3268 = vmatprep.subr.bf16.mxu0 %v1871
    %3269 = vmatpush1.bf16.msra.mxu0 %v1870
    %3270 = vmatprep.subr.bf16.mxu0 %v1883
    %3271 = vmatpush1.bf16.msra.mxu0 %v1882
    %3272 = vmatprep.subr.bf16.mxu0 %v1895
    %3273 = vmatpush1.bf16.msra.mxu0 %v1894
    %3274 = vmatprep.subr.bf16.mxu0 %v1907
    %3275 = vmatpush1.bf16.msra.mxu0 %v1906
    %3276 = vmatprep.subr.bf16.mxu0 %v1919
    %3277 = vmatpush1.bf16.msra.mxu0 %v1918
    %3278 = vmatprep.subr.bf16.mxu0 %v1931
    %3279 = vmatpush1.bf16.msra.mxu0 %v1930
    %3280 = vmatprep.subr.bf16.mxu0 %v1943
    %3281 = vmatpush1.bf16.msra.mxu0 %v1942
    %3282 = vmatprep.subr.bf16.mxu0 %v1955
    %3283 = vmatpush1.bf16.msra.mxu0 %v1954
    %3284 = vmatprep.subr.bf16.mxu0 %v1967
    %3285 = vmatpush1.bf16.msra.mxu0 %v1966
    %3286 = vmatprep.subr.bf16.mxu0 %v1979
    %3287 = vmatpush1.bf16.msra.mxu0 %v1978
    %3288 = vmatprep.subr.bf16.mxu0 %v1991
    %3289 = vmatpush1.bf16.msra.mxu0 %v1990
    %3290 = vmatprep.subr.bf16.mxu0 %v2003
    %3291 = vmatpush1.bf16.msra.mxu0 %v2002
    %3292 = vmatprep.subr.bf16.mxu0 %v2015
    %3293 = vmatpush1.bf16.msra.mxu0 %v2014
    %3294 = vmatprep.subr.bf16.mxu0 %v2027
    %3295 = vmatpush1.bf16.msra.mxu0 %v2026
    %3296 = vmatprep.subr.bf16.mxu0 %v2039
    %3297 = vmatpush1.bf16.msra.mxu0 %v2038
    %3298 = vmatprep.subr.bf16.mxu0 %v2051
    %3299 = vmatpush1.bf16.msra.mxu0 %v2050
    %3300 = vmatprep.mubr.bf16.mxu0 %v3062
    %3301 = vmatmul.mubr.bf16.gmra.mrb[0].mxu0 %v3061
    %v3302 = vpop.f32.mrb[0].mxu0
    %v3303 = vadd.f32 %v3262, %v3302
    %v3304 = vpop.f32.mrb[0].mxu0
    %v3305 = vadd.f32 %v3264, %v3304
    %v3306 = vpop.f32.mrb[0].mxu0
    %v3307 = vpop.f32.mrb[0].mxu0
    %3308 = vdwg.mxu0
    %3309 = vmatprep.subr.bf16.mxu0 %v1681
    %3310 = vmatpush1.bf16.msra.mxu0 %v1680
    %3311 = vmatprep.subr.bf16.mxu0 %v1693
    %3312 = vmatpush1.bf16.msra.mxu0 %v1692
    %3313 = vmatprep.subr.bf16.mxu0 %v1705
    %3314 = vmatpush1.bf16.msra.mxu0 %v1704
    %3315 = vmatprep.subr.bf16.mxu0 %v1717
    %3316 = vmatpush1.bf16.msra.mxu0 %v1716
    %3317 = vmatprep.subr.bf16.mxu0 %v1729
    %3318 = vmatpush1.bf16.msra.mxu0 %v1728
    %3319 = vmatprep.subr.bf16.mxu0 %v1741
    %3320 = vmatpush1.bf16.msra.mxu0 %v1740
    %3321 = vmatprep.subr.bf16.mxu0 %v1753
    %3322 = vmatpush1.bf16.msra.mxu0 %v1752
    %3323 = vmatprep.subr.bf16.mxu0 %v1765
    %3324 = vmatpush1.bf16.msra.mxu0 %v1764
    %3325 = vmatprep.subr.bf16.mxu0 %v1777
    %3326 = vmatpush1.bf16.msra.mxu0 %v1776
    %3327 = vmatprep.subr.bf16.mxu0 %v1789
    %3328 = vmatpush1.bf16.msra.mxu0 %v1788
    %3329 = vmatprep.subr.bf16.mxu0 %v1801
    %3330 = vmatpush1.bf16.msra.mxu0 %v1800
    %3331 = vmatprep.subr.bf16.mxu0 %v1813
    %3332 = vmatpush1.bf16.msra.mxu0 %v1812
    %3333 = vmatprep.subr.bf16.mxu0 %v1825
    %3334 = vmatpush1.bf16.msra.mxu0 %v1824
    %3335 = vmatprep.subr.bf16.mxu0 %v1837
    %3336 = vmatpush1.bf16.msra.mxu0 %v1836
    %3337 = vmatprep.subr.bf16.mxu0 %v1849
    %3338 = vmatpush1.bf16.msra.mxu0 %v1848
    %3339 = vmatprep.subr.bf16.mxu0 %v1861
    %3340 = vmatpush1.bf16.msra.mxu0 %v1860
    %3341 = vmatprep.mubr.bf16.mxu0 %v3060
    %3342 = vmatmul.mubr.bf16.gmra.mrb[0].mxu0 %v3059
    %v3343 = vpop.f32.mrb[0].mxu0
    %v3344 = vadd.f32 0.0, %v3343
    %v3345 = vpop.f32.mrb[0].mxu0
    %v3346 = vadd.f32 0.0, %v3345
    %v3347 = vpop.f32.mrb[0].mxu0
    %v3348 = vpop.f32.mrb[0].mxu0
    %3349 = vdwg.mxu0
    %3350 = vmatprep.subr.bf16.mxu0 %v1873
    %3351 = vmatpush1.bf16.msra.mxu0 %v1872
    %3352 = vmatprep.subr.bf16.mxu0 %v1885
    %3353 = vmatpush1.bf16.msra.mxu0 %v1884
    %3354 = vmatprep.subr.bf16.mxu0 %v1897
    %3355 = vmatpush1.bf16.msra.mxu0 %v1896
    %3356 = vmatprep.subr.bf16.mxu0 %v1909
    %3357 = vmatpush1.bf16.msra.mxu0 %v1908
    %3358 = vmatprep.subr.bf16.mxu0 %v1921
    %3359 = vmatpush1.bf16.msra.mxu0 %v1920
    %3360 = vmatprep.subr.bf16.mxu0 %v1933
    %3361 = vmatpush1.bf16.msra.mxu0 %v1932
    %3362 = vmatprep.subr.bf16.mxu0 %v1945
    %3363 = vmatpush1.bf16.msra.mxu0 %v1944
    %3364 = vmatprep.subr.bf16.mxu0 %v1957
    %3365 = vmatpush1.bf16.msra.mxu0 %v1956
    %3366 = vmatprep.subr.bf16.mxu0 %v1969
    %3367 = vmatpush1.bf16.msra.mxu0 %v1968
    %3368 = vmatprep.subr.bf16.mxu0 %v1981
    %3369 = vmatpush1.bf16.msra.mxu0 %v1980
    %3370 = vmatprep.subr.bf16.mxu0 %v1993
    %3371 = vmatpush1.bf16.msra.mxu0 %v1992
    %3372 = vmatprep.subr.bf16.mxu0 %v2005
    %3373 = vmatpush1.bf16.msra.mxu0 %v2004
    %3374 = vmatprep.subr.bf16.mxu0 %v2017
    %3375 = vmatpush1.bf16.msra.mxu0 %v2016
    %3376 = vmatprep.subr.bf16.mxu0 %v2029
    %3377 = vmatpush1.bf16.msra.mxu0 %v2028
    %3378 = vmatprep.subr.bf16.mxu0 %v2041
    %3379 = vmatpush1.bf16.msra.mxu0 %v2040
    %3380 = vmatprep.subr.bf16.mxu0 %v2053
    %3381 = vmatpush1.bf16.msra.mxu0 %v2052
    %3382 = vmatprep.mubr.bf16.mxu0 %v3062
    %3383 = vmatmul.mubr.bf16.gmra.mrb[0].mxu0 %v3061
    %v3384 = vpop.f32.mrb[0].mxu0
    %v3385 = vadd.f32 %v3344, %v3384
    %v3386 = vpop.f32.mrb[0].mxu0
    %v3387 = vadd.f32 %v3346, %v3386
    %v3388 = vpop.f32.mrb[0].mxu0
    %v3389 = vpop.f32.mrb[0].mxu0
    %3390 = vdwg.mxu0
    %3391 = vmatprep.subr.bf16.mxu0 %v1683
    %3392 = vmatpush1.bf16.msra.mxu0 %v1682
    %3393 = vmatprep.subr.bf16.mxu0 %v1695
    %3394 = vmatpush1.bf16.msra.mxu0 %v1694
    %3395 = vmatprep.subr.bf16.mxu0 %v1707
    %3396 = vmatpush1.bf16.msra.mxu0 %v1706
    %3397 = vmatprep.subr.bf16.mxu0 %v1719
    %3398 = vmatpush1.bf16.msra.mxu0 %v1718
    %3399 = vmatprep.subr.bf16.mxu0 %v1731
    %3400 = vmatpush1.bf16.msra.mxu0 %v1730
    %3401 = vmatprep.subr.bf16.mxu0 %v1743
    %3402 = vmatpush1.bf16.msra.mxu0 %v1742
    %3403 = vmatprep.subr.bf16.mxu0 %v1755
    %3404 = vmatpush1.bf16.msra.mxu0 %v1754
    %3405 = vmatprep.subr.bf16.mxu0 %v1767
    %3406 = vmatpush1.bf16.msra.mxu0 %v1766
    %3407 = vmatprep.subr.bf16.mxu0 %v1779
    %3408 = vmatpush1.bf16.msra.mxu0 %v1778
    %3409 = vmatprep.subr.bf16.mxu0 %v1791
    %3410 = vmatpush1.bf16.msra.mxu0 %v1790
    %3411 = vmatprep.subr.bf16.mxu0 %v1803
    %3412 = vmatpush1.bf16.msra.mxu0 %v1802
    %3413 = vmatprep.subr.bf16.mxu0 %v1815
    %3414 = vmatpush1.bf16.msra.mxu0 %v1814
    %3415 = vmatprep.subr.bf16.mxu0 %v1827
    %3416 = vmatpush1.bf16.msra.mxu0 %v1826
    %3417 = vmatprep.subr.bf16.mxu0 %v1839
    %3418 = vmatpush1.bf16.msra.mxu0 %v1838
    %3419 = vmatprep.subr.bf16.mxu0 %v1851
    %3420 = vmatpush1.bf16.msra.mxu0 %v1850
    %3421 = vmatprep.subr.bf16.mxu0 %v1863
    %3422 = vmatpush1.bf16.msra.mxu0 %v1862
    %3423 = vmatprep.mubr.bf16.mxu0 %v3060
    %3424 = vmatmul.mubr.bf16.gmra.mrb[0].mxu0 %v3059
    %v3425 = vpop.f32.mrb[0].mxu0
    %v3426 = vadd.f32 0.0, %v3425
    %v3427 = vpop.f32.mrb[0].mxu0
    %v3428 = vadd.f32 0.0, %v3427
    %v3429 = vpop.f32.mrb[0].mxu0
    %v3430 = vpop.f32.mrb[0].mxu0
    %3431 = vdwg.mxu0
    %3432 = vmatprep.subr.bf16.mxu0 %v1875
    %3433 = vmatpush1.bf16.msra.mxu0 %v1874
    %3434 = vmatprep.subr.bf16.mxu0 %v1887
    %3435 = vmatpush1.bf16.msra.mxu0 %v1886
    %3436 = vmatprep.subr.bf16.mxu0 %v1899
    %3437 = vmatpush1.bf16.msra.mxu0 %v1898
    %3438 = vmatprep.subr.bf16.mxu0 %v1911
    %3439 = vmatpush1.bf16.msra.mxu0 %v1910
    %3440 = vmatprep.subr.bf16.mxu0 %v1923
    %3441 = vmatpush1.bf16.msra.mxu0 %v1922
    %3442 = vmatprep.subr.bf16.mxu0 %v1935
    %3443 = vmatpush1.bf16.msra.mxu0 %v1934
    %3444 = vmatprep.subr.bf16.mxu0 %v1947
    %3445 = vmatpush1.bf16.msra.mxu0 %v1946
    %3446 = vmatprep.subr.bf16.mxu0 %v1959
    %3447 = vmatpush1.bf16.msra.mxu0 %v1958
    %3448 = vmatprep.subr.bf16.mxu0 %v1971
    %3449 = vmatpush1.bf16.msra.mxu0 %v1970
    %3450 = vmatprep.subr.bf16.mxu0 %v1983
    %3451 = vmatpush1.bf16.msra.mxu0 %v1982
    %3452 = vmatprep.subr.bf16.mxu0 %v1995
    %3453 = vmatpush1.bf16.msra.mxu0 %v1994
    %3454 = vmatprep.subr.bf16.mxu0 %v2007
    %3455 = vmatpush1.bf16.msra.mxu0 %v2006
    %3456 = vmatprep.subr.bf16.mxu0 %v2019
    %3457 = vmatpush1.bf16.msra.mxu0 %v2018
    %3458 = vmatprep.subr.bf16.mxu0 %v2031
    %3459 = vmatpush1.bf16.msra.mxu0 %v2030
    %3460 = vmatprep.subr.bf16.mxu0 %v2043
    %3461 = vmatpush1.bf16.msra.mxu0 %v2042
    %3462 = vmatprep.subr.bf16.mxu0 %v2055
    %3463 = vmatpush1.bf16.msra.mxu0 %v2054
    %3464 = vmatprep.mubr.bf16.mxu0 %v3062
    %3465 = vmatmul.mubr.bf16.gmra.mrb[0].mxu0 %v3061
    %v3466 = vpop.f32.mrb[0].mxu0
    %v3467 = vadd.f32 %v3426, %v3466
    %v3468 = vpop.f32.mrb[0].mxu0
    %v3469 = vadd.f32 %v3428, %v3468
    %v3470 = vpop.f32.mrb[0].mxu0
    %v3471 = vpop.f32.mrb[0].mxu0
    %3472 = vdwg.mxu0
    %3473 = vmatprep.subr.bf16.mxu0 %v1685
    %3474 = vmatpush1.bf16.msra.mxu0 %v1684
    %3475 = vmatprep.subr.bf16.mxu0 %v1697
    %3476 = vmatpush1.bf16.msra.mxu0 %v1696
    %3477 = vmatprep.subr.bf16.mxu0 %v1709
    %3478 = vmatpush1.bf16.msra.mxu0 %v1708
    %3479 = vmatprep.subr.bf16.mxu0 %v1721
    %3480 = vmatpush1.bf16.msra.mxu0 %v1720
    %3481 = vmatprep.subr.bf16.mxu0 %v1733
    %3482 = vmatpush1.bf16.msra.mxu0 %v1732
    %3483 = vmatprep.subr.bf16.mxu0 %v1745
    %3484 = vmatpush1.bf16.msra.mxu0 %v1744
    %3485 = vmatprep.subr.bf16.mxu0 %v1757
    %3486 = vmatpush1.bf16.msra.mxu0 %v1756
    %3487 = vmatprep.subr.bf16.mxu0 %v1769
    %3488 = vmatpush1.bf16.msra.mxu0 %v1768
    %3489 = vmatprep.subr.bf16.mxu0 %v1781
    %3490 = vmatpush1.bf16.msra.mxu0 %v1780
    %3491 = vmatprep.subr.bf16.mxu0 %v1793
    %3492 = vmatpush1.bf16.msra.mxu0 %v1792
    %3493 = vmatprep.subr.bf16.mxu0 %v1805
    %3494 = vmatpush1.bf16.msra.mxu0 %v1804
    %3495 = vmatprep.subr.bf16.mxu0 %v1817
    %3496 = vmatpush1.bf16.msra.mxu0 %v1816
    %3497 = vmatprep.subr.bf16.mxu0 %v1829
    %3498 = vmatpush1.bf16.msra.mxu0 %v1828
    %3499 = vmatprep.subr.bf16.mxu0 %v1841
    %3500 = vmatpush1.bf16.msra.mxu0 %v1840
    %3501 = vmatprep.subr.bf16.mxu0 %v1853
    %3502 = vmatpush1.bf16.msra.mxu0 %v1852
    %3503 = vmatprep.subr.bf16.mxu0 %v1865
    %3504 = vmatpush1.bf16.msra.mxu0 %v1864
    %3505 = vmatprep.mubr.bf16.mxu0 %v3060
    %3506 = vmatmul.mubr.bf16.gmra.mrb[0].mxu0 %v3059
    %v3507 = vpop.f32.mrb[0].mxu0
    %v3508 = vadd.f32 0.0, %v3507
    %v3509 = vpop.f32.mrb[0].mxu0
    %v3510 = vadd.f32 0.0, %v3509
    %v3511 = vpop.f32.mrb[0].mxu0
    %v3512 = vpop.f32.mrb[0].mxu0
    %3513 = vdwg.mxu0
    %3514 = vmatprep.subr.bf16.mxu0 %v1877
    %3515 = vmatpush1.bf16.msra.mxu0 %v1876
    %3516 = vmatprep.subr.bf16.mxu0 %v1889
    %3517 = vmatpush1.bf16.msra.mxu0 %v1888
    %3518 = vmatprep.subr.bf16.mxu0 %v1901
    %3519 = vmatpush1.bf16.msra.mxu0 %v1900
    %3520 = vmatprep.subr.bf16.mxu0 %v1913
    %3521 = vmatpush1.bf16.msra.mxu0 %v1912
    %3522 = vmatprep.subr.bf16.mxu0 %v1925
    %3523 = vmatpush1.bf16.msra.mxu0 %v1924
    %3524 = vmatprep.subr.bf16.mxu0 %v1937
    %3525 = vmatpush1.bf16.msra.mxu0 %v1936
    %3526 = vmatprep.subr.bf16.mxu0 %v1949
    %3527 = vmatpush1.bf16.msra.mxu0 %v1948
    %3528 = vmatprep.subr.bf16.mxu0 %v1961
    %3529 = vmatpush1.bf16.msra.mxu0 %v1960
    %3530 = vmatprep.subr.bf16.mxu0 %v1973
    %3531 = vmatpush1.bf16.msra.mxu0 %v1972
    %3532 = vmatprep.subr.bf16.mxu0 %v1985
    %3533 = vmatpush1.bf16.msra.mxu0 %v1984
    %3534 = vmatprep.subr.bf16.mxu0 %v1997
    %3535 = vmatpush1.bf16.msra.mxu0 %v1996
    %3536 = vmatprep.subr.bf16.mxu0 %v2009
    %3537 = vmatpush1.bf16.msra.mxu0 %v2008
    %3538 = vmatprep.subr.bf16.mxu0 %v2021
    %3539 = vmatpush1.bf16.msra.mxu0 %v2020
    %3540 = vmatprep.subr.bf16.mxu0 %v2033
    %3541 = vmatpush1.bf16.msra.mxu0 %v2032
    %3542 = vmatprep.subr.bf16.mxu0 %v2045
    %3543 = vmatpush1.bf16.msra.mxu0 %v2044
    %3544 = vmatprep.subr.bf16.mxu0 %v2057
    %3545 = vmatpush1.bf16.msra.mxu0 %v2056
    %3546 = vmatprep.mubr.bf16.mxu0 %v3062
    %3547 = vmatmul.mubr.bf16.gmra.mrb[0].mxu0 %v3061
    %v3548 = vpop.f32.mrb[0].mxu0
    %v3549 = vadd.f32 %v3508, %v3548
    %v3550 = vpop.f32.mrb[0].mxu0
    %v3551 = vadd.f32 %v3510, %v3550
    %v3552 = vpop.f32.mrb[0].mxu0
    %v3553 = vpop.f32.mrb[0].mxu0
    %3554 = vdwg.mxu0
    %v3555 = vadd.f32 %v3047, %v3139
    %v3556 = vadd.f32 %v3048, %v3141
    %v3557 = vadd.f32 %v3049, %v3221
    %v3558 = vadd.f32 %v3050, %v3223
    %v3559 = vxor.u32 %v3555, 2147483648
    %v3560 = vxor.u32 %v3556, 2147483648
    %v3561 = vxor.u32 %v3557, 2147483648
    %v3562 = vxor.u32 %v3558, 2147483648
    %v3563 = vmul.f32 %v3559, 1.442695
    %v3564 = vpow.pop %v3563
    %v3565 = vmul.f32 %v3560, 1.442695
    %v3566 = vpow.pop %v3565
    %v3567 = vmul.f32 %v3561, 1.442695
    %v3568 = vpow.pop %v3567
    %v3569 = vmul.f32 %v3562, 1.442695
    %v3570 = vpow.pop %v3569
    %v3571 = vadd.f32 %v3564, 1.0
    %v3572 = vadd.f32 %v3566, 1.0
    %v3573 = vadd.f32 %v3568, 1.0
    %v3574 = vadd.f32 %v3570, 1.0
    %v3575 = vrcp.pop %v3571
    %v3576 = vmul.f32 1.0, %v3575
    %v3577 = vrcp.pop %v3572
    %v3578 = vmul.f32 1.0, %v3577
    %v3579 = vrcp.pop %v3573
    %v3580 = vmul.f32 1.0, %v3579
    %v3581 = vrcp.pop %v3574
    %v3582 = vmul.f32 1.0, %v3581
    %v3583 = vadd.f32 %v3051, %v3303
    %v3584 = vadd.f32 %v3052, %v3305
    %v3585 = vadd.f32 %v3053, %v3385
    %v3586 = vadd.f32 %v3054, %v3387
    %v3587 = vxor.u32 %v3583, 2147483648
    %v3588 = vxor.u32 %v3584, 2147483648
    %v3589 = vxor.u32 %v3585, 2147483648
    %v3590 = vxor.u32 %v3586, 2147483648
    %v3591 = vmul.f32 %v3587, 1.442695
    %v3592 = vpow.pop %v3591
    %v3593 = vmul.f32 %v3588, 1.442695
    %v3594 = vpow.pop %v3593
    %v3595 = vmul.f32 %v3589, 1.442695
    %v3596 = vpow.pop %v3595
    %v3597 = vmul.f32 %v3590, 1.442695
    %v3598 = vpow.pop %v3597
    %v3599 = vadd.f32 %v3592, 1.0
    %v3600 = vadd.f32 %v3594, 1.0
    %v3601 = vadd.f32 %v3596, 1.0
    %v3602 = vadd.f32 %v3598, 1.0
    %v3603 = vrcp.pop %v3599
    %v3604 = vmul.f32 1.0, %v3603
    %v3605 = vrcp.pop %v3600
    %v3606 = vmul.f32 1.0, %v3605
    %v3607 = vrcp.pop %v3601
    %v3608 = vmul.f32 1.0, %v3607
    %v3609 = vrcp.pop %v3602
    %v3610 = vmul.f32 1.0, %v3609
    %v3611 = vadd.f32 %v3467, %v2994
    %v3612 = vadd.f32 %v3469, %v2998
    %v3613 = vadd.f32 %v3549, %v3002
    %v3614 = vadd.f32 %v3551, %v3006
    %v3615 = vmul.f32 %v3576, %v3611
    %v3616 = vmul.f32 %v3578, %v3612
    %v3617 = vmul.f32 %v3580, %v3613
    %v3618 = vmul.f32 %v3582, %v3614
    %v3619 = vadd.f32 %v3055, %v3615
    %v3620 = vadd.f32 %v3056, %v3616
    %v3621 = vadd.f32 %v3057, %v3617
    %v3622 = vadd.f32 %v3058, %v3618
    %v3623 = vtanh.pop %v3619
    %v3624 = vtanh.pop %v3620
    %v3625 = vtanh.pop %v3621
    %v3626 = vtanh.pop %v3622
    %v3627 = vsub.f32 1.0, %v3604
    %v3628 = vsub.f32 1.0, %v3606
    %v3629 = vsub.f32 1.0, %v3608
    %v3630 = vsub.f32 1.0, %v3610
    %v3631 = vmul.f32 %v3627, %v3623
    %v3632 = vmul.f32 %v3628, %v3624
    %v3633 = vmul.f32 %v3629, %v3625
    %v3634 = vmul.f32 %v3630, %v3626
    %v3635 = vmul.f32 %v3604, %v3039
    %v3636 = vmul.f32 %v3606, %v3040
    %v3637 = vmul.f32 %v3608, %v3041
    %v3638 = vmul.f32 %v3610, %v3042
    %v3639 = vadd.f32 %v3631, %v3635
    %v3640 = vadd.f32 %v3632, %v3636
    %v3641 = vadd.f32 %v3633, %v3637
    %v3642 = vadd.f32 %v3634, %v3638
    %3643 = vst [vmem:[#allocation2 + $0x20] sm:$0xff] %v3639
    %3644 = vst [vmem:[#allocation2 + $0x28] sm:$0xff] %v3640
    %3645 = vst [vmem:[#allocation2 + $0x30] sm:$0xff] %v3641
    %3646 = vst [vmem:[#allocation2 + $0x38] sm:$0xff] %v3642
    %v3647 = vld [vmem:[#allocation2] sm:$0xff]
    %v3648 = vld [vmem:[#allocation2 + $0x8] sm:$0xff]
    %v3649 = vld [vmem:[#allocation2 + $0x10] sm:$0xff]
    %v3650 = vld [vmem:[#allocation2 + $0x18] sm:$0xff]
    %v3651 = vld [vmem:[#allocation2 + $0x20] sm:$0xff]
    %v3652 = vld [vmem:[#allocation2 + $0x28] sm:$0xff]
    %v3653 = vld [vmem:[#allocation2 + $0x30] sm:$0xff]
    %v3654 = vld [vmem:[#allocation2 + $0x38] sm:$0xff]
    %v3655 = vpack.c.bf16 %v3651, %v3647
    %v3656 = vpack.c.bf16 %v3652, %v3648
    %v3657 = vpack.c.bf16 %v3653, %v3649
    %v3658 = vpack.c.bf16 %v3654, %v3650
    %v3659 = vld [vmem:[#allocation9] sm:$0xff]
    %v3660 = vld [vmem:[#allocation9 + $0x8] sm:$0xff]
    %v3661 = vld [vmem:[#allocation9 + $0x10] sm:$0xff]
    %v3662 = vld [vmem:[#allocation9 + $0x18] sm:$0xff]
    %v3663 = vld [vmem:[#allocation9 + $0x20] sm:$0xff]
    %v3664 = vld [vmem:[#allocation9 + $0x28] sm:$0xff]
    %v3665 = vld [vmem:[#allocation9 + $0x30] sm:$0xff]
    %v3666 = vld [vmem:[#allocation9 + $0x38] sm:$0xff]
    %v3667 = vld [vmem:[#allocation9 + $0x40] sm:$0xff]
    %v3668 = vld [vmem:[#allocation9 + $0x48] sm:$0xff]
    %v3669 = vld [vmem:[#allocation9 + $0x50] sm:$0xff]
    %v3670 = vld [vmem:[#allocation9 + $0x58] sm:$0xff]
    %v3671 = vld [vmem:[#allocation9 + $0x60] sm:$0xff]
    %v3672 = vld [vmem:[#allocation9 + $0x68] sm:$0xff]
    %v3673 = vld [vmem:[#allocation9 + $0x70] sm:$0xff]
    %v3674 = vld [vmem:[#allocation9 + $0x78] sm:$0xff]
    %v3675 = vld [vmem:[#allocation9 + $0x80] sm:$0xff]
    %v3676 = vld [vmem:[#allocation9 + $0x88] sm:$0xff]
    %v3677 = vld [vmem:[#allocation9 + $0x90] sm:$0xff]
    %v3678 = vld [vmem:[#allocation9 + $0x98] sm:$0xff]
    %v3679 = vld [vmem:[#allocation9 + $0xa0] sm:$0xff]
    %v3680 = vld [vmem:[#allocation9 + $0xa8] sm:$0xff]
    %v3681 = vld [vmem:[#allocation9 + $0xb0] sm:$0xff]
    %v3682 = vld [vmem:[#allocation9 + $0xb8] sm:$0xff]
    %v3683 = vld [vmem:[#allocation9 + $0xc0] sm:$0xff]
    %v3684 = vld [vmem:[#allocation9 + $0xc8] sm:$0xff]
    %v3685 = vld [vmem:[#allocation9 + $0xd0] sm:$0xff]
    %v3686 = vld [vmem:[#allocation9 + $0xd8] sm:$0xff]
    %v3687 = vld [vmem:[#allocation9 + $0xe0] sm:$0xff]
    %v3688 = vld [vmem:[#allocation9 + $0xe8] sm:$0xff]
    %v3689 = vld [vmem:[#allocation9 + $0xf0] sm:$0xff]
    %v3690 = vld [vmem:[#allocation9 + $0xf8] sm:$0xff]
    %v3691 = vld [vmem:[#allocation9 + $0x100] sm:$0xff]
    %v3692 = vld [vmem:[#allocation9 + $0x108] sm:$0xff]
    %v3693 = vld [vmem:[#allocation9 + $0x110] sm:$0xff]
    %v3694 = vld [vmem:[#allocation9 + $0x118] sm:$0xff]
    %v3695 = vld [vmem:[#allocation9 + $0x120] sm:$0xff]
    %v3696 = vld [vmem:[#allocation9 + $0x128] sm:$0xff]
    %v3697 = vld [vmem:[#allocation9 + $0x130] sm:$0xff]
    %v3698 = vld [vmem:[#allocation9 + $0x138] sm:$0xff]
    %v3699 = vld [vmem:[#allocation9 + $0x140] sm:$0xff]
    %v3700 = vld [vmem:[#allocation9 + $0x148] sm:$0xff]
    %v3701 = vld [vmem:[#allocation9 + $0x150] sm:$0xff]
    %v3702 = vld [vmem:[#allocation9 + $0x158] sm:$0xff]
    %v3703 = vld [vmem:[#allocation9 + $0x160] sm:$0xff]
    %v3704 = vld [vmem:[#allocation9 + $0x168] sm:$0xff]
    %v3705 = vld [vmem:[#allocation9 + $0x170] sm:$0xff]
    %v3706 = vld [vmem:[#allocation9 + $0x178] sm:$0xff]
    %v3707 = vld [vmem:[#allocation9 + $0x180] sm:$0xff]
    %v3708 = vld [vmem:[#allocation9 + $0x188] sm:$0xff]
    %v3709 = vld [vmem:[#allocation9 + $0x190] sm:$0xff]
    %v3710 = vld [vmem:[#allocation9 + $0x198] sm:$0xff]
    %v3711 = vld [vmem:[#allocation9 + $0x1a0] sm:$0xff]
    %v3712 = vld [vmem:[#allocation9 + $0x1a8] sm:$0xff]
    %v3713 = vld [vmem:[#allocation9 + $0x1b0] sm:$0xff]
    %v3714 = vld [vmem:[#allocation9 + $0x1b8] sm:$0xff]
    %v3715 = vld [vmem:[#allocation9 + $0x1c0] sm:$0xff]
    %v3716 = vld [vmem:[#allocation9 + $0x1c8] sm:$0xff]
    %v3717 = vld [vmem:[#allocation9 + $0x1d0] sm:$0xff]
    %v3718 = vld [vmem:[#allocation9 + $0x1d8] sm:$0xff]
    %v3719 = vld [vmem:[#allocation9 + $0x1e0] sm:$0xff]
    %v3720 = vld [vmem:[#allocation9 + $0x1e8] sm:$0xff]
    %v3721 = vld [vmem:[#allocation9 + $0x1f0] sm:$0xff]
    %v3722 = vld [vmem:[#allocation9 + $0x1f8] sm:$0xff]
    %v3723 = vld [vmem:[#allocation9 + $0x200] sm:$0xff]
    %v3724 = vld [vmem:[#allocation9 + $0x208] sm:$0xff]
    %v3725 = vld [vmem:[#allocation9 + $0x210] sm:$0xff]
    %v3726 = vld [vmem:[#allocation9 + $0x218] sm:$0xff]
    %v3727 = vld [vmem:[#allocation9 + $0x220] sm:$0xff]
    %v3728 = vld [vmem:[#allocation9 + $0x228] sm:$0xff]
    %v3729 = vld [vmem:[#allocation9 + $0x230] sm:$0xff]
    %v3730 = vld [vmem:[#allocation9 + $0x238] sm:$0xff]
    %v3731 = vld [vmem:[#allocation9 + $0x240] sm:$0xff]
    %v3732 = vld [vmem:[#allocation9 + $0x248] sm:$0xff]
    %v3733 = vld [vmem:[#allocation9 + $0x250] sm:$0xff]
    %v3734 = vld [vmem:[#allocation9 + $0x258] sm:$0xff]
    %v3735 = vld [vmem:[#allocation9 + $0x260] sm:$0xff]
    %v3736 = vld [vmem:[#allocation9 + $0x268] sm:$0xff]
    %v3737 = vld [vmem:[#allocation9 + $0x270] sm:$0xff]
    %v3738 = vld [vmem:[#allocation9 + $0x278] sm:$0xff]
    %v3739 = vld [vmem:[#allocation9 + $0x280] sm:$0xff]
    %v3740 = vld [vmem:[#allocation9 + $0x288] sm:$0xff]
    %v3741 = vld [vmem:[#allocation9 + $0x290] sm:$0xff]
    %v3742 = vld [vmem:[#allocation9 + $0x298] sm:$0xff]
    %v3743 = vld [vmem:[#allocation9 + $0x2a0] sm:$0xff]
    %v3744 = vld [vmem:[#allocation9 + $0x2a8] sm:$0xff]
    %v3745 = vld [vmem:[#allocation9 + $0x2b0] sm:$0xff]
    %v3746 = vld [vmem:[#allocation9 + $0x2b8] sm:$0xff]
    %v3747 = vld [vmem:[#allocation9 + $0x2c0] sm:$0xff]
    %v3748 = vld [vmem:[#allocation9 + $0x2c8] sm:$0xff]
    %v3749 = vld [vmem:[#allocation9 + $0x2d0] sm:$0xff]
    %v3750 = vld [vmem:[#allocation9 + $0x2d8] sm:$0xff]
    %v3751 = vld [vmem:[#allocation9 + $0x2e0] sm:$0xff]
    %v3752 = vld [vmem:[#allocation9 + $0x2e8] sm:$0xff]
    %v3753 = vld [vmem:[#allocation9 + $0x2f0] sm:$0xff]
    %v3754 = vld [vmem:[#allocation9 + $0x2f8] sm:$0xff]
    %v3755 = vld [vmem:[#allocation9 + $0x300] sm:$0xff]
    %v3756 = vld [vmem:[#allocation9 + $0x308] sm:$0xff]
    %v3757 = vld [vmem:[#allocation9 + $0x310] sm:$0xff]
    %v3758 = vld [vmem:[#allocation9 + $0x318] sm:$0xff]
    %v3759 = vld [vmem:[#allocation9 + $0x320] sm:$0xff]
    %v3760 = vld [vmem:[#allocation9 + $0x328] sm:$0xff]
    %v3761 = vld [vmem:[#allocation9 + $0x330] sm:$0xff]
    %v3762 = vld [vmem:[#allocation9 + $0x338] sm:$0xff]
    %v3763 = vld [vmem:[#allocation9 + $0x340] sm:$0xff]
    %v3764 = vld [vmem:[#allocation9 + $0x348] sm:$0xff]
    %v3765 = vld [vmem:[#allocation9 + $0x350] sm:$0xff]
    %v3766 = vld [vmem:[#allocation9 + $0x358] sm:$0xff]
    %v3767 = vld [vmem:[#allocation9 + $0x360] sm:$0xff]
    %v3768 = vld [vmem:[#allocation9 + $0x368] sm:$0xff]
    %v3769 = vld [vmem:[#allocation9 + $0x370] sm:$0xff]
    %v3770 = vld [vmem:[#allocation9 + $0x378] sm:$0xff]
    %v3771 = vld [vmem:[#allocation9 + $0x380] sm:$0xff]
    %v3772 = vld [vmem:[#allocation9 + $0x388] sm:$0xff]
    %v3773 = vld [vmem:[#allocation9 + $0x390] sm:$0xff]
    %v3774 = vld [vmem:[#allocation9 + $0x398] sm:$0xff]
    %v3775 = vld [vmem:[#allocation9 + $0x3a0] sm:$0xff]
    %v3776 = vld [vmem:[#allocation9 + $0x3a8] sm:$0xff]
    %v3777 = vld [vmem:[#allocation9 + $0x3b0] sm:$0xff]
    %v3778 = vld [vmem:[#allocation9 + $0x3b8] sm:$0xff]
    %v3779 = vld [vmem:[#allocation9 + $0x3c0] sm:$0xff]
    %v3780 = vld [vmem:[#allocation9 + $0x3c8] sm:$0xff]
    %v3781 = vld [vmem:[#allocation9 + $0x3d0] sm:$0xff]
    %v3782 = vld [vmem:[#allocation9 + $0x3d8] sm:$0xff]
    %v3783 = vld [vmem:[#allocation9 + $0x3e0] sm:$0xff]
    %v3784 = vld [vmem:[#allocation9 + $0x3e8] sm:$0xff]
    %v3785 = vld [vmem:[#allocation9 + $0x3f0] sm:$0xff]
    %v3786 = vld [vmem:[#allocation9 + $0x3f8] sm:$0xff]
    %v3787 = vld [vmem:[#allocation9 + $0x400] sm:$0xff]
    %v3788 = vld [vmem:[#allocation9 + $0x408] sm:$0xff]
    %v3789 = vld [vmem:[#allocation9 + $0x410] sm:$0xff]
    %v3790 = vld [vmem:[#allocation9 + $0x418] sm:$0xff]
    %v3791 = vld [vmem:[#allocation9 + $0x420] sm:$0xff]
    %v3792 = vld [vmem:[#allocation9 + $0x428] sm:$0xff]
    %v3793 = vld [vmem:[#allocation9 + $0x430] sm:$0xff]
    %v3794 = vld [vmem:[#allocation9 + $0x438] sm:$0xff]
    %v3795 = vld [vmem:[#allocation9 + $0x440] sm:$0xff]
    %v3796 = vld [vmem:[#allocation9 + $0x448] sm:$0xff]
    %v3797 = vld [vmem:[#allocation9 + $0x450] sm:$0xff]
    %v3798 = vld [vmem:[#allocation9 + $0x458] sm:$0xff]
    %v3799 = vld [vmem:[#allocation9 + $0x460] sm:$0xff]
    %v3800 = vld [vmem:[#allocation9 + $0x468] sm:$0xff]
    %v3801 = vld [vmem:[#allocation9 + $0x470] sm:$0xff]
    %v3802 = vld [vmem:[#allocation9 + $0x478] sm:$0xff]
    %v3803 = vld [vmem:[#allocation9 + $0x480] sm:$0xff]
    %v3804 = vld [vmem:[#allocation9 + $0x488] sm:$0xff]
    %v3805 = vld [vmem:[#allocation9 + $0x490] sm:$0xff]
    %v3806 = vld [vmem:[#allocation9 + $0x498] sm:$0xff]
    %v3807 = vld [vmem:[#allocation9 + $0x4a0] sm:$0xff]
    %v3808 = vld [vmem:[#allocation9 + $0x4a8] sm:$0xff]
    %v3809 = vld [vmem:[#allocation9 + $0x4b0] sm:$0xff]
    %v3810 = vld [vmem:[#allocation9 + $0x4b8] sm:$0xff]
    %v3811 = vld [vmem:[#allocation9 + $0x4c0] sm:$0xff]
    %v3812 = vld [vmem:[#allocation9 + $0x4c8] sm:$0xff]
    %v3813 = vld [vmem:[#allocation9 + $0x4d0] sm:$0xff]
    %v3814 = vld [vmem:[#allocation9 + $0x4d8] sm:$0xff]
    %v3815 = vld [vmem:[#allocation9 + $0x4e0] sm:$0xff]
    %v3816 = vld [vmem:[#allocation9 + $0x4e8] sm:$0xff]
    %v3817 = vld [vmem:[#allocation9 + $0x4f0] sm:$0xff]
    %v3818 = vld [vmem:[#allocation9 + $0x4f8] sm:$0xff]
    %v3819 = vld [vmem:[#allocation9 + $0x500] sm:$0xff]
    %v3820 = vld [vmem:[#allocation9 + $0x508] sm:$0xff]
    %v3821 = vld [vmem:[#allocation9 + $0x510] sm:$0xff]
    %v3822 = vld [vmem:[#allocation9 + $0x518] sm:$0xff]
    %v3823 = vld [vmem:[#allocation9 + $0x520] sm:$0xff]
    %v3824 = vld [vmem:[#allocation9 + $0x528] sm:$0xff]
    %v3825 = vld [vmem:[#allocation9 + $0x530] sm:$0xff]
    %v3826 = vld [vmem:[#allocation9 + $0x538] sm:$0xff]
    %v3827 = vld [vmem:[#allocation9 + $0x540] sm:$0xff]
    %v3828 = vld [vmem:[#allocation9 + $0x548] sm:$0xff]
    %v3829 = vld [vmem:[#allocation9 + $0x550] sm:$0xff]
    %v3830 = vld [vmem:[#allocation9 + $0x558] sm:$0xff]
    %v3831 = vld [vmem:[#allocation9 + $0x560] sm:$0xff]
    %v3832 = vld [vmem:[#allocation9 + $0x568] sm:$0xff]
    %v3833 = vld [vmem:[#allocation9 + $0x570] sm:$0xff]
    %v3834 = vld [vmem:[#allocation9 + $0x578] sm:$0xff]
    %v3835 = vld [vmem:[#allocation9 + $0x580] sm:$0xff]
    %v3836 = vld [vmem:[#allocation9 + $0x588] sm:$0xff]
    %v3837 = vld [vmem:[#allocation9 + $0x590] sm:$0xff]
    %v3838 = vld [vmem:[#allocation9 + $0x598] sm:$0xff]
    %v3839 = vld [vmem:[#allocation9 + $0x5a0] sm:$0xff]
    %v3840 = vld [vmem:[#allocation9 + $0x5a8] sm:$0xff]
    %v3841 = vld [vmem:[#allocation9 + $0x5b0] sm:$0xff]
    %v3842 = vld [vmem:[#allocation9 + $0x5b8] sm:$0xff]
    %v3843 = vld [vmem:[#allocation9 + $0x5c0] sm:$0xff]
    %v3844 = vld [vmem:[#allocation9 + $0x5c8] sm:$0xff]
    %v3845 = vld [vmem:[#allocation9 + $0x5d0] sm:$0xff]
    %v3846 = vld [vmem:[#allocation9 + $0x5d8] sm:$0xff]
    %v3847 = vld [vmem:[#allocation9 + $0x5e0] sm:$0xff]
    %v3848 = vld [vmem:[#allocation9 + $0x5e8] sm:$0xff]
    %v3849 = vld [vmem:[#allocation9 + $0x5f0] sm:$0xff]
    %v3850 = vld [vmem:[#allocation9 + $0x5f8] sm:$0xff]
    %v3851 = vld [vmem:[%s4] sm:$0x3f]
    %v3853 = vlaneseq
    %v3854 = vshrl.u32 %v3853, 7
    %v3855 = vsub.s32 0, %v3854
    %v3856 = vrot.slane %v3851, %v3855
    %v3857 = vlaneseq
    %v3858 = vshrl.u32 %v3857, 7
    %v3859 = vsub.s32 1, %v3858
    %v3860 = vrot.slane %v3851, %v3859
    %v3861 = vlaneseq
    %v3862 = vshrl.u32 %v3861, 7
    %v3863 = vsub.s32 2, %v3862
    %v3864 = vrot.slane %v3851, %v3863
    %v3865 = vlaneseq
    %v3866 = vshrl.u32 %v3865, 7
    %v3867 = vsub.s32 3, %v3866
    %v3868 = vrot.slane %v3851, %v3867
    %v3869 = vlaneseq
    %v3870 = vshrl.u32 %v3869, 7
    %v3871 = vsub.s32 4, %v3870
    %v3872 = vrot.slane %v3851, %v3871
    %v3873 = vlaneseq
    %v3874 = vshrl.u32 %v3873, 7
    %v3875 = vsub.s32 5, %v3874
    %v3876 = vrot.slane %v3851, %v3875
    %v4075 = vunpack.c.l.b16 %v3659
    %v4076 = vunpack.c.h.b16 %v3659
    %v4077 = vunpack.c.l.b16 %v3660
    %v4078 = vunpack.c.h.b16 %v3660
    %v4079 = vunpack.c.l.b16 %v3661
    %v4080 = vunpack.c.h.b16 %v3661
    %v4081 = vunpack.c.l.b16 %v3662
    %v4082 = vunpack.c.h.b16 %v3662
    %v4083 = vunpack.c.l.b16 %v3663
    %v4084 = vunpack.c.h.b16 %v3663
    %v4085 = vunpack.c.l.b16 %v3664
    %v4086 = vunpack.c.h.b16 %v3664
    %v4087 = vunpack.c.l.b16 %v3665
    %v4088 = vunpack.c.h.b16 %v3665
    %v4089 = vunpack.c.l.b16 %v3666
    %v4090 = vunpack.c.h.b16 %v3666
    %v4091 = vunpack.c.l.b16 %v3667
    %v4092 = vunpack.c.h.b16 %v3667
    %v4093 = vunpack.c.l.b16 %v3668
    %v4094 = vunpack.c.h.b16 %v3668
    %v4095 = vunpack.c.l.b16 %v3669
    %v4096 = vunpack.c.h.b16 %v3669
    %v4097 = vunpack.c.l.b16 %v3670
    %v4098 = vunpack.c.h.b16 %v3670
    %v4099 = vunpack.c.l.b16 %v3671
    %v4100 = vunpack.c.h.b16 %v3671
    %v4101 = vunpack.c.l.b16 %v3672
    %v4102 = vunpack.c.h.b16 %v3672
    %v4103 = vunpack.c.l.b16 %v3673
    %v4104 = vunpack.c.h.b16 %v3673
    %v4105 = vunpack.c.l.b16 %v3674
    %v4106 = vunpack.c.h.b16 %v3674
    %v4107 = vunpack.c.l.b16 %v3675
    %v4108 = vunpack.c.h.b16 %v3675
    %v4109 = vunpack.c.l.b16 %v3676
    %v4110 = vunpack.c.h.b16 %v3676
    %v4111 = vunpack.c.l.b16 %v3677
    %v4112 = vunpack.c.h.b16 %v3677
    %v4113 = vunpack.c.l.b16 %v3678
    %v4114 = vunpack.c.h.b16 %v3678
    %v4115 = vunpack.c.l.b16 %v3679
    %v4116 = vunpack.c.h.b16 %v3679
    %v4117 = vunpack.c.l.b16 %v3680
    %v4118 = vunpack.c.h.b16 %v3680
    %v4119 = vunpack.c.l.b16 %v3681
    %v4120 = vunpack.c.h.b16 %v3681
    %v4121 = vunpack.c.l.b16 %v3682
    %v4122 = vunpack.c.h.b16 %v3682
    %v4123 = vunpack.c.l.b16 %v3683
    %v4124 = vunpack.c.h.b16 %v3683
    %v4125 = vunpack.c.l.b16 %v3684
    %v4126 = vunpack.c.h.b16 %v3684
    %v4127 = vunpack.c.l.b16 %v3685
    %v4128 = vunpack.c.h.b16 %v3685
    %v4129 = vunpack.c.l.b16 %v3686
    %v4130 = vunpack.c.h.b16 %v3686
    %v4131 = vunpack.c.l.b16 %v3687
    %v4132 = vunpack.c.h.b16 %v3687
    %v4133 = vunpack.c.l.b16 %v3688
    %v4134 = vunpack.c.h.b16 %v3688
    %v4135 = vunpack.c.l.b16 %v3689
    %v4136 = vunpack.c.h.b16 %v3689
    %v4137 = vunpack.c.l.b16 %v3690
    %v4138 = vunpack.c.h.b16 %v3690
    %v4139 = vunpack.c.l.b16 %v3691
    %v4140 = vunpack.c.h.b16 %v3691
    %v4141 = vunpack.c.l.b16 %v3692
    %v4142 = vunpack.c.h.b16 %v3692
    %v4143 = vunpack.c.l.b16 %v3693
    %v4144 = vunpack.c.h.b16 %v3693
    %v4145 = vunpack.c.l.b16 %v3694
    %v4146 = vunpack.c.h.b16 %v3694
    %v4147 = vunpack.c.l.b16 %v3695
    %v4148 = vunpack.c.h.b16 %v3695
    %v4149 = vunpack.c.l.b16 %v3696
    %v4150 = vunpack.c.h.b16 %v3696
    %v4151 = vunpack.c.l.b16 %v3697
    %v4152 = vunpack.c.h.b16 %v3697
    %v4153 = vunpack.c.l.b16 %v3698
    %v4154 = vunpack.c.h.b16 %v3698
    %v4155 = vunpack.c.l.b16 %v3699
    %v4156 = vunpack.c.h.b16 %v3699
    %v4157 = vunpack.c.l.b16 %v3700
    %v4158 = vunpack.c.h.b16 %v3700
    %v4159 = vunpack.c.l.b16 %v3701
    %v4160 = vunpack.c.h.b16 %v3701
    %v4161 = vunpack.c.l.b16 %v3702
    %v4162 = vunpack.c.h.b16 %v3702
    %v4163 = vunpack.c.l.b16 %v3703
    %v4164 = vunpack.c.h.b16 %v3703
    %v4165 = vunpack.c.l.b16 %v3704
    %v4166 = vunpack.c.h.b16 %v3704
    %v4167 = vunpack.c.l.b16 %v3705
    %v4168 = vunpack.c.h.b16 %v3705
    %v4169 = vunpack.c.l.b16 %v3706
    %v4170 = vunpack.c.h.b16 %v3706
    %v4171 = vunpack.c.l.b16 %v3707
    %v4172 = vunpack.c.h.b16 %v3707
    %v4173 = vunpack.c.l.b16 %v3708
    %v4174 = vunpack.c.h.b16 %v3708
    %v4175 = vunpack.c.l.b16 %v3709
    %v4176 = vunpack.c.h.b16 %v3709
    %v4177 = vunpack.c.l.b16 %v3710
    %v4178 = vunpack.c.h.b16 %v3710
    %v4179 = vunpack.c.l.b16 %v3711
    %v4180 = vunpack.c.h.b16 %v3711
    %v4181 = vunpack.c.l.b16 %v3712
    %v4182 = vunpack.c.h.b16 %v3712
    %v4183 = vunpack.c.l.b16 %v3713
    %v4184 = vunpack.c.h.b16 %v3713
    %v4185 = vunpack.c.l.b16 %v3714
    %v4186 = vunpack.c.h.b16 %v3714
    %v4187 = vunpack.c.l.b16 %v3715
    %v4188 = vunpack.c.h.b16 %v3715
    %v4189 = vunpack.c.l.b16 %v3716
    %v4190 = vunpack.c.h.b16 %v3716
    %v4191 = vunpack.c.l.b16 %v3717
    %v4192 = vunpack.c.h.b16 %v3717
    %v4193 = vunpack.c.l.b16 %v3718
    %v4194 = vunpack.c.h.b16 %v3718
    %v4195 = vunpack.c.l.b16 %v3719
    %v4196 = vunpack.c.h.b16 %v3719
    %v4197 = vunpack.c.l.b16 %v3720
    %v4198 = vunpack.c.h.b16 %v3720
    %v4199 = vunpack.c.l.b16 %v3721
    %v4200 = vunpack.c.h.b16 %v3721
    %v4201 = vunpack.c.l.b16 %v3722
    %v4202 = vunpack.c.h.b16 %v3722
    %v4203 = vunpack.c.l.b16 %v3723
    %v4204 = vunpack.c.h.b16 %v3723
    %v4205 = vunpack.c.l.b16 %v3724
    %v4206 = vunpack.c.h.b16 %v3724
    %v4207 = vunpack.c.l.b16 %v3725
    %v4208 = vunpack.c.h.b16 %v3725
    %v4209 = vunpack.c.l.b16 %v3726
    %v4210 = vunpack.c.h.b16 %v3726
    %v4211 = vunpack.c.l.b16 %v3727
    %v4212 = vunpack.c.h.b16 %v3727
    %v4213 = vunpack.c.l.b16 %v3728
    %v4214 = vunpack.c.h.b16 %v3728
    %v4215 = vunpack.c.l.b16 %v3729
    %v4216 = vunpack.c.h.b16 %v3729
    %v4217 = vunpack.c.l.b16 %v3730
    %v4218 = vunpack.c.h.b16 %v3730
    %v4219 = vunpack.c.l.b16 %v3731
    %v4220 = vunpack.c.h.b16 %v3731
    %v4221 = vunpack.c.l.b16 %v3732
    %v4222 = vunpack.c.h.b16 %v3732
    %v4223 = vunpack.c.l.b16 %v3733
    %v4224 = vunpack.c.h.b16 %v3733
    %v4225 = vunpack.c.l.b16 %v3734
    %v4226 = vunpack.c.h.b16 %v3734
    %v4227 = vunpack.c.l.b16 %v3735
    %v4228 = vunpack.c.h.b16 %v3735
    %v4229 = vunpack.c.l.b16 %v3736
    %v4230 = vunpack.c.h.b16 %v3736
    %v4231 = vunpack.c.l.b16 %v3737
    %v4232 = vunpack.c.h.b16 %v3737
    %v4233 = vunpack.c.l.b16 %v3738
    %v4234 = vunpack.c.h.b16 %v3738
    %v4235 = vunpack.c.l.b16 %v3739
    %v4236 = vunpack.c.h.b16 %v3739
    %v4237 = vunpack.c.l.b16 %v3740
    %v4238 = vunpack.c.h.b16 %v3740
    %v4239 = vunpack.c.l.b16 %v3741
    %v4240 = vunpack.c.h.b16 %v3741
    %v4241 = vunpack.c.l.b16 %v3742
    %v4242 = vunpack.c.h.b16 %v3742
    %v4243 = vunpack.c.l.b16 %v3743
    %v4244 = vunpack.c.h.b16 %v3743
    %v4245 = vunpack.c.l.b16 %v3744
    %v4246 = vunpack.c.h.b16 %v3744
    %v4247 = vunpack.c.l.b16 %v3745
    %v4248 = vunpack.c.h.b16 %v3745
    %v4249 = vunpack.c.l.b16 %v3746
    %v4250 = vunpack.c.h.b16 %v3746
    %v4251 = vunpack.c.l.b16 %v3747
    %v4252 = vunpack.c.h.b16 %v3747
    %v4253 = vunpack.c.l.b16 %v3748
    %v4254 = vunpack.c.h.b16 %v3748
    %v4255 = vunpack.c.l.b16 %v3749
    %v4256 = vunpack.c.h.b16 %v3749
    %v4257 = vunpack.c.l.b16 %v3750
    %v4258 = vunpack.c.h.b16 %v3750
    %v4259 = vunpack.c.l.b16 %v3751
    %v4260 = vunpack.c.h.b16 %v3751
    %v4261 = vunpack.c.l.b16 %v3752
    %v4262 = vunpack.c.h.b16 %v3752
    %v4263 = vunpack.c.l.b16 %v3753
    %v4264 = vunpack.c.h.b16 %v3753
    %v4265 = vunpack.c.l.b16 %v3754
    %v4266 = vunpack.c.h.b16 %v3754
    %v4267 = vunpack.c.l.b16 %v3755
    %v4268 = vunpack.c.h.b16 %v3755
    %v4269 = vunpack.c.l.b16 %v3756
    %v4270 = vunpack.c.h.b16 %v3756
    %v4271 = vunpack.c.l.b16 %v3757
    %v4272 = vunpack.c.h.b16 %v3757
    %v4273 = vunpack.c.l.b16 %v3758
    %v4274 = vunpack.c.h.b16 %v3758
    %v4275 = vunpack.c.l.b16 %v3759
    %v4276 = vunpack.c.h.b16 %v3759
    %v4277 = vunpack.c.l.b16 %v3760
    %v4278 = vunpack.c.h.b16 %v3760
    %v4279 = vunpack.c.l.b16 %v3761
    %v4280 = vunpack.c.h.b16 %v3761
    %v4281 = vunpack.c.l.b16 %v3762
    %v4282 = vunpack.c.h.b16 %v3762
    %v4283 = vunpack.c.l.b16 %v3763
    %v4284 = vunpack.c.h.b16 %v3763
    %v4285 = vunpack.c.l.b16 %v3764
    %v4286 = vunpack.c.h.b16 %v3764
    %v4287 = vunpack.c.l.b16 %v3765
    %v4288 = vunpack.c.h.b16 %v3765
    %v4289 = vunpack.c.l.b16 %v3766
    %v4290 = vunpack.c.h.b16 %v3766
    %v4291 = vunpack.c.l.b16 %v3767
    %v4292 = vunpack.c.h.b16 %v3767
    %v4293 = vunpack.c.l.b16 %v3768
    %v4294 = vunpack.c.h.b16 %v3768
    %v4295 = vunpack.c.l.b16 %v3769
    %v4296 = vunpack.c.h.b16 %v3769
    %v4297 = vunpack.c.l.b16 %v3770
    %v4298 = vunpack.c.h.b16 %v3770
    %v4299 = vunpack.c.l.b16 %v3771
    %v4300 = vunpack.c.h.b16 %v3771
    %v4301 = vunpack.c.l.b16 %v3772
    %v4302 = vunpack.c.h.b16 %v3772
    %v4303 = vunpack.c.l.b16 %v3773
    %v4304 = vunpack.c.h.b16 %v3773
    %v4305 = vunpack.c.l.b16 %v3774
    %v4306 = vunpack.c.h.b16 %v3774
    %v4307 = vunpack.c.l.b16 %v3775
    %v4308 = vunpack.c.h.b16 %v3775
    %v4309 = vunpack.c.l.b16 %v3776
    %v4310 = vunpack.c.h.b16 %v3776
    %v4311 = vunpack.c.l.b16 %v3777
    %v4312 = vunpack.c.h.b16 %v3777
    %v4313 = vunpack.c.l.b16 %v3778
    %v4314 = vunpack.c.h.b16 %v3778
    %v4315 = vunpack.c.l.b16 %v3779
    %v4316 = vunpack.c.h.b16 %v3779
    %v4317 = vunpack.c.l.b16 %v3780
    %v4318 = vunpack.c.h.b16 %v3780
    %v4319 = vunpack.c.l.b16 %v3781
    %v4320 = vunpack.c.h.b16 %v3781
    %v4321 = vunpack.c.l.b16 %v3782
    %v4322 = vunpack.c.h.b16 %v3782
    %v4323 = vunpack.c.l.b16 %v3783
    %v4324 = vunpack.c.h.b16 %v3783
    %v4325 = vunpack.c.l.b16 %v3784
    %v4326 = vunpack.c.h.b16 %v3784
    %v4327 = vunpack.c.l.b16 %v3785
    %v4328 = vunpack.c.h.b16 %v3785
    %v4329 = vunpack.c.l.b16 %v3786
    %v4330 = vunpack.c.h.b16 %v3786
    %v4331 = vunpack.c.l.b16 %v3787
    %v4332 = vunpack.c.h.b16 %v3787
    %v4333 = vunpack.c.l.b16 %v3788
    %v4334 = vunpack.c.h.b16 %v3788
    %v4335 = vunpack.c.l.b16 %v3789
    %v4336 = vunpack.c.h.b16 %v3789
    %v4337 = vunpack.c.l.b16 %v3790
    %v4338 = vunpack.c.h.b16 %v3790
    %v4339 = vunpack.c.l.b16 %v3791
    %v4340 = vunpack.c.h.b16 %v3791
    %v4341 = vunpack.c.l.b16 %v3792
    %v4342 = vunpack.c.h.b16 %v3792
    %v4343 = vunpack.c.l.b16 %v3793
    %v4344 = vunpack.c.h.b16 %v3793
    %v4345 = vunpack.c.l.b16 %v3794
    %v4346 = vunpack.c.h.b16 %v3794
    %v4347 = vunpack.c.l.b16 %v3795
    %v4348 = vunpack.c.h.b16 %v3795
    %v4349 = vunpack.c.l.b16 %v3796
    %v4350 = vunpack.c.h.b16 %v3796
    %v4351 = vunpack.c.l.b16 %v3797
    %v4352 = vunpack.c.h.b16 %v3797
    %v4353 = vunpack.c.l.b16 %v3798
    %v4354 = vunpack.c.h.b16 %v3798
    %v4355 = vunpack.c.l.b16 %v3799
    %v4356 = vunpack.c.h.b16 %v3799
    %v4357 = vunpack.c.l.b16 %v3800
    %v4358 = vunpack.c.h.b16 %v3800
    %v4359 = vunpack.c.l.b16 %v3801
    %v4360 = vunpack.c.h.b16 %v3801
    %v4361 = vunpack.c.l.b16 %v3802
    %v4362 = vunpack.c.h.b16 %v3802
    %v4363 = vunpack.c.l.b16 %v3803
    %v4364 = vunpack.c.h.b16 %v3803
    %v4365 = vunpack.c.l.b16 %v3804
    %v4366 = vunpack.c.h.b16 %v3804
    %v4367 = vunpack.c.l.b16 %v3805
    %v4368 = vunpack.c.h.b16 %v3805
    %v4369 = vunpack.c.l.b16 %v3806
    %v4370 = vunpack.c.h.b16 %v3806
    %v4371 = vunpack.c.l.b16 %v3807
    %v4372 = vunpack.c.h.b16 %v3807
    %v4373 = vunpack.c.l.b16 %v3808
    %v4374 = vunpack.c.h.b16 %v3808
    %v4375 = vunpack.c.l.b16 %v3809
    %v4376 = vunpack.c.h.b16 %v3809
    %v4377 = vunpack.c.l.b16 %v3810
    %v4378 = vunpack.c.h.b16 %v3810
    %v4379 = vunpack.c.l.b16 %v3811
    %v4380 = vunpack.c.h.b16 %v3811
    %v4381 = vunpack.c.l.b16 %v3812
    %v4382 = vunpack.c.h.b16 %v3812
    %v4383 = vunpack.c.l.b16 %v3813
    %v4384 = vunpack.c.h.b16 %v3813
    %v4385 = vunpack.c.l.b16 %v3814
    %v4386 = vunpack.c.h.b16 %v3814
    %v4387 = vunpack.c.l.b16 %v3815
    %v4388 = vunpack.c.h.b16 %v3815
    %v4389 = vunpack.c.l.b16 %v3816
    %v4390 = vunpack.c.h.b16 %v3816
    %v4391 = vunpack.c.l.b16 %v3817
    %v4392 = vunpack.c.h.b16 %v3817
    %v4393 = vunpack.c.l.b16 %v3818
    %v4394 = vunpack.c.h.b16 %v3818
    %v4395 = vunpack.c.l.b16 %v3819
    %v4396 = vunpack.c.h.b16 %v3819
    %v4397 = vunpack.c.l.b16 %v3820
    %v4398 = vunpack.c.h.b16 %v3820
    %v4399 = vunpack.c.l.b16 %v3821
    %v4400 = vunpack.c.h.b16 %v3821
    %v4401 = vunpack.c.l.b16 %v3822
    %v4402 = vunpack.c.h.b16 %v3822
    %v4403 = vunpack.c.l.b16 %v3823
    %v4404 = vunpack.c.h.b16 %v3823
    %v4405 = vunpack.c.l.b16 %v3824
    %v4406 = vunpack.c.h.b16 %v3824
    %v4407 = vunpack.c.l.b16 %v3825
    %v4408 = vunpack.c.h.b16 %v3825
    %v4409 = vunpack.c.l.b16 %v3826
    %v4410 = vunpack.c.h.b16 %v3826
    %v4411 = vunpack.c.l.b16 %v3827
    %v4412 = vunpack.c.h.b16 %v3827
    %v4413 = vunpack.c.l.b16 %v3828
    %v4414 = vunpack.c.h.b16 %v3828
    %v4415 = vunpack.c.l.b16 %v3829
    %v4416 = vunpack.c.h.b16 %v3829
    %v4417 = vunpack.c.l.b16 %v3830
    %v4418 = vunpack.c.h.b16 %v3830
    %v4419 = vunpack.c.l.b16 %v3831
    %v4420 = vunpack.c.h.b16 %v3831
    %v4421 = vunpack.c.l.b16 %v3832
    %v4422 = vunpack.c.h.b16 %v3832
    %v4423 = vunpack.c.l.b16 %v3833
    %v4424 = vunpack.c.h.b16 %v3833
    %v4425 = vunpack.c.l.b16 %v3834
    %v4426 = vunpack.c.h.b16 %v3834
    %v4427 = vunpack.c.l.b16 %v3835
    %v4428 = vunpack.c.h.b16 %v3835
    %v4429 = vunpack.c.l.b16 %v3836
    %v4430 = vunpack.c.h.b16 %v3836
    %v4431 = vunpack.c.l.b16 %v3837
    %v4432 = vunpack.c.h.b16 %v3837
    %v4433 = vunpack.c.l.b16 %v3838
    %v4434 = vunpack.c.h.b16 %v3838
    %v4435 = vunpack.c.l.b16 %v3839
    %v4436 = vunpack.c.h.b16 %v3839
    %v4437 = vunpack.c.l.b16 %v3840
    %v4438 = vunpack.c.h.b16 %v3840
    %v4439 = vunpack.c.l.b16 %v3841
    %v4440 = vunpack.c.h.b16 %v3841
    %v4441 = vunpack.c.l.b16 %v3842
    %v4442 = vunpack.c.h.b16 %v3842
    %v4443 = vunpack.c.l.b16 %v3843
    %v4444 = vunpack.c.h.b16 %v3843
    %v4445 = vunpack.c.l.b16 %v3844
    %v4446 = vunpack.c.h.b16 %v3844
    %v4447 = vunpack.c.l.b16 %v3845
    %v4448 = vunpack.c.h.b16 %v3845
    %v4449 = vunpack.c.l.b16 %v3846
    %v4450 = vunpack.c.h.b16 %v3846
    %v4451 = vunpack.c.l.b16 %v3847
    %v4452 = vunpack.c.h.b16 %v3847
    %v4453 = vunpack.c.l.b16 %v3848
    %v4454 = vunpack.c.h.b16 %v3848
    %v4455 = vunpack.c.l.b16 %v3849
    %v4456 = vunpack.c.h.b16 %v3849
    %v4457 = vunpack.c.l.b16 %v3850
    %v4458 = vunpack.c.h.b16 %v3850
    %v4459 = vpack.c.b16 %v4081, %v4075
    %v4460 = vpack.c.b16 %v4082, %v4076
    %v4461 = vpack.c.b16 %v4083, %v4077
    %v4462 = vpack.c.b16 %v4084, %v4078
    %v4463 = vpack.c.b16 %v4085, %v4079
    %v4464 = vpack.c.b16 %v4086, %v4080
    %v4465 = vpack.c.b16 %v4093, %v4087
    %v4466 = vpack.c.b16 %v4094, %v4088
    %v4467 = vpack.c.b16 %v4095, %v4089
    %v4468 = vpack.c.b16 %v4096, %v4090
    %v4469 = vpack.c.b16 %v4097, %v4091
    %v4470 = vpack.c.b16 %v4098, %v4092
    %v4471 = vpack.c.b16 %v4105, %v4099
    %v4472 = vpack.c.b16 %v4106, %v4100
    %v4473 = vpack.c.b16 %v4107, %v4101
    %v4474 = vpack.c.b16 %v4108, %v4102
    %v4475 = vpack.c.b16 %v4109, %v4103
    %v4476 = vpack.c.b16 %v4110, %v4104
    %v4477 = vpack.c.b16 %v4117, %v4111
    %v4478 = vpack.c.b16 %v4118, %v4112
    %v4479 = vpack.c.b16 %v4119, %v4113
    %v4480 = vpack.c.b16 %v4120, %v4114
    %v4481 = vpack.c.b16 %v4121, %v4115
    %v4482 = vpack.c.b16 %v4122, %v4116
    %v4483 = vpack.c.b16 %v4129, %v4123
    %v4484 = vpack.c.b16 %v4130, %v4124
    %v4485 = vpack.c.b16 %v4131, %v4125
    %v4486 = vpack.c.b16 %v4132, %v4126
    %v4487 = vpack.c.b16 %v4133, %v4127
    %v4488 = vpack.c.b16 %v4134, %v4128
    %v4489 = vpack.c.b16 %v4141, %v4135
    %v4490 = vpack.c.b16 %v4142, %v4136
    %v4491 = vpack.c.b16 %v4143, %v4137
    %v4492 = vpack.c.b16 %v4144, %v4138
    %v4493 = vpack.c.b16 %v4145, %v4139
    %v4494 = vpack.c.b16 %v4146, %v4140
    %v4495 = vpack.c.b16 %v4153, %v4147
    %v4496 = vpack.c.b16 %v4154, %v4148
    %v4497 = vpack.c.b16 %v4155, %v4149
    %v4498 = vpack.c.b16 %v4156, %v4150
    %v4499 = vpack.c.b16 %v4157, %v4151
    %v4500 = vpack.c.b16 %v4158, %v4152
    %v4501 = vpack.c.b16 %v4165, %v4159
    %v4502 = vpack.c.b16 %v4166, %v4160
    %v4503 = vpack.c.b16 %v4167, %v4161
    %v4504 = vpack.c.b16 %v4168, %v4162
    %v4505 = vpack.c.b16 %v4169, %v4163
    %v4506 = vpack.c.b16 %v4170, %v4164
    %v4507 = vpack.c.b16 %v4177, %v4171
    %v4508 = vpack.c.b16 %v4178, %v4172
    %v4509 = vpack.c.b16 %v4179, %v4173
    %v4510 = vpack.c.b16 %v4180, %v4174
    %v4511 = vpack.c.b16 %v4181, %v4175
    %v4512 = vpack.c.b16 %v4182, %v4176
    %v4513 = vpack.c.b16 %v4189, %v4183
    %v4514 = vpack.c.b16 %v4190, %v4184
    %v4515 = vpack.c.b16 %v4191, %v4185
    %v4516 = vpack.c.b16 %v4192, %v4186
    %v4517 = vpack.c.b16 %v4193, %v4187
    %v4518 = vpack.c.b16 %v4194, %v4188
    %v4519 = vpack.c.b16 %v4201, %v4195
    %v4520 = vpack.c.b16 %v4202, %v4196
    %v4521 = vpack.c.b16 %v4203, %v4197
    %v4522 = vpack.c.b16 %v4204, %v4198
    %v4523 = vpack.c.b16 %v4205, %v4199
    %v4524 = vpack.c.b16 %v4206, %v4200
    %v4525 = vpack.c.b16 %v4213, %v4207
    %v4526 = vpack.c.b16 %v4214, %v4208
    %v4527 = vpack.c.b16 %v4215, %v4209
    %v4528 = vpack.c.b16 %v4216, %v4210
    %v4529 = vpack.c.b16 %v4217, %v4211
    %v4530 = vpack.c.b16 %v4218, %v4212
    %v4531 = vpack.c.b16 %v4225, %v4219
    %v4532 = vpack.c.b16 %v4226, %v4220
    %v4533 = vpack.c.b16 %v4227, %v4221
    %v4534 = vpack.c.b16 %v4228, %v4222
    %v4535 = vpack.c.b16 %v4229, %v4223
    %v4536 = vpack.c.b16 %v4230, %v4224
    %v4537 = vpack.c.b16 %v4237, %v4231
    %v4538 = vpack.c.b16 %v4238, %v4232
    %v4539 = vpack.c.b16 %v4239, %v4233
    %v4540 = vpack.c.b16 %v4240, %v4234
    %v4541 = vpack.c.b16 %v4241, %v4235
    %v4542 = vpack.c.b16 %v4242, %v4236
    %v4543 = vpack.c.b16 %v4249, %v4243
    %v4544 = vpack.c.b16 %v4250, %v4244
    %v4545 = vpack.c.b16 %v4251, %v4245
    %v4546 = vpack.c.b16 %v4252, %v4246
    %v4547 = vpack.c.b16 %v4253, %v4247
    %v4548 = vpack.c.b16 %v4254, %v4248
    %v4549 = vpack.c.b16 %v4261, %v4255
    %v4550 = vpack.c.b16 %v4262, %v4256
    %v4551 = vpack.c.b16 %v4263, %v4257
    %v4552 = vpack.c.b16 %v4264, %v4258
    %v4553 = vpack.c.b16 %v4265, %v4259
    %v4554 = vpack.c.b16 %v4266, %v4260
    %v4555 = vpack.c.b16 %v4273, %v4267
    %v4556 = vpack.c.b16 %v4274, %v4268
    %v4557 = vpack.c.b16 %v4275, %v4269
    %v4558 = vpack.c.b16 %v4276, %v4270
    %v4559 = vpack.c.b16 %v4277, %v4271
    %v4560 = vpack.c.b16 %v4278, %v4272
    %v4561 = vpack.c.b16 %v4285, %v4279
    %v4562 = vpack.c.b16 %v4286, %v4280
    %v4563 = vpack.c.b16 %v4287, %v4281
    %v4564 = vpack.c.b16 %v4288, %v4282
    %v4565 = vpack.c.b16 %v4289, %v4283
    %v4566 = vpack.c.b16 %v4290, %v4284
    %v4567 = vpack.c.b16 %v4297, %v4291
    %v4568 = vpack.c.b16 %v4298, %v4292
    %v4569 = vpack.c.b16 %v4299, %v4293
    %v4570 = vpack.c.b16 %v4300, %v4294
    %v4571 = vpack.c.b16 %v4301, %v4295
    %v4572 = vpack.c.b16 %v4302, %v4296
    %v4573 = vpack.c.b16 %v4309, %v4303
    %v4574 = vpack.c.b16 %v4310, %v4304
    %v4575 = vpack.c.b16 %v4311, %v4305
    %v4576 = vpack.c.b16 %v4312, %v4306
    %v4577 = vpack.c.b16 %v4313, %v4307
    %v4578 = vpack.c.b16 %v4314, %v4308
    %v4579 = vpack.c.b16 %v4321, %v4315
    %v4580 = vpack.c.b16 %v4322, %v4316
    %v4581 = vpack.c.b16 %v4323, %v4317
    %v4582 = vpack.c.b16 %v4324, %v4318
    %v4583 = vpack.c.b16 %v4325, %v4319
    %v4584 = vpack.c.b16 %v4326, %v4320
    %v4585 = vpack.c.b16 %v4333, %v4327
    %v4586 = vpack.c.b16 %v4334, %v4328
    %v4587 = vpack.c.b16 %v4335, %v4329
    %v4588 = vpack.c.b16 %v4336, %v4330
    %v4589 = vpack.c.b16 %v4337, %v4331
    %v4590 = vpack.c.b16 %v4338, %v4332
    %v4591 = vpack.c.b16 %v4345, %v4339
    %v4592 = vpack.c.b16 %v4346, %v4340
    %v4593 = vpack.c.b16 %v4347, %v4341
    %v4594 = vpack.c.b16 %v4348, %v4342
    %v4595 = vpack.c.b16 %v4349, %v4343
    %v4596 = vpack.c.b16 %v4350, %v4344
    %v4597 = vpack.c.b16 %v4357, %v4351
    %v4598 = vpack.c.b16 %v4358, %v4352
    %v4599 = vpack.c.b16 %v4359, %v4353
    %v4600 = vpack.c.b16 %v4360, %v4354
    %v4601 = vpack.c.b16 %v4361, %v4355
    %v4602 = vpack.c.b16 %v4362, %v4356
    %v4603 = vpack.c.b16 %v4369, %v4363
    %v4604 = vpack.c.b16 %v4370, %v4364
    %v4605 = vpack.c.b16 %v4371, %v4365
    %v4606 = vpack.c.b16 %v4372, %v4366
    %v4607 = vpack.c.b16 %v4373, %v4367
    %v4608 = vpack.c.b16 %v4374, %v4368
    %v4609 = vpack.c.b16 %v4381, %v4375
    %v4610 = vpack.c.b16 %v4382, %v4376
    %v4611 = vpack.c.b16 %v4383, %v4377
    %v4612 = vpack.c.b16 %v4384, %v4378
    %v4613 = vpack.c.b16 %v4385, %v4379
    %v4614 = vpack.c.b16 %v4386, %v4380
    %v4615 = vpack.c.b16 %v4393, %v4387
    %v4616 = vpack.c.b16 %v4394, %v4388
    %v4617 = vpack.c.b16 %v4395, %v4389
    %v4618 = vpack.c.b16 %v4396, %v4390
    %v4619 = vpack.c.b16 %v4397, %v4391
    %v4620 = vpack.c.b16 %v4398, %v4392
    %v4621 = vpack.c.b16 %v4405, %v4399
    %v4622 = vpack.c.b16 %v4406, %v4400
    %v4623 = vpack.c.b16 %v4407, %v4401
    %v4624 = vpack.c.b16 %v4408, %v4402
    %v4625 = vpack.c.b16 %v4409, %v4403
    %v4626 = vpack.c.b16 %v4410, %v4404
    %v4627 = vpack.c.b16 %v4417, %v4411
    %v4628 = vpack.c.b16 %v4418, %v4412
    %v4629 = vpack.c.b16 %v4419, %v4413
    %v4630 = vpack.c.b16 %v4420, %v4414
    %v4631 = vpack.c.b16 %v4421, %v4415
    %v4632 = vpack.c.b16 %v4422, %v4416
    %v4633 = vpack.c.b16 %v4429, %v4423
    %v4634 = vpack.c.b16 %v4430, %v4424
    %v4635 = vpack.c.b16 %v4431, %v4425
    %v4636 = vpack.c.b16 %v4432, %v4426
    %v4637 = vpack.c.b16 %v4433, %v4427
    %v4638 = vpack.c.b16 %v4434, %v4428
    %v4639 = vpack.c.b16 %v4441, %v4435
    %v4640 = vpack.c.b16 %v4442, %v4436
    %v4641 = vpack.c.b16 %v4443, %v4437
    %v4642 = vpack.c.b16 %v4444, %v4438
    %v4643 = vpack.c.b16 %v4445, %v4439
    %v4644 = vpack.c.b16 %v4446, %v4440
    %v4645 = vpack.c.b16 %v4453, %v4447
    %v4646 = vpack.c.b16 %v4454, %v4448
    %v4647 = vpack.c.b16 %v4455, %v4449
    %v4648 = vpack.c.b16 %v4456, %v4450
    %v4649 = vpack.c.b16 %v4457, %v4451
    %v4650 = vpack.c.b16 %v4458, %v4452
    %4843 = vmatprep.subr.bf16.mxu0 %v4460
    %4844 = vmatpush1.bf16.msra.mxu0 %v4459
    %4845 = vmatprep.subr.bf16.mxu0 %v4466
    %4846 = vmatpush1.bf16.msra.mxu0 %v4465
    %4847 = vmatprep.subr.bf16.mxu0 %v4472
    %4848 = vmatpush1.bf16.msra.mxu0 %v4471
    %4849 = vmatprep.subr.bf16.mxu0 %v4478
    %4850 = vmatpush1.bf16.msra.mxu0 %v4477
    %4851 = vmatprep.subr.bf16.mxu0 %v4484
    %4852 = vmatpush1.bf16.msra.mxu0 %v4483
    %4853 = vmatprep.subr.bf16.mxu0 %v4490
    %4854 = vmatpush1.bf16.msra.mxu0 %v4489
    %4855 = vmatprep.subr.bf16.mxu0 %v4496
    %4856 = vmatpush1.bf16.msra.mxu0 %v4495
    %4857 = vmatprep.subr.bf16.mxu0 %v4502
    %4858 = vmatpush1.bf16.msra.mxu0 %v4501
    %4859 = vmatprep.subr.bf16.mxu0 %v4508
    %4860 = vmatpush1.bf16.msra.mxu0 %v4507
    %4861 = vmatprep.subr.bf16.mxu0 %v4514
    %4862 = vmatpush1.bf16.msra.mxu0 %v4513
    %4863 = vmatprep.subr.bf16.mxu0 %v4520
    %4864 = vmatpush1.bf16.msra.mxu0 %v4519
    %4865 = vmatprep.subr.bf16.mxu0 %v4526
    %4866 = vmatpush1.bf16.msra.mxu0 %v4525
    %4867 = vmatprep.subr.bf16.mxu0 %v4532
    %4868 = vmatpush1.bf16.msra.mxu0 %v4531
    %4869 = vmatprep.subr.bf16.mxu0 %v4538
    %4870 = vmatpush1.bf16.msra.mxu0 %v4537
    %4871 = vmatprep.subr.bf16.mxu0 %v4544
    %4872 = vmatpush1.bf16.msra.mxu0 %v4543
    %4873 = vmatprep.subr.bf16.mxu0 %v4550
    %4874 = vmatpush1.bf16.msra.mxu0 %v4549
    %4875 = vmatprep.mubr.bf16.mxu0 %v3656
    %4876 = vmatmul.mubr.bf16.gmra.mrb[0].mxu0 %v3655
    %v4877 = vpop.f32.mrb[0].mxu0
    %v4878 = vadd.f32 %v3856, %v4877
    %v4879 = vpop.f32.mrb[0].mxu0
    %v4880 = vadd.f32 %v3860, %v4879
    %v4881 = vpop.f32.mrb[0].mxu0
    %v4882 = vadd.f32 %v3856, %v4881
    %v4883 = vpop.f32.mrb[0].mxu0
    %v4884 = vadd.f32 %v3860, %v4883
    %4885 = vdwg.mxu0
    %4886 = vmatprep.subr.bf16.mxu0 %v4556
    %4887 = vmatpush1.bf16.msra.mxu0 %v4555
    %4888 = vmatprep.subr.bf16.mxu0 %v4562
    %4889 = vmatpush1.bf16.msra.mxu0 %v4561
    %4890 = vmatprep.subr.bf16.mxu0 %v4568
    %4891 = vmatpush1.bf16.msra.mxu0 %v4567
    %4892 = vmatprep.subr.bf16.mxu0 %v4574
    %4893 = vmatpush1.bf16.msra.mxu0 %v4573
    %4894 = vmatprep.subr.bf16.mxu0 %v4580
    %4895 = vmatpush1.bf16.msra.mxu0 %v4579
    %4896 = vmatprep.subr.bf16.mxu0 %v4586
    %4897 = vmatpush1.bf16.msra.mxu0 %v4585
    %4898 = vmatprep.subr.bf16.mxu0 %v4592
    %4899 = vmatpush1.bf16.msra.mxu0 %v4591
    %4900 = vmatprep.subr.bf16.mxu0 %v4598
    %4901 = vmatpush1.bf16.msra.mxu0 %v4597
    %4902 = vmatprep.subr.bf16.mxu0 %v4604
    %4903 = vmatpush1.bf16.msra.mxu0 %v4603
    %4904 = vmatprep.subr.bf16.mxu0 %v4610
    %4905 = vmatpush1.bf16.msra.mxu0 %v4609
    %4906 = vmatprep.subr.bf16.mxu0 %v4616
    %4907 = vmatpush1.bf16.msra.mxu0 %v4615
    %4908 = vmatprep.subr.bf16.mxu0 %v4622
    %4909 = vmatpush1.bf16.msra.mxu0 %v4621
    %4910 = vmatprep.subr.bf16.mxu0 %v4628
    %4911 = vmatpush1.bf16.msra.mxu0 %v4627
    %4912 = vmatprep.subr.bf16.mxu0 %v4634
    %4913 = vmatpush1.bf16.msra.mxu0 %v4633
    %4914 = vmatprep.subr.bf16.mxu0 %v4640
    %4915 = vmatpush1.bf16.msra.mxu0 %v4639
    %4916 = vmatprep.subr.bf16.mxu0 %v4646
    %4917 = vmatpush1.bf16.msra.mxu0 %v4645
    %4918 = vmatprep.mubr.bf16.mxu0 %v3658
    %4919 = vmatmul.mubr.bf16.gmra.mrb[0].mxu0 %v3657
    %v4920 = vpop.f32.mrb[0].mxu0
    %v4921 = vadd.f32 %v4878, %v4920
    %v4922 = vpop.f32.mrb[0].mxu0
    %v4923 = vadd.f32 %v4880, %v4922
    %v4924 = vpop.f32.mrb[0].mxu0
    %v4925 = vadd.f32 %v4882, %v4924
    %v4926 = vpop.f32.mrb[0].mxu0
    %v4927 = vadd.f32 %v4884, %v4926
    %4928 = vdwg.mxu0
    %4929 = vmatprep.subr.bf16.mxu0 %v4462
    %4930 = vmatpush1.bf16.msra.mxu0 %v4461
    %4931 = vmatprep.subr.bf16.mxu0 %v4468
    %4932 = vmatpush1.bf16.msra.mxu0 %v4467
    %4933 = vmatprep.subr.bf16.mxu0 %v4474
    %4934 = vmatpush1.bf16.msra.mxu0 %v4473
    %4935 = vmatprep.subr.bf16.mxu0 %v4480
    %4936 = vmatpush1.bf16.msra.mxu0 %v4479
    %4937 = vmatprep.subr.bf16.mxu0 %v4486
    %4938 = vmatpush1.bf16.msra.mxu0 %v4485
    %4939 = vmatprep.subr.bf16.mxu0 %v4492
    %4940 = vmatpush1.bf16.msra.mxu0 %v4491
    %4941 = vmatprep.subr.bf16.mxu0 %v4498
    %4942 = vmatpush1.bf16.msra.mxu0 %v4497
    %4943 = vmatprep.subr.bf16.mxu0 %v4504
    %4944 = vmatpush1.bf16.msra.mxu0 %v4503
    %4945 = vmatprep.subr.bf16.mxu0 %v4510
    %4946 = vmatpush1.bf16.msra.mxu0 %v4509
    %4947 = vmatprep.subr.bf16.mxu0 %v4516
    %4948 = vmatpush1.bf16.msra.mxu0 %v4515
    %4949 = vmatprep.subr.bf16.mxu0 %v4522
    %4950 = vmatpush1.bf16.msra.mxu0 %v4521
    %4951 = vmatprep.subr.bf16.mxu0 %v4528
    %4952 = vmatpush1.bf16.msra.mxu0 %v4527
    %4953 = vmatprep.subr.bf16.mxu0 %v4534
    %4954 = vmatpush1.bf16.msra.mxu0 %v4533
    %4955 = vmatprep.subr.bf16.mxu0 %v4540
    %4956 = vmatpush1.bf16.msra.mxu0 %v4539
    %4957 = vmatprep.subr.bf16.mxu0 %v4546
    %4958 = vmatpush1.bf16.msra.mxu0 %v4545
    %4959 = vmatprep.subr.bf16.mxu0 %v4552
    %4960 = vmatpush1.bf16.msra.mxu0 %v4551
    %4961 = vmatprep.mubr.bf16.mxu0 %v3656
    %4962 = vmatmul.mubr.bf16.gmra.mrb[0].mxu0 %v3655
    %v4963 = vpop.f32.mrb[0].mxu0
    %v4964 = vadd.f32 %v3864, %v4963
    %v4965 = vpop.f32.mrb[0].mxu0
    %v4966 = vadd.f32 %v3868, %v4965
    %v4967 = vpop.f32.mrb[0].mxu0
    %v4968 = vadd.f32 %v3864, %v4967
    %v4969 = vpop.f32.mrb[0].mxu0
    %v4970 = vadd.f32 %v3868, %v4969
    %4971 = vdwg.mxu0
    %4972 = vmatprep.subr.bf16.mxu0 %v4558
    %4973 = vmatpush1.bf16.msra.mxu0 %v4557
    %4974 = vmatprep.subr.bf16.mxu0 %v4564
    %4975 = vmatpush1.bf16.msra.mxu0 %v4563
    %4976 = vmatprep.subr.bf16.mxu0 %v4570
    %4977 = vmatpush1.bf16.msra.mxu0 %v4569
    %4978 = vmatprep.subr.bf16.mxu0 %v4576
    %4979 = vmatpush1.bf16.msra.mxu0 %v4575
    %4980 = vmatprep.subr.bf16.mxu0 %v4582
    %4981 = vmatpush1.bf16.msra.mxu0 %v4581
    %4982 = vmatprep.subr.bf16.mxu0 %v4588
    %4983 = vmatpush1.bf16.msra.mxu0 %v4587
    %4984 = vmatprep.subr.bf16.mxu0 %v4594
    %4985 = vmatpush1.bf16.msra.mxu0 %v4593
    %4986 = vmatprep.subr.bf16.mxu0 %v4600
    %4987 = vmatpush1.bf16.msra.mxu0 %v4599
    %4988 = vmatprep.subr.bf16.mxu0 %v4606
    %4989 = vmatpush1.bf16.msra.mxu0 %v4605
    %4990 = vmatprep.subr.bf16.mxu0 %v4612
    %4991 = vmatpush1.bf16.msra.mxu0 %v4611
    %4992 = vmatprep.subr.bf16.mxu0 %v4618
    %4993 = vmatpush1.bf16.msra.mxu0 %v4617
    %4994 = vmatprep.subr.bf16.mxu0 %v4624
    %4995 = vmatpush1.bf16.msra.mxu0 %v4623
    %4996 = vmatprep.subr.bf16.mxu0 %v4630
    %4997 = vmatpush1.bf16.msra.mxu0 %v4629
    %4998 = vmatprep.subr.bf16.mxu0 %v4636
    %4999 = vmatpush1.bf16.msra.mxu0 %v4635
    %5000 = vmatprep.subr.bf16.mxu0 %v4642
    %5001 = vmatpush1.bf16.msra.mxu0 %v4641
    %5002 = vmatprep.subr.bf16.mxu0 %v4648
    %5003 = vmatpush1.bf16.msra.mxu0 %v4647
    %5004 = vmatprep.mubr.bf16.mxu0 %v3658
    %5005 = vmatmul.mubr.bf16.gmra.mrb[0].mxu0 %v3657
    %v5006 = vpop.f32.mrb[0].mxu0
    %v5007 = vadd.f32 %v4964, %v5006
    %v5008 = vpop.f32.mrb[0].mxu0
    %v5009 = vadd.f32 %v4966, %v5008
    %v5010 = vpop.f32.mrb[0].mxu0
    %v5011 = vadd.f32 %v4968, %v5010
    %v5012 = vpop.f32.mrb[0].mxu0
    %v5013 = vadd.f32 %v4970, %v5012
    %5014 = vdwg.mxu0
    %5015 = vmatprep.subr.bf16.mxu0 %v4464
    %5016 = vmatpush1.bf16.msra.mxu0 %v4463
    %5017 = vmatprep.subr.bf16.mxu0 %v4470
    %5018 = vmatpush1.bf16.msra.mxu0 %v4469
    %5019 = vmatprep.subr.bf16.mxu0 %v4476
    %5020 = vmatpush1.bf16.msra.mxu0 %v4475
    %5021 = vmatprep.subr.bf16.mxu0 %v4482
    %5022 = vmatpush1.bf16.msra.mxu0 %v4481
    %5023 = vmatprep.subr.bf16.mxu0 %v4488
    %5024 = vmatpush1.bf16.msra.mxu0 %v4487
    %5025 = vmatprep.subr.bf16.mxu0 %v4494
    %5026 = vmatpush1.bf16.msra.mxu0 %v4493
    %5027 = vmatprep.subr.bf16.mxu0 %v4500
    %5028 = vmatpush1.bf16.msra.mxu0 %v4499
    %5029 = vmatprep.subr.bf16.mxu0 %v4506
    %5030 = vmatpush1.bf16.msra.mxu0 %v4505
    %5031 = vmatprep.subr.bf16.mxu0 %v4512
    %5032 = vmatpush1.bf16.msra.mxu0 %v4511
    %5033 = vmatprep.subr.bf16.mxu0 %v4518
    %5034 = vmatpush1.bf16.msra.mxu0 %v4517
    %5035 = vmatprep.subr.bf16.mxu0 %v4524
    %5036 = vmatpush1.bf16.msra.mxu0 %v4523
    %5037 = vmatprep.subr.bf16.mxu0 %v4530
    %5038 = vmatpush1.bf16.msra.mxu0 %v4529
    %5039 = vmatprep.subr.bf16.mxu0 %v4536
    %5040 = vmatpush1.bf16.msra.mxu0 %v4535
    %5041 = vmatprep.subr.bf16.mxu0 %v4542
    %5042 = vmatpush1.bf16.msra.mxu0 %v4541
    %5043 = vmatprep.subr.bf16.mxu0 %v4548
    %5044 = vmatpush1.bf16.msra.mxu0 %v4547
    %5045 = vmatprep.subr.bf16.mxu0 %v4554
    %5046 = vmatpush1.bf16.msra.mxu0 %v4553
    %5047 = vmatprep.mubr.bf16.mxu0 %v3656
    %5048 = vmatmul.mubr.bf16.gmra.mrb[0].mxu0 %v3655
    %v5049 = vpop.f32.mrb[0].mxu0
    %v5050 = vadd.f32 %v3872, %v5049
    %v5051 = vpop.f32.mrb[0].mxu0
    %v5052 = vadd.f32 %v3876, %v5051
    %v5053 = vpop.f32.mrb[0].mxu0
    %v5054 = vadd.f32 %v3872, %v5053
    %v5055 = vpop.f32.mrb[0].mxu0
    %v5056 = vadd.f32 %v3876, %v5055
    %5057 = vdwg.mxu0
    %5058 = vmatprep.subr.bf16.mxu0 %v4560
    %5059 = vmatpush1.bf16.msra.mxu0 %v4559
    %5060 = vmatprep.subr.bf16.mxu0 %v4566
    %5061 = vmatpush1.bf16.msra.mxu0 %v4565
    %5062 = vmatprep.subr.bf16.mxu0 %v4572
    %5063 = vmatpush1.bf16.msra.mxu0 %v4571
    %5064 = vmatprep.subr.bf16.mxu0 %v4578
    %5065 = vmatpush1.bf16.msra.mxu0 %v4577
    %5066 = vmatprep.subr.bf16.mxu0 %v4584
    %5067 = vmatpush1.bf16.msra.mxu0 %v4583
    %5068 = vmatprep.subr.bf16.mxu0 %v4590
    %5069 = vmatpush1.bf16.msra.mxu0 %v4589
    %5070 = vmatprep.subr.bf16.mxu0 %v4596
    %5071 = vmatpush1.bf16.msra.mxu0 %v4595
    %5072 = vmatprep.subr.bf16.mxu0 %v4602
    %5073 = vmatpush1.bf16.msra.mxu0 %v4601
    %5074 = vmatprep.subr.bf16.mxu0 %v4608
    %5075 = vmatpush1.bf16.msra.mxu0 %v4607
    %5076 = vmatprep.subr.bf16.mxu0 %v4614
    %5077 = vmatpush1.bf16.msra.mxu0 %v4613
    %5078 = vmatprep.subr.bf16.mxu0 %v4620
    %5079 = vmatpush1.bf16.msra.mxu0 %v4619
    %5080 = vmatprep.subr.bf16.mxu0 %v4626
    %5081 = vmatpush1.bf16.msra.mxu0 %v4625
    %5082 = vmatprep.subr.bf16.mxu0 %v4632
    %5083 = vmatpush1.bf16.msra.mxu0 %v4631
    %5084 = vmatprep.subr.bf16.mxu0 %v4638
    %5085 = vmatpush1.bf16.msra.mxu0 %v4637
    %5086 = vmatprep.subr.bf16.mxu0 %v4644
    %5087 = vmatpush1.bf16.msra.mxu0 %v4643
    %5088 = vmatprep.subr.bf16.mxu0 %v4650
    %5089 = vmatpush1.bf16.msra.mxu0 %v4649
    %5090 = vmatprep.mubr.bf16.mxu0 %v3658
    %5091 = vmatmul.mubr.bf16.gmra.mrb[0].mxu0 %v3657
    %v5092 = vpop.f32.mrb[0].mxu0
    %v5093 = vadd.f32 %v5050, %v5092
    %v5094 = vpop.f32.mrb[0].mxu0
    %v5095 = vadd.f32 %v5052, %v5094
    %v5096 = vpop.f32.mrb[0].mxu0
    %v5097 = vadd.f32 %v5054, %v5096
    %v5098 = vpop.f32.mrb[0].mxu0
    %v5099 = vadd.f32 %v5056, %v5098
    %5100 = vdwg.mxu0
    %5101 = vst [vmem:[#allocation6] sm:$0xff] %v4921
    %5102 = vst [vmem:[#allocation6 + $0x8] sm:$0xff] %v4923
    %5103 = vst [vmem:[#allocation6 + $0x10] sm:$0xff] %v5007
    %5104 = vst [vmem:[#allocation6 + $0x18] sm:$0xff] %v5009
    %5105 = vst [vmem:[#allocation6 + $0x20] sm:$0xff] %v5093
    %5106 = vst [vmem:[#allocation6 + $0x28] sm:$0xff] %v5095
    %5107 = vst [vmem:[#allocation6 + $0x30] sm:$0xff] %v4925
    %5108 = vst [vmem:[#allocation6 + $0x38] sm:$0xff] %v4927
    %5109 = vst [vmem:[#allocation6 + $0x40] sm:$0xff] %v5011
    %5110 = vst [vmem:[#allocation6 + $0x48] sm:$0xff] %v5013
    %5111 = vst [vmem:[#allocation6 + $0x50] sm:$0xff] %v5097
    %5112 = vst [vmem:[#allocation6 + $0x58] sm:$0xff] %v5099
    %v5113 = vld [vmem:[#allocation11] sm:$0xff]
    %v5114 = vld [vmem:[#allocation11 + $0x8] sm:$0xff]
    %v5115 = vld [vmem:[#allocation11 + $0x10] sm:$0xff]
    %v5116 = vld [vmem:[#allocation11 + $0x18] sm:$0xff]
    %v5117 = vld [vmem:[#allocation11 + $0x20] sm:$0xff]
    %v5118 = vld [vmem:[#allocation11 + $0x28] sm:$0xff]
    %v5119 = vld [vmem:[#allocation11 + $0x30] sm:$0xff]
    %v5120 = vld [vmem:[#allocation11 + $0x38] sm:$0xff]
    %v5121 = vld [vmem:[#allocation11 + $0x40] sm:$0xff]
    %v5122 = vld [vmem:[#allocation11 + $0x48] sm:$0xff]
    %v5123 = vld [vmem:[#allocation11 + $0x50] sm:$0xff]
    %v5124 = vld [vmem:[#allocation11 + $0x58] sm:$0xff]
    %v5125 = vld [vmem:[#allocation11 + $0x60] sm:$0xff]
    %v5126 = vld [vmem:[#allocation11 + $0x68] sm:$0xff]
    %v5127 = vld [vmem:[#allocation11 + $0x70] sm:$0xff]
    %v5128 = vld [vmem:[#allocation11 + $0x78] sm:$0xff]
    %v5129 = vld [vmem:[#allocation11 + $0x80] sm:$0xff]
    %v5130 = vld [vmem:[#allocation11 + $0x88] sm:$0xff]
    %v5131 = vld [vmem:[#allocation11 + $0x90] sm:$0xff]
    %v5132 = vld [vmem:[#allocation11 + $0x98] sm:$0xff]
    %v5133 = vld [vmem:[#allocation11 + $0xa0] sm:$0xff]
    %v5134 = vld [vmem:[#allocation11 + $0xa8] sm:$0xff]
    %v5135 = vld [vmem:[#allocation11 + $0xb0] sm:$0xff]
    %v5136 = vld [vmem:[#allocation11 + $0xb8] sm:$0xff]
    %v5137 = vld [vmem:[#allocation11 + $0xc0] sm:$0xff]
    %v5138 = vld [vmem:[#allocation11 + $0xc8] sm:$0xff]
    %v5139 = vld [vmem:[#allocation11 + $0xd0] sm:$0xff]
    %v5140 = vld [vmem:[#allocation11 + $0xd8] sm:$0xff]
    %v5141 = vld [vmem:[#allocation11 + $0xe0] sm:$0xff]
    %v5142 = vld [vmem:[#allocation11 + $0xe8] sm:$0xff]
    %v5143 = vld [vmem:[#allocation11 + $0xf0] sm:$0xff]
    %v5144 = vld [vmem:[#allocation11 + $0xf8] sm:$0xff]
    %v5145 = vld [vmem:[#allocation11 + $0x100] sm:$0xff]
    %v5146 = vld [vmem:[#allocation11 + $0x108] sm:$0xff]
    %v5147 = vld [vmem:[#allocation11 + $0x110] sm:$0xff]
    %v5148 = vld [vmem:[#allocation11 + $0x118] sm:$0xff]
    %v5149 = vld [vmem:[#allocation11 + $0x120] sm:$0xff]
    %v5150 = vld [vmem:[#allocation11 + $0x128] sm:$0xff]
    %v5151 = vld [vmem:[#allocation11 + $0x130] sm:$0xff]
    %v5152 = vld [vmem:[#allocation11 + $0x138] sm:$0xff]
    %v5153 = vld [vmem:[#allocation11 + $0x140] sm:$0xff]
    %v5154 = vld [vmem:[#allocation11 + $0x148] sm:$0xff]
    %v5155 = vld [vmem:[#allocation11 + $0x150] sm:$0xff]
    %v5156 = vld [vmem:[#allocation11 + $0x158] sm:$0xff]
    %v5157 = vld [vmem:[#allocation11 + $0x160] sm:$0xff]
    %v5158 = vld [vmem:[#allocation11 + $0x168] sm:$0xff]
    %v5159 = vld [vmem:[#allocation11 + $0x170] sm:$0xff]
    %v5160 = vld [vmem:[#allocation11 + $0x178] sm:$0xff]
    %v5161 = vld [vmem:[#allocation11 + $0x180] sm:$0xff]
    %v5162 = vld [vmem:[#allocation11 + $0x188] sm:$0xff]
    %v5163 = vld [vmem:[#allocation11 + $0x190] sm:$0xff]
    %v5164 = vld [vmem:[#allocation11 + $0x198] sm:$0xff]
    %v5165 = vld [vmem:[#allocation11 + $0x1a0] sm:$0xff]
    %v5166 = vld [vmem:[#allocation11 + $0x1a8] sm:$0xff]
    %v5167 = vld [vmem:[#allocation11 + $0x1b0] sm:$0xff]
    %v5168 = vld [vmem:[#allocation11 + $0x1b8] sm:$0xff]
    %v5169 = vld [vmem:[#allocation11 + $0x1c0] sm:$0xff]
    %v5170 = vld [vmem:[#allocation11 + $0x1c8] sm:$0xff]
    %v5171 = vld [vmem:[#allocation11 + $0x1d0] sm:$0xff]
    %v5172 = vld [vmem:[#allocation11 + $0x1d8] sm:$0xff]
    %v5173 = vld [vmem:[#allocation11 + $0x1e0] sm:$0xff]
    %v5174 = vld [vmem:[#allocation11 + $0x1e8] sm:$0xff]
    %v5175 = vld [vmem:[#allocation11 + $0x1f0] sm:$0xff]
    %v5176 = vld [vmem:[#allocation11 + $0x1f8] sm:$0xff]
    %v5177 = vld [vmem:[#allocation11 + $0x200] sm:$0xff]
    %v5178 = vld [vmem:[#allocation11 + $0x208] sm:$0xff]
    %v5179 = vld [vmem:[#allocation11 + $0x210] sm:$0xff]
    %v5180 = vld [vmem:[#allocation11 + $0x218] sm:$0xff]
    %v5181 = vld [vmem:[#allocation11 + $0x220] sm:$0xff]
    %v5182 = vld [vmem:[#allocation11 + $0x228] sm:$0xff]
    %v5183 = vld [vmem:[#allocation11 + $0x230] sm:$0xff]
    %v5184 = vld [vmem:[#allocation11 + $0x238] sm:$0xff]
    %v5185 = vld [vmem:[#allocation11 + $0x240] sm:$0xff]
    %v5186 = vld [vmem:[#allocation11 + $0x248] sm:$0xff]
    %v5187 = vld [vmem:[#allocation11 + $0x250] sm:$0xff]
    %v5188 = vld [vmem:[#allocation11 + $0x258] sm:$0xff]
    %v5189 = vld [vmem:[#allocation11 + $0x260] sm:$0xff]
    %v5190 = vld [vmem:[#allocation11 + $0x268] sm:$0xff]
    %v5191 = vld [vmem:[#allocation11 + $0x270] sm:$0xff]
    %v5192 = vld [vmem:[#allocation11 + $0x278] sm:$0xff]
    %v5193 = vld [vmem:[#allocation11 + $0x280] sm:$0xff]
    %v5194 = vld [vmem:[#allocation11 + $0x288] sm:$0xff]
    %v5195 = vld [vmem:[#allocation11 + $0x290] sm:$0xff]
    %v5196 = vld [vmem:[#allocation11 + $0x298] sm:$0xff]
    %v5197 = vld [vmem:[#allocation11 + $0x2a0] sm:$0xff]
    %v5198 = vld [vmem:[#allocation11 + $0x2a8] sm:$0xff]
    %v5199 = vld [vmem:[#allocation11 + $0x2b0] sm:$0xff]
    %v5200 = vld [vmem:[#allocation11 + $0x2b8] sm:$0xff]
    %v5201 = vld [vmem:[#allocation11 + $0x2c0] sm:$0xff]
    %v5202 = vld [vmem:[#allocation11 + $0x2c8] sm:$0xff]
    %v5203 = vld [vmem:[#allocation11 + $0x2d0] sm:$0xff]
    %v5204 = vld [vmem:[#allocation11 + $0x2d8] sm:$0xff]
    %v5205 = vld [vmem:[#allocation11 + $0x2e0] sm:$0xff]
    %v5206 = vld [vmem:[#allocation11 + $0x2e8] sm:$0xff]
    %v5207 = vld [vmem:[#allocation11 + $0x2f0] sm:$0xff]
    %v5208 = vld [vmem:[#allocation11 + $0x2f8] sm:$0xff]
    %v5209 = vld [vmem:[%s6] sm:$0x3]
    %v5210 = vld [vmem:[#allocation6] sm:$0xff]
    %v5211 = vld [vmem:[#allocation6 + $0x8] sm:$0xff]
    %v5212 = vld [vmem:[#allocation6 + $0x10] sm:$0xff]
    %v5213 = vld [vmem:[#allocation6 + $0x18] sm:$0xff]
    %v5214 = vld [vmem:[#allocation6 + $0x20] sm:$0xff]
    %v5215 = vld [vmem:[#allocation6 + $0x28] sm:$0xff]
    %v5312 = vunpack.c.l.b16 %v5113
    %v5313 = vunpack.c.h.b16 %v5113
    %v5314 = vunpack.c.l.b16 %v5114
    %v5315 = vunpack.c.h.b16 %v5114
    %v5316 = vunpack.c.l.b16 %v5115
    %v5317 = vunpack.c.h.b16 %v5115
    %v5318 = vunpack.c.l.b16 %v5116
    %v5319 = vunpack.c.h.b16 %v5116
    %v5320 = vunpack.c.l.b16 %v5117
    %v5321 = vunpack.c.h.b16 %v5117
    %v5322 = vunpack.c.l.b16 %v5118
    %v5323 = vunpack.c.h.b16 %v5118
    %v5324 = vunpack.c.l.b16 %v5119
    %v5325 = vunpack.c.h.b16 %v5119
    %v5326 = vunpack.c.l.b16 %v5120
    %v5327 = vunpack.c.h.b16 %v5120
    %v5328 = vunpack.c.l.b16 %v5121
    %v5329 = vunpack.c.h.b16 %v5121
    %v5330 = vunpack.c.l.b16 %v5122
    %v5331 = vunpack.c.h.b16 %v5122
    %v5332 = vunpack.c.l.b16 %v5123
    %v5333 = vunpack.c.h.b16 %v5123
    %v5334 = vunpack.c.l.b16 %v5124
    %v5335 = vunpack.c.h.b16 %v5124
    %v5336 = vunpack.c.l.b16 %v5125
    %v5337 = vunpack.c.h.b16 %v5125
    %v5338 = vunpack.c.l.b16 %v5126
    %v5339 = vunpack.c.h.b16 %v5126
    %v5340 = vunpack.c.l.b16 %v5127
    %v5341 = vunpack.c.h.b16 %v5127
    %v5342 = vunpack.c.l.b16 %v5128
    %v5343 = vunpack.c.h.b16 %v5128
    %v5344 = vunpack.c.l.b16 %v5129
    %v5345 = vunpack.c.h.b16 %v5129
    %v5346 = vunpack.c.l.b16 %v5130
    %v5347 = vunpack.c.h.b16 %v5130
    %v5348 = vunpack.c.l.b16 %v5131
    %v5349 = vunpack.c.h.b16 %v5131
    %v5350 = vunpack.c.l.b16 %v5132
    %v5351 = vunpack.c.h.b16 %v5132
    %v5352 = vunpack.c.l.b16 %v5133
    %v5353 = vunpack.c.h.b16 %v5133
    %v5354 = vunpack.c.l.b16 %v5134
    %v5355 = vunpack.c.h.b16 %v5134
    %v5356 = vunpack.c.l.b16 %v5135
    %v5357 = vunpack.c.h.b16 %v5135
    %v5358 = vunpack.c.l.b16 %v5136
    %v5359 = vunpack.c.h.b16 %v5136
    %v5360 = vunpack.c.l.b16 %v5137
    %v5361 = vunpack.c.h.b16 %v5137
    %v5362 = vunpack.c.l.b16 %v5138
    %v5363 = vunpack.c.h.b16 %v5138
    %v5364 = vunpack.c.l.b16 %v5139
    %v5365 = vunpack.c.h.b16 %v5139
    %v5366 = vunpack.c.l.b16 %v5140
    %v5367 = vunpack.c.h.b16 %v5140
    %v5368 = vunpack.c.l.b16 %v5141
    %v5369 = vunpack.c.h.b16 %v5141
    %v5370 = vunpack.c.l.b16 %v5142
    %v5371 = vunpack.c.h.b16 %v5142
    %v5372 = vunpack.c.l.b16 %v5143
    %v5373 = vunpack.c.h.b16 %v5143
    %v5374 = vunpack.c.l.b16 %v5144
    %v5375 = vunpack.c.h.b16 %v5144
    %v5376 = vunpack.c.l.b16 %v5145
    %v5377 = vunpack.c.h.b16 %v5145
    %v5378 = vunpack.c.l.b16 %v5146
    %v5379 = vunpack.c.h.b16 %v5146
    %v5380 = vunpack.c.l.b16 %v5147
    %v5381 = vunpack.c.h.b16 %v5147
    %v5382 = vunpack.c.l.b16 %v5148
    %v5383 = vunpack.c.h.b16 %v5148
    %v5384 = vunpack.c.l.b16 %v5149
    %v5385 = vunpack.c.h.b16 %v5149
    %v5386 = vunpack.c.l.b16 %v5150
    %v5387 = vunpack.c.h.b16 %v5150
    %v5388 = vunpack.c.l.b16 %v5151
    %v5389 = vunpack.c.h.b16 %v5151
    %v5390 = vunpack.c.l.b16 %v5152
    %v5391 = vunpack.c.h.b16 %v5152
    %v5392 = vunpack.c.l.b16 %v5153
    %v5393 = vunpack.c.h.b16 %v5153
    %v5394 = vunpack.c.l.b16 %v5154
    %v5395 = vunpack.c.h.b16 %v5154
    %v5396 = vunpack.c.l.b16 %v5155
    %v5397 = vunpack.c.h.b16 %v5155
    %v5398 = vunpack.c.l.b16 %v5156
    %v5399 = vunpack.c.h.b16 %v5156
    %v5400 = vunpack.c.l.b16 %v5157
    %v5401 = vunpack.c.h.b16 %v5157
    %v5402 = vunpack.c.l.b16 %v5158
    %v5403 = vunpack.c.h.b16 %v5158
    %v5404 = vunpack.c.l.b16 %v5159
    %v5405 = vunpack.c.h.b16 %v5159
    %v5406 = vunpack.c.l.b16 %v5160
    %v5407 = vunpack.c.h.b16 %v5160
    %v5408 = vunpack.c.l.b16 %v5161
    %v5409 = vunpack.c.h.b16 %v5161
    %v5410 = vunpack.c.l.b16 %v5162
    %v5411 = vunpack.c.h.b16 %v5162
    %v5412 = vunpack.c.l.b16 %v5163
    %v5413 = vunpack.c.h.b16 %v5163
    %v5414 = vunpack.c.l.b16 %v5164
    %v5415 = vunpack.c.h.b16 %v5164
    %v5416 = vunpack.c.l.b16 %v5165
    %v5417 = vunpack.c.h.b16 %v5165
    %v5418 = vunpack.c.l.b16 %v5166
    %v5419 = vunpack.c.h.b16 %v5166
    %v5420 = vunpack.c.l.b16 %v5167
    %v5421 = vunpack.c.h.b16 %v5167
    %v5422 = vunpack.c.l.b16 %v5168
    %v5423 = vunpack.c.h.b16 %v5168
    %v5424 = vunpack.c.l.b16 %v5169
    %v5425 = vunpack.c.h.b16 %v5169
    %v5426 = vunpack.c.l.b16 %v5170
    %v5427 = vunpack.c.h.b16 %v5170
    %v5428 = vunpack.c.l.b16 %v5171
    %v5429 = vunpack.c.h.b16 %v5171
    %v5430 = vunpack.c.l.b16 %v5172
    %v5431 = vunpack.c.h.b16 %v5172
    %v5432 = vunpack.c.l.b16 %v5173
    %v5433 = vunpack.c.h.b16 %v5173
    %v5434 = vunpack.c.l.b16 %v5174
    %v5435 = vunpack.c.h.b16 %v5174
    %v5436 = vunpack.c.l.b16 %v5175
    %v5437 = vunpack.c.h.b16 %v5175
    %v5438 = vunpack.c.l.b16 %v5176
    %v5439 = vunpack.c.h.b16 %v5176
    %v5440 = vunpack.c.l.b16 %v5177
    %v5441 = vunpack.c.h.b16 %v5177
    %v5442 = vunpack.c.l.b16 %v5178
    %v5443 = vunpack.c.h.b16 %v5178
    %v5444 = vunpack.c.l.b16 %v5179
    %v5445 = vunpack.c.h.b16 %v5179
    %v5446 = vunpack.c.l.b16 %v5180
    %v5447 = vunpack.c.h.b16 %v5180
    %v5448 = vunpack.c.l.b16 %v5181
    %v5449 = vunpack.c.h.b16 %v5181
    %v5450 = vunpack.c.l.b16 %v5182
    %v5451 = vunpack.c.h.b16 %v5182
    %v5452 = vunpack.c.l.b16 %v5183
    %v5453 = vunpack.c.h.b16 %v5183
    %v5454 = vunpack.c.l.b16 %v5184
    %v5455 = vunpack.c.h.b16 %v5184
    %v5456 = vunpack.c.l.b16 %v5185
    %v5457 = vunpack.c.h.b16 %v5185
    %v5458 = vunpack.c.l.b16 %v5186
    %v5459 = vunpack.c.h.b16 %v5186
    %v5460 = vunpack.c.l.b16 %v5187
    %v5461 = vunpack.c.h.b16 %v5187
    %v5462 = vunpack.c.l.b16 %v5188
    %v5463 = vunpack.c.h.b16 %v5188
    %v5464 = vunpack.c.l.b16 %v5189
    %v5465 = vunpack.c.h.b16 %v5189
    %v5466 = vunpack.c.l.b16 %v5190
    %v5467 = vunpack.c.h.b16 %v5190
    %v5468 = vunpack.c.l.b16 %v5191
    %v5469 = vunpack.c.h.b16 %v5191
    %v5470 = vunpack.c.l.b16 %v5192
    %v5471 = vunpack.c.h.b16 %v5192
    %v5472 = vunpack.c.l.b16 %v5193
    %v5473 = vunpack.c.h.b16 %v5193
    %v5474 = vunpack.c.l.b16 %v5194
    %v5475 = vunpack.c.h.b16 %v5194
    %v5476 = vunpack.c.l.b16 %v5195
    %v5477 = vunpack.c.h.b16 %v5195
    %v5478 = vunpack.c.l.b16 %v5196
    %v5479 = vunpack.c.h.b16 %v5196
    %v5480 = vunpack.c.l.b16 %v5197
    %v5481 = vunpack.c.h.b16 %v5197
    %v5482 = vunpack.c.l.b16 %v5198
    %v5483 = vunpack.c.h.b16 %v5198
    %v5484 = vunpack.c.l.b16 %v5199
    %v5485 = vunpack.c.h.b16 %v5199
    %v5486 = vunpack.c.l.b16 %v5200
    %v5487 = vunpack.c.h.b16 %v5200
    %v5488 = vunpack.c.l.b16 %v5201
    %v5489 = vunpack.c.h.b16 %v5201
    %v5490 = vunpack.c.l.b16 %v5202
    %v5491 = vunpack.c.h.b16 %v5202
    %v5492 = vunpack.c.l.b16 %v5203
    %v5493 = vunpack.c.h.b16 %v5203
    %v5494 = vunpack.c.l.b16 %v5204
    %v5495 = vunpack.c.h.b16 %v5204
    %v5496 = vunpack.c.l.b16 %v5205
    %v5497 = vunpack.c.h.b16 %v5205
    %v5498 = vunpack.c.l.b16 %v5206
    %v5499 = vunpack.c.h.b16 %v5206
    %v5500 = vunpack.c.l.b16 %v5207
    %v5501 = vunpack.c.h.b16 %v5207
    %v5502 = vunpack.c.l.b16 %v5208
    %v5503 = vunpack.c.h.b16 %v5208
    %v5504 = vpack.c.b16 %v5318, %v5312
    %v5505 = vpack.c.b16 %v5319, %v5313
    %v5506 = vpack.c.b16 %v5320, %v5314
    %v5507 = vpack.c.b16 %v5321, %v5315
    %v5508 = vpack.c.b16 %v5322, %v5316
    %v5509 = vpack.c.b16 %v5323, %v5317
    %v5510 = vpack.c.b16 %v5330, %v5324
    %v5511 = vpack.c.b16 %v5331, %v5325
    %v5512 = vpack.c.b16 %v5332, %v5326
    %v5513 = vpack.c.b16 %v5333, %v5327
    %v5514 = vpack.c.b16 %v5334, %v5328
    %v5515 = vpack.c.b16 %v5335, %v5329
    %v5516 = vpack.c.b16 %v5342, %v5336
    %v5517 = vpack.c.b16 %v5343, %v5337
    %v5518 = vpack.c.b16 %v5344, %v5338
    %v5519 = vpack.c.b16 %v5345, %v5339
    %v5520 = vpack.c.b16 %v5346, %v5340
    %v5521 = vpack.c.b16 %v5347, %v5341
    %v5522 = vpack.c.b16 %v5354, %v5348
    %v5523 = vpack.c.b16 %v5355, %v5349
    %v5524 = vpack.c.b16 %v5356, %v5350
    %v5525 = vpack.c.b16 %v5357, %v5351
    %v5526 = vpack.c.b16 %v5358, %v5352
    %v5527 = vpack.c.b16 %v5359, %v5353
    %v5528 = vpack.c.b16 %v5366, %v5360
    %v5529 = vpack.c.b16 %v5367, %v5361
    %v5530 = vpack.c.b16 %v5368, %v5362
    %v5531 = vpack.c.b16 %v5369, %v5363
    %v5532 = vpack.c.b16 %v5370, %v5364
    %v5533 = vpack.c.b16 %v5371, %v5365
    %v5534 = vpack.c.b16 %v5378, %v5372
    %v5535 = vpack.c.b16 %v5379, %v5373
    %v5536 = vpack.c.b16 %v5380, %v5374
    %v5537 = vpack.c.b16 %v5381, %v5375
    %v5538 = vpack.c.b16 %v5382, %v5376
    %v5539 = vpack.c.b16 %v5383, %v5377
    %v5540 = vpack.c.b16 %v5390, %v5384
    %v5541 = vpack.c.b16 %v5391, %v5385
    %v5542 = vpack.c.b16 %v5392, %v5386
    %v5543 = vpack.c.b16 %v5393, %v5387
    %v5544 = vpack.c.b16 %v5394, %v5388
    %v5545 = vpack.c.b16 %v5395, %v5389
    %v5546 = vpack.c.b16 %v5402, %v5396
    %v5547 = vpack.c.b16 %v5403, %v5397
    %v5548 = vpack.c.b16 %v5404, %v5398
    %v5549 = vpack.c.b16 %v5405, %v5399
    %v5550 = vpack.c.b16 %v5406, %v5400
    %v5551 = vpack.c.b16 %v5407, %v5401
    %v5552 = vpack.c.b16 %v5414, %v5408
    %v5553 = vpack.c.b16 %v5415, %v5409
    %v5554 = vpack.c.b16 %v5416, %v5410
    %v5555 = vpack.c.b16 %v5417, %v5411
    %v5556 = vpack.c.b16 %v5418, %v5412
    %v5557 = vpack.c.b16 %v5419, %v5413
    %v5558 = vpack.c.b16 %v5426, %v5420
    %v5559 = vpack.c.b16 %v5427, %v5421
    %v5560 = vpack.c.b16 %v5428, %v5422
    %v5561 = vpack.c.b16 %v5429, %v5423
    %v5562 = vpack.c.b16 %v5430, %v5424
    %v5563 = vpack.c.b16 %v5431, %v5425
    %v5564 = vpack.c.b16 %v5438, %v5432
    %v5565 = vpack.c.b16 %v5439, %v5433
    %v5566 = vpack.c.b16 %v5440, %v5434
    %v5567 = vpack.c.b16 %v5441, %v5435
    %v5568 = vpack.c.b16 %v5442, %v5436
    %v5569 = vpack.c.b16 %v5443, %v5437
    %v5570 = vpack.c.b16 %v5450, %v5444
    %v5571 = vpack.c.b16 %v5451, %v5445
    %v5572 = vpack.c.b16 %v5452, %v5446
    %v5573 = vpack.c.b16 %v5453, %v5447
    %v5574 = vpack.c.b16 %v5454, %v5448
    %v5575 = vpack.c.b16 %v5455, %v5449
    %v5576 = vpack.c.b16 %v5462, %v5456
    %v5577 = vpack.c.b16 %v5463, %v5457
    %v5578 = vpack.c.b16 %v5464, %v5458
    %v5579 = vpack.c.b16 %v5465, %v5459
    %v5580 = vpack.c.b16 %v5466, %v5460
    %v5581 = vpack.c.b16 %v5467, %v5461
    %v5582 = vpack.c.b16 %v5474, %v5468
    %v5583 = vpack.c.b16 %v5475, %v5469
    %v5584 = vpack.c.b16 %v5476, %v5470
    %v5585 = vpack.c.b16 %v5477, %v5471
    %v5586 = vpack.c.b16 %v5478, %v5472
    %v5587 = vpack.c.b16 %v5479, %v5473
    %v5588 = vpack.c.b16 %v5486, %v5480
    %v5589 = vpack.c.b16 %v5487, %v5481
    %v5590 = vpack.c.b16 %v5488, %v5482
    %v5591 = vpack.c.b16 %v5489, %v5483
    %v5592 = vpack.c.b16 %v5490, %v5484
    %v5593 = vpack.c.b16 %v5491, %v5485
    %v5594 = vpack.c.b16 %v5498, %v5492
    %v5595 = vpack.c.b16 %v5499, %v5493
    %v5596 = vpack.c.b16 %v5500, %v5494
    %v5597 = vpack.c.b16 %v5501, %v5495
    %v5598 = vpack.c.b16 %v5502, %v5496
    %v5599 = vpack.c.b16 %v5503, %v5497
    %5696 = vmatprep.subr.bf16.mxu0 %v5505
    %5697 = vmatpush1.bf16.msra.mxu0 %v5504
    %5698 = vmatprep.subr.bf16.mxu0 %v5511
    %5699 = vmatpush1.bf16.msra.mxu0 %v5510
    %5700 = vmatprep.subr.bf16.mxu0 %v5517
    %5701 = vmatpush1.bf16.msra.mxu0 %v5516
    %5702 = vmatprep.subr.bf16.mxu0 %v5523
    %5703 = vmatpush1.bf16.msra.mxu0 %v5522
    %5704 = vmatprep.subr.bf16.mxu0 %v5529
    %5705 = vmatpush1.bf16.msra.mxu0 %v5528
    %5706 = vmatprep.subr.bf16.mxu0 %v5535
    %5707 = vmatpush1.bf16.msra.mxu0 %v5534
    %5708 = vmatprep.subr.bf16.mxu0 %v5541
    %5709 = vmatpush1.bf16.msra.mxu0 %v5540
    %5710 = vmatprep.subr.bf16.mxu0 %v5547
    %5711 = vmatpush1.bf16.msra.mxu0 %v5546
    %5712 = vmatprep.subr.bf16.mxu0 %v5553
    %5713 = vmatpush1.bf16.msra.mxu0 %v5552
    %5714 = vmatprep.subr.bf16.mxu0 %v5559
    %5715 = vmatpush1.bf16.msra.mxu0 %v5558
    %5716 = vmatprep.subr.bf16.mxu0 %v5565
    %5717 = vmatpush1.bf16.msra.mxu0 %v5564
    %5718 = vmatprep.subr.bf16.mxu0 %v5571
    %5719 = vmatpush1.bf16.msra.mxu0 %v5570
    %5720 = vmatprep.subr.bf16.mxu0 %v5577
    %5721 = vmatpush1.bf16.msra.mxu0 %v5576
    %5722 = vmatprep.subr.bf16.mxu0 %v5583
    %5723 = vmatpush1.bf16.msra.mxu0 %v5582
    %5724 = vmatprep.subr.bf16.mxu0 %v5589
    %5725 = vmatpush1.bf16.msra.mxu0 %v5588
    %5726 = vmatprep.subr.bf16.mxu0 %v5595
    %5727 = vmatpush1.bf16.msra.mxu0 %v5594
    %5728 = vmatprep.mubr.bf16.mxu0 0
    %5729 = vmatmul.mubr.bf16.gmra.mrb[0].mxu0 0
    %v5730 = vpop.f32.mrb[0].mxu0
    %v5731 = vadd.f32 0.0, %v5730
    %v5732 = vpop.f32.mrb[0].mxu0
    %v5733 = vadd.f32 0.0, %v5732
    %v5734 = vpop.f32.mrb[0].mxu0
    %v5735 = vpop.f32.mrb[0].mxu0
    %5736 = vdwg.mxu0
    %5737 = vmatprep.subr.bf16.mxu0 %v5507
    %5738 = vmatpush1.bf16.msra.mxu0 %v5506
    %5739 = vmatprep.subr.bf16.mxu0 %v5513
    %5740 = vmatpush1.bf16.msra.mxu0 %v5512
    %5741 = vmatprep.subr.bf16.mxu0 %v5519
    %5742 = vmatpush1.bf16.msra.mxu0 %v5518
    %5743 = vmatprep.subr.bf16.mxu0 %v5525
    %5744 = vmatpush1.bf16.msra.mxu0 %v5524
    %5745 = vmatprep.subr.bf16.mxu0 %v5531
    %5746 = vmatpush1.bf16.msra.mxu0 %v5530
    %5747 = vmatprep.subr.bf16.mxu0 %v5537
    %5748 = vmatpush1.bf16.msra.mxu0 %v5536
    %5749 = vmatprep.subr.bf16.mxu0 %v5543
    %5750 = vmatpush1.bf16.msra.mxu0 %v5542
    %5751 = vmatprep.subr.bf16.mxu0 %v5549
    %5752 = vmatpush1.bf16.msra.mxu0 %v5548
    %5753 = vmatprep.subr.bf16.mxu0 %v5555
    %5754 = vmatpush1.bf16.msra.mxu0 %v5554
    %5755 = vmatprep.subr.bf16.mxu0 %v5561
    %5756 = vmatpush1.bf16.msra.mxu0 %v5560
    %5757 = vmatprep.subr.bf16.mxu0 %v5567
    %5758 = vmatpush1.bf16.msra.mxu0 %v5566
    %5759 = vmatprep.subr.bf16.mxu0 %v5573
    %5760 = vmatpush1.bf16.msra.mxu0 %v5572
    %5761 = vmatprep.subr.bf16.mxu0 %v5579
    %5762 = vmatpush1.bf16.msra.mxu0 %v5578
    %5763 = vmatprep.subr.bf16.mxu0 %v5585
    %5764 = vmatpush1.bf16.msra.mxu0 %v5584
    %5765 = vmatprep.subr.bf16.mxu0 %v5591
    %5766 = vmatpush1.bf16.msra.mxu0 %v5590
    %5767 = vmatprep.subr.bf16.mxu0 %v5597
    %5768 = vmatpush1.bf16.msra.mxu0 %v5596
    %5769 = vmatprep.mubr.bf16.mxu0 0
    %5770 = vmatmul.mubr.bf16.gmra.mrb[0].mxu0 0
    %v5771 = vpop.f32.mrb[0].mxu0
    %v5772 = vadd.f32 0.0, %v5771
    %v5773 = vpop.f32.mrb[0].mxu0
    %v5774 = vadd.f32 0.0, %v5773
    %v5775 = vpop.f32.mrb[0].mxu0
    %v5776 = vpop.f32.mrb[0].mxu0
    %5777 = vdwg.mxu0
    %5778 = vmatprep.subr.bf16.mxu0 %v5509
    %5779 = vmatpush1.bf16.msra.mxu0 %v5508
    %5780 = vmatprep.subr.bf16.mxu0 %v5515
    %5781 = vmatpush1.bf16.msra.mxu0 %v5514
    %5782 = vmatprep.subr.bf16.mxu0 %v5521
    %5783 = vmatpush1.bf16.msra.mxu0 %v5520
    %5784 = vmatprep.subr.bf16.mxu0 %v5527
    %5785 = vmatpush1.bf16.msra.mxu0 %v5526
    %5786 = vmatprep.subr.bf16.mxu0 %v5533
    %5787 = vmatpush1.bf16.msra.mxu0 %v5532
    %5788 = vmatprep.subr.bf16.mxu0 %v5539
    %5789 = vmatpush1.bf16.msra.mxu0 %v5538
    %5790 = vmatprep.subr.bf16.mxu0 %v5545
    %5791 = vmatpush1.bf16.msra.mxu0 %v5544
    %5792 = vmatprep.subr.bf16.mxu0 %v5551
    %5793 = vmatpush1.bf16.msra.mxu0 %v5550
    %5794 = vmatprep.subr.bf16.mxu0 %v5557
    %5795 = vmatpush1.bf16.msra.mxu0 %v5556
    %5796 = vmatprep.subr.bf16.mxu0 %v5563
    %5797 = vmatpush1.bf16.msra.mxu0 %v5562
    %5798 = vmatprep.subr.bf16.mxu0 %v5569
    %5799 = vmatpush1.bf16.msra.mxu0 %v5568
    %5800 = vmatprep.subr.bf16.mxu0 %v5575
    %5801 = vmatpush1.bf16.msra.mxu0 %v5574
    %5802 = vmatprep.subr.bf16.mxu0 %v5581
    %5803 = vmatpush1.bf16.msra.mxu0 %v5580
    %5804 = vmatprep.subr.bf16.mxu0 %v5587
    %5805 = vmatpush1.bf16.msra.mxu0 %v5586
    %5806 = vmatprep.subr.bf16.mxu0 %v5593
    %5807 = vmatpush1.bf16.msra.mxu0 %v5592
    %5808 = vmatprep.subr.bf16.mxu0 %v5599
    %5809 = vmatpush1.bf16.msra.mxu0 %v5598
    %5810 = vmatprep.mubr.bf16.mxu0 0
    %5811 = vmatmul.mubr.bf16.gmra.mrb[0].mxu0 0
    %v5812 = vpop.f32.mrb[0].mxu0
    %v5813 = vadd.f32 0.0, %v5812
    %v5814 = vpop.f32.mrb[0].mxu0
    %v5815 = vadd.f32 0.0, %v5814
    %v5816 = vpop.f32.mrb[0].mxu0
    %v5817 = vpop.f32.mrb[0].mxu0
    %5818 = vdwg.mxu0
    %v5819 = vadd.f32 %v5210, %v5731
    %v5820 = vadd.f32 %v5211, %v5733
    %v5821 = vxor.u32 %v5819, 2147483648
    %v5822 = vxor.u32 %v5820, 2147483648
    %v5823 = vmul.f32 %v5821, 1.442695
    %v5824 = vpow.pop %v5823
    %v5825 = vmul.f32 %v5822, 1.442695
    %v5826 = vpow.pop %v5825
    %v5827 = vadd.f32 %v5824, 1.0
    %v5828 = vadd.f32 %v5826, 1.0
    %v5829 = vrcp.pop %v5827
    %v5830 = vmul.f32 1.0, %v5829
    %v5831 = vrcp.pop %v5828
    %v5832 = vmul.f32 1.0, %v5831
    %v5833 = vadd.f32 %v5212, %v5772
    %v5834 = vadd.f32 %v5213, %v5774
    %v5835 = vxor.u32 %v5833, 2147483648
    %v5836 = vxor.u32 %v5834, 2147483648
    %v5837 = vmul.f32 %v5835, 1.442695
    %v5838 = vpow.pop %v5837
    %v5839 = vmul.f32 %v5836, 1.442695
    %v5840 = vpow.pop %v5839
    %v5841 = vadd.f32 %v5838, 1.0
    %v5842 = vadd.f32 %v5840, 1.0
    %v5843 = vrcp.pop %v5841
    %v5844 = vmul.f32 1.0, %v5843
    %v5845 = vrcp.pop %v5842
    %v5846 = vmul.f32 1.0, %v5845
    %v5848 = vlaneseq
    %v5849 = vshrl.u32 %v5848, 7
    %v5850 = vsub.s32 0, %v5849
    %v5851 = vrot.slane %v5209, %v5850
    %v5852 = vlaneseq
    %v5853 = vshrl.u32 %v5852, 7
    %v5854 = vsub.s32 1, %v5853
    %v5855 = vrot.slane %v5209, %v5854
    %v5858 = vadd.f32 %v5813, %v5851
    %v5859 = vadd.f32 %v5815, %v5855
    %v5860 = vmul.f32 %v5830, %v5858
    %v5861 = vmul.f32 %v5832, %v5859
    %v5862 = vadd.f32 %v5214, %v5860
    %v5863 = vadd.f32 %v5215, %v5861
    %v5864 = vtanh.pop %v5862
    %v5865 = vtanh.pop %v5863
    %v5866 = vsub.f32 1.0, %v5844
    %v5867 = vsub.f32 1.0, %v5846
    %v5868 = vmul.f32 %v5866, %v5864
    %v5869 = vmul.f32 %v5867, %v5865
    %v5870 = vmul.f32 %v5844, 0.0
    %v5871 = vmul.f32 %v5846, 0.0
    %v5872 = vadd.f32 %v5868, %v5870
    %v5873 = vadd.f32 %v5869, %v5871
    %5874 = vst [vmem:[#allocation3] sm:$0xff] %v5872
    %5875 = vst [vmem:[#allocation3 + $0x8] sm:$0xff] %v5873
    %v5876 = vld [vmem:[#allocation6 + $0x30] sm:$0xff]
    %v5877 = vld [vmem:[#allocation6 + $0x38] sm:$0xff]
    %v5878 = vld [vmem:[#allocation6 + $0x40] sm:$0xff]
    %v5879 = vld [vmem:[#allocation6 + $0x48] sm:$0xff]
    %v5880 = vld [vmem:[#allocation6 + $0x50] sm:$0xff]
    %v5881 = vld [vmem:[#allocation6 + $0x58] sm:$0xff]
    %v5882 = vpack.c.bf16 %v5872, %v5872
    %v5883 = vpack.c.bf16 %v5873, %v5873
    %5884 = vmatprep.subr.bf16.mxu0 %v5505
    %5885 = vmatpush1.bf16.msra.mxu0 %v5504
    %5886 = vmatprep.subr.bf16.mxu0 %v5511
    %5887 = vmatpush1.bf16.msra.mxu0 %v5510
    %5888 = vmatprep.subr.bf16.mxu0 %v5517
    %5889 = vmatpush1.bf16.msra.mxu0 %v5516
    %5890 = vmatprep.subr.bf16.mxu0 %v5523
    %5891 = vmatpush1.bf16.msra.mxu0 %v5522
    %5892 = vmatprep.subr.bf16.mxu0 %v5529
    %5893 = vmatpush1.bf16.msra.mxu0 %v5528
    %5894 = vmatprep.subr.bf16.mxu0 %v5535
    %5895 = vmatpush1.bf16.msra.mxu0 %v5534
    %5896 = vmatprep.subr.bf16.mxu0 %v5541
    %5897 = vmatpush1.bf16.msra.mxu0 %v5540
    %5898 = vmatprep.subr.bf16.mxu0 %v5547
    %5899 = vmatpush1.bf16.msra.mxu0 %v5546
    %5900 = vmatprep.subr.bf16.mxu0 %v5553
    %5901 = vmatpush1.bf16.msra.mxu0 %v5552
    %5902 = vmatprep.subr.bf16.mxu0 %v5559
    %5903 = vmatpush1.bf16.msra.mxu0 %v5558
    %5904 = vmatprep.subr.bf16.mxu0 %v5565
    %5905 = vmatpush1.bf16.msra.mxu0 %v5564
    %5906 = vmatprep.subr.bf16.mxu0 %v5571
    %5907 = vmatpush1.bf16.msra.mxu0 %v5570
    %5908 = vmatprep.subr.bf16.mxu0 %v5577
    %5909 = vmatpush1.bf16.msra.mxu0 %v5576
    %5910 = vmatprep.subr.bf16.mxu0 %v5583
    %5911 = vmatpush1.bf16.msra.mxu0 %v5582
    %5912 = vmatprep.subr.bf16.mxu0 %v5589
    %5913 = vmatpush1.bf16.msra.mxu0 %v5588
    %5914 = vmatprep.subr.bf16.mxu0 %v5595
    %5915 = vmatpush1.bf16.msra.mxu0 %v5594
    %5916 = vmatprep.mubr.bf16.mxu0 %v5883
    %5917 = vmatmul.mubr.bf16.gmra.mrb[0].mxu0 %v5882
    %v5918 = vpop.f32.mrb[0].mxu0
    %v5919 = vadd.f32 0.0, %v5918
    %v5920 = vpop.f32.mrb[0].mxu0
    %v5921 = vadd.f32 0.0, %v5920
    %v5922 = vpop.f32.mrb[0].mxu0
    %v5923 = vpop.f32.mrb[0].mxu0
    %5924 = vdwg.mxu0
    %5925 = vmatprep.subr.bf16.mxu0 %v5507
    %5926 = vmatpush1.bf16.msra.mxu0 %v5506
    %5927 = vmatprep.subr.bf16.mxu0 %v5513
    %5928 = vmatpush1.bf16.msra.mxu0 %v5512
    %5929 = vmatprep.subr.bf16.mxu0 %v5519
    %5930 = vmatpush1.bf16.msra.mxu0 %v5518
    %5931 = vmatprep.subr.bf16.mxu0 %v5525
    %5932 = vmatpush1.bf16.msra.mxu0 %v5524
    %5933 = vmatprep.subr.bf16.mxu0 %v5531
    %5934 = vmatpush1.bf16.msra.mxu0 %v5530
    %5935 = vmatprep.subr.bf16.mxu0 %v5537
    %5936 = vmatpush1.bf16.msra.mxu0 %v5536
    %5937 = vmatprep.subr.bf16.mxu0 %v5543
    %5938 = vmatpush1.bf16.msra.mxu0 %v5542
    %5939 = vmatprep.subr.bf16.mxu0 %v5549
    %5940 = vmatpush1.bf16.msra.mxu0 %v5548
    %5941 = vmatprep.subr.bf16.mxu0 %v5555
    %5942 = vmatpush1.bf16.msra.mxu0 %v5554
    %5943 = vmatprep.subr.bf16.mxu0 %v5561
    %5944 = vmatpush1.bf16.msra.mxu0 %v5560
    %5945 = vmatprep.subr.bf16.mxu0 %v5567
    %5946 = vmatpush1.bf16.msra.mxu0 %v5566
    %5947 = vmatprep.subr.bf16.mxu0 %v5573
    %5948 = vmatpush1.bf16.msra.mxu0 %v5572
    %5949 = vmatprep.subr.bf16.mxu0 %v5579
    %5950 = vmatpush1.bf16.msra.mxu0 %v5578
    %5951 = vmatprep.subr.bf16.mxu0 %v5585
    %5952 = vmatpush1.bf16.msra.mxu0 %v5584
    %5953 = vmatprep.subr.bf16.mxu0 %v5591
    %5954 = vmatpush1.bf16.msra.mxu0 %v5590
    %5955 = vmatprep.subr.bf16.mxu0 %v5597
    %5956 = vmatpush1.bf16.msra.mxu0 %v5596
    %5957 = vmatprep.mubr.bf16.mxu0 %v5883
    %5958 = vmatmul.mubr.bf16.gmra.mrb[0].mxu0 %v5882
    %v5959 = vpop.f32.mrb[0].mxu0
    %v5960 = vadd.f32 0.0, %v5959
    %v5961 = vpop.f32.mrb[0].mxu0
    %v5962 = vadd.f32 0.0, %v5961
    %v5963 = vpop.f32.mrb[0].mxu0
    %v5964 = vpop.f32.mrb[0].mxu0
    %5965 = vdwg.mxu0
    %5966 = vmatprep.subr.bf16.mxu0 %v5509
    %5967 = vmatpush1.bf16.msra.mxu0 %v5508
    %5968 = vmatprep.subr.bf16.mxu0 %v5515
    %5969 = vmatpush1.bf16.msra.mxu0 %v5514
    %5970 = vmatprep.subr.bf16.mxu0 %v5521
    %5971 = vmatpush1.bf16.msra.mxu0 %v5520
    %5972 = vmatprep.subr.bf16.mxu0 %v5527
    %5973 = vmatpush1.bf16.msra.mxu0 %v5526
    %5974 = vmatprep.subr.bf16.mxu0 %v5533
    %5975 = vmatpush1.bf16.msra.mxu0 %v5532
    %5976 = vmatprep.subr.bf16.mxu0 %v5539
    %5977 = vmatpush1.bf16.msra.mxu0 %v5538
    %5978 = vmatprep.subr.bf16.mxu0 %v5545
    %5979 = vmatpush1.bf16.msra.mxu0 %v5544
    %5980 = vmatprep.subr.bf16.mxu0 %v5551
    %5981 = vmatpush1.bf16.msra.mxu0 %v5550
    %5982 = vmatprep.subr.bf16.mxu0 %v5557
    %5983 = vmatpush1.bf16.msra.mxu0 %v5556
    %5984 = vmatprep.subr.bf16.mxu0 %v5563
    %5985 = vmatpush1.bf16.msra.mxu0 %v5562
    %5986 = vmatprep.subr.bf16.mxu0 %v5569
    %5987 = vmatpush1.bf16.msra.mxu0 %v5568
    %5988 = vmatprep.subr.bf16.mxu0 %v5575
    %5989 = vmatpush1.bf16.msra.mxu0 %v5574
    %5990 = vmatprep.subr.bf16.mxu0 %v5581
    %5991 = vmatpush1.bf16.msra.mxu0 %v5580
    %5992 = vmatprep.subr.bf16.mxu0 %v5587
    %5993 = vmatpush1.bf16.msra.mxu0 %v5586
    %5994 = vmatprep.subr.bf16.mxu0 %v5593
    %5995 = vmatpush1.bf16.msra.mxu0 %v5592
    %5996 = vmatprep.subr.bf16.mxu0 %v5599
    %5997 = vmatpush1.bf16.msra.mxu0 %v5598
    %5998 = vmatprep.mubr.bf16.mxu0 %v5883
    %5999 = vmatmul.mubr.bf16.gmra.mrb[0].mxu0 %v5882
    %v6000 = vpop.f32.mrb[0].mxu0
    %v6001 = vadd.f32 0.0, %v6000
    %v6002 = vpop.f32.mrb[0].mxu0
    %v6003 = vadd.f32 0.0, %v6002
    %v6004 = vpop.f32.mrb[0].mxu0
    %v6005 = vpop.f32.mrb[0].mxu0
    %6006 = vdwg.mxu0
    %v6007 = vadd.f32 %v5876, %v5919
    %v6008 = vadd.f32 %v5877, %v5921
    %v6009 = vxor.u32 %v6007, 2147483648
    %v6010 = vxor.u32 %v6008, 2147483648
    %v6011 = vmul.f32 %v6009, 1.442695
    %v6012 = vpow.pop %v6011
    %v6013 = vmul.f32 %v6010, 1.442695
    %v6014 = vpow.pop %v6013
    %v6015 = vadd.f32 %v6012, 1.0
    %v6016 = vadd.f32 %v6014, 1.0
    %v6017 = vrcp.pop %v6015
    %v6018 = vmul.f32 1.0, %v6017
    %v6019 = vrcp.pop %v6016
    %v6020 = vmul.f32 1.0, %v6019
    %v6021 = vadd.f32 %v5878, %v5960
    %v6022 = vadd.f32 %v5879, %v5962
    %v6023 = vxor.u32 %v6021, 2147483648
    %v6024 = vxor.u32 %v6022, 2147483648
    %v6025 = vmul.f32 %v6023, 1.442695
    %v6026 = vpow.pop %v6025
    %v6027 = vmul.f32 %v6024, 1.442695
    %v6028 = vpow.pop %v6027
    %v6029 = vadd.f32 %v6026, 1.0
    %v6030 = vadd.f32 %v6028, 1.0
    %v6031 = vrcp.pop %v6029
    %v6032 = vmul.f32 1.0, %v6031
    %v6033 = vrcp.pop %v6030
    %v6034 = vmul.f32 1.0, %v6033
    %v6035 = vadd.f32 %v6001, %v5851
    %v6036 = vadd.f32 %v6003, %v5855
    %v6037 = vmul.f32 %v6018, %v6035
    %v6038 = vmul.f32 %v6020, %v6036
    %v6039 = vadd.f32 %v5880, %v6037
    %v6040 = vadd.f32 %v5881, %v6038
    %v6041 = vtanh.pop %v6039
    %v6042 = vtanh.pop %v6040
    %v6043 = vsub.f32 1.0, %v6032
    %v6044 = vsub.f32 1.0, %v6034
    %v6045 = vmul.f32 %v6043, %v6041
    %v6046 = vmul.f32 %v6044, %v6042
    %v6047 = vmul.f32 %v6032, %v5872
    %v6048 = vmul.f32 %v6034, %v5873
    %v6049 = vadd.f32 %v6045, %v6047
    %v6050 = vadd.f32 %v6046, %v6048
    %6051 = vst [vmem:[#allocation3 + $0x10] sm:$0xff] %v6049
    %6052 = vst [vmem:[#allocation3 + $0x18] sm:$0xff] %v6050
    %v6053 = vld [vmem:[#allocation3] sm:$0xff]
    %v6054 = vld [vmem:[#allocation3 + $0x8] sm:$0xff]
    %v6055 = vld [vmem:[#allocation3 + $0x10] sm:$0xff]
    %v6056 = vld [vmem:[#allocation3 + $0x18] sm:$0xff]
    %v6057 = vpack.c.bf16 %v6055, %v6053
    %v6058 = vpack.c.bf16 %v6056, %v6054
    %v6059 = vld [vmem:[%s7] sm:$0xff]
    %v6060 = vld [vmem:[%s7 + $0x8] sm:$0xf]
    %v6061 = vld [vmem:[%s7 + $0xc] sm:$0xff]
    %v6062 = vld [vmem:[%s7 + $0x14] sm:$0xf]
    %v6063 = vld [vmem:[%s7 + $0x18] sm:$0xff]
    %v6064 = vld [vmem:[%s7 + $0x20] sm:$0xf]
    %v6065 = vld [vmem:[%s7 + $0x24] sm:$0xff]
    %v6066 = vld [vmem:[%s7 + $0x2c] sm:$0xf]
    %v6067 = vld [vmem:[%s7 + $0x30] sm:$0xff]
    %v6068 = vld [vmem:[%s7 + $0x38] sm:$0xf]
    %v6069 = vld [vmem:[%s7 + $0x3c] sm:$0xff]
    %v6070 = vld [vmem:[%s7 + $0x44] sm:$0xf]
    %v6071 = vld [vmem:[%s7 + $0x48] sm:$0xff]
    %v6072 = vld [vmem:[%s7 + $0x50] sm:$0xf]
    %v6073 = vld [vmem:[%s7 + $0x54] sm:$0xff]
    %v6074 = vld [vmem:[%s7 + $0x5c] sm:$0xf]
    %v6075 = vld [vmem:[%s7 + $0x60] sm:$0xff]
    %v6076 = vld [vmem:[%s7 + $0x68] sm:$0xf]
    %v6077 = vld [vmem:[%s7 + $0x6c] sm:$0xff]
    %v6078 = vld [vmem:[%s7 + $0x74] sm:$0xf]
    %v6079 = vld [vmem:[%s7 + $0x78] sm:$0xff]
    %v6080 = vld [vmem:[%s7 + $0x80] sm:$0xf]
    %v6081 = vld [vmem:[%s7 + $0x84] sm:$0xff]
    %v6082 = vld [vmem:[%s7 + $0x8c] sm:$0xf]
    %v6083 = vld [vmem:[%s7 + $0x90] sm:$0xff]
    %v6084 = vld [vmem:[%s7 + $0x98] sm:$0xf]
    %v6085 = vld [vmem:[%s7 + $0x9c] sm:$0xff]
    %v6086 = vld [vmem:[%s7 + $0xa4] sm:$0xf]
    %v6087 = vld [vmem:[%s7 + $0xa8] sm:$0xff]
    %v6088 = vld [vmem:[%s7 + $0xb0] sm:$0xf]
    %v6089 = vld [vmem:[%s7 + $0xb4] sm:$0xff]
    %v6090 = vld [vmem:[%s7 + $0xbc] sm:$0xf]
    %v6091 = vld [vmem:[%s7 + $0xc0] sm:$0xff]
    %v6092 = vld [vmem:[%s7 + $0xc8] sm:$0xf]
    %v6093 = vld [vmem:[%s7 + $0xcc] sm:$0xff]
    %v6094 = vld [vmem:[%s7 + $0xd4] sm:$0xf]
    %v6095 = vld [vmem:[%s7 + $0xd8] sm:$0xff]
    %v6096 = vld [vmem:[%s7 + $0xe0] sm:$0xf]
    %v6097 = vld [vmem:[%s7 + $0xe4] sm:$0xff]
    %v6098 = vld [vmem:[%s7 + $0xec] sm:$0xf]
    %v6099 = vld [vmem:[%s7 + $0xf0] sm:$0xff]
    %v6100 = vld [vmem:[%s7 + $0xf8] sm:$0xf]
    %v6101 = vld [vmem:[%s7 + $0xfc] sm:$0xff]
    %v6102 = vld [vmem:[%s7 + $0x104] sm:$0xf]
    %v6103 = vld [vmem:[%s7 + $0x108] sm:$0xff]
    %v6104 = vld [vmem:[%s7 + $0x110] sm:$0xf]
    %v6105 = vld [vmem:[%s7 + $0x114] sm:$0xff]
    %v6106 = vld [vmem:[%s7 + $0x11c] sm:$0xf]
    %v6107 = vld [vmem:[%s7 + $0x120] sm:$0xff]
    %v6108 = vld [vmem:[%s7 + $0x128] sm:$0xf]
    %v6109 = vld [vmem:[%s7 + $0x12c] sm:$0xff]
    %v6110 = vld [vmem:[%s7 + $0x134] sm:$0xf]
    %v6111 = vld [vmem:[%s7 + $0x138] sm:$0xff]
    %v6112 = vld [vmem:[%s7 + $0x140] sm:$0xf]
    %v6113 = vld [vmem:[%s7 + $0x144] sm:$0xff]
    %v6114 = vld [vmem:[%s7 + $0x14c] sm:$0xf]
    %v6115 = vld [vmem:[%s7 + $0x150] sm:$0xff]
    %v6116 = vld [vmem:[%s7 + $0x158] sm:$0xf]
    %v6117 = vld [vmem:[%s7 + $0x15c] sm:$0xff]
    %v6118 = vld [vmem:[%s7 + $0x164] sm:$0xf]
    %v6119 = vld [vmem:[%s7 + $0x168] sm:$0xff]
    %v6120 = vld [vmem:[%s7 + $0x170] sm:$0xf]
    %v6121 = vld [vmem:[%s7 + $0x174] sm:$0xff]
    %v6122 = vld [vmem:[%s7 + $0x17c] sm:$0xf]
    %v6123 = vld [vmem:[%s8] sm:$0x7]
    %v6125 = vlaneseq
    %v6126 = vshrl.u32 %v6125, 7
    %v6127 = vsub.s32 0, %v6126
    %v6128 = vrot.slane %v6123, %v6127
    %v6129 = vlaneseq
    %v6130 = vshrl.u32 %v6129, 7
    %v6131 = vsub.s32 1, %v6130
    %v6132 = vrot.slane %v6123, %v6131
    %v6133 = vlaneseq
    %v6134 = vshrl.u32 %v6133, 7
    %v6135 = vsub.s32 2, %v6134
    %v6136 = vrot.slane %v6123, %v6135
    %v6204 = vunpack.c.l.b16 %v6059
    %v6205 = vunpack.c.h.b16 %v6059
    %v6206 = vunpack.c.l.b16 %v6060
    %v6207 = vunpack.c.l.b16 %v6061
    %v6208 = vunpack.c.h.b16 %v6061
    %v6209 = vunpack.c.l.b16 %v6062
    %v6210 = vunpack.c.l.b16 %v6063
    %v6211 = vunpack.c.h.b16 %v6063
    %v6212 = vunpack.c.l.b16 %v6064
    %v6213 = vunpack.c.l.b16 %v6065
    %v6214 = vunpack.c.h.b16 %v6065
    %v6215 = vunpack.c.l.b16 %v6066
    %v6216 = vunpack.c.l.b16 %v6067
    %v6217 = vunpack.c.h.b16 %v6067
    %v6218 = vunpack.c.l.b16 %v6068
    %v6219 = vunpack.c.l.b16 %v6069
    %v6220 = vunpack.c.h.b16 %v6069
    %v6221 = vunpack.c.l.b16 %v6070
    %v6222 = vunpack.c.l.b16 %v6071
    %v6223 = vunpack.c.h.b16 %v6071
    %v6224 = vunpack.c.l.b16 %v6072
    %v6225 = vunpack.c.l.b16 %v6073
    %v6226 = vunpack.c.h.b16 %v6073
    %v6227 = vunpack.c.l.b16 %v6074
    %v6228 = vunpack.c.l.b16 %v6075
    %v6229 = vunpack.c.h.b16 %v6075
    %v6230 = vunpack.c.l.b16 %v6076
    %v6231 = vunpack.c.l.b16 %v6077
    %v6232 = vunpack.c.h.b16 %v6077
    %v6233 = vunpack.c.l.b16 %v6078
    %v6234 = vunpack.c.l.b16 %v6079
    %v6235 = vunpack.c.h.b16 %v6079
    %v6236 = vunpack.c.l.b16 %v6080
    %v6237 = vunpack.c.l.b16 %v6081
    %v6238 = vunpack.c.h.b16 %v6081
    %v6239 = vunpack.c.l.b16 %v6082
    %v6240 = vunpack.c.l.b16 %v6083
    %v6241 = vunpack.c.h.b16 %v6083
    %v6242 = vunpack.c.l.b16 %v6084
    %v6243 = vunpack.c.l.b16 %v6085
    %v6244 = vunpack.c.h.b16 %v6085
    %v6245 = vunpack.c.l.b16 %v6086
    %v6246 = vunpack.c.l.b16 %v6087
    %v6247 = vunpack.c.h.b16 %v6087
    %v6248 = vunpack.c.l.b16 %v6088
    %v6249 = vunpack.c.l.b16 %v6089
    %v6250 = vunpack.c.h.b16 %v6089
    %v6251 = vunpack.c.l.b16 %v6090
    %v6252 = vunpack.c.l.b16 %v6091
    %v6253 = vunpack.c.h.b16 %v6091
    %v6254 = vunpack.c.l.b16 %v6092
    %v6255 = vunpack.c.l.b16 %v6093
    %v6256 = vunpack.c.h.b16 %v6093
    %v6257 = vunpack.c.l.b16 %v6094
    %v6258 = vunpack.c.l.b16 %v6095
    %v6259 = vunpack.c.h.b16 %v6095
    %v6260 = vunpack.c.l.b16 %v6096
    %v6261 = vunpack.c.l.b16 %v6097
    %v6262 = vunpack.c.h.b16 %v6097
    %v6263 = vunpack.c.l.b16 %v6098
    %v6264 = vunpack.c.l.b16 %v6099
    %v6265 = vunpack.c.h.b16 %v6099
    %v6266 = vunpack.c.l.b16 %v6100
    %v6267 = vunpack.c.l.b16 %v6101
    %v6268 = vunpack.c.h.b16 %v6101
    %v6269 = vunpack.c.l.b16 %v6102
    %v6270 = vunpack.c.l.b16 %v6103
    %v6271 = vunpack.c.h.b16 %v6103
    %v6272 = vunpack.c.l.b16 %v6104
    %v6273 = vunpack.c.l.b16 %v6105
    %v6274 = vunpack.c.h.b16 %v6105
    %v6275 = vunpack.c.l.b16 %v6106
    %v6276 = vunpack.c.l.b16 %v6107
    %v6277 = vunpack.c.h.b16 %v6107
    %v6278 = vunpack.c.l.b16 %v6108
    %v6279 = vunpack.c.l.b16 %v6109
    %v6280 = vunpack.c.h.b16 %v6109
    %v6281 = vunpack.c.l.b16 %v6110
    %v6282 = vunpack.c.l.b16 %v6111
    %v6283 = vunpack.c.h.b16 %v6111
    %v6284 = vunpack.c.l.b16 %v6112
    %v6285 = vunpack.c.l.b16 %v6113
    %v6286 = vunpack.c.h.b16 %v6113
    %v6287 = vunpack.c.l.b16 %v6114
    %v6288 = vunpack.c.l.b16 %v6115
    %v6289 = vunpack.c.h.b16 %v6115
    %v6290 = vunpack.c.l.b16 %v6116
    %v6291 = vunpack.c.l.b16 %v6117
    %v6292 = vunpack.c.h.b16 %v6117
    %v6293 = vunpack.c.l.b16 %v6118
    %v6294 = vunpack.c.l.b16 %v6119
    %v6295 = vunpack.c.h.b16 %v6119
    %v6296 = vunpack.c.l.b16 %v6120
    %v6297 = vunpack.c.l.b16 %v6121
    %v6298 = vunpack.c.h.b16 %v6121
    %v6299 = vunpack.c.l.b16 %v6122
    %v6300 = vpack.c.b16 %v6207, %v6204
    %v6301 = vpack.c.b16 %v6208, %v6205
    %v6302 = vpack.c.b16 %v6209, %v6206
    %v6303 = vpack.c.b16 %v6213, %v6210
    %v6304 = vpack.c.b16 %v6214, %v6211
    %v6305 = vpack.c.b16 %v6215, %v6212
    %v6306 = vpack.c.b16 %v6219, %v6216
    %v6307 = vpack.c.b16 %v6220, %v6217
    %v6308 = vpack.c.b16 %v6221, %v6218
    %v6309 = vpack.c.b16 %v6225, %v6222
    %v6310 = vpack.c.b16 %v6226, %v6223
    %v6311 = vpack.c.b16 %v6227, %v6224
    %v6312 = vpack.c.b16 %v6231, %v6228
    %v6313 = vpack.c.b16 %v6232, %v6229
    %v6314 = vpack.c.b16 %v6233, %v6230
    %v6315 = vpack.c.b16 %v6237, %v6234
    %v6316 = vpack.c.b16 %v6238, %v6235
    %v6317 = vpack.c.b16 %v6239, %v6236
    %v6318 = vpack.c.b16 %v6243, %v6240
    %v6319 = vpack.c.b16 %v6244, %v6241
    %v6320 = vpack.c.b16 %v6245, %v6242
    %v6321 = vpack.c.b16 %v6249, %v6246
    %v6322 = vpack.c.b16 %v6250, %v6247
    %v6323 = vpack.c.b16 %v6251, %v6248
    %v6324 = vpack.c.b16 %v6255, %v6252
    %v6325 = vpack.c.b16 %v6256, %v6253
    %v6326 = vpack.c.b16 %v6257, %v6254
    %v6327 = vpack.c.b16 %v6261, %v6258
    %v6328 = vpack.c.b16 %v6262, %v6259
    %v6329 = vpack.c.b16 %v6263, %v6260
    %v6330 = vpack.c.b16 %v6267, %v6264
    %v6331 = vpack.c.b16 %v6268, %v6265
    %v6332 = vpack.c.b16 %v6269, %v6266
    %v6333 = vpack.c.b16 %v6273, %v6270
    %v6334 = vpack.c.b16 %v6274, %v6271
    %v6335 = vpack.c.b16 %v6275, %v6272
    %v6336 = vpack.c.b16 %v6279, %v6276
    %v6337 = vpack.c.b16 %v6280, %v6277
    %v6338 = vpack.c.b16 %v6281, %v6278
    %v6339 = vpack.c.b16 %v6285, %v6282
    %v6340 = vpack.c.b16 %v6286, %v6283
    %v6341 = vpack.c.b16 %v6287, %v6284
    %v6342 = vpack.c.b16 %v6291, %v6288
    %v6343 = vpack.c.b16 %v6292, %v6289
    %v6344 = vpack.c.b16 %v6293, %v6290
    %v6345 = vpack.c.b16 %v6297, %v6294
    %v6346 = vpack.c.b16 %v6298, %v6295
    %v6347 = vpack.c.b16 %v6299, %v6296
    %6396 = vmatprep.subr.bf16.mxu0 %v6301
    %6397 = vmatpush1.bf16.msra.mxu0 %v6300
    %6398 = vmatprep.subr.bf16.mxu0 %v6304
    %6399 = vmatpush1.bf16.msra.mxu0 %v6303
    %6400 = vmatprep.subr.bf16.mxu0 %v6307
    %6401 = vmatpush1.bf16.msra.mxu0 %v6306
    %6402 = vmatprep.subr.bf16.mxu0 %v6310
    %6403 = vmatpush1.bf16.msra.mxu0 %v6309
    %6404 = vmatprep.subr.bf16.mxu0 %v6313
    %6405 = vmatpush1.bf16.msra.mxu0 %v6312
    %6406 = vmatprep.subr.bf16.mxu0 %v6316
    %6407 = vmatpush1.bf16.msra.mxu0 %v6315
    %6408 = vmatprep.subr.bf16.mxu0 %v6319
    %6409 = vmatpush1.bf16.msra.mxu0 %v6318
    %6410 = vmatprep.subr.bf16.mxu0 %v6322
    %6411 = vmatpush1.bf16.msra.mxu0 %v6321
    %6412 = vmatprep.subr.bf16.mxu0 %v6325
    %6413 = vmatpush1.bf16.msra.mxu0 %v6324
    %6414 = vmatprep.subr.bf16.mxu0 %v6328
    %6415 = vmatpush1.bf16.msra.mxu0 %v6327
    %6416 = vmatprep.subr.bf16.mxu0 %v6331
    %6417 = vmatpush1.bf16.msra.mxu0 %v6330
    %6418 = vmatprep.subr.bf16.mxu0 %v6334
    %6419 = vmatpush1.bf16.msra.mxu0 %v6333
    %6420 = vmatprep.subr.bf16.mxu0 %v6337
    %6421 = vmatpush1.bf16.msra.mxu0 %v6336
    %6422 = vmatprep.subr.bf16.mxu0 %v6340
    %6423 = vmatpush1.bf16.msra.mxu0 %v6339
    %6424 = vmatprep.subr.bf16.mxu0 %v6343
    %6425 = vmatpush1.bf16.msra.mxu0 %v6342
    %6426 = vmatprep.subr.bf16.mxu0 %v6346
    %6427 = vmatpush1.bf16.msra.mxu0 %v6345
    %6428 = vmatprep.mubr.bf16.mxu0 %v6058
    %6429 = vmatmul.mubr.bf16.gmra.mrb[0].mxu0 %v6057
    %v6430 = vpop.f32.mrb[0].mxu0
    %v6431 = vadd.f32 %v6128, %v6430
    %v6432 = vpop.f32.mrb[0].mxu0
    %v6433 = vadd.f32 %v6132, %v6432
    %v6434 = vpop.f32.mrb[0].mxu0
    %v6435 = vadd.f32 %v6128, %v6434
    %v6436 = vpop.f32.mrb[0].mxu0
    %v6437 = vadd.f32 %v6132, %v6436
    %6438 = vdwg.mxu0
    %6439 = vmatprep.subr.bf16.mxu0 0
    %6440 = vmatpush1.bf16.msra.mxu0 %v6302
    %6441 = vmatprep.subr.bf16.mxu0 0
    %6442 = vmatpush1.bf16.msra.mxu0 %v6305
    %6443 = vmatprep.subr.bf16.mxu0 0
    %6444 = vmatpush1.bf16.msra.mxu0 %v6308
    %6445 = vmatprep.subr.bf16.mxu0 0
    %6446 = vmatpush1.bf16.msra.mxu0 %v6311
    %6447 = vmatprep.subr.bf16.mxu0 0
    %6448 = vmatpush1.bf16.msra.mxu0 %v6314
    %6449 = vmatprep.subr.bf16.mxu0 0
    %6450 = vmatpush1.bf16.msra.mxu0 %v6317
    %6451 = vmatprep.subr.bf16.mxu0 0
    %6452 = vmatpush1.bf16.msra.mxu0 %v6320
    %6453 = vmatprep.subr.bf16.mxu0 0
    %6454 = vmatpush1.bf16.msra.mxu0 %v6323
    %6455 = vmatprep.subr.bf16.mxu0 0
    %6456 = vmatpush1.bf16.msra.mxu0 %v6326
    %6457 = vmatprep.subr.bf16.mxu0 0
    %6458 = vmatpush1.bf16.msra.mxu0 %v6329
    %6459 = vmatprep.subr.bf16.mxu0 0
    %6460 = vmatpush1.bf16.msra.mxu0 %v6332
    %6461 = vmatprep.subr.bf16.mxu0 0
    %6462 = vmatpush1.bf16.msra.mxu0 %v6335
    %6463 = vmatprep.subr.bf16.mxu0 0
    %6464 = vmatpush1.bf16.msra.mxu0 %v6338
    %6465 = vmatprep.subr.bf16.mxu0 0
    %6466 = vmatpush1.bf16.msra.mxu0 %v6341
    %6467 = vmatprep.subr.bf16.mxu0 0
    %6468 = vmatpush1.bf16.msra.mxu0 %v6344
    %6469 = vmatprep.subr.bf16.mxu0 0
    %6470 = vmatpush1.bf16.msra.mxu0 %v6347
    %6471 = vmatprep.mubr.bf16.mxu0 %v6058
    %6472 = vmatmul.mubr.bf16.gmra.mrb[0].mxu0 %v6057
    %v6473 = vpop.f32.mrb[0].mxu0
    %v6474 = vadd.f32 %v6136, %v6473
    %v6475 = vpop.f32.mrb[0].mxu0
    %v6476 = vpop.f32.mrb[0].mxu0
    %v6477 = vadd.f32 %v6136, %v6476
    %v6478 = vpop.f32.mrb[0].mxu0
    %6479 = vdwg.mxu0
    %6480 = vst [vmem:[#allocation7] sm:$0xff] %v6431
    %6481 = vst [vmem:[#allocation7 + $0x8] sm:$0xff] %v6433
    %6482 = vst [vmem:[#allocation7 + $0x10] sm:$0xff] %v6474
    %6483 = vst [vmem:[#allocation7 + $0x18] sm:$0xff] %v6435
    %6484 = vst [vmem:[#allocation7 + $0x20] sm:$0xff] %v6437
    %6485 = vst [vmem:[#allocation7 + $0x28] sm:$0xff] %v6477
    %v6486 = vld [vmem:[#allocation13] sm:$0xff]
    %v6487 = vld [vmem:[#allocation13 + $0x8] sm:$0xf]
    %v6488 = vld [vmem:[#allocation13 + $0xc] sm:$0xff]
    %v6489 = vld [vmem:[#allocation13 + $0x14] sm:$0xf]
    %v6490 = vld [vmem:[#allocation13 + $0x18] sm:$0xff]
    %v6491 = vld [vmem:[#allocation13 + $0x20] sm:$0xf]
    %v6492 = vld [vmem:[#allocation13 + $0x24] sm:$0xff]
    %v6493 = vld [vmem:[#allocation13 + $0x2c] sm:$0xf]
    %v6494 = vld [vmem:[#allocation13 + $0x30] sm:$0xff]
    %v6495 = vld [vmem:[#allocation13 + $0x38] sm:$0xf]
    %v6496 = vld [vmem:[#allocation13 + $0x3c] sm:$0xff]
    %v6497 = vld [vmem:[#allocation13 + $0x44] sm:$0xf]
    %v6498 = vld [vmem:[#allocation13 + $0x48] sm:$0xff]
    %v6499 = vld [vmem:[#allocation13 + $0x50] sm:$0xf]
    %v6500 = vld [vmem:[#allocation13 + $0x54] sm:$0xff]
    %v6501 = vld [vmem:[#allocation13 + $0x5c] sm:$0xf]
    %v6502 = vld [vmem:[#allocation13 + $0x60] sm:$0xff]
    %v6503 = vld [vmem:[#allocation13 + $0x68] sm:$0xf]
    %v6504 = vld [vmem:[#allocation13 + $0x6c] sm:$0xff]
    %v6505 = vld [vmem:[#allocation13 + $0x74] sm:$0xf]
    %v6506 = vld [vmem:[#allocation13 + $0x78] sm:$0xff]
    %v6507 = vld [vmem:[#allocation13 + $0x80] sm:$0xf]
    %v6508 = vld [vmem:[#allocation13 + $0x84] sm:$0xff]
    %v6509 = vld [vmem:[#allocation13 + $0x8c] sm:$0xf]
    %v6510 = vld [vmem:[#allocation13 + $0x90] sm:$0xff]
    %v6511 = vld [vmem:[#allocation13 + $0x98] sm:$0xf]
    %v6512 = vld [vmem:[#allocation13 + $0x9c] sm:$0xff]
    %v6513 = vld [vmem:[#allocation13 + $0xa4] sm:$0xf]
    %v6514 = vld [vmem:[#allocation13 + $0xa8] sm:$0xff]
    %v6515 = vld [vmem:[#allocation13 + $0xb0] sm:$0xf]
    %v6516 = vld [vmem:[#allocation13 + $0xb4] sm:$0xff]
    %v6517 = vld [vmem:[#allocation13 + $0xbc] sm:$0xf]
    %v6518 = vld [vmem:[%s10] sm:$0x1]
    %v6519 = vld [vmem:[#allocation7] sm:$0xff]
    %v6520 = vld [vmem:[#allocation7 + $0x8] sm:$0xff]
    %v6521 = vld [vmem:[#allocation7 + $0x10] sm:$0xff]
    %v6554 = vunpack.c.l.b16 %v6486
    %v6555 = vunpack.c.h.b16 %v6486
    %v6556 = vunpack.c.l.b16 %v6487
    %v6557 = vunpack.c.l.b16 %v6488
    %v6558 = vunpack.c.h.b16 %v6488
    %v6559 = vunpack.c.l.b16 %v6489
    %v6560 = vunpack.c.l.b16 %v6490
    %v6561 = vunpack.c.h.b16 %v6490
    %v6562 = vunpack.c.l.b16 %v6491
    %v6563 = vunpack.c.l.b16 %v6492
    %v6564 = vunpack.c.h.b16 %v6492
    %v6565 = vunpack.c.l.b16 %v6493
    %v6566 = vunpack.c.l.b16 %v6494
    %v6567 = vunpack.c.h.b16 %v6494
    %v6568 = vunpack.c.l.b16 %v6495
    %v6569 = vunpack.c.l.b16 %v6496
    %v6570 = vunpack.c.h.b16 %v6496
    %v6571 = vunpack.c.l.b16 %v6497
    %v6572 = vunpack.c.l.b16 %v6498
    %v6573 = vunpack.c.h.b16 %v6498
    %v6574 = vunpack.c.l.b16 %v6499
    %v6575 = vunpack.c.l.b16 %v6500
    %v6576 = vunpack.c.h.b16 %v6500
    %v6577 = vunpack.c.l.b16 %v6501
    %v6578 = vunpack.c.l.b16 %v6502
    %v6579 = vunpack.c.h.b16 %v6502
    %v6580 = vunpack.c.l.b16 %v6503
    %v6581 = vunpack.c.l.b16 %v6504
    %v6582 = vunpack.c.h.b16 %v6504
    %v6583 = vunpack.c.l.b16 %v6505
    %v6584 = vunpack.c.l.b16 %v6506
    %v6585 = vunpack.c.h.b16 %v6506
    %v6586 = vunpack.c.l.b16 %v6507
    %v6587 = vunpack.c.l.b16 %v6508
    %v6588 = vunpack.c.h.b16 %v6508
    %v6589 = vunpack.c.l.b16 %v6509
    %v6590 = vunpack.c.l.b16 %v6510
    %v6591 = vunpack.c.h.b16 %v6510
    %v6592 = vunpack.c.l.b16 %v6511
    %v6593 = vunpack.c.l.b16 %v6512
    %v6594 = vunpack.c.h.b16 %v6512
    %v6595 = vunpack.c.l.b16 %v6513
    %v6596 = vunpack.c.l.b16 %v6514
    %v6597 = vunpack.c.h.b16 %v6514
    %v6598 = vunpack.c.l.b16 %v6515
    %v6599 = vunpack.c.l.b16 %v6516
    %v6600 = vunpack.c.h.b16 %v6516
    %v6601 = vunpack.c.l.b16 %v6517
    %v6602 = vpack.c.b16 %v6557, %v6554
    %v6603 = vpack.c.b16 %v6558, %v6555
    %v6604 = vpack.c.b16 %v6559, %v6556
    %v6605 = vpack.c.b16 %v6563, %v6560
    %v6606 = vpack.c.b16 %v6564, %v6561
    %v6607 = vpack.c.b16 %v6565, %v6562
    %v6608 = vpack.c.b16 %v6569, %v6566
    %v6609 = vpack.c.b16 %v6570, %v6567
    %v6610 = vpack.c.b16 %v6571, %v6568
    %v6611 = vpack.c.b16 %v6575, %v6572
    %v6612 = vpack.c.b16 %v6576, %v6573
    %v6613 = vpack.c.b16 %v6577, %v6574
    %v6614 = vpack.c.b16 %v6581, %v6578
    %v6615 = vpack.c.b16 %v6582, %v6579
    %v6616 = vpack.c.b16 %v6583, %v6580
    %v6617 = vpack.c.b16 %v6587, %v6584
    %v6618 = vpack.c.b16 %v6588, %v6585
    %v6619 = vpack.c.b16 %v6589, %v6586
    %v6620 = vpack.c.b16 %v6593, %v6590
    %v6621 = vpack.c.b16 %v6594, %v6591
    %v6622 = vpack.c.b16 %v6595, %v6592
    %v6623 = vpack.c.b16 %v6599, %v6596
    %v6624 = vpack.c.b16 %v6600, %v6597
    %v6625 = vpack.c.b16 %v6601, %v6598
    %6650 = vmatprep.subr.bf16.mxu0 %v6603
    %6651 = vmatpush1.bf16.msra.mxu0 %v6602
    %6652 = vmatprep.subr.bf16.mxu0 %v6606
    %6653 = vmatpush1.bf16.msra.mxu0 %v6605
    %6654 = vmatprep.subr.bf16.mxu0 %v6609
    %6655 = vmatpush1.bf16.msra.mxu0 %v6608
    %6656 = vmatprep.subr.bf16.mxu0 %v6612
    %6657 = vmatpush1.bf16.msra.mxu0 %v6611
    %6658 = vmatprep.subr.bf16.mxu0 %v6615
    %6659 = vmatpush1.bf16.msra.mxu0 %v6614
    %6660 = vmatprep.subr.bf16.mxu0 %v6618
    %6661 = vmatpush1.bf16.msra.mxu0 %v6617
    %6662 = vmatprep.subr.bf16.mxu0 %v6621
    %6663 = vmatpush1.bf16.msra.mxu0 %v6620
    %6664 = vmatprep.subr.bf16.mxu0 %v6624
    %6665 = vmatpush1.bf16.msra.mxu0 %v6623
    %6666 = vmatprep.subr.bf16.mxu0 0
    %6667 = vmatpush1.bf16.msra.mxu0 0
    %6668 = vmatprep.subr.bf16.mxu0 0
    %6669 = vmatpush1.bf16.msra.mxu0 0
    %6670 = vmatprep.subr.bf16.mxu0 0
    %6671 = vmatpush1.bf16.msra.mxu0 0
    %6672 = vmatprep.subr.bf16.mxu0 0
    %6673 = vmatpush1.bf16.msra.mxu0 0
    %6674 = vmatprep.subr.bf16.mxu0 0
    %6675 = vmatpush1.bf16.msra.mxu0 0
    %6676 = vmatprep.subr.bf16.mxu0 0
    %6677 = vmatpush1.bf16.msra.mxu0 0
    %6678 = vmatprep.subr.bf16.mxu0 0
    %6679 = vmatpush1.bf16.msra.mxu0 0
    %6680 = vmatprep.subr.bf16.mxu0 0
    %6681 = vmatpush1.bf16.msra.mxu0 0
    %6682 = vmatprep.mubr.bf16.mxu0 0
    %6683 = vmatmul.mubr.bf16.gmra.mrb[0].mxu0 0
    %v6684 = vpop.f32.mrb[0].mxu0
    %v6685 = vadd.f32 0.0, %v6684
    %v6686 = vpop.f32.mrb[0].mxu0
    %v6687 = vadd.f32 0.0, %v6686
    %v6688 = vpop.f32.mrb[0].mxu0
    %v6689 = vpop.f32.mrb[0].mxu0
    %6690 = vdwg.mxu0
    %6691 = vmatprep.subr.bf16.mxu0 0
    %6692 = vmatpush1.bf16.msra.mxu0 %v6604
    %6693 = vmatprep.subr.bf16.mxu0 0
    %6694 = vmatpush1.bf16.msra.mxu0 %v6607
    %6695 = vmatprep.subr.bf16.mxu0 0
    %6696 = vmatpush1.bf16.msra.mxu0 %v6610
    %6697 = vmatprep.subr.bf16.mxu0 0
    %6698 = vmatpush1.bf16.msra.mxu0 %v6613
    %6699 = vmatprep.subr.bf16.mxu0 0
    %6700 = vmatpush1.bf16.msra.mxu0 %v6616
    %6701 = vmatprep.subr.bf16.mxu0 0
    %6702 = vmatpush1.bf16.msra.mxu0 %v6619
    %6703 = vmatprep.subr.bf16.mxu0 0
    %6704 = vmatpush1.bf16.msra.mxu0 %v6622
    %6705 = vmatprep.subr.bf16.mxu0 0
    %6706 = vmatpush1.bf16.msra.mxu0 %v6625
    %6707 = vmatprep.subr.bf16.mxu0 0
    %6708 = vmatpush1.bf16.msra.mxu0 0
    %6709 = vmatprep.subr.bf16.mxu0 0
    %6710 = vmatpush1.bf16.msra.mxu0 0
    %6711 = vmatprep.subr.bf16.mxu0 0
    %6712 = vmatpush1.bf16.msra.mxu0 0
    %6713 = vmatprep.subr.bf16.mxu0 0
    %6714 = vmatpush1.bf16.msra.mxu0 0
    %6715 = vmatprep.subr.bf16.mxu0 0
    %6716 = vmatpush1.bf16.msra.mxu0 0
    %6717 = vmatprep.subr.bf16.mxu0 0
    %6718 = vmatpush1.bf16.msra.mxu0 0
    %6719 = vmatprep.subr.bf16.mxu0 0
    %6720 = vmatpush1.bf16.msra.mxu0 0
    %6721 = vmatprep.subr.bf16.mxu0 0
    %6722 = vmatpush1.bf16.msra.mxu0 0
    %6723 = vmatprep.mubr.bf16.mxu0 0
    %6724 = vmatmul.mubr.bf16.gmra.mrb[0].mxu0 0
    %v6725 = vpop.f32.mrb[0].mxu0
    %v6726 = vadd.f32 0.0, %v6725
    %v6727 = vpop.f32.mrb[0].mxu0
    %v6728 = vpop.f32.mrb[0].mxu0
    %v6729 = vpop.f32.mrb[0].mxu0
    %6730 = vdwg.mxu0
    %v6731 = vadd.f32 %v6519, %v6685
    %v6732 = vxor.u32 %v6731, 2147483648
    %v6733 = vmul.f32 %v6732, 1.442695
    %v6734 = vpow.pop %v6733
    %v6735 = vadd.f32 %v6734, 1.0
    %v6736 = vrcp.pop %v6735
    %v6737 = vmul.f32 1.0, %v6736
    %v6738 = vadd.f32 %v6520, %v6687
    %v6739 = vxor.u32 %v6738, 2147483648
    %v6740 = vmul.f32 %v6739, 1.442695
    %v6741 = vpow.pop %v6740
    %v6742 = vadd.f32 %v6741, 1.0
    %v6743 = vrcp.pop %v6742
    %v6744 = vmul.f32 1.0, %v6743
    %v6746 = vlaneseq
    %v6747 = vshrl.u32 %v6746, 7
    %v6748 = vsub.s32 0, %v6747
    %v6749 = vrot.slane %v6518, %v6748
    %v6751 = vadd.f32 %v6726, %v6749
    %v6752 = vmul.f32 %v6737, %v6751
    %v6753 = vadd.f32 %v6521, %v6752
    %v6754 = vtanh.pop %v6753
    %v6755 = vsub.f32 1.0, %v6744
    %v6756 = vmul.f32 %v6755, %v6754
    %v6757 = vmul.f32 %v6744, 0.0
    %v6758 = vadd.f32 %v6756, %v6757
    %6759 = vst [vmem:[#allocation4] sm:$0xff] %v6758
    %v6760 = vld [vmem:[#allocation7 + $0x18] sm:$0xff]
    %v6761 = vld [vmem:[#allocation7 + $0x20] sm:$0xff]
    %v6762 = vld [vmem:[#allocation7 + $0x28] sm:$0xff]
    %v6763 = vpack.c.bf16 %v6758, %v6758
    %6764 = vmatprep.subr.bf16.mxu0 %v6603
    %6765 = vmatpush1.bf16.msra.mxu0 %v6602
    %6766 = vmatprep.subr.bf16.mxu0 %v6606
    %6767 = vmatpush1.bf16.msra.mxu0 %v6605
    %6768 = vmatprep.subr.bf16.mxu0 %v6609
    %6769 = vmatpush1.bf16.msra.mxu0 %v6608
    %6770 = vmatprep.subr.bf16.mxu0 %v6612
    %6771 = vmatpush1.bf16.msra.mxu0 %v6611
    %6772 = vmatprep.subr.bf16.mxu0 %v6615
    %6773 = vmatpush1.bf16.msra.mxu0 %v6614
    %6774 = vmatprep.subr.bf16.mxu0 %v6618
    %6775 = vmatpush1.bf16.msra.mxu0 %v6617
    %6776 = vmatprep.subr.bf16.mxu0 %v6621
    %6777 = vmatpush1.bf16.msra.mxu0 %v6620
    %6778 = vmatprep.subr.bf16.mxu0 %v6624
    %6779 = vmatpush1.bf16.msra.mxu0 %v6623
    %6780 = vmatprep.subr.bf16.mxu0 0
    %6781 = vmatpush1.bf16.msra.mxu0 0
    %6782 = vmatprep.subr.bf16.mxu0 0
    %6783 = vmatpush1.bf16.msra.mxu0 0
    %6784 = vmatprep.subr.bf16.mxu0 0
    %6785 = vmatpush1.bf16.msra.mxu0 0
    %6786 = vmatprep.subr.bf16.mxu0 0
    %6787 = vmatpush1.bf16.msra.mxu0 0
    %6788 = vmatprep.subr.bf16.mxu0 0
    %6789 = vmatpush1.bf16.msra.mxu0 0
    %6790 = vmatprep.subr.bf16.mxu0 0
    %6791 = vmatpush1.bf16.msra.mxu0 0
    %6792 = vmatprep.subr.bf16.mxu0 0
    %6793 = vmatpush1.bf16.msra.mxu0 0
    %6794 = vmatprep.subr.bf16.mxu0 0
    %6795 = vmatpush1.bf16.msra.mxu0 0
    %6796 = vmatprep.mubr.bf16.mxu0 0
    %6797 = vmatmul.mubr.bf16.gmra.mrb[0].mxu0 %v6763
    %v6798 = vpop.f32.mrb[0].mxu0
    %v6799 = vadd.f32 0.0, %v6798
    %v6800 = vpop.f32.mrb[0].mxu0
    %v6801 = vadd.f32 0.0, %v6800
    %v6802 = vpop.f32.mrb[0].mxu0
    %v6803 = vpop.f32.mrb[0].mxu0
    %6804 = vdwg.mxu0
    %6805 = vmatprep.subr.bf16.mxu0 0
    %6806 = vmatpush1.bf16.msra.mxu0 %v6604
    %6807 = vmatprep.subr.bf16.mxu0 0
    %6808 = vmatpush1.bf16.msra.mxu0 %v6607
    %6809 = vmatprep.subr.bf16.mxu0 0
    %6810 = vmatpush1.bf16.msra.mxu0 %v6610
    %6811 = vmatprep.subr.bf16.mxu0 0
    %6812 = vmatpush1.bf16.msra.mxu0 %v6613
    %6813 = vmatprep.subr.bf16.mxu0 0
    %6814 = vmatpush1.bf16.msra.mxu0 %v6616
    %6815 = vmatprep.subr.bf16.mxu0 0
    %6816 = vmatpush1.bf16.msra.mxu0 %v6619
    %6817 = vmatprep.subr.bf16.mxu0 0
    %6818 = vmatpush1.bf16.msra.mxu0 %v6622
    %6819 = vmatprep.subr.bf16.mxu0 0
    %6820 = vmatpush1.bf16.msra.mxu0 %v6625
    %6821 = vmatprep.subr.bf16.mxu0 0
    %6822 = vmatpush1.bf16.msra.mxu0 0
    %6823 = vmatprep.subr.bf16.mxu0 0
    %6824 = vmatpush1.bf16.msra.mxu0 0
    %6825 = vmatprep.subr.bf16.mxu0 0
    %6826 = vmatpush1.bf16.msra.mxu0 0
    %6827 = vmatprep.subr.bf16.mxu0 0
    %6828 = vmatpush1.bf16.msra.mxu0 0
    %6829 = vmatprep.subr.bf16.mxu0 0
    %6830 = vmatpush1.bf16.msra.mxu0 0
    %6831 = vmatprep.subr.bf16.mxu0 0
    %6832 = vmatpush1.bf16.msra.mxu0 0
    %6833 = vmatprep.subr.bf16.mxu0 0
    %6834 = vmatpush1.bf16.msra.mxu0 0
    %6835 = vmatprep.subr.bf16.mxu0 0
    %6836 = vmatpush1.bf16.msra.mxu0 0
    %6837 = vmatprep.mubr.bf16.mxu0 0
    %6838 = vmatmul.mubr.bf16.gmra.mrb[0].mxu0 %v6763
    %v6839 = vpop.f32.mrb[0].mxu0
    %v6840 = vadd.f32 0.0, %v6839
    %v6841 = vpop.f32.mrb[0].mxu0
    %v6842 = vpop.f32.mrb[0].mxu0
    %v6843 = vpop.f32.mrb[0].mxu0
    %6844 = vdwg.mxu0
    %v6845 = vadd.f32 %v6760, %v6799
    %v6846 = vxor.u32 %v6845, 2147483648
    %v6847 = vmul.f32 %v6846, 1.442695
    %v6848 = vpow.pop %v6847
    %v6849 = vadd.f32 %v6848, 1.0
    %v6850 = vrcp.pop %v6849
    %v6851 = vmul.f32 1.0, %v6850
    %v6852 = vadd.f32 %v6761, %v6801
    %v6853 = vxor.u32 %v6852, 2147483648
    %v6854 = vmul.f32 %v6853, 1.442695
    %v6855 = vpow.pop %v6854
    %v6856 = vadd.f32 %v6855, 1.0
    %v6857 = vrcp.pop %v6856
    %v6858 = vmul.f32 1.0, %v6857
    %v6859 = vadd.f32 %v6840, %v6749
    %v6860 = vmul.f32 %v6851, %v6859
    %v6861 = vadd.f32 %v6762, %v6860
    %v6862 = vtanh.pop %v6861
    %v6863 = vsub.f32 1.0, %v6858
    %v6864 = vmul.f32 %v6863, %v6862
    %v6865 = vmul.f32 %v6858, %v6758
    %v6866 = vadd.f32 %v6864, %v6865
    %6867 = vst [vmem:[#allocation4 + $0x8] sm:$0xff] %v6866
    %v6868 = vld [vmem:[#allocation4] sm:$0xff]
    %v6869 = vld [vmem:[#allocation4 + $0x8] sm:$0xff]
    %v6870 = vpack.c.bf16 %v6869, %v6868
    %v6871 = vld [vmem:[#allocation14] sm:$0xff]
    %v6872 = vld [vmem:[#allocation14 + $0x8] sm:$0xf]
    %v6873 = vld [vmem:[#allocation14 + $0xc] sm:$0xff]
    %v6874 = vld [vmem:[#allocation14 + $0x14] sm:$0xf]
    %v6875 = vld [vmem:[#allocation14 + $0x18] sm:$0xff]
    %v6876 = vld [vmem:[#allocation14 + $0x20] sm:$0xf]
    %v6877 = vld [vmem:[#allocation14 + $0x24] sm:$0xff]
    %v6878 = vld [vmem:[#allocation14 + $0x2c] sm:$0xf]
    %v6879 = vld [vmem:[#allocation14 + $0x30] sm:$0xff]
    %v6880 = vld [vmem:[#allocation14 + $0x38] sm:$0xf]
    %v6881 = vld [vmem:[#allocation14 + $0x3c] sm:$0xff]
    %v6882 = vld [vmem:[#allocation14 + $0x44] sm:$0xf]
    %v6883 = vld [vmem:[#allocation14 + $0x48] sm:$0xff]
    %v6884 = vld [vmem:[#allocation14 + $0x50] sm:$0xf]
    %v6885 = vld [vmem:[#allocation14 + $0x54] sm:$0xff]
    %v6886 = vld [vmem:[#allocation14 + $0x5c] sm:$0xf]
    %v6887 = vld [vmem:[#allocation14 + $0x60] sm:$0xff]
    %v6888 = vld [vmem:[#allocation14 + $0x68] sm:$0xf]
    %v6889 = vld [vmem:[#allocation14 + $0x6c] sm:$0xff]
    %v6890 = vld [vmem:[#allocation14 + $0x74] sm:$0xf]
    %v6891 = vld [vmem:[#allocation14 + $0x78] sm:$0xff]
    %v6892 = vld [vmem:[#allocation14 + $0x80] sm:$0xf]
    %v6893 = vld [vmem:[#allocation14 + $0x84] sm:$0xff]
    %v6894 = vld [vmem:[#allocation14 + $0x8c] sm:$0xf]
    %v6895 = vld [vmem:[#allocation14 + $0x90] sm:$0xff]
    %v6896 = vld [vmem:[#allocation14 + $0x98] sm:$0xf]
    %v6897 = vld [vmem:[#allocation14 + $0x9c] sm:$0xff]
    %v6898 = vld [vmem:[#allocation14 + $0xa4] sm:$0xf]
    %v6899 = vld [vmem:[#allocation14 + $0xa8] sm:$0xff]
    %v6900 = vld [vmem:[#allocation14 + $0xb0] sm:$0xf]
    %v6901 = vld [vmem:[#allocation14 + $0xb4] sm:$0xff]
    %v6902 = vld [vmem:[#allocation14 + $0xbc] sm:$0xf]
    %v6903 = vld [vmem:[%s12] sm:$0x7]
    %v6905 = vlaneseq
    %v6906 = vshrl.u32 %v6905, 7
    %v6907 = vsub.s32 0, %v6906
    %v6908 = vrot.slane %v6903, %v6907
    %v6909 = vlaneseq
    %v6910 = vshrl.u32 %v6909, 7
    %v6911 = vsub.s32 1, %v6910
    %v6912 = vrot.slane %v6903, %v6911
    %v6913 = vlaneseq
    %v6914 = vshrl.u32 %v6913, 7
    %v6915 = vsub.s32 2, %v6914
    %v6916 = vrot.slane %v6903, %v6915
    %v6952 = vunpack.c.l.b16 %v6871
    %v6953 = vunpack.c.h.b16 %v6871
    %v6954 = vunpack.c.l.b16 %v6872
    %v6955 = vunpack.c.l.b16 %v6873
    %v6956 = vunpack.c.h.b16 %v6873
    %v6957 = vunpack.c.l.b16 %v6874
    %v6958 = vunpack.c.l.b16 %v6875
    %v6959 = vunpack.c.h.b16 %v6875
    %v6960 = vunpack.c.l.b16 %v6876
    %v6961 = vunpack.c.l.b16 %v6877
    %v6962 = vunpack.c.h.b16 %v6877
    %v6963 = vunpack.c.l.b16 %v6878
    %v6964 = vunpack.c.l.b16 %v6879
    %v6965 = vunpack.c.h.b16 %v6879
    %v6966 = vunpack.c.l.b16 %v6880
    %v6967 = vunpack.c.l.b16 %v6881
    %v6968 = vunpack.c.h.b16 %v6881
    %v6969 = vunpack.c.l.b16 %v6882
    %v6970 = vunpack.c.l.b16 %v6883
    %v6971 = vunpack.c.h.b16 %v6883
    %v6972 = vunpack.c.l.b16 %v6884
    %v6973 = vunpack.c.l.b16 %v6885
    %v6974 = vunpack.c.h.b16 %v6885
    %v6975 = vunpack.c.l.b16 %v6886
    %v6976 = vunpack.c.l.b16 %v6887
    %v6977 = vunpack.c.h.b16 %v6887
    %v6978 = vunpack.c.l.b16 %v6888
    %v6979 = vunpack.c.l.b16 %v6889
    %v6980 = vunpack.c.h.b16 %v6889
    %v6981 = vunpack.c.l.b16 %v6890
    %v6982 = vunpack.c.l.b16 %v6891
    %v6983 = vunpack.c.h.b16 %v6891
    %v6984 = vunpack.c.l.b16 %v6892
    %v6985 = vunpack.c.l.b16 %v6893
    %v6986 = vunpack.c.h.b16 %v6893
    %v6987 = vunpack.c.l.b16 %v6894
    %v6988 = vunpack.c.l.b16 %v6895
    %v6989 = vunpack.c.h.b16 %v6895
    %v6990 = vunpack.c.l.b16 %v6896
    %v6991 = vunpack.c.l.b16 %v6897
    %v6992 = vunpack.c.h.b16 %v6897
    %v6993 = vunpack.c.l.b16 %v6898
    %v6994 = vunpack.c.l.b16 %v6899
    %v6995 = vunpack.c.h.b16 %v6899
    %v6996 = vunpack.c.l.b16 %v6900
    %v6997 = vunpack.c.l.b16 %v6901
    %v6998 = vunpack.c.h.b16 %v6901
    %v6999 = vunpack.c.l.b16 %v6902
    %v7000 = vpack.c.b16 %v6955, %v6952
    %v7001 = vpack.c.b16 %v6956, %v6953
    %v7002 = vpack.c.b16 %v6957, %v6954
    %v7003 = vpack.c.b16 %v6961, %v6958
    %v7004 = vpack.c.b16 %v6962, %v6959
    %v7005 = vpack.c.b16 %v6963, %v6960
    %v7006 = vpack.c.b16 %v6967, %v6964
    %v7007 = vpack.c.b16 %v6968, %v6965
    %v7008 = vpack.c.b16 %v6969, %v6966
    %v7009 = vpack.c.b16 %v6973, %v6970
    %v7010 = vpack.c.b16 %v6974, %v6971
    %v7011 = vpack.c.b16 %v6975, %v6972
    %v7012 = vpack.c.b16 %v6979, %v6976
    %v7013 = vpack.c.b16 %v6980, %v6977
    %v7014 = vpack.c.b16 %v6981, %v6978
    %v7015 = vpack.c.b16 %v6985, %v6982
    %v7016 = vpack.c.b16 %v6986, %v6983
    %v7017 = vpack.c.b16 %v6987, %v6984
    %v7018 = vpack.c.b16 %v6991, %v6988
    %v7019 = vpack.c.b16 %v6992, %v6989
    %v7020 = vpack.c.b16 %v6993, %v6990
    %v7021 = vpack.c.b16 %v6997, %v6994
    %v7022 = vpack.c.b16 %v6998, %v6995
    %v7023 = vpack.c.b16 %v6999, %v6996
    %7048 = vmatprep.subr.bf16.mxu0 %v7001
    %7049 = vmatpush1.bf16.msra.mxu0 %v7000
    %7050 = vmatprep.subr.bf16.mxu0 %v7004
    %7051 = vmatpush1.bf16.msra.mxu0 %v7003
    %7052 = vmatprep.subr.bf16.mxu0 %v7007
    %7053 = vmatpush1.bf16.msra.mxu0 %v7006
    %7054 = vmatprep.subr.bf16.mxu0 %v7010
    %7055 = vmatpush1.bf16.msra.mxu0 %v7009
    %7056 = vmatprep.subr.bf16.mxu0 %v7013
    %7057 = vmatpush1.bf16.msra.mxu0 %v7012
    %7058 = vmatprep.subr.bf16.mxu0 %v7016
    %7059 = vmatpush1.bf16.msra.mxu0 %v7015
    %7060 = vmatprep.subr.bf16.mxu0 %v7019
    %7061 = vmatpush1.bf16.msra.mxu0 %v7018
    %7062 = vmatprep.subr.bf16.mxu0 %v7022
    %7063 = vmatpush1.bf16.msra.mxu0 %v7021
    %7064 = vmatprep.subr.bf16.mxu0 0
    %7065 = vmatpush1.bf16.msra.mxu0 0
    %7066 = vmatprep.subr.bf16.mxu0 0
    %7067 = vmatpush1.bf16.msra.mxu0 0
    %7068 = vmatprep.subr.bf16.mxu0 0
    %7069 = vmatpush1.bf16.msra.mxu0 0
    %7070 = vmatprep.subr.bf16.mxu0 0
    %7071 = vmatpush1.bf16.msra.mxu0 0
    %7072 = vmatprep.subr.bf16.mxu0 0
    %7073 = vmatpush1.bf16.msra.mxu0 0
    %7074 = vmatprep.subr.bf16.mxu0 0
    %7075 = vmatpush1.bf16.msra.mxu0 0
    %7076 = vmatprep.subr.bf16.mxu0 0
    %7077 = vmatpush1.bf16.msra.mxu0 0
    %7078 = vmatprep.subr.bf16.mxu0 0
    %7079 = vmatpush1.bf16.msra.mxu0 0
    %7080 = vmatprep.mubr.bf16.mxu0 0
    %7081 = vmatmul.mubr.bf16.gmra.mrb[0].mxu0 %v6870
    %v7082 = vpop.f32.mrb[0].mxu0
    %v7083 = vadd.f32 %v6908, %v7082
    %v7084 = vpop.f32.mrb[0].mxu0
    %v7085 = vadd.f32 %v6912, %v7084
    %v7086 = vpop.f32.mrb[0].mxu0
    %v7087 = vadd.f32 %v6908, %v7086
    %v7088 = vpop.f32.mrb[0].mxu0
    %v7089 = vadd.f32 %v6912, %v7088
    %7090 = vdwg.mxu0
    %7091 = vmatprep.subr.bf16.mxu0 0
    %7092 = vmatpush1.bf16.msra.mxu0 %v7002
    %7093 = vmatprep.subr.bf16.mxu0 0
    %7094 = vmatpush1.bf16.msra.mxu0 %v7005
    %7095 = vmatprep.subr.bf16.mxu0 0
    %7096 = vmatpush1.bf16.msra.mxu0 %v7008
    %7097 = vmatprep.subr.bf16.mxu0 0
    %7098 = vmatpush1.bf16.msra.mxu0 %v7011
    %7099 = vmatprep.subr.bf16.mxu0 0
    %7100 = vmatpush1.bf16.msra.mxu0 %v7014
    %7101 = vmatprep.subr.bf16.mxu0 0
    %7102 = vmatpush1.bf16.msra.mxu0 %v7017
    %7103 = vmatprep.subr.bf16.mxu0 0
    %7104 = vmatpush1.bf16.msra.mxu0 %v7020
    %7105 = vmatprep.subr.bf16.mxu0 0
    %7106 = vmatpush1.bf16.msra.mxu0 %v7023
    %7107 = vmatprep.subr.bf16.mxu0 0
    %7108 = vmatpush1.bf16.msra.mxu0 0
    %7109 = vmatprep.subr.bf16.mxu0 0
    %7110 = vmatpush1.bf16.msra.mxu0 0
    %7111 = vmatprep.subr.bf16.mxu0 0
    %7112 = vmatpush1.bf16.msra.mxu0 0
    %7113 = vmatprep.subr.bf16.mxu0 0
    %7114 = vmatpush1.bf16.msra.mxu0 0
    %7115 = vmatprep.subr.bf16.mxu0 0
    %7116 = vmatpush1.bf16.msra.mxu0 0
    %7117 = vmatprep.subr.bf16.mxu0 0
    %7118 = vmatpush1.bf16.msra.mxu0 0
    %7119 = vmatprep.subr.bf16.mxu0 0
    %7120 = vmatpush1.bf16.msra.mxu0 0
    %7121 = vmatprep.subr.bf16.mxu0 0
    %7122 = vmatpush1.bf16.msra.mxu0 0
    %7123 = vmatprep.mubr.bf16.mxu0 0
    %7124 = vmatmul.mubr.bf16.gmra.mrb[0].mxu0 %v6870
    %v7125 = vpop.f32.mrb[0].mxu0
    %v7126 = vadd.f32 %v6916, %v7125
    %v7127 = vpop.f32.mrb[0].mxu0
    %v7128 = vpop.f32.mrb[0].mxu0
    %v7129 = vadd.f32 %v6916, %v7128
    %v7130 = vpop.f32.mrb[0].mxu0
    %7131 = vdwg.mxu0
    %7132 = vst [vmem:[#allocation8] sm:$0xff] %v7083
    %7133 = vst [vmem:[#allocation8 + $0x8] sm:$0xff] %v7085
    %7134 = vst [vmem:[#allocation8 + $0x10] sm:$0xff] %v7126
    %7135 = vst [vmem:[#allocation8 + $0x18] sm:$0xff] %v7087
    %7136 = vst [vmem:[#allocation8 + $0x20] sm:$0xff] %v7089
    %7137 = vst [vmem:[#allocation8 + $0x28] sm:$0xff] %v7129
    %v7138 = vld [vmem:[#allocation16] sm:$0xff]
    %v7139 = vld [vmem:[#allocation16 + $0x8] sm:$0xf]
    %v7140 = vld [vmem:[#allocation16 + $0xc] sm:$0xff]
    %v7141 = vld [vmem:[#allocation16 + $0x14] sm:$0xf]
    %v7142 = vld [vmem:[#allocation16 + $0x18] sm:$0xff]
    %v7143 = vld [vmem:[#allocation16 + $0x20] sm:$0xf]
    %v7144 = vld [vmem:[#allocation16 + $0x24] sm:$0xff]
    %v7145 = vld [vmem:[#allocation16 + $0x2c] sm:$0xf]
    %v7146 = vld [vmem:[#allocation16 + $0x30] sm:$0xff]
    %v7147 = vld [vmem:[#allocation16 + $0x38] sm:$0xf]
    %v7148 = vld [vmem:[#allocation16 + $0x3c] sm:$0xff]
    %v7149 = vld [vmem:[#allocation16 + $0x44] sm:$0xf]
    %v7150 = vld [vmem:[#allocation16 + $0x48] sm:$0xff]
    %v7151 = vld [vmem:[#allocation16 + $0x50] sm:$0xf]
    %v7152 = vld [vmem:[#allocation16 + $0x54] sm:$0xff]
    %v7153 = vld [vmem:[#allocation16 + $0x5c] sm:$0xf]
    %v7154 = vld [vmem:[#allocation16 + $0x60] sm:$0xff]
    %v7155 = vld [vmem:[#allocation16 + $0x68] sm:$0xf]
    %v7156 = vld [vmem:[#allocation16 + $0x6c] sm:$0xff]
    %v7157 = vld [vmem:[#allocation16 + $0x74] sm:$0xf]
    %v7158 = vld [vmem:[#allocation16 + $0x78] sm:$0xff]
    %v7159 = vld [vmem:[#allocation16 + $0x80] sm:$0xf]
    %v7160 = vld [vmem:[#allocation16 + $0x84] sm:$0xff]
    %v7161 = vld [vmem:[#allocation16 + $0x8c] sm:$0xf]
    %v7162 = vld [vmem:[#allocation16 + $0x90] sm:$0xff]
    %v7163 = vld [vmem:[#allocation16 + $0x98] sm:$0xf]
    %v7164 = vld [vmem:[#allocation16 + $0x9c] sm:$0xff]
    %v7165 = vld [vmem:[#allocation16 + $0xa4] sm:$0xf]
    %v7166 = vld [vmem:[#allocation16 + $0xa8] sm:$0xff]
    %v7167 = vld [vmem:[#allocation16 + $0xb0] sm:$0xf]
    %v7168 = vld [vmem:[#allocation16 + $0xb4] sm:$0xff]
    %v7169 = vld [vmem:[#allocation16 + $0xbc] sm:$0xf]
    %v7170 = vld [vmem:[%s14] sm:$0x1]
    %v7171 = vld [vmem:[#allocation8] sm:$0xff]
    %v7172 = vld [vmem:[#allocation8 + $0x8] sm:$0xff]
    %v7173 = vld [vmem:[#allocation8 + $0x10] sm:$0xff]
    %v7206 = vunpack.c.l.b16 %v7138
    %v7207 = vunpack.c.h.b16 %v7138
    %v7208 = vunpack.c.l.b16 %v7139
    %v7209 = vunpack.c.l.b16 %v7140
    %v7210 = vunpack.c.h.b16 %v7140
    %v7211 = vunpack.c.l.b16 %v7141
    %v7212 = vunpack.c.l.b16 %v7142
    %v7213 = vunpack.c.h.b16 %v7142
    %v7214 = vunpack.c.l.b16 %v7143
    %v7215 = vunpack.c.l.b16 %v7144
    %v7216 = vunpack.c.h.b16 %v7144
    %v7217 = vunpack.c.l.b16 %v7145
    %v7218 = vunpack.c.l.b16 %v7146
    %v7219 = vunpack.c.h.b16 %v7146
    %v7220 = vunpack.c.l.b16 %v7147
    %v7221 = vunpack.c.l.b16 %v7148
    %v7222 = vunpack.c.h.b16 %v7148
    %v7223 = vunpack.c.l.b16 %v7149
    %v7224 = vunpack.c.l.b16 %v7150
    %v7225 = vunpack.c.h.b16 %v7150
    %v7226 = vunpack.c.l.b16 %v7151
    %v7227 = vunpack.c.l.b16 %v7152
    %v7228 = vunpack.c.h.b16 %v7152
    %v7229 = vunpack.c.l.b16 %v7153
    %v7230 = vunpack.c.l.b16 %v7154
    %v7231 = vunpack.c.h.b16 %v7154
    %v7232 = vunpack.c.l.b16 %v7155
    %v7233 = vunpack.c.l.b16 %v7156
    %v7234 = vunpack.c.h.b16 %v7156
    %v7235 = vunpack.c.l.b16 %v7157
    %v7236 = vunpack.c.l.b16 %v7158
    %v7237 = vunpack.c.h.b16 %v7158
    %v7238 = vunpack.c.l.b16 %v7159
    %v7239 = vunpack.c.l.b16 %v7160
    %v7240 = vunpack.c.h.b16 %v7160
    %v7241 = vunpack.c.l.b16 %v7161
    %v7242 = vunpack.c.l.b16 %v7162
    %v7243 = vunpack.c.h.b16 %v7162
    %v7244 = vunpack.c.l.b16 %v7163
    %v7245 = vunpack.c.l.b16 %v7164
    %v7246 = vunpack.c.h.b16 %v7164
    %v7247 = vunpack.c.l.b16 %v7165
    %v7248 = vunpack.c.l.b16 %v7166
    %v7249 = vunpack.c.h.b16 %v7166
    %v7250 = vunpack.c.l.b16 %v7167
    %v7251 = vunpack.c.l.b16 %v7168
    %v7252 = vunpack.c.h.b16 %v7168
    %v7253 = vunpack.c.l.b16 %v7169
    %v7254 = vpack.c.b16 %v7209, %v7206
    %v7255 = vpack.c.b16 %v7210, %v7207
    %v7256 = vpack.c.b16 %v7211, %v7208
    %v7257 = vpack.c.b16 %v7215, %v7212
    %v7258 = vpack.c.b16 %v7216, %v7213
    %v7259 = vpack.c.b16 %v7217, %v7214
    %v7260 = vpack.c.b16 %v7221, %v7218
    %v7261 = vpack.c.b16 %v7222, %v7219
    %v7262 = vpack.c.b16 %v7223, %v7220
    %v7263 = vpack.c.b16 %v7227, %v7224
    %v7264 = vpack.c.b16 %v7228, %v7225
    %v7265 = vpack.c.b16 %v7229, %v7226
    %v7266 = vpack.c.b16 %v7233, %v7230
    %v7267 = vpack.c.b16 %v7234, %v7231
    %v7268 = vpack.c.b16 %v7235, %v7232
    %v7269 = vpack.c.b16 %v7239, %v7236
    %v7270 = vpack.c.b16 %v7240, %v7237
    %v7271 = vpack.c.b16 %v7241, %v7238
    %v7272 = vpack.c.b16 %v7245, %v7242
    %v7273 = vpack.c.b16 %v7246, %v7243
    %v7274 = vpack.c.b16 %v7247, %v7244
    %v7275 = vpack.c.b16 %v7251, %v7248
    %v7276 = vpack.c.b16 %v7252, %v7249
    %v7277 = vpack.c.b16 %v7253, %v7250
    %7302 = vmatprep.subr.bf16.mxu0 %v7255
    %7303 = vmatpush1.bf16.msra.mxu0 %v7254
    %7304 = vmatprep.subr.bf16.mxu0 %v7258
    %7305 = vmatpush1.bf16.msra.mxu0 %v7257
    %7306 = vmatprep.subr.bf16.mxu0 %v7261
    %7307 = vmatpush1.bf16.msra.mxu0 %v7260
    %7308 = vmatprep.subr.bf16.mxu0 %v7264
    %7309 = vmatpush1.bf16.msra.mxu0 %v7263
    %7310 = vmatprep.subr.bf16.mxu0 %v7267
    %7311 = vmatpush1.bf16.msra.mxu0 %v7266
    %7312 = vmatprep.subr.bf16.mxu0 %v7270
    %7313 = vmatpush1.bf16.msra.mxu0 %v7269
    %7314 = vmatprep.subr.bf16.mxu0 %v7273
    %7315 = vmatpush1.bf16.msra.mxu0 %v7272
    %7316 = vmatprep.subr.bf16.mxu0 %v7276
    %7317 = vmatpush1.bf16.msra.mxu0 %v7275
    %7318 = vmatprep.subr.bf16.mxu0 0
    %7319 = vmatpush1.bf16.msra.mxu0 0
    %7320 = vmatprep.subr.bf16.mxu0 0
    %7321 = vmatpush1.bf16.msra.mxu0 0
    %7322 = vmatprep.subr.bf16.mxu0 0
    %7323 = vmatpush1.bf16.msra.mxu0 0
    %7324 = vmatprep.subr.bf16.mxu0 0
    %7325 = vmatpush1.bf16.msra.mxu0 0
    %7326 = vmatprep.subr.bf16.mxu0 0
    %7327 = vmatpush1.bf16.msra.mxu0 0
    %7328 = vmatprep.subr.bf16.mxu0 0
    %7329 = vmatpush1.bf16.msra.mxu0 0
    %7330 = vmatprep.subr.bf16.mxu0 0
    %7331 = vmatpush1.bf16.msra.mxu0 0
    %7332 = vmatprep.subr.bf16.mxu0 0
    %7333 = vmatpush1.bf16.msra.mxu0 0
    %7334 = vmatprep.mubr.bf16.mxu0 0
    %7335 = vmatmul.mubr.bf16.gmra.mrb[0].mxu0 0
    %v7336 = vpop.f32.mrb[0].mxu0
    %v7337 = vadd.f32 0.0, %v7336
    %v7338 = vpop.f32.mrb[0].mxu0
    %v7339 = vadd.f32 0.0, %v7338
    %v7340 = vpop.f32.mrb[0].mxu0
    %v7341 = vpop.f32.mrb[0].mxu0
    %7342 = vdwg.mxu0
    %7343 = vmatprep.subr.bf16.mxu0 0
    %7344 = vmatpush1.bf16.msra.mxu0 %v7256
    %7345 = vmatprep.subr.bf16.mxu0 0
    %7346 = vmatpush1.bf16.msra.mxu0 %v7259
    %7347 = vmatprep.subr.bf16.mxu0 0
    %7348 = vmatpush1.bf16.msra.mxu0 %v7262
    %7349 = vmatprep.subr.bf16.mxu0 0
    %7350 = vmatpush1.bf16.msra.mxu0 %v7265
    %7351 = vmatprep.subr.bf16.mxu0 0
    %7352 = vmatpush1.bf16.msra.mxu0 %v7268
    %7353 = vmatprep.subr.bf16.mxu0 0
    %7354 = vmatpush1.bf16.msra.mxu0 %v7271
    %7355 = vmatprep.subr.bf16.mxu0 0
    %7356 = vmatpush1.bf16.msra.mxu0 %v7274
    %7357 = vmatprep.subr.bf16.mxu0 0
    %7358 = vmatpush1.bf16.msra.mxu0 %v7277
    %7359 = vmatprep.subr.bf16.mxu0 0
    %7360 = vmatpush1.bf16.msra.mxu0 0
    %7361 = vmatprep.subr.bf16.mxu0 0
    %7362 = vmatpush1.bf16.msra.mxu0 0
    %7363 = vmatprep.subr.bf16.mxu0 0
    %7364 = vmatpush1.bf16.msra.mxu0 0
    %7365 = vmatprep.subr.bf16.mxu0 0
    %7366 = vmatpush1.bf16.msra.mxu0 0
    %7367 = vmatprep.subr.bf16.mxu0 0
    %7368 = vmatpush1.bf16.msra.mxu0 0
    %7369 = vmatprep.subr.bf16.mxu0 0
    %7370 = vmatpush1.bf16.msra.mxu0 0
    %7371 = vmatprep.subr.bf16.mxu0 0
    %7372 = vmatpush1.bf16.msra.mxu0 0
    %7373 = vmatprep.subr.bf16.mxu0 0
    %7374 = vmatpush1.bf16.msra.mxu0 0
    %7375 = vmatprep.mubr.bf16.mxu0 0
    %7376 = vmatmul.mubr.bf16.gmra.mrb[0].mxu0 0
    %v7377 = vpop.f32.mrb[0].mxu0
    %v7378 = vadd.f32 0.0, %v7377
    %v7379 = vpop.f32.mrb[0].mxu0
    %v7380 = vpop.f32.mrb[0].mxu0
    %v7381 = vpop.f32.mrb[0].mxu0
    %7382 = vdwg.mxu0
    %v7383 = vadd.f32 %v7171, %v7337
    %v7384 = vxor.u32 %v7383, 2147483648
    %v7385 = vmul.f32 %v7384, 1.442695
    %v7386 = vpow.pop %v7385
    %v7387 = vadd.f32 %v7386, 1.0
    %v7388 = vrcp.pop %v7387
    %v7389 = vmul.f32 1.0, %v7388
    %v7390 = vadd.f32 %v7172, %v7339
    %v7391 = vxor.u32 %v7390, 2147483648
    %v7392 = vmul.f32 %v7391, 1.442695
    %v7393 = vpow.pop %v7392
    %v7394 = vadd.f32 %v7393, 1.0
    %v7395 = vrcp.pop %v7394
    %v7396 = vmul.f32 1.0, %v7395
    %v7398 = vlaneseq
    %v7399 = vshrl.u32 %v7398, 7
    %v7400 = vsub.s32 0, %v7399
    %v7401 = vrot.slane %v7170, %v7400
    %v7403 = vadd.f32 %v7378, %v7401
    %v7404 = vmul.f32 %v7389, %v7403
    %v7405 = vadd.f32 %v7173, %v7404
    %v7406 = vtanh.pop %v7405
    %v7407 = vsub.f32 1.0, %v7396
    %v7408 = vmul.f32 %v7407, %v7406
    %v7409 = vmul.f32 %v7396, 0.0
    %v7410 = vadd.f32 %v7408, %v7409
    %7411 = vst [vmem:[#allocation5] sm:$0xff] %v7410
    %v7412 = vld [vmem:[#allocation8 + $0x18] sm:$0xff]
    %v7413 = vld [vmem:[#allocation8 + $0x20] sm:$0xff]
    %v7414 = vld [vmem:[#allocation8 + $0x28] sm:$0xff]
    %v7415 = vpack.c.bf16 %v7410, %v7410
    %7416 = vmatprep.subr.bf16.mxu0 %v7255
    %7417 = vmatpush1.bf16.msra.mxu0 %v7254
    %7418 = vmatprep.subr.bf16.mxu0 %v7258
    %7419 = vmatpush1.bf16.msra.mxu0 %v7257
    %7420 = vmatprep.subr.bf16.mxu0 %v7261
    %7421 = vmatpush1.bf16.msra.mxu0 %v7260
    %7422 = vmatprep.subr.bf16.mxu0 %v7264
    %7423 = vmatpush1.bf16.msra.mxu0 %v7263
    %7424 = vmatprep.subr.bf16.mxu0 %v7267
    %7425 = vmatpush1.bf16.msra.mxu0 %v7266
    %7426 = vmatprep.subr.bf16.mxu0 %v7270
    %7427 = vmatpush1.bf16.msra.mxu0 %v7269
    %7428 = vmatprep.subr.bf16.mxu0 %v7273
    %7429 = vmatpush1.bf16.msra.mxu0 %v7272
    %7430 = vmatprep.subr.bf16.mxu0 %v7276
    %7431 = vmatpush1.bf16.msra.mxu0 %v7275
    %7432 = vmatprep.subr.bf16.mxu0 0
    %7433 = vmatpush1.bf16.msra.mxu0 0
    %7434 = vmatprep.subr.bf16.mxu0 0
    %7435 = vmatpush1.bf16.msra.mxu0 0
    %7436 = vmatprep.subr.bf16.mxu0 0
    %7437 = vmatpush1.bf16.msra.mxu0 0
    %7438 = vmatprep.subr.bf16.mxu0 0
    %7439 = vmatpush1.bf16.msra.mxu0 0
    %7440 = vmatprep.subr.bf16.mxu0 0
    %7441 = vmatpush1.bf16.msra.mxu0 0
    %7442 = vmatprep.subr.bf16.mxu0 0
    %7443 = vmatpush1.bf16.msra.mxu0 0
    %7444 = vmatprep.subr.bf16.mxu0 0
    %7445 = vmatpush1.bf16.msra.mxu0 0
    %7446 = vmatprep.subr.bf16.mxu0 0
    %7447 = vmatpush1.bf16.msra.mxu0 0
    %7448 = vmatprep.mubr.bf16.mxu0 0
    %7449 = vmatmul.mubr.bf16.gmra.mrb[0].mxu0 %v7415
    %v7450 = vpop.f32.mrb[0].mxu0
    %v7451 = vadd.f32 0.0, %v7450
    %v7452 = vpop.f32.mrb[0].mxu0
    %v7453 = vadd.f32 0.0, %v7452
    %v7454 = vpop.f32.mrb[0].mxu0
    %v7455 = vpop.f32.mrb[0].mxu0
    %7456 = vdwg.mxu0
    %7457 = vmatprep.subr.bf16.mxu0 0
    %7458 = vmatpush1.bf16.msra.mxu0 %v7256
    %7459 = vmatprep.subr.bf16.mxu0 0
    %7460 = vmatpush1.bf16.msra.mxu0 %v7259
    %7461 = vmatprep.subr.bf16.mxu0 0
    %7462 = vmatpush1.bf16.msra.mxu0 %v7262
    %7463 = vmatprep.subr.bf16.mxu0 0
    %7464 = vmatpush1.bf16.msra.mxu0 %v7265
    %7465 = vmatprep.subr.bf16.mxu0 0
    %7466 = vmatpush1.bf16.msra.mxu0 %v7268
    %7467 = vmatprep.subr.bf16.mxu0 0
    %7468 = vmatpush1.bf16.msra.mxu0 %v7271
    %7469 = vmatprep.subr.bf16.mxu0 0
    %7470 = vmatpush1.bf16.msra.mxu0 %v7274
    %7471 = vmatprep.subr.bf16.mxu0 0
    %7472 = vmatpush1.bf16.msra.mxu0 %v7277
    %7473 = vmatprep.subr.bf16.mxu0 0
    %7474 = vmatpush1.bf16.msra.mxu0 0
    %7475 = vmatprep.subr.bf16.mxu0 0
    %7476 = vmatpush1.bf16.msra.mxu0 0
    %7477 = vmatprep.subr.bf16.mxu0 0
    %7478 = vmatpush1.bf16.msra.mxu0 0
    %7479 = vmatprep.subr.bf16.mxu0 0
    %7480 = vmatpush1.bf16.msra.mxu0 0
    %7481 = vmatprep.subr.bf16.mxu0 0
    %7482 = vmatpush1.bf16.msra.mxu0 0
    %7483 = vmatprep.subr.bf16.mxu0 0
    %7484 = vmatpush1.bf16.msra.mxu0 0
    %7485 = vmatprep.subr.bf16.mxu0 0
    %7486 = vmatpush1.bf16.msra.mxu0 0
    %7487 = vmatprep.subr.bf16.mxu0 0
    %7488 = vmatpush1.bf16.msra.mxu0 0
    %7489 = vmatprep.mubr.bf16.mxu0 0
    %7490 = vmatmul.mubr.bf16.gmra.mrb[0].mxu0 %v7415
    %v7491 = vpop.f32.mrb[0].mxu0
    %v7492 = vadd.f32 0.0, %v7491
    %v7493 = vpop.f32.mrb[0].mxu0
    %v7494 = vpop.f32.mrb[0].mxu0
    %v7495 = vpop.f32.mrb[0].mxu0
    %7496 = vdwg.mxu0
    %v7497 = vadd.f32 %v7412, %v7451
    %v7498 = vxor.u32 %v7497, 2147483648
    %v7499 = vmul.f32 %v7498, 1.442695
    %v7500 = vpow.pop %v7499
    %v7501 = vadd.f32 %v7500, 1.0
    %v7502 = vrcp.pop %v7501
    %v7503 = vmul.f32 1.0, %v7502
    %v7504 = vadd.f32 %v7413, %v7453
    %v7505 = vxor.u32 %v7504, 2147483648
    %v7506 = vmul.f32 %v7505, 1.442695
    %v7507 = vpow.pop %v7506
    %v7508 = vadd.f32 %v7507, 1.0
    %v7509 = vrcp.pop %v7508
    %v7510 = vmul.f32 1.0, %v7509
    %v7511 = vadd.f32 %v7492, %v7401
    %v7512 = vmul.f32 %v7503, %v7511
    %v7513 = vadd.f32 %v7414, %v7512
    %v7514 = vtanh.pop %v7513
    %v7515 = vsub.f32 1.0, %v7510
    %v7516 = vmul.f32 %v7515, %v7514
    %v7517 = vmul.f32 %v7510, %v7410
    %v7518 = vadd.f32 %v7516, %v7517
    %7519 = vst [vmem:[#allocation5 + $0x8] sm:$0xff] %v7518
    %v7520 = vld [vmem:[#allocation5] sm:$0xff]
    %v7521 = vpack.c.bf16 %v7520, %v7520
    %v7522 = vld [vmem:[#allocation5 + $0x8] sm:$0xff]
    %v7523 = vpack.c.bf16 %v7522, %v7522
    %v7524 = vld [vmem:[%s15] sm:$0xf]
    %v7525 = vld [vmem:[%s15 + $0x4] sm:$0xf]
    %v7526 = vld [vmem:[%s15 + $0x8] sm:$0xf]
    %v7527 = vld [vmem:[%s15 + $0xc] sm:$0xf]
    %v7528 = vld [vmem:[%s15 + $0x10] sm:$0xf]
    %v7529 = vld [vmem:[%s15 + $0x14] sm:$0xf]
    %v7530 = vld [vmem:[%s15 + $0x18] sm:$0xf]
    %v7531 = vld [vmem:[%s15 + $0x1c] sm:$0xf]
    %v7532 = vld [vmem:[%s15 + $0x20] sm:$0xf]
    %v7533 = vld [vmem:[%s15 + $0x24] sm:$0xf]
    %v7534 = vld [vmem:[%s15 + $0x28] sm:$0xf]
    %v7535 = vld [vmem:[%s15 + $0x2c] sm:$0xf]
    %v7536 = vld [vmem:[%s15 + $0x30] sm:$0xf]
    %v7537 = vld [vmem:[%s15 + $0x34] sm:$0xf]
    %v7538 = vld [vmem:[%s15 + $0x38] sm:$0xf]
    %v7539 = vld [vmem:[%s15 + $0x3c] sm:$0xf]
    %s7540 = scalar_lea.vmem %s15, 64
    %v7541 = vld [vmem:[%s7540] sm:$0xf]
    %v7542 = vld [vmem:[%s7540 + $0x4] sm:$0xf]
    %v7543 = vld [vmem:[%s7540 + $0x8] sm:$0xf]
    %v7544 = vld [vmem:[%s7540 + $0xc] sm:$0xf]
    %v7545 = vld [vmem:[%s7540 + $0x10] sm:$0xf]
    %v7546 = vld [vmem:[%s7540 + $0x14] sm:$0xf]
    %v7547 = vld [vmem:[%s7540 + $0x18] sm:$0xf]
    %v7548 = vld [vmem:[%s7540 + $0x1c] sm:$0xf]
    %v7549 = vld [vmem:[%s7540 + $0x20] sm:$0xf]
    %v7550 = vld [vmem:[%s7540 + $0x24] sm:$0xf]
    %v7551 = vld [vmem:[%s7540 + $0x28] sm:$0xf]
    %v7552 = vld [vmem:[%s7540 + $0x2c] sm:$0xf]
    %v7553 = vld [vmem:[%s7540 + $0x30] sm:$0xf]
    %v7554 = vld [vmem:[%s7540 + $0x34] sm:$0xf]
    %v7555 = vld [vmem:[%s7540 + $0x38] sm:$0xf]
    %v7556 = vld [vmem:[%s7540 + $0x3c] sm:$0xf]
    %v7573 = vunpack.c.l.b16 %v7541
    %v7574 = vunpack.c.l.b16 %v7542
    %v7575 = vunpack.c.l.b16 %v7543
    %v7576 = vunpack.c.l.b16 %v7544
    %v7577 = vunpack.c.l.b16 %v7545
    %v7578 = vunpack.c.l.b16 %v7546
    %v7579 = vunpack.c.l.b16 %v7547
    %v7580 = vunpack.c.l.b16 %v7548
    %v7581 = vunpack.c.l.b16 %v7549
    %v7582 = vunpack.c.l.b16 %v7550
    %v7583 = vunpack.c.l.b16 %v7551
    %v7584 = vunpack.c.l.b16 %v7552
    %v7585 = vunpack.c.l.b16 %v7553
    %v7586 = vunpack.c.l.b16 %v7554
    %v7587 = vunpack.c.l.b16 %v7555
    %v7588 = vunpack.c.l.b16 %v7556
    %v7589 = vpack.c.b16 %v7574, %v7573
    %v7590 = vpack.c.b16 %v7576, %v7575
    %v7591 = vpack.c.b16 %v7578, %v7577
    %v7592 = vpack.c.b16 %v7580, %v7579
    %v7593 = vpack.c.b16 %v7582, %v7581
    %v7594 = vpack.c.b16 %v7584, %v7583
    %v7595 = vpack.c.b16 %v7586, %v7585
    %v7596 = vpack.c.b16 %v7588, %v7587
    %7605 = vmatprep.subr.bf16.mxu0 0
    %7606 = vmatpush1.bf16.msra.mxu0 %v7589
    %7607 = vmatprep.subr.bf16.mxu0 0
    %7608 = vmatpush1.bf16.msra.mxu0 %v7590
    %7609 = vmatprep.subr.bf16.mxu0 0
    %7610 = vmatpush1.bf16.msra.mxu0 %v7591
    %7611 = vmatprep.subr.bf16.mxu0 0
    %7612 = vmatpush1.bf16.msra.mxu0 %v7592
    %7613 = vmatprep.subr.bf16.mxu0 0
    %7614 = vmatpush1.bf16.msra.mxu0 %v7593
    %7615 = vmatprep.subr.bf16.mxu0 0
    %7616 = vmatpush1.bf16.msra.mxu0 %v7594
    %7617 = vmatprep.subr.bf16.mxu0 0
    %7618 = vmatpush1.bf16.msra.mxu0 %v7595
    %7619 = vmatprep.subr.bf16.mxu0 0
    %7620 = vmatpush1.bf16.msra.mxu0 %v7596
    %7621 = vmatprep.subr.bf16.mxu0 0
    %7622 = vmatpush1.bf16.msra.mxu0 0
    %7623 = vmatprep.subr.bf16.mxu0 0
    %7624 = vmatpush1.bf16.msra.mxu0 0
    %7625 = vmatprep.subr.bf16.mxu0 0
    %7626 = vmatpush1.bf16.msra.mxu0 0
    %7627 = vmatprep.subr.bf16.mxu0 0
    %7628 = vmatpush1.bf16.msra.mxu0 0
    %7629 = vmatprep.subr.bf16.mxu0 0
    %7630 = vmatpush1.bf16.msra.mxu0 0
    %7631 = vmatprep.subr.bf16.mxu0 0
    %7632 = vmatpush1.bf16.msra.mxu0 0
    %7633 = vmatprep.subr.bf16.mxu0 0
    %7634 = vmatpush1.bf16.msra.mxu0 0
    %7635 = vmatprep.subr.bf16.mxu0 0
    %7636 = vmatpush1.bf16.msra.mxu0 0
    %7637 = vmatprep.mubr.bf16.mxu0 0
    %7638 = vmatmul.mubr.bf16.gmra.mrb[0].mxu0 %v7523
    %v7639 = vpop.f32.mrb[0].mxu0
    %v7640 = vadd.f32 0.0, %v7639
    %v7641 = vpop.f32.mrb[0].mxu0
    %v7642 = vpop.f32.mrb[0].mxu0
    %v7643 = vpop.f32.mrb[0].mxu0
    %7644 = vdwg.mxu0
    %v7661 = vunpack.c.l.b16 %v7524
    %v7662 = vunpack.c.l.b16 %v7525
    %v7663 = vunpack.c.l.b16 %v7526
    %v7664 = vunpack.c.l.b16 %v7527
    %v7665 = vunpack.c.l.b16 %v7528
    %v7666 = vunpack.c.l.b16 %v7529
    %v7667 = vunpack.c.l.b16 %v7530
    %v7668 = vunpack.c.l.b16 %v7531
    %v7669 = vunpack.c.l.b16 %v7532
    %v7670 = vunpack.c.l.b16 %v7533
    %v7671 = vunpack.c.l.b16 %v7534
    %v7672 = vunpack.c.l.b16 %v7535
    %v7673 = vunpack.c.l.b16 %v7536
    %v7674 = vunpack.c.l.b16 %v7537
    %v7675 = vunpack.c.l.b16 %v7538
    %v7676 = vunpack.c.l.b16 %v7539
    %v7677 = vpack.c.b16 %v7662, %v7661
    %v7678 = vpack.c.b16 %v7664, %v7663
    %v7679 = vpack.c.b16 %v7666, %v7665
    %v7680 = vpack.c.b16 %v7668, %v7667
    %v7681 = vpack.c.b16 %v7670, %v7669
    %v7682 = vpack.c.b16 %v7672, %v7671
    %v7683 = vpack.c.b16 %v7674, %v7673
    %v7684 = vpack.c.b16 %v7676, %v7675
    %7693 = vmatprep.subr.bf16.mxu0 0
    %7694 = vmatpush1.bf16.msra.mxu0 %v7677
    %7695 = vmatprep.subr.bf16.mxu0 0
    %7696 = vmatpush1.bf16.msra.mxu0 %v7678
    %7697 = vmatprep.subr.bf16.mxu0 0
    %7698 = vmatpush1.bf16.msra.mxu0 %v7679
    %7699 = vmatprep.subr.bf16.mxu0 0
    %7700 = vmatpush1.bf16.msra.mxu0 %v7680
    %7701 = vmatprep.subr.bf16.mxu0 0
    %7702 = vmatpush1.bf16.msra.mxu0 %v7681
    %7703 = vmatprep.subr.bf16.mxu0 0
    %7704 = vmatpush1.bf16.msra.mxu0 %v7682
    %7705 = vmatprep.subr.bf16.mxu0 0
    %7706 = vmatpush1.bf16.msra.mxu0 %v7683
    %7707 = vmatprep.subr.bf16.mxu0 0
    %7708 = vmatpush1.bf16.msra.mxu0 %v7684
    %7709 = vmatprep.subr.bf16.mxu0 0
    %7710 = vmatpush1.bf16.msra.mxu0 0
    %7711 = vmatprep.subr.bf16.mxu0 0
    %7712 = vmatpush1.bf16.msra.mxu0 0
    %7713 = vmatprep.subr.bf16.mxu0 0
    %7714 = vmatpush1.bf16.msra.mxu0 0
    %7715 = vmatprep.subr.bf16.mxu0 0
    %7716 = vmatpush1.bf16.msra.mxu0 0
    %7717 = vmatprep.subr.bf16.mxu0 0
    %7718 = vmatpush1.bf16.msra.mxu0 0
    %7719 = vmatprep.subr.bf16.mxu0 0
    %7720 = vmatpush1.bf16.msra.mxu0 0
    %7721 = vmatprep.subr.bf16.mxu0 0
    %7722 = vmatpush1.bf16.msra.mxu0 0
    %7723 = vmatprep.subr.bf16.mxu0 0
    %7724 = vmatpush1.bf16.msra.mxu0 0
    %7725 = vmatprep.mubr.bf16.mxu0 0
    %7726 = vmatmul.mubr.bf16.gmra.mrb[0].mxu0 %v7521
    %v7727 = vpop.f32.mrb[0].mxu0
    %v7728 = vadd.f32 %v7640, %v7727
    %v7729 = vpop.f32.mrb[0].mxu0
    %v7730 = vpop.f32.mrb[0].mxu0
    %v7731 = vpop.f32.mrb[0].mxu0
    %7732 = vdwg.mxu0
    %v7733 = vld [vmem:[%s16] sm:$0x1]
    %v7735 = vlaneseq
    %v7736 = vshrl.u32 %v7735, 7
    %v7737 = vsub.s32 0, %v7736
    %v7738 = vrot.slane %v7733, %v7737
    %v7740 = vadd.f32 %v7728, %v7738
    %vm7741 = vcmask 64512
    %7742 = vst.msk [vmem:[%s17] sm:$0xff] %vm7741, %v7740
    // Predicated region
    $region90: #{dqn_forward.1} parent=1 // pred_check
      _
    $region91: #{dqn_forward.1} parent=1 // pred_check_branch
      %7744 = sbr.rel (0) target = $region93
    $region92: #{dqn_forward.1} parent=1 // pred_region
      _
    $region93: #{dqn_forward.1} parent=1 // pred_fallthru
      _
    // Predicated region
    $region94: #{dqn_forward.1} parent=1 // pred_check
      _
    $region95: #{dqn_forward.1} parent=1 // pred_check_branch
      %7746 = sbr.rel (0) target = $region97
    $region96: #{dqn_forward.1} parent=1 // pred_region
      _
    $region97: #{dqn_forward.1} parent=1 // pred_fallthru
      _
    %7747 = vsyncpa [#allocation10], 1
    %7748 = vsyncpa [#allocation12], 1
    %7749 = vsyncpa [#allocation15], 1

</llo_original>
